<compile_context>
chip_gen: v6e
topology: v6e:2x2x1
jax: 0.10.0
libtpu: 0.0.40
codegen_flags: <defaults>
</compile_context>

<pallas_src>
import functools
import math

import jax
import jax.numpy as jnp
from jax.experimental import pallas as pl
from jax.experimental.pallas import tpu as pltpu

KSZ = 6   # conv kernel size (all three layers)
PAD = 1   # conv padding (all three layers)


def _emit_patches(src_ref, dst_ref, wp, m):
    """im2col: fill dst (m, 36*C) from the flat zero-padded activation src (Hp*Wp, C).

    Patch row q = i*wp + j (rows with j >= Wout are junk, ignored downstream);
    column block t = kh*KSZ + kw holds src[q + kh*wp + kw, :].  Taps are grouped so
    every store is a full 128-lane (unmasked) slab when C divides 128.
    """
    c = src_ref.shape[-1]
    taps = KSZ * KSZ
    g = 128 // c if (128 % c == 0 and taps % max(1, 128 // c) == 0) else 1
    for t0 in range(0, taps, g):
        cols = []
        for t in range(t0, t0 + g):
            kh, kw = divmod(t, KSZ)
            sh = kh * wp + kw
            cols.append(src_ref[sh:sh + m, :].astype(dst_ref.dtype))
        blk = cols[0] if g == 1 else jnp.concatenate(cols, axis=-1)
        dst_ref[:, t0 * c:(t0 + g) * c] = blk


def _fused_cnn_kernel(p1_ref, w1_ref, b1_ref, w2_ref, b2_ref, w3_ref, b3_ref,
                      o_ref, a2_ref, a3_ref, p2_ref, p3_ref, *, dims):
    """Whole network for ONE batch element; everything resident in VMEM.

    p1_ref : (1, h1o*w1o, 36*Cin) bf16  layer-1 im2col patches (built on host/XLA)
    wX_ref : (36*CinX, CoutX)     bf16  im2col weight slabs
    bX_ref : (1, CoutX)           f32
    o_ref  : (1, 1, Cout3)        f32   pooled logits
    a2/a3  : flat zero-padded conv2/conv3 inputs (VMEM scratch, f32)
    p2/p3  : conv2/conv3 im2col patch matrices  (VMEM scratch, bf16)
    """
    (h1o, w1o), (h2o, w2o), (h3o, w3o) = dims
    wp2 = w1o + 2 * PAD
    wp3 = w2o + 2 * PAD
    m2 = (h2o - 1) * wp2 + w2o          # patch rows incl. junk (stay in-bounds)
    m3 = (h3o - 1) * wp3 + w3o

    # Zero pad-borders every step (scratch is per-core under the parallel batch grid).
    a2_ref[...] = jnp.zeros_like(a2_ref)
    a3_ref[...] = jnp.zeros_like(a3_ref)

    # ---- conv1 + ReLU: single im2col matmul, K = 36*Cin ----
    h1 = jnp.dot(p1_ref[0], w1_ref[...], preferred_element_type=jnp.float32)
    h1 = jnp.maximum(h1 + b1_ref[...], 0.0)                      # (h1o*w1o, C1)

    # scatter valid rows into the flat zero-padded conv2 input (interior offset +1,+1)
    for i in range(h1o):
        d = (i + PAD) * wp2 + PAD
        a2_ref[d:d + w1o, :] = h1[i * w1o:(i + 1) * w1o, :]

    # ---- conv2 + ReLU: im2col patch scratch + single matmul, K = 1152 ----
    _emit_patches(a2_ref, p2_ref, wp2, m2)
    h2 = jnp.dot(p2_ref[...], w2_ref[...], preferred_element_type=jnp.float32)
    h2 = jnp.maximum(h2 + b2_ref[...], 0.0)                      # (m2, C2), junk rows incl.

    for i in range(h2o):
        d = (i + PAD) * wp3 + PAD
        a3_ref[d:d + w2o, :] = h2[i * wp2:i * wp2 + w2o, :]

    # ---- conv3 + ReLU + fused adaptive_avg_pool2d(1) ----
    _emit_patches(a3_ref, p3_ref, wp3, m3)
    h3 = jnp.dot(p3_ref[...], w3_ref[...], preferred_element_type=jnp.float32)
    h3 = jnp.maximum(h3 + b3_ref[...], 0.0)                      # (m3, C3)

    # mask junk rows (flat column >= w3o) once, then one reduction
    q = jax.lax.broadcasted_iota(jnp.int32, h3.shape, 0)
    valid = (q % wp3) < w3o
    pooled = jnp.sum(jnp.where(valid, h3, 0.0), axis=0, keepdims=True)
    o_ref[0] = pooled * (1.0 / float(h3o * w3o))


def model_forward(x_nchw, params):
    """Pallas implementation of Model.forward (NCHW input, like PyTorch)."""
    (w1, b1), (w2, b2), (w3, b3) = params
    x = jnp.transpose(x_nchw, (0, 2, 3, 1)).astype(jnp.float32)   # NCHW -> NHWC
    n, h, w, cin = x.shape
    c1, c2, c3 = w1.shape[-1], w2.shape[-1], w3.shape[-1]

    h1o, w1o = h + 2 * PAD - KSZ + 1, w + 2 * PAD - KSZ + 1
    h2o, w2o = h1o + 2 * PAD - KSZ + 1, w1o + 2 * PAD - KSZ + 1
    h3o, w3o = h2o + 2 * PAD - KSZ + 1, w2o + 2 * PAD - KSZ + 1
    hp2, wp2 = h1o + 2 * PAD, w1o + 2 * PAD
    hp3, wp3 = h2o + 2 * PAD, w2o + 2 * PAD
    m2 = (h2o - 1) * wp2 + w2o
    m3 = (h3o - 1) * wp3 + w3o

    # Layer-1 im2col on the XLA side: (N, h1o*w1o, 36*Cin), tap-major / channel-minor.
    xp = jnp.pad(x, ((0, 0), (PAD, PAD), (PAD, PAD), (0, 0)))
    p1 = jnp.concatenate(
        [xp[:, kh:kh + h1o, kw:kw + w1o, :] for kh in range(KSZ) for kw in range(KSZ)],
        axis=-1).reshape(n, h1o * w1o, KSZ * KSZ * cin).astype(jnp.bfloat16)

    # Weights as (36*Cin, Cout) im2col slabs, bf16 for the MXU; biases stay f32.
    w1f = w1.reshape(KSZ * KSZ * cin, c1).astype(jnp.bfloat16)
    w2f = w2.reshape(KSZ * KSZ * c1, c2).astype(jnp.bfloat16)
    w3f = w3.reshape(KSZ * KSZ * c2, c3).astype(jnp.bfloat16)
    b1f = b1.reshape(1, c1).astype(jnp.float32)
    b2f = b2.reshape(1, c2).astype(jnp.float32)
    b3f = b3.reshape(1, c3).astype(jnp.float32)

    kernel = functools.partial(
        _fused_cnn_kernel, dims=((h1o, w1o), (h2o, w2o), (h3o, w3o)))

    out = pl.pallas_call(
        kernel,
        out_shape=jax.ShapeDtypeStruct((n, 1, c3), jnp.float32),
        grid=(n,),
        in_specs=[
            pl.BlockSpec((1, h1o * w1o, KSZ * KSZ * cin), lambda b: (b, 0, 0)),
            pl.BlockSpec((KSZ * KSZ * cin, c1), lambda b: (0, 0)),   # weights resident
            pl.BlockSpec((1, c1), lambda b: (0, 0)),
            pl.BlockSpec((KSZ * KSZ * c1, c2), lambda b: (0, 0)),
            pl.BlockSpec((1, c2), lambda b: (0, 0)),
            pl.BlockSpec((KSZ * KSZ * c2, c3), lambda b: (0, 0)),
            pl.BlockSpec((1, c3), lambda b: (0, 0)),
        ],
        out_specs=pl.BlockSpec((1, 1, c3), lambda b: (b, 0, 0)),
        scratch_shapes=[
            pltpu.VMEM((hp2 * wp2, c1), jnp.float32),        # padded conv2 input
            pltpu.VMEM((hp3 * wp3, c2), jnp.float32),        # padded conv3 input
            pltpu.VMEM((m2, KSZ * KSZ * c1), jnp.bfloat16),  # conv2 im2col patches
            pltpu.VMEM((m3, KSZ * KSZ * c2), jnp.bfloat16),  # conv3 im2col patches
        ],
        compiler_params=pltpu.CompilerParams(
            dimension_semantics=("parallel",)),   # batch across the 2 TCs on v7x
    )(p1, w1f, b1f, w2f, b2f, w3f, b3f)
    return out[:, 0, :]                           # (N, 10)


def ref_forward(x_nchw, params):
    """Pure-JAX f32 reference for correctness checking."""
    x = jnp.transpose(x_nchw, (0, 2, 3, 1))
    for w, b in params:
        x = jax.lax.conv_general_dilated(
            x, w, window_strides=(1, 1), padding=[(PAD, PAD), (PAD, PAD)],
            dimension_numbers=("NHWC", "HWIO", "NHWC"),
        )
        x = jax.nn.relu(x + b)
    return jnp.mean(x, axis=(1, 2))


def init_conv(key, cin, cout, ksz):
    # Deterministic init matching PyTorch Conv2d default bounds: U(-1/sqrt(fan_in), +).
    kw_key, kb_key = jax.random.split(key)
    fan_in = cin * ksz * ksz
    bound = 1.0 / math.sqrt(fan_in)
    w = jax.random.uniform(kw_key, (ksz, ksz, cin, cout), jnp.float32, -bound, bound)
    b = jax.random.uniform(kb_key, (cout,), jnp.float32, -bound, bound)
    return w, b


if __name__ == "__main__":
    key = jax.random.PRNGKey(0)
    kx, k1, k2, k3 = jax.random.split(key, 4)

    N, C, H, W = 2, 3, 16, 16
    x = jax.random.normal(kx, (N, C, H, W), jnp.float32)

    params = [
        init_conv(k1, 3, 32, KSZ),
        init_conv(k2, 32, 32, KSZ),
        init_conv(k3, 32, 10, KSZ),
    ]

    fwd = jax.jit(model_forward)
    out = jax.block_until_ready(fwd(x, params))

    ref = ref_forward(x, params)
    assert out.shape == (N, 10), out.shape
    # bf16 MXU inputs with f32 accumulation: compare against the f32 reference at 1e-2.
    assert jnp.allclose(out, ref, atol=1e-2, rtol=1e-2), (out, ref)

    print("KERNEL_OK")
</pallas_src>

<mosaic_0001>
module attributes {stable_mosaic.version = 11 : i64} {
  func.func @_fused_cnn_kernel(%arg0: i32, %arg1: memref<1x169x108xbf16, #tpu.memory_space<vmem>>, %arg2: memref<108x32xbf16, #tpu.memory_space<vmem>>, %arg3: memref<1x32xf32, #tpu.memory_space<vmem>>, %arg4: memref<1152x32xbf16, #tpu.memory_space<vmem>>, %arg5: memref<1x32xf32, #tpu.memory_space<vmem>>, %arg6: memref<1152x10xbf16, #tpu.memory_space<vmem>>, %arg7: memref<1x10xf32, #tpu.memory_space<vmem>>, %arg8: memref<1x1x10xf32, #tpu.memory_space<vmem>>, %arg9: memref<225x32xf32, #tpu.memory_space<vmem>>, %arg10: memref<144x32xf32, #tpu.memory_space<vmem>>, %arg11: memref<145x1152xbf16, #tpu.memory_space<vmem>>, %arg12: memref<79x1152xbf16, #tpu.memory_space<vmem>>) attributes {dimension_semantics = [#tpu.dimension_semantics<parallel>], iteration_bounds = array<i64: 2>, scalar_prefetch = 0 : i64, scratch_operands = 4 : i64, tpu.core_type = #tpu.core_type<tc>, window_params = [{transform_indices = @transform_0, window_bounds = array<i64: 1, 169, 108>}, {pipeline_mode = #tpu.pipeline_mode<synchronous>, transform_indices = @transform_1, window_bounds = array<i64: 108, 32>}, {pipeline_mode = #tpu.pipeline_mode<synchronous>, transform_indices = @transform_2, window_bounds = array<i64: 1, 32>}, {pipeline_mode = #tpu.pipeline_mode<synchronous>, transform_indices = @transform_3, window_bounds = array<i64: 1152, 32>}, {pipeline_mode = #tpu.pipeline_mode<synchronous>, transform_indices = @transform_4, window_bounds = array<i64: 1, 32>}, {pipeline_mode = #tpu.pipeline_mode<synchronous>, transform_indices = @transform_5, window_bounds = array<i64: 1152, 10>}, {pipeline_mode = #tpu.pipeline_mode<synchronous>, transform_indices = @transform_6, window_bounds = array<i64: 1, 10>}, {transform_indices = @transform_7, window_bounds = array<i64: 1, 1, 10>}]} {
    %cst = arith.constant 0.000000e+00 : f32
    %0 = vector.broadcast %cst : f32 to vector<225x32xf32>
    %c0 = arith.constant 0 : index
    %c0_0 = arith.constant 0 : index
    %1 = vector.load %arg9[%c0, %c0_0] : memref<225x32xf32, #tpu.memory_space<vmem>>, vector<225x32xf32>
    tpu.vector_store %arg9[%c0, %c0_0], %0 {strides = array<i32>} : memref<225x32xf32, #tpu.memory_space<vmem>>, vector<225x32xf32>,
    %cst_1 = arith.constant 0.000000e+00 : f32
    %2 = vector.broadcast %cst_1 : f32 to vector<144x32xf32>
    %c0_2 = arith.constant 0 : index
    %c0_3 = arith.constant 0 : index
    %3 = vector.load %arg10[%c0_2, %c0_3] : memref<144x32xf32, #tpu.memory_space<vmem>>, vector<144x32xf32>
    tpu.vector_store %arg10[%c0_2, %c0_3], %2 {strides = array<i32>} : memref<144x32xf32, #tpu.memory_space<vmem>>, vector<144x32xf32>,
    %c0_4 = arith.constant 0 : index
    %c0_5 = arith.constant 0 : index
    %c0_6 = arith.constant 0 : index
    %4 = vector.load %arg1[%c0_4, %c0_5, %c0_6] : memref<1x169x108xbf16, #tpu.memory_space<vmem>>, vector<1x169x108xbf16>
    %5 = vector.shape_cast %4 : vector<1x169x108xbf16> to vector<169x108xbf16>
    %c0_7 = arith.constant 0 : index
    %c0_8 = arith.constant 0 : index
    %6 = vector.load %arg2[%c0_7, %c0_8] : memref<108x32xbf16, #tpu.memory_space<vmem>>, vector<108x32xbf16>
    %cst_9 = arith.constant dense<0.000000e+00> : vector<169x32xf32>
    %7 = tpu.matmul %5, %6, %cst_9 {dimension_numbers = #tpu.dot_dimension_numbers<[1], [0], [0], [1], [0, 0, 1, 1], [], []>} : vector<169x108xbf16>, vector<108x32xbf16>, vector<169x32xf32> -> vector<169x32xf32>
    %c0_10 = arith.constant 0 : index
    %c0_11 = arith.constant 0 : index
    %8 = vector.load %arg3[%c0_10, %c0_11] : memref<1x32xf32, #tpu.memory_space<vmem>>, vector<1x32xf32>
    %9 = vector.broadcast %8 : vector<1x32xf32> to vector<169x32xf32>
    %10 = arith.addf %7, %9 : vector<169x32xf32>
    %cst_12 = arith.constant 0.000000e+00 : f32
    %11 = vector.broadcast %cst_12 : f32 to vector<169x32xf32>
    %12 = arith.maximumf %10, %11 : vector<169x32xf32>
    %13 = vector.extract_strided_slice %12 {offsets = [0, 0], sizes = [13, 32], strides = [1, 1]} : vector<169x32xf32> to vector<13x32xf32>
    %c16 = arith.constant 16 : index
    %c0_13 = arith.constant 0 : index
    %14 = vector.load %arg9[%c16, %c0_13] : memref<225x32xf32, #tpu.memory_space<vmem>>, vector<13x32xf32>
    tpu.vector_store %arg9[%c16, %c0_13], %13 {strides = array<i32>} : memref<225x32xf32, #tpu.memory_space<vmem>>, vector<13x32xf32>,
    %15 = vector.extract_strided_slice %12 {offsets = [13, 0], sizes = [13, 32], strides = [1, 1]} : vector<169x32xf32> to vector<13x32xf32>
    %c31 = arith.constant 31 : index
    %c0_14 = arith.constant 0 : index
    %16 = vector.load %arg9[%c31, %c0_14] : memref<225x32xf32, #tpu.memory_space<vmem>>, vector<13x32xf32>
    tpu.vector_store %arg9[%c31, %c0_14], %15 {strides = array<i32>} : memref<225x32xf32, #tpu.memory_space<vmem>>, vector<13x32xf32>,
    %17 = vector.extract_strided_slice %12 {offsets = [26, 0], sizes = [13, 32], strides = [1, 1]} : vector<169x32xf32> to vector<13x32xf32>
    %c46 = arith.constant 46 : index
    %c0_15 = arith.constant 0 : index
    %18 = vector.load %arg9[%c46, %c0_15] : memref<225x32xf32, #tpu.memory_space<vmem>>, vector<13x32xf32>
    tpu.vector_store %arg9[%c46, %c0_15], %17 {strides = array<i32>} : memref<225x32xf32, #tpu.memory_space<vmem>>, vector<13x32xf32>,
    %19 = vector.extract_strided_slice %12 {offsets = [39, 0], sizes = [13, 32], strides = [1, 1]} : vector<169x32xf32> to vector<13x32xf32>
    %c61 = arith.constant 61 : index
    %c0_16 = arith.constant 0 : index
    %20 = vector.load %arg9[%c61, %c0_16] : memref<225x32xf32, #tpu.memory_space<vmem>>, vector<13x32xf32>
    tpu.vector_store %arg9[%c61, %c0_16], %19 {strides = array<i32>} : memref<225x32xf32, #tpu.memory_space<vmem>>, vector<13x32xf32>,
    %21 = vector.extract_strided_slice %12 {offsets = [52, 0], sizes = [13, 32], strides = [1, 1]} : vector<169x32xf32> to vector<13x32xf32>
    %c76 = arith.constant 76 : index
    %c0_17 = arith.constant 0 : index
    %22 = vector.load %arg9[%c76, %c0_17] : memref<225x32xf32, #tpu.memory_space<vmem>>, vector<13x32xf32>
    tpu.vector_store %arg9[%c76, %c0_17], %21 {strides = array<i32>} : memref<225x32xf32, #tpu.memory_space<vmem>>, vector<13x32xf32>,
    %23 = vector.extract_strided_slice %12 {offsets = [65, 0], sizes = [13, 32], strides = [1, 1]} : vector<169x32xf32> to vector<13x32xf32>
    %c91 = arith.constant 91 : index
    %c0_18 = arith.constant 0 : index
    %24 = vector.load %arg9[%c91, %c0_18] : memref<225x32xf32, #tpu.memory_space<vmem>>, vector<13x32xf32>
    tpu.vector_store %arg9[%c91, %c0_18], %23 {strides = array<i32>} : memref<225x32xf32, #tpu.memory_space<vmem>>, vector<13x32xf32>,
    %25 = vector.extract_strided_slice %12 {offsets = [78, 0], sizes = [13, 32], strides = [1, 1]} : vector<169x32xf32> to vector<13x32xf32>
    %c106 = arith.constant 106 : index
    %c0_19 = arith.constant 0 : index
    %26 = vector.load %arg9[%c106, %c0_19] : memref<225x32xf32, #tpu.memory_space<vmem>>, vector<13x32xf32>
    tpu.vector_store %arg9[%c106, %c0_19], %25 {strides = array<i32>} : memref<225x32xf32, #tpu.memory_space<vmem>>, vector<13x32xf32>,
    %27 = vector.extract_strided_slice %12 {offsets = [91, 0], sizes = [13, 32], strides = [1, 1]} : vector<169x32xf32> to vector<13x32xf32>
    %c121 = arith.constant 121 : index
    %c0_20 = arith.constant 0 : index
    %28 = vector.load %arg9[%c121, %c0_20] : memref<225x32xf32, #tpu.memory_space<vmem>>, vector<13x32xf32>
    tpu.vector_store %arg9[%c121, %c0_20], %27 {strides = array<i32>} : memref<225x32xf32, #tpu.memory_space<vmem>>, vector<13x32xf32>,
    %29 = vector.extract_strided_slice %12 {offsets = [104, 0], sizes = [13, 32], strides = [1, 1]} : vector<169x32xf32> to vector<13x32xf32>
    %c136 = arith.constant 136 : index
    %c0_21 = arith.constant 0 : index
    %30 = vector.load %arg9[%c136, %c0_21] : memref<225x32xf32, #tpu.memory_space<vmem>>, vector<13x32xf32>
    tpu.vector_store %arg9[%c136, %c0_21], %29 {strides = array<i32>} : memref<225x32xf32, #tpu.memory_space<vmem>>, vector<13x32xf32>,
    %31 = vector.extract_strided_slice %12 {offsets = [117, 0], sizes = [13, 32], strides = [1, 1]} : vector<169x32xf32> to vector<13x32xf32>
    %c151 = arith.constant 151 : index
    %c0_22 = arith.constant 0 : index
    %32 = vector.load %arg9[%c151, %c0_22] : memref<225x32xf32, #tpu.memory_space<vmem>>, vector<13x32xf32>
    tpu.vector_store %arg9[%c151, %c0_22], %31 {strides = array<i32>} : memref<225x32xf32, #tpu.memory_space<vmem>>, vector<13x32xf32>,
    %33 = vector.extract_strided_slice %12 {offsets = [130, 0], sizes = [13, 32], strides = [1, 1]} : vector<169x32xf32> to vector<13x32xf32>
    %c166 = arith.constant 166 : index
    %c0_23 = arith.constant 0 : index
    %34 = vector.load %arg9[%c166, %c0_23] : memref<225x32xf32, #tpu.memory_space<vmem>>, vector<13x32xf32>
    tpu.vector_store %arg9[%c166, %c0_23], %33 {strides = array<i32>} : memref<225x32xf32, #tpu.memory_space<vmem>>, vector<13x32xf32>,
    %35 = vector.extract_strided_slice %12 {offsets = [143, 0], sizes = [13, 32], strides = [1, 1]} : vector<169x32xf32> to vector<13x32xf32>
    %c181 = arith.constant 181 : index
    %c0_24 = arith.constant 0 : index
    %36 = vector.load %arg9[%c181, %c0_24] : memref<225x32xf32, #tpu.memory_space<vmem>>, vector<13x32xf32>
    tpu.vector_store %arg9[%c181, %c0_24], %35 {strides = array<i32>} : memref<225x32xf32, #tpu.memory_space<vmem>>, vector<13x32xf32>,
    %37 = vector.extract_strided_slice %12 {offsets = [156, 0], sizes = [13, 32], strides = [1, 1]} : vector<169x32xf32> to vector<13x32xf32>
    %c196 = arith.constant 196 : index
    %c0_25 = arith.constant 0 : index
    %38 = vector.load %arg9[%c196, %c0_25] : memref<225x32xf32, #tpu.memory_space<vmem>>, vector<13x32xf32>
    tpu.vector_store %arg9[%c196, %c0_25], %37 {strides = array<i32>} : memref<225x32xf32, #tpu.memory_space<vmem>>, vector<13x32xf32>,
    %c0_26 = arith.constant 0 : index
    %c0_27 = arith.constant 0 : index
    %39 = vector.load %arg9[%c0_26, %c0_27] : memref<225x32xf32, #tpu.memory_space<vmem>>, vector<145x32xf32>
    %40 = arith.truncf %39 : vector<145x32xf32> to vector<145x32xbf16>
    %c1 = arith.constant 1 : index
    %c0_28 = arith.constant 0 : index
    %41 = vector.load %arg9[%c1, %c0_28] : memref<225x32xf32, #tpu.memory_space<vmem>>, vector<145x32xf32>
    %42 = arith.truncf %41 : vector<145x32xf32> to vector<145x32xbf16>
    %c2 = arith.constant 2 : index
    %c0_29 = arith.constant 0 : index
    %43 = vector.load %arg9[%c2, %c0_29] : memref<225x32xf32, #tpu.memory_space<vmem>>, vector<145x32xf32>
    %44 = arith.truncf %43 : vector<145x32xf32> to vector<145x32xbf16>
    %c3 = arith.constant 3 : index
    %c0_30 = arith.constant 0 : index
    %45 = vector.load %arg9[%c3, %c0_30] : memref<225x32xf32, #tpu.memory_space<vmem>>, vector<145x32xf32>
    %46 = arith.truncf %45 : vector<145x32xf32> to vector<145x32xbf16>
    %47 = tpu.concatenate %40, %42, %44, %46 in 1 : vector<145x32xbf16>, vector<145x32xbf16>, vector<145x32xbf16>, vector<145x32xbf16> -> vector<145x128xbf16>
    %c0_31 = arith.constant 0 : index
    %c0_32 = arith.constant 0 : index
    %48 = vector.load %arg11[%c0_31, %c0_32] : memref<145x1152xbf16, #tpu.memory_space<vmem>>, vector<145x128xbf16>
    tpu.vector_store %arg11[%c0_31, %c0_32], %47 {strides = array<i32>} : memref<145x1152xbf16, #tpu.memory_space<vmem>>, vector<145x128xbf16>,
    %c4 = arith.constant 4 : index
    %c0_33 = arith.constant 0 : index
    %49 = vector.load %arg9[%c4, %c0_33] : memref<225x32xf32, #tpu.memory_space<vmem>>, vector<145x32xf32>
    %50 = arith.truncf %49 : vector<145x32xf32> to vector<145x32xbf16>
    %c5 = arith.constant 5 : index
    %c0_34 = arith.constant 0 : index
    %51 = vector.load %arg9[%c5, %c0_34] : memref<225x32xf32, #tpu.memory_space<vmem>>, vector<145x32xf32>
    %52 = arith.truncf %51 : vector<145x32xf32> to vector<145x32xbf16>
    %c15 = arith.constant 15 : index
    %c0_35 = arith.constant 0 : index
    %53 = vector.load %arg9[%c15, %c0_35] : memref<225x32xf32, #tpu.memory_space<vmem>>, vector<145x32xf32>
    %54 = arith.truncf %53 : vector<145x32xf32> to vector<145x32xbf16>
    %c16_36 = arith.constant 16 : index
    %c0_37 = arith.constant 0 : index
    %55 = vector.load %arg9[%c16_36, %c0_37] : memref<225x32xf32, #tpu.memory_space<vmem>>, vector<145x32xf32>
    %56 = arith.truncf %55 : vector<145x32xf32> to vector<145x32xbf16>
    %57 = tpu.concatenate %50, %52, %54, %56 in 1 : vector<145x32xbf16>, vector<145x32xbf16>, vector<145x32xbf16>, vector<145x32xbf16> -> vector<145x128xbf16>
    %c0_38 = arith.constant 0 : index
    %c128 = arith.constant 128 : index
    %58 = vector.load %arg11[%c0_38, %c128] : memref<145x1152xbf16, #tpu.memory_space<vmem>>, vector<145x128xbf16>
    tpu.vector_store %arg11[%c0_38, %c128], %57 {strides = array<i32>} : memref<145x1152xbf16, #tpu.memory_space<vmem>>, vector<145x128xbf16>,
    %c17 = arith.constant 17 : index
    %c0_39 = arith.constant 0 : index
    %59 = vector.load %arg9[%c17, %c0_39] : memref<225x32xf32, #tpu.memory_space<vmem>>, vector<145x32xf32>
    %60 = arith.truncf %59 : vector<145x32xf32> to vector<145x32xbf16>
    %c18 = arith.constant 18 : index
    %c0_40 = arith.constant 0 : index
    %61 = vector.load %arg9[%c18, %c0_40] : memref<225x32xf32, #tpu.memory_space<vmem>>, vector<145x32xf32>
    %62 = arith.truncf %61 : vector<145x32xf32> to vector<145x32xbf16>
    %c19 = arith.constant 19 : index
    %c0_41 = arith.constant 0 : index
    %63 = vector.load %arg9[%c19, %c0_41] : memref<225x32xf32, #tpu.memory_space<vmem>>, vector<145x32xf32>
    %64 = arith.truncf %63 : vector<145x32xf32> to vector<145x32xbf16>
    %c20 = arith.constant 20 : index
    %c0_42 = arith.constant 0 : index
    %65 = vector.load %arg9[%c20, %c0_42] : memref<225x32xf32, #tpu.memory_space<vmem>>, vector<145x32xf32>
    %66 = arith.truncf %65 : vector<145x32xf32> to vector<145x32xbf16>
    %67 = tpu.concatenate %60, %62, %64, %66 in 1 : vector<145x32xbf16>, vector<145x32xbf16>, vector<145x32xbf16>, vector<145x32xbf16> -> vector<145x128xbf16>
    %c0_43 = arith.constant 0 : index
    %c256 = arith.constant 256 : index
    %68 = vector.load %arg11[%c0_43, %c256] : memref<145x1152xbf16, #tpu.memory_space<vmem>>, vector<145x128xbf16>
    tpu.vector_store %arg11[%c0_43, %c256], %67 {strides = array<i32>} : memref<145x1152xbf16, #tpu.memory_space<vmem>>, vector<145x128xbf16>,
    %c30 = arith.constant 30 : index
    %c0_44 = arith.constant 0 : index
    %69 = vector.load %arg9[%c30, %c0_44] : memref<225x32xf32, #tpu.memory_space<vmem>>, vector<145x32xf32>
    %70 = arith.truncf %69 : vector<145x32xf32> to vector<145x32xbf16>
    %c31_45 = arith.constant 31 : index
    %c0_46 = arith.constant 0 : index
    %71 = vector.load %arg9[%c31_45, %c0_46] : memref<225x32xf32, #tpu.memory_space<vmem>>, vector<145x32xf32>
    %72 = arith.truncf %71 : vector<145x32xf32> to vector<145x32xbf16>
    %c32 = arith.constant 32 : index
    %c0_47 = arith.constant 0 : index
    %73 = vector.load %arg9[%c32, %c0_47] : memref<225x32xf32, #tpu.memory_space<vmem>>, vector<145x32xf32>
    %74 = arith.truncf %73 : vector<145x32xf32> to vector<145x32xbf16>
    %c33 = arith.constant 33 : index
    %c0_48 = arith.constant 0 : index
    %75 = vector.load %arg9[%c33, %c0_48] : memref<225x32xf32, #tpu.memory_space<vmem>>, vector<145x32xf32>
    %76 = arith.truncf %75 : vector<145x32xf32> to vector<145x32xbf16>
    %77 = tpu.concatenate %70, %72, %74, %76 in 1 : vector<145x32xbf16>, vector<145x32xbf16>, vector<145x32xbf16>, vector<145x32xbf16> -> vector<145x128xbf16>
    %c0_49 = arith.constant 0 : index
    %c384 = arith.constant 384 : index
    %78 = vector.load %arg11[%c0_49, %c384] : memref<145x1152xbf16, #tpu.memory_space<vmem>>, vector<145x128xbf16>
    tpu.vector_store %arg11[%c0_49, %c384], %77 {strides = array<i32>} : memref<145x1152xbf16, #tpu.memory_space<vmem>>, vector<145x128xbf16>,
    %c34 = arith.constant 34 : index
    %c0_50 = arith.constant 0 : index
    %79 = vector.load %arg9[%c34, %c0_50] : memref<225x32xf32, #tpu.memory_space<vmem>>, vector<145x32xf32>
    %80 = arith.truncf %79 : vector<145x32xf32> to vector<145x32xbf16>
    %c35 = arith.constant 35 : index
    %c0_51 = arith.constant 0 : index
    %81 = vector.load %arg9[%c35, %c0_51] : memref<225x32xf32, #tpu.memory_space<vmem>>, vector<145x32xf32>
    %82 = arith.truncf %81 : vector<145x32xf32> to vector<145x32xbf16>
    %c45 = arith.constant 45 : index
    %c0_52 = arith.constant 0 : index
    %83 = vector.load %arg9[%c45, %c0_52] : memref<225x32xf32, #tpu.memory_space<vmem>>, vector<145x32xf32>
    %84 = arith.truncf %83 : vector<145x32xf32> to vector<145x32xbf16>
    %c46_53 = arith.constant 46 : index
    %c0_54 = arith.constant 0 : index
    %85 = vector.load %arg9[%c46_53, %c0_54] : memref<225x32xf32, #tpu.memory_space<vmem>>, vector<145x32xf32>
    %86 = arith.truncf %85 : vector<145x32xf32> to vector<145x32xbf16>
    %87 = tpu.concatenate %80, %82, %84, %86 in 1 : vector<145x32xbf16>, vector<145x32xbf16>, vector<145x32xbf16>, vector<145x32xbf16> -> vector<145x128xbf16>
    %c0_55 = arith.constant 0 : index
    %c512 = arith.constant 512 : index
    %88 = vector.load %arg11[%c0_55, %c512] : memref<145x1152xbf16, #tpu.memory_space<vmem>>, vector<145x128xbf16>
    tpu.vector_store %arg11[%c0_55, %c512], %87 {strides = array<i32>} : memref<145x1152xbf16, #tpu.memory_space<vmem>>, vector<145x128xbf16>,
    %c47 = arith.constant 47 : index
    %c0_56 = arith.constant 0 : index
    %89 = vector.load %arg9[%c47, %c0_56] : memref<225x32xf32, #tpu.memory_space<vmem>>, vector<145x32xf32>
    %90 = arith.truncf %89 : vector<145x32xf32> to vector<145x32xbf16>
    %c48 = arith.constant 48 : index
    %c0_57 = arith.constant 0 : index
    %91 = vector.load %arg9[%c48, %c0_57] : memref<225x32xf32, #tpu.memory_space<vmem>>, vector<145x32xf32>
    %92 = arith.truncf %91 : vector<145x32xf32> to vector<145x32xbf16>
    %c49 = arith.constant 49 : index
    %c0_58 = arith.constant 0 : index
    %93 = vector.load %arg9[%c49, %c0_58] : memref<225x32xf32, #tpu.memory_space<vmem>>, vector<145x32xf32>
    %94 = arith.truncf %93 : vector<145x32xf32> to vector<145x32xbf16>
    %c50 = arith.constant 50 : index
    %c0_59 = arith.constant 0 : index
    %95 = vector.load %arg9[%c50, %c0_59] : memref<225x32xf32, #tpu.memory_space<vmem>>, vector<145x32xf32>
    %96 = arith.truncf %95 : vector<145x32xf32> to vector<145x32xbf16>
    %97 = tpu.concatenate %90, %92, %94, %96 in 1 : vector<145x32xbf16>, vector<145x32xbf16>, vector<145x32xbf16>, vector<145x32xbf16> -> vector<145x128xbf16>
    %c0_60 = arith.constant 0 : index
    %c640 = arith.constant 640 : index
    %98 = vector.load %arg11[%c0_60, %c640] : memref<145x1152xbf16, #tpu.memory_space<vmem>>, vector<145x128xbf16>
    tpu.vector_store %arg11[%c0_60, %c640], %97 {strides = array<i32>} : memref<145x1152xbf16, #tpu.memory_space<vmem>>, vector<145x128xbf16>,
    %c60 = arith.constant 60 : index
    %c0_61 = arith.constant 0 : index
    %99 = vector.load %arg9[%c60, %c0_61] : memref<225x32xf32, #tpu.memory_space<vmem>>, vector<145x32xf32>
    %100 = arith.truncf %99 : vector<145x32xf32> to vector<145x32xbf16>
    %c61_62 = arith.constant 61 : index
    %c0_63 = arith.constant 0 : index
    %101 = vector.load %arg9[%c61_62, %c0_63] : memref<225x32xf32, #tpu.memory_space<vmem>>, vector<145x32xf32>
    %102 = arith.truncf %101 : vector<145x32xf32> to vector<145x32xbf16>
    %c62 = arith.constant 62 : index
    %c0_64 = arith.constant 0 : index
    %103 = vector.load %arg9[%c62, %c0_64] : memref<225x32xf32, #tpu.memory_space<vmem>>, vector<145x32xf32>
    %104 = arith.truncf %103 : vector<145x32xf32> to vector<145x32xbf16>
    %c63 = arith.constant 63 : index
    %c0_65 = arith.constant 0 : index
    %105 = vector.load %arg9[%c63, %c0_65] : memref<225x32xf32, #tpu.memory_space<vmem>>, vector<145x32xf32>
    %106 = arith.truncf %105 : vector<145x32xf32> to vector<145x32xbf16>
    %107 = tpu.concatenate %100, %102, %104, %106 in 1 : vector<145x32xbf16>, vector<145x32xbf16>, vector<145x32xbf16>, vector<145x32xbf16> -> vector<145x128xbf16>
    %c0_66 = arith.constant 0 : index
    %c768 = arith.constant 768 : index
    %108 = vector.load %arg11[%c0_66, %c768] : memref<145x1152xbf16, #tpu.memory_space<vmem>>, vector<145x128xbf16>
    tpu.vector_store %arg11[%c0_66, %c768], %107 {strides = array<i32>} : memref<145x1152xbf16, #tpu.memory_space<vmem>>, vector<145x128xbf16>,
    %c64 = arith.constant 64 : index
    %c0_67 = arith.constant 0 : index
    %109 = vector.load %arg9[%c64, %c0_67] : memref<225x32xf32, #tpu.memory_space<vmem>>, vector<145x32xf32>
    %110 = arith.truncf %109 : vector<145x32xf32> to vector<145x32xbf16>
    %c65 = arith.constant 65 : index
    %c0_68 = arith.constant 0 : index
    %111 = vector.load %arg9[%c65, %c0_68] : memref<225x32xf32, #tpu.memory_space<vmem>>, vector<145x32xf32>
    %112 = arith.truncf %111 : vector<145x32xf32> to vector<145x32xbf16>
    %c75 = arith.constant 75 : index
    %c0_69 = arith.constant 0 : index
    %113 = vector.load %arg9[%c75, %c0_69] : memref<225x32xf32, #tpu.memory_space<vmem>>, vector<145x32xf32>
    %114 = arith.truncf %113 : vector<145x32xf32> to vector<145x32xbf16>
    %c76_70 = arith.constant 76 : index
    %c0_71 = arith.constant 0 : index
    %115 = vector.load %arg9[%c76_70, %c0_71] : memref<225x32xf32, #tpu.memory_space<vmem>>, vector<145x32xf32>
    %116 = arith.truncf %115 : vector<145x32xf32> to vector<145x32xbf16>
    %117 = tpu.concatenate %110, %112, %114, %116 in 1 : vector<145x32xbf16>, vector<145x32xbf16>, vector<145x32xbf16>, vector<145x32xbf16> -> vector<145x128xbf16>
    %c0_72 = arith.constant 0 : index
    %c896 = arith.constant 896 : index
    %118 = vector.load %arg11[%c0_72, %c896] : memref<145x1152xbf16, #tpu.memory_space<vmem>>, vector<145x128xbf16>
    tpu.vector_store %arg11[%c0_72, %c896], %117 {strides = array<i32>} : memref<145x1152xbf16, #tpu.memory_space<vmem>>, vector<145x128xbf16>,
    %c77 = arith.constant 77 : index
    %c0_73 = arith.constant 0 : index
    %119 = vector.load %arg9[%c77, %c0_73] : memref<225x32xf32, #tpu.memory_space<vmem>>, vector<145x32xf32>
    %120 = arith.truncf %119 : vector<145x32xf32> to vector<145x32xbf16>
    %c78 = arith.constant 78 : index
    %c0_74 = arith.constant 0 : index
    %121 = vector.load %arg9[%c78, %c0_74] : memref<225x32xf32, #tpu.memory_space<vmem>>, vector<145x32xf32>
    %122 = arith.truncf %121 : vector<145x32xf32> to vector<145x32xbf16>
    %c79 = arith.constant 79 : index
    %c0_75 = arith.constant 0 : index
    %123 = vector.load %arg9[%c79, %c0_75] : memref<225x32xf32, #tpu.memory_space<vmem>>, vector<145x32xf32>
    %124 = arith.truncf %123 : vector<145x32xf32> to vector<145x32xbf16>
    %c80 = arith.constant 80 : index
    %c0_76 = arith.constant 0 : index
    %125 = vector.load %arg9[%c80, %c0_76] : memref<225x32xf32, #tpu.memory_space<vmem>>, vector<145x32xf32>
    %126 = arith.truncf %125 : vector<145x32xf32> to vector<145x32xbf16>
    %127 = tpu.concatenate %120, %122, %124, %126 in 1 : vector<145x32xbf16>, vector<145x32xbf16>, vector<145x32xbf16>, vector<145x32xbf16> -> vector<145x128xbf16>
    %c0_77 = arith.constant 0 : index
    %c1024 = arith.constant 1024 : index
    %128 = vector.load %arg11[%c0_77, %c1024] : memref<145x1152xbf16, #tpu.memory_space<vmem>>, vector<145x128xbf16>
    tpu.vector_store %arg11[%c0_77, %c1024], %127 {strides = array<i32>} : memref<145x1152xbf16, #tpu.memory_space<vmem>>, vector<145x128xbf16>,
    %c0_78 = arith.constant 0 : index
    %c0_79 = arith.constant 0 : index
    %129 = vector.load %arg11[%c0_78, %c0_79] : memref<145x1152xbf16, #tpu.memory_space<vmem>>, vector<145x1152xbf16>
    %c0_80 = arith.constant 0 : index
    %c0_81 = arith.constant 0 : index
    %130 = vector.load %arg4[%c0_80, %c0_81] : memref<1152x32xbf16, #tpu.memory_space<vmem>>, vector<1152x32xbf16>
    %cst_82 = arith.constant dense<0.000000e+00> : vector<145x32xf32>
    %131 = tpu.matmul %129, %130, %cst_82 {dimension_numbers = #tpu.dot_dimension_numbers<[1], [0], [0], [1], [0, 0, 1, 1], [], []>} : vector<145x1152xbf16>, vector<1152x32xbf16>, vector<145x32xf32> -> vector<145x32xf32>
    %c0_83 = arith.constant 0 : index
    %c0_84 = arith.constant 0 : index
    %132 = vector.load %arg5[%c0_83, %c0_84] : memref<1x32xf32, #tpu.memory_space<vmem>>, vector<1x32xf32>
    %133 = vector.broadcast %132 : vector<1x32xf32> to vector<145x32xf32>
    %134 = arith.addf %131, %133 : vector<145x32xf32>
    %cst_85 = arith.constant 0.000000e+00 : f32
    %135 = vector.broadcast %cst_85 : f32 to vector<145x32xf32>
    %136 = arith.maximumf %134, %135 : vector<145x32xf32>
    %137 = vector.extract_strided_slice %136 {offsets = [0, 0], sizes = [10, 32], strides = [1, 1]} : vector<145x32xf32> to vector<10x32xf32>
    %c13 = arith.constant 13 : index
    %c0_86 = arith.constant 0 : index
    %138 = vector.load %arg10[%c13, %c0_86] : memref<144x32xf32, #tpu.memory_space<vmem>>, vector<10x32xf32>
    tpu.vector_store %arg10[%c13, %c0_86], %137 {strides = array<i32>} : memref<144x32xf32, #tpu.memory_space<vmem>>, vector<10x32xf32>,
    %139 = vector.extract_strided_slice %136 {offsets = [15, 0], sizes = [10, 32], strides = [1, 1]} : vector<145x32xf32> to vector<10x32xf32>
    %c25 = arith.constant 25 : index
    %c0_87 = arith.constant 0 : index
    %140 = vector.load %arg10[%c25, %c0_87] : memref<144x32xf32, #tpu.memory_space<vmem>>, vector<10x32xf32>
    tpu.vector_store %arg10[%c25, %c0_87], %139 {strides = array<i32>} : memref<144x32xf32, #tpu.memory_space<vmem>>, vector<10x32xf32>,
    %141 = vector.extract_strided_slice %136 {offsets = [30, 0], sizes = [10, 32], strides = [1, 1]} : vector<145x32xf32> to vector<10x32xf32>
    %c37 = arith.constant 37 : index
    %c0_88 = arith.constant 0 : index
    %142 = vector.load %arg10[%c37, %c0_88] : memref<144x32xf32, #tpu.memory_space<vmem>>, vector<10x32xf32>
    tpu.vector_store %arg10[%c37, %c0_88], %141 {strides = array<i32>} : memref<144x32xf32, #tpu.memory_space<vmem>>, vector<10x32xf32>,
    %143 = vector.extract_strided_slice %136 {offsets = [45, 0], sizes = [10, 32], strides = [1, 1]} : vector<145x32xf32> to vector<10x32xf32>
    %c49_89 = arith.constant 49 : index
    %c0_90 = arith.constant 0 : index
    %144 = vector.load %arg10[%c49_89, %c0_90] : memref<144x32xf32, #tpu.memory_space<vmem>>, vector<10x32xf32>
    tpu.vector_store %arg10[%c49_89, %c0_90], %143 {strides = array<i32>} : memref<144x32xf32, #tpu.memory_space<vmem>>, vector<10x32xf32>,
    %145 = vector.extract_strided_slice %136 {offsets = [60, 0], sizes = [10, 32], strides = [1, 1]} : vector<145x32xf32> to vector<10x32xf32>
    %c61_91 = arith.constant 61 : index
    %c0_92 = arith.constant 0 : index
    %146 = vector.load %arg10[%c61_91, %c0_92] : memref<144x32xf32, #tpu.memory_space<vmem>>, vector<10x32xf32>
    tpu.vector_store %arg10[%c61_91, %c0_92], %145 {strides = array<i32>} : memref<144x32xf32, #tpu.memory_space<vmem>>, vector<10x32xf32>,
    %147 = vector.extract_strided_slice %136 {offsets = [75, 0], sizes = [10, 32], strides = [1, 1]} : vector<145x32xf32> to vector<10x32xf32>
    %c73 = arith.constant 73 : index
    %c0_93 = arith.constant 0 : index
    %148 = vector.load %arg10[%c73, %c0_93] : memref<144x32xf32, #tpu.memory_space<vmem>>, vector<10x32xf32>
    tpu.vector_store %arg10[%c73, %c0_93], %147 {strides = array<i32>} : memref<144x32xf32, #tpu.memory_space<vmem>>, vector<10x32xf32>,
    %149 = vector.extract_strided_slice %136 {offsets = [90, 0], sizes = [10, 32], strides = [1, 1]} : vector<145x32xf32> to vector<10x32xf32>
    %c85 = arith.constant 85 : index
    %c0_94 = arith.constant 0 : index
    %150 = vector.load %arg10[%c85, %c0_94] : memref<144x32xf32, #tpu.memory_space<vmem>>, vector<10x32xf32>
    tpu.vector_store %arg10[%c85, %c0_94], %149 {strides = array<i32>} : memref<144x32xf32, #tpu.memory_space<vmem>>, vector<10x32xf32>,
    %151 = vector.extract_strided_slice %136 {offsets = [105, 0], sizes = [10, 32], strides = [1, 1]} : vector<145x32xf32> to vector<10x32xf32>
    %c97 = arith.constant 97 : index
    %c0_95 = arith.constant 0 : index
    %152 = vector.load %arg10[%c97, %c0_95] : memref<144x32xf32, #tpu.memory_space<vmem>>, vector<10x32xf32>
    tpu.vector_store %arg10[%c97, %c0_95], %151 {strides = array<i32>} : memref<144x32xf32, #tpu.memory_space<vmem>>, vector<10x32xf32>,
    %153 = vector.extract_strided_slice %136 {offsets = [120, 0], sizes = [10, 32], strides = [1, 1]} : vector<145x32xf32> to vector<10x32xf32>
    %c109 = arith.constant 109 : index
    %c0_96 = arith.constant 0 : index
    %154 = vector.load %arg10[%c109, %c0_96] : memref<144x32xf32, #tpu.memory_space<vmem>>, vector<10x32xf32>
    tpu.vector_store %arg10[%c109, %c0_96], %153 {strides = array<i32>} : memref<144x32xf32, #tpu.memory_space<vmem>>, vector<10x32xf32>,
    %155 = vector.extract_strided_slice %136 {offsets = [135, 0], sizes = [10, 32], strides = [1, 1]} : vector<145x32xf32> to vector<10x32xf32>
    %c121_97 = arith.constant 121 : index
    %c0_98 = arith.constant 0 : index
    %156 = vector.load %arg10[%c121_97, %c0_98] : memref<144x32xf32, #tpu.memory_space<vmem>>, vector<10x32xf32>
    tpu.vector_store %arg10[%c121_97, %c0_98], %155 {strides = array<i32>} : memref<144x32xf32, #tpu.memory_space<vmem>>, vector<10x32xf32>,
    %c0_99 = arith.constant 0 : index
    %c0_100 = arith.constant 0 : index
    %157 = vector.load %arg10[%c0_99, %c0_100] : memref<144x32xf32, #tpu.memory_space<vmem>>, vector<79x32xf32>
    %158 = arith.truncf %157 : vector<79x32xf32> to vector<79x32xbf16>
    %c1_101 = arith.constant 1 : index
    %c0_102 = arith.constant 0 : index
    %159 = vector.load %arg10[%c1_101, %c0_102] : memref<144x32xf32, #tpu.memory_space<vmem>>, vector<79x32xf32>
    %160 = arith.truncf %159 : vector<79x32xf32> to vector<79x32xbf16>
    %c2_103 = arith.constant 2 : index
    %c0_104 = arith.constant 0 : index
    %161 = vector.load %arg10[%c2_103, %c0_104] : memref<144x32xf32, #tpu.memory_space<vmem>>, vector<79x32xf32>
    %162 = arith.truncf %161 : vector<79x32xf32> to vector<79x32xbf16>
    %c3_105 = arith.constant 3 : index
    %c0_106 = arith.constant 0 : index
    %163 = vector.load %arg10[%c3_105, %c0_106] : memref<144x32xf32, #tpu.memory_space<vmem>>, vector<79x32xf32>
    %164 = arith.truncf %163 : vector<79x32xf32> to vector<79x32xbf16>
    %165 = tpu.concatenate %158, %160, %162, %164 in 1 : vector<79x32xbf16>, vector<79x32xbf16>, vector<79x32xbf16>, vector<79x32xbf16> -> vector<79x128xbf16>
    %c0_107 = arith.constant 0 : index
    %c0_108 = arith.constant 0 : index
    %166 = vector.load %arg12[%c0_107, %c0_108] : memref<79x1152xbf16, #tpu.memory_space<vmem>>, vector<79x128xbf16>
    tpu.vector_store %arg12[%c0_107, %c0_108], %165 {strides = array<i32>} : memref<79x1152xbf16, #tpu.memory_space<vmem>>, vector<79x128xbf16>,
    %c4_109 = arith.constant 4 : index
    %c0_110 = arith.constant 0 : index
    %167 = vector.load %arg10[%c4_109, %c0_110] : memref<144x32xf32, #tpu.memory_space<vmem>>, vector<79x32xf32>
    %168 = arith.truncf %167 : vector<79x32xf32> to vector<79x32xbf16>
    %c5_111 = arith.constant 5 : index
    %c0_112 = arith.constant 0 : index
    %169 = vector.load %arg10[%c5_111, %c0_112] : memref<144x32xf32, #tpu.memory_space<vmem>>, vector<79x32xf32>
    %170 = arith.truncf %169 : vector<79x32xf32> to vector<79x32xbf16>
    %c12 = arith.constant 12 : index
    %c0_113 = arith.constant 0 : index
    %171 = vector.load %arg10[%c12, %c0_113] : memref<144x32xf32, #tpu.memory_space<vmem>>, vector<79x32xf32>
    %172 = arith.truncf %171 : vector<79x32xf32> to vector<79x32xbf16>
    %c13_114 = arith.constant 13 : index
    %c0_115 = arith.constant 0 : index
    %173 = vector.load %arg10[%c13_114, %c0_115] : memref<144x32xf32, #tpu.memory_space<vmem>>, vector<79x32xf32>
    %174 = arith.truncf %173 : vector<79x32xf32> to vector<79x32xbf16>
    %175 = tpu.concatenate %168, %170, %172, %174 in 1 : vector<79x32xbf16>, vector<79x32xbf16>, vector<79x32xbf16>, vector<79x32xbf16> -> vector<79x128xbf16>
    %c0_116 = arith.constant 0 : index
    %c128_117 = arith.constant 128 : index
    %176 = vector.load %arg12[%c0_116, %c128_117] : memref<79x1152xbf16, #tpu.memory_space<vmem>>, vector<79x128xbf16>
    tpu.vector_store %arg12[%c0_116, %c128_117], %175 {strides = array<i32>} : memref<79x1152xbf16, #tpu.memory_space<vmem>>, vector<79x128xbf16>,
    %c14 = arith.constant 14 : index
    %c0_118 = arith.constant 0 : index
    %177 = vector.load %arg10[%c14, %c0_118] : memref<144x32xf32, #tpu.memory_space<vmem>>, vector<79x32xf32>
    %178 = arith.truncf %177 : vector<79x32xf32> to vector<79x32xbf16>
    %c15_119 = arith.constant 15 : index
    %c0_120 = arith.constant 0 : index
    %179 = vector.load %arg10[%c15_119, %c0_120] : memref<144x32xf32, #tpu.memory_space<vmem>>, vector<79x32xf32>
    %180 = arith.truncf %179 : vector<79x32xf32> to vector<79x32xbf16>
    %c16_121 = arith.constant 16 : index
    %c0_122 = arith.constant 0 : index
    %181 = vector.load %arg10[%c16_121, %c0_122] : memref<144x32xf32, #tpu.memory_space<vmem>>, vector<79x32xf32>
    %182 = arith.truncf %181 : vector<79x32xf32> to vector<79x32xbf16>
    %c17_123 = arith.constant 17 : index
    %c0_124 = arith.constant 0 : index
    %183 = vector.load %arg10[%c17_123, %c0_124] : memref<144x32xf32, #tpu.memory_space<vmem>>, vector<79x32xf32>
    %184 = arith.truncf %183 : vector<79x32xf32> to vector<79x32xbf16>
    %185 = tpu.concatenate %178, %180, %182, %184 in 1 : vector<79x32xbf16>, vector<79x32xbf16>, vector<79x32xbf16>, vector<79x32xbf16> -> vector<79x128xbf16>
    %c0_125 = arith.constant 0 : index
    %c256_126 = arith.constant 256 : index
    %186 = vector.load %arg12[%c0_125, %c256_126] : memref<79x1152xbf16, #tpu.memory_space<vmem>>, vector<79x128xbf16>
    tpu.vector_store %arg12[%c0_125, %c256_126], %185 {strides = array<i32>} : memref<79x1152xbf16, #tpu.memory_space<vmem>>, vector<79x128xbf16>,
    %c24 = arith.constant 24 : index
    %c0_127 = arith.constant 0 : index
    %187 = vector.load %arg10[%c24, %c0_127] : memref<144x32xf32, #tpu.memory_space<vmem>>, vector<79x32xf32>
    %188 = arith.truncf %187 : vector<79x32xf32> to vector<79x32xbf16>
    %c25_128 = arith.constant 25 : index
    %c0_129 = arith.constant 0 : index
    %189 = vector.load %arg10[%c25_128, %c0_129] : memref<144x32xf32, #tpu.memory_space<vmem>>, vector<79x32xf32>
    %190 = arith.truncf %189 : vector<79x32xf32> to vector<79x32xbf16>
    %c26 = arith.constant 26 : index
    %c0_130 = arith.constant 0 : index
    %191 = vector.load %arg10[%c26, %c0_130] : memref<144x32xf32, #tpu.memory_space<vmem>>, vector<79x32xf32>
    %192 = arith.truncf %191 : vector<79x32xf32> to vector<79x32xbf16>
    %c27 = arith.constant 27 : index
    %c0_131 = arith.constant 0 : index
    %193 = vector.load %arg10[%c27, %c0_131] : memref<144x32xf32, #tpu.memory_space<vmem>>, vector<79x32xf32>
    %194 = arith.truncf %193 : vector<79x32xf32> to vector<79x32xbf16>
    %195 = tpu.concatenate %188, %190, %192, %194 in 1 : vector<79x32xbf16>, vector<79x32xbf16>, vector<79x32xbf16>, vector<79x32xbf16> -> vector<79x128xbf16>
    %c0_132 = arith.constant 0 : index
    %c384_133 = arith.constant 384 : index
    %196 = vector.load %arg12[%c0_132, %c384_133] : memref<79x1152xbf16, #tpu.memory_space<vmem>>, vector<79x128xbf16>
    tpu.vector_store %arg12[%c0_132, %c384_133], %195 {strides = array<i32>} : memref<79x1152xbf16, #tpu.memory_space<vmem>>, vector<79x128xbf16>,
    %c28 = arith.constant 28 : index
    %c0_134 = arith.constant 0 : index
    %197 = vector.load %arg10[%c28, %c0_134] : memref<144x32xf32, #tpu.memory_space<vmem>>, vector<79x32xf32>
    %198 = arith.truncf %197 : vector<79x32xf32> to vector<79x32xbf16>
    %c29 = arith.constant 29 : index
    %c0_135 = arith.constant 0 : index
    %199 = vector.load %arg10[%c29, %c0_135] : memref<144x32xf32, #tpu.memory_space<vmem>>, vector<79x32xf32>
    %200 = arith.truncf %199 : vector<79x32xf32> to vector<79x32xbf16>
    %c36 = arith.constant 36 : index
    %c0_136 = arith.constant 0 : index
    %201 = vector.load %arg10[%c36, %c0_136] : memref<144x32xf32, #tpu.memory_space<vmem>>, vector<79x32xf32>
    %202 = arith.truncf %201 : vector<79x32xf32> to vector<79x32xbf16>
    %c37_137 = arith.constant 37 : index
    %c0_138 = arith.constant 0 : index
    %203 = vector.load %arg10[%c37_137, %c0_138] : memref<144x32xf32, #tpu.memory_space<vmem>>, vector<79x32xf32>
    %204 = arith.truncf %203 : vector<79x32xf32> to vector<79x32xbf16>
    %205 = tpu.concatenate %198, %200, %202, %204 in 1 : vector<79x32xbf16>, vector<79x32xbf16>, vector<79x32xbf16>, vector<79x32xbf16> -> vector<79x128xbf16>
    %c0_139 = arith.constant 0 : index
    %c512_140 = arith.constant 512 : index
    %206 = vector.load %arg12[%c0_139, %c512_140] : memref<79x1152xbf16, #tpu.memory_space<vmem>>, vector<79x128xbf16>
    tpu.vector_store %arg12[%c0_139, %c512_140], %205 {strides = array<i32>} : memref<79x1152xbf16, #tpu.memory_space<vmem>>, vector<79x128xbf16>,
    %c38 = arith.constant 38 : index
    %c0_141 = arith.constant 0 : index
    %207 = vector.load %arg10[%c38, %c0_141] : memref<144x32xf32, #tpu.memory_space<vmem>>, vector<79x32xf32>
    %208 = arith.truncf %207 : vector<79x32xf32> to vector<79x32xbf16>
    %c39 = arith.constant 39 : index
    %c0_142 = arith.constant 0 : index
    %209 = vector.load %arg10[%c39, %c0_142] : memref<144x32xf32, #tpu.memory_space<vmem>>, vector<79x32xf32>
    %210 = arith.truncf %209 : vector<79x32xf32> to vector<79x32xbf16>
    %c40 = arith.constant 40 : index
    %c0_143 = arith.constant 0 : index
    %211 = vector.load %arg10[%c40, %c0_143] : memref<144x32xf32, #tpu.memory_space<vmem>>, vector<79x32xf32>
    %212 = arith.truncf %211 : vector<79x32xf32> to vector<79x32xbf16>
    %c41 = arith.constant 41 : index
    %c0_144 = arith.constant 0 : index
    %213 = vector.load %arg10[%c41, %c0_144] : memref<144x32xf32, #tpu.memory_space<vmem>>, vector<79x32xf32>
    %214 = arith.truncf %213 : vector<79x32xf32> to vector<79x32xbf16>
    %215 = tpu.concatenate %208, %210, %212, %214 in 1 : vector<79x32xbf16>, vector<79x32xbf16>, vector<79x32xbf16>, vector<79x32xbf16> -> vector<79x128xbf16>
    %c0_145 = arith.constant 0 : index
    %c640_146 = arith.constant 640 : index
    %216 = vector.load %arg12[%c0_145, %c640_146] : memref<79x1152xbf16, #tpu.memory_space<vmem>>, vector<79x128xbf16>
    tpu.vector_store %arg12[%c0_145, %c640_146], %215 {strides = array<i32>} : memref<79x1152xbf16, #tpu.memory_space<vmem>>, vector<79x128xbf16>,
    %c48_147 = arith.constant 48 : index
    %c0_148 = arith.constant 0 : index
    %217 = vector.load %arg10[%c48_147, %c0_148] : memref<144x32xf32, #tpu.memory_space<vmem>>, vector<79x32xf32>
    %218 = arith.truncf %217 : vector<79x32xf32> to vector<79x32xbf16>
    %c49_149 = arith.constant 49 : index
    %c0_150 = arith.constant 0 : index
    %219 = vector.load %arg10[%c49_149, %c0_150] : memref<144x32xf32, #tpu.memory_space<vmem>>, vector<79x32xf32>
    %220 = arith.truncf %219 : vector<79x32xf32> to vector<79x32xbf16>
    %c50_151 = arith.constant 50 : index
    %c0_152 = arith.constant 0 : index
    %221 = vector.load %arg10[%c50_151, %c0_152] : memref<144x32xf32, #tpu.memory_space<vmem>>, vector<79x32xf32>
    %222 = arith.truncf %221 : vector<79x32xf32> to vector<79x32xbf16>
    %c51 = arith.constant 51 : index
    %c0_153 = arith.constant 0 : index
    %223 = vector.load %arg10[%c51, %c0_153] : memref<144x32xf32, #tpu.memory_space<vmem>>, vector<79x32xf32>
    %224 = arith.truncf %223 : vector<79x32xf32> to vector<79x32xbf16>
    %225 = tpu.concatenate %218, %220, %222, %224 in 1 : vector<79x32xbf16>, vector<79x32xbf16>, vector<79x32xbf16>, vector<79x32xbf16> -> vector<79x128xbf16>
    %c0_154 = arith.constant 0 : index
    %c768_155 = arith.constant 768 : index
    %226 = vector.load %arg12[%c0_154, %c768_155] : memref<79x1152xbf16, #tpu.memory_space<vmem>>, vector<79x128xbf16>
    tpu.vector_store %arg12[%c0_154, %c768_155], %225 {strides = array<i32>} : memref<79x1152xbf16, #tpu.memory_space<vmem>>, vector<79x128xbf16>,
    %c52 = arith.constant 52 : index
    %c0_156 = arith.constant 0 : index
    %227 = vector.load %arg10[%c52, %c0_156] : memref<144x32xf32, #tpu.memory_space<vmem>>, vector<79x32xf32>
    %228 = arith.truncf %227 : vector<79x32xf32> to vector<79x32xbf16>
    %c53 = arith.constant 53 : index
    %c0_157 = arith.constant 0 : index
    %229 = vector.load %arg10[%c53, %c0_157] : memref<144x32xf32, #tpu.memory_space<vmem>>, vector<79x32xf32>
    %230 = arith.truncf %229 : vector<79x32xf32> to vector<79x32xbf16>
    %c60_158 = arith.constant 60 : index
    %c0_159 = arith.constant 0 : index
    %231 = vector.load %arg10[%c60_158, %c0_159] : memref<144x32xf32, #tpu.memory_space<vmem>>, vector<79x32xf32>
    %232 = arith.truncf %231 : vector<79x32xf32> to vector<79x32xbf16>
    %c61_160 = arith.constant 61 : index
    %c0_161 = arith.constant 0 : index
    %233 = vector.load %arg10[%c61_160, %c0_161] : memref<144x32xf32, #tpu.memory_space<vmem>>, vector<79x32xf32>
    %234 = arith.truncf %233 : vector<79x32xf32> to vector<79x32xbf16>
    %235 = tpu.concatenate %228, %230, %232, %234 in 1 : vector<79x32xbf16>, vector<79x32xbf16>, vector<79x32xbf16>, vector<79x32xbf16> -> vector<79x128xbf16>
    %c0_162 = arith.constant 0 : index
    %c896_163 = arith.constant 896 : index
    %236 = vector.load %arg12[%c0_162, %c896_163] : memref<79x1152xbf16, #tpu.memory_space<vmem>>, vector<79x128xbf16>
    tpu.vector_store %arg12[%c0_162, %c896_163], %235 {strides = array<i32>} : memref<79x1152xbf16, #tpu.memory_space<vmem>>, vector<79x128xbf16>,
    %c62_164 = arith.constant 62 : index
    %c0_165 = arith.constant 0 : index
    %237 = vector.load %arg10[%c62_164, %c0_165] : memref<144x32xf32, #tpu.memory_space<vmem>>, vector<79x32xf32>
    %238 = arith.truncf %237 : vector<79x32xf32> to vector<79x32xbf16>
    %c63_166 = arith.constant 63 : index
    %c0_167 = arith.constant 0 : index
    %239 = vector.load %arg10[%c63_166, %c0_167] : memref<144x32xf32, #tpu.memory_space<vmem>>, vector<79x32xf32>
    %240 = arith.truncf %239 : vector<79x32xf32> to vector<79x32xbf16>
    %c64_168 = arith.constant 64 : index
    %c0_169 = arith.constant 0 : index
    %241 = vector.load %arg10[%c64_168, %c0_169] : memref<144x32xf32, #tpu.memory_space<vmem>>, vector<79x32xf32>
    %242 = arith.truncf %241 : vector<79x32xf32> to vector<79x32xbf16>
    %c65_170 = arith.constant 65 : index
    %c0_171 = arith.constant 0 : index
    %243 = vector.load %arg10[%c65_170, %c0_171] : memref<144x32xf32, #tpu.memory_space<vmem>>, vector<79x32xf32>
    %244 = arith.truncf %243 : vector<79x32xf32> to vector<79x32xbf16>
    %245 = tpu.concatenate %238, %240, %242, %244 in 1 : vector<79x32xbf16>, vector<79x32xbf16>, vector<79x32xbf16>, vector<79x32xbf16> -> vector<79x128xbf16>
    %c0_172 = arith.constant 0 : index
    %c1024_173 = arith.constant 1024 : index
    %246 = vector.load %arg12[%c0_172, %c1024_173] : memref<79x1152xbf16, #tpu.memory_space<vmem>>, vector<79x128xbf16>
    tpu.vector_store %arg12[%c0_172, %c1024_173], %245 {strides = array<i32>} : memref<79x1152xbf16, #tpu.memory_space<vmem>>, vector<79x128xbf16>,
    %c0_174 = arith.constant 0 : index
    %c0_175 = arith.constant 0 : index
    %247 = vector.load %arg12[%c0_174, %c0_175] : memref<79x1152xbf16, #tpu.memory_space<vmem>>, vector<79x1152xbf16>
    %c0_176 = arith.constant 0 : index
    %c0_177 = arith.constant 0 : index
    %248 = vector.load %arg6[%c0_176, %c0_177] : memref<1152x10xbf16, #tpu.memory_space<vmem>>, vector<1152x10xbf16>
    %cst_178 = arith.constant dense<0.000000e+00> : vector<79x10xf32>
    %249 = tpu.matmul %247, %248, %cst_178 {dimension_numbers = #tpu.dot_dimension_numbers<[1], [0], [0], [1], [0, 0, 1, 1], [], []>} : vector<79x1152xbf16>, vector<1152x10xbf16>, vector<79x10xf32> -> vector<79x10xf32>
    %c0_179 = arith.constant 0 : index
    %c0_180 = arith.constant 0 : index
    %250 = vector.load %arg7[%c0_179, %c0_180] : memref<1x10xf32, #tpu.memory_space<vmem>>, vector<1x10xf32>
    %251 = vector.broadcast %250 : vector<1x10xf32> to vector<79x10xf32>
    %252 = arith.addf %249, %251 : vector<79x10xf32>
    %cst_181 = arith.constant 0.000000e+00 : f32
    %253 = vector.broadcast %cst_181 : f32 to vector<79x10xf32>
    %254 = arith.maximumf %252, %253 : vector<79x10xf32>
    %255 = tpu.iota {dimensions = array<i32: 0>} : vector<79x10xi32>
    %c12_i32 = arith.constant 12 : i32
    %c0_i32 = arith.constant 0 : i32
    %256 = arith.cmpi eq, %c12_i32, %c0_i32 : i32
    %c1_i32 = arith.constant 1 : i32
    %257 = arith.select %256, %c1_i32, %c12_i32 : i32
    %258 = vector.broadcast %257 : i32 to vector<79x10xi32>
    %259 = arith.remsi %255, %258 : vector<79x10xi32>
    %c0_i32_182 = arith.constant 0 : i32
    %260 = vector.broadcast %c0_i32_182 : i32 to vector<79x10xi32>
    %261 = arith.cmpi ne, %259, %260 : vector<79x10xi32>
    %c0_i32_183 = arith.constant 0 : i32
    %262 = vector.broadcast %c0_i32_183 : i32 to vector<79x10xi32>
    %263 = arith.cmpi slt, %259, %262 : vector<79x10xi32>
    %c0_i32_184 = arith.constant 0 : i32
    %264 = arith.cmpi slt, %257, %c0_i32_184 : i32
    %265 = vector.broadcast %264 : i1 to vector<79x10xi1>
    %266 = vector.broadcast %265 : vector<79x10xi1> to vector<79x10xi1>
    %267 = arith.xori %263, %266 : vector<79x10xi1>
    %268 = arith.andi %267, %261 : vector<79x10xi1>
    %269 = vector.broadcast %257 : i32 to vector<79x10xi32>
    %270 = arith.addi %259, %269 : vector<79x10xi32>
    %271 = arith.select %268, %270, %259 : vector<79x10xi1>, vector<79x10xi32>
    %c7_i32 = arith.constant 7 : i32
    %272 = vector.broadcast %c7_i32 : i32 to vector<79x10xi32>
    %273 = arith.cmpi slt, %271, %272 : vector<79x10xi32>
    %cst_185 = arith.constant 0.000000e+00 : f32
    %274 = vector.broadcast %cst_185 : f32 to vector<79x10xf32>
    %275 = arith.select %273, %254, %274 : vector<79x10xi1>, vector<79x10xf32>
    %cst_186 = arith.constant dense<0.000000e+00> : vector<10xf32>
    %276 = vector.multi_reduction <add>, %275, %cst_186 [0] : vector<79x10xf32> to vector<10xf32>
    %277 = vector.shape_cast %276 : vector<10xf32> to vector<1x10xf32>
    %cst_187 = arith.constant 0.0204081628 : f32
    %278 = vector.broadcast %cst_187 : f32 to vector<1x10xf32>
    %279 = arith.mulf %277, %278 : vector<1x10xf32>
    %c0_188 = arith.constant 0 : index
    %c0_189 = arith.constant 0 : index
    %c0_190 = arith.constant 0 : index
    %280 = vector.load %arg8[%c0_188, %c0_189, %c0_190] : memref<1x1x10xf32, #tpu.memory_space<vmem>>, vector<1x1x10xf32>
    %281 = vector.shape_cast %280 : vector<1x1x10xf32> to vector<1x10xf32>
    %282 = vector.shape_cast %279 : vector<1x10xf32> to vector<1x1x10xf32>
    tpu.vector_store %arg8[%c0_188, %c0_189, %c0_190], %282 {strides = array<i32>} : memref<1x1x10xf32, #tpu.memory_space<vmem>>, vector<1x1x10xf32>,
    return
  }
  func.func @transform_0(%arg0: i32) -> (i32, i32, i32) {
    %c0_i32 = arith.constant 0 : i32
    %c0_i32_0 = arith.constant 0 : i32
    %c0_i32_1 = arith.constant 0 : i32
    return %arg0, %c0_i32, %c0_i32_0 : i32, i32, i32
  }
  func.func @transform_1(%arg0: i32) -> (i32, i32) {
    %c0_i32 = arith.constant 0 : i32
    %c0_i32_0 = arith.constant 0 : i32
    %c0_i32_1 = arith.constant 0 : i32
    return %c0_i32, %c0_i32_0 : i32, i32
  }
  func.func @transform_2(%arg0: i32) -> (i32, i32) {
    %c0_i32 = arith.constant 0 : i32
    %c0_i32_0 = arith.constant 0 : i32
    %c0_i32_1 = arith.constant 0 : i32
    return %c0_i32, %c0_i32_0 : i32, i32
  }
  func.func @transform_3(%arg0: i32) -> (i32, i32) {
    %c0_i32 = arith.constant 0 : i32
    %c0_i32_0 = arith.constant 0 : i32
    %c0_i32_1 = arith.constant 0 : i32
    return %c0_i32, %c0_i32_0 : i32, i32
  }
  func.func @transform_4(%arg0: i32) -> (i32, i32) {
    %c0_i32 = arith.constant 0 : i32
    %c0_i32_0 = arith.constant 0 : i32
    %c0_i32_1 = arith.constant 0 : i32
    return %c0_i32, %c0_i32_0 : i32, i32
  }
  func.func @transform_5(%arg0: i32) -> (i32, i32) {
    %c0_i32 = arith.constant 0 : i32
    %c0_i32_0 = arith.constant 0 : i32
    %c0_i32_1 = arith.constant 0 : i32
    return %c0_i32, %c0_i32_0 : i32, i32
  }
  func.func @transform_6(%arg0: i32) -> (i32, i32) {
    %c0_i32 = arith.constant 0 : i32
    %c0_i32_0 = arith.constant 0 : i32
    %c0_i32_1 = arith.constant 0 : i32
    return %c0_i32, %c0_i32_0 : i32, i32
  }
  func.func @transform_7(%arg0: i32) -> (i32, i32, i32) {
    %c0_i32 = arith.constant 0 : i32
    %c0_i32_0 = arith.constant 0 : i32
    %c0_i32_1 = arith.constant 0 : i32
    return %arg0, %c0_i32, %c0_i32_0 : i32, i32, i32
  }
}

</mosaic_0001>

<llo_original>
// kernel: model_forward.1
$region0: #{model_forward.1}
  #allocation0 [shape = 'u32[]', space=smem, size = 0x4, offset = 0x4, fixed_abs, tag = 'smem constant byte address 0x4 - core index']
  #allocation1 [shape = 'u32[144,128]{1,0:T(1,128)}', space=vmem, size = 0x12000, scoped, tag = 'internal scratch']
  #allocation2 [shape = 'f32[225,32]{1,0:T(8,128)}', space=vmem, size = 0x1d000, scoped, tag = 'scratch operand']
  #allocation3 [shape = 'f32[144,32]{1,0:T(8,128)}', space=vmem, size = 0x12000, scoped, tag = 'scratch operand']
  #allocation4 [shape = 'bf16[145,1152]{1,0:T(8,128)(2,1)}', space=vmem, size = 0x55800, scoped, tag = 'scratch operand']
  #allocation5 [shape = 'bf16[79,1152]{1,0:T(8,128)(2,1)}', space=vmem, size = 0x2d000, scoped, tag = 'scratch operand']
  %s0 = inlined_call_operand.vmem [shape: bf16[2,169,108], index: 0, kind: input, shape index: {}]
  %s1 = inlined_call_operand.vmem [shape: bf16[108,32], index: 1, kind: input, shape index: {}]
  %s2 = inlined_call_operand.vmem [shape: f32[1,32], index: 2, kind: input, shape index: {}]
  %s3 = inlined_call_operand.vmem [shape: bf16[1152,32], index: 3, kind: input, shape index: {}]
  %s4 = inlined_call_operand.vmem [shape: f32[1,32], index: 4, kind: input, shape index: {}]
  %s5 = inlined_call_operand.vmem [shape: bf16[1152,10], index: 5, kind: input, shape index: {}]
  %s6 = inlined_call_operand.vmem [shape: f32[1,10], index: 6, kind: input, shape index: {}]
  %s7 = inlined_call_operand.hbm [shape: f32[2,1,10], index: 7, kind: output, shape index: {}]
  %s8 = sld [smem:[#allocation0]]
  $region61: #{model_forward.1} parent=0
    _
  %s10 = ssub.s32 1, %s8
  %s11 = scalar_select 0, %s10, %s8
  $region1: #{model_forward.1} parent=0
    #allocation6 [shape = 'u8[1024]{0}', space=vmem, size = 0x400, scoped, tag = 'output window, operand 0']
    #allocation7 [shape = 's32[2]{0}', space=sflag, size = 0x8, scoped, tag = 'scoped memory for model_forward.1']
    %12 = vsyncpa [#allocation7], 0
    %s13 = scalar_lea.sflag [#allocation7], 1
    %14 = vsyncpa %s13, 0
    loop: start=0, step=1, limit=4
    $region2: #{model_forward.1} parent=1 // loop_pre_header
      _
    $region3: #{model_forward.1} parent=1 // loop_header
      %s16 = sphi 0, %s20
      %p17 = scmp.ge.s32.totalorder %s16, 4
      %s26 = sphi 0, %s28
      %s29 = sphi 0, %s26
      %s30 = sphi 0, %s29
      %s46 = sphi 0, %s30
      %s50 = sphi 0, %s50
      %s52 = sphi 0, %s50
      %s53 = sphi 0, %s52
      %s67 = sphi 0, %s53
      %s71 = sphi 0, %s71
      %s73 = sphi 0, %s71
      %s74 = sphi 0, %s73
      %s88 = sphi 0, %s74
      %s92 = sphi 0, %s92
      %s94 = sphi 0, %s92
      %s95 = sphi 0, %s94
      %s109 = sphi 0, %s95
      %s113 = sphi 0, %s113
      %s115 = sphi 0, %s113
      %s116 = sphi 0, %s115
      %s130 = sphi 0, %s116
      %s134 = sphi 0, %s134
      %s136 = sphi 0, %s134
      %s137 = sphi 0, %s136
      %s151 = sphi 0, %s137
      %s155 = sphi 0, %s155
      %s157 = sphi 0, %s155
      %s158 = sphi 0, %s157
      %s172 = sphi 0, %s158
      %s178 = sphi 0, %s180
      %s181 = sphi 0, %s178
      %s182 = sphi 0, %s181
      %s198 = sphi 0, %s182
    $region4: #{model_forward.1} parent=1 // loop_header_branch
      %19 = sbr.rel (%p17) target = $region8
    $region5: #{model_forward.1} parent=1 // loop_body
      %s21 = ssub.s32 %s16, 1
      %s22 = ssub.s32 %s16, 2
      %s23 = sadd.s32 %s16, 1
      %s24 = ssub.s32 %s16, %s23
      %p25 = scmp.eq.s32.totalorder %s24, 0
      %s27 = sadd.s32 %s26, 1
      %s28 = scalar_select %p25, %s26, %s27
      %p31 = pneg %p25
      %p32 = scmp.eq.s32.totalorder %s16, 1
      %p33 = por %p31, %p32
      %p34 = scmp.ne.s32.totalorder %s26, %s29
      %p35 = scmp.eq.s32.totalorder %s16, 0
      %p36 = por %p34, %p35
      %p37 = scmp.ne.s32.totalorder %s26, %s29
      %p38 = scmp.eq.s32.totalorder %s21, 1
      %p39 = por %p37, %p38
      %p40 = scmp.ne.s32.totalorder %s29, %s30
      %p41 = scmp.eq.s32.totalorder %s21, 0
      %p42 = por %p40, %p41
      %p43 = scmp.ne.s32.totalorder %s29, %s30
      %p44 = scmp.eq.s32.totalorder %s22, 1
      %p45 = por %p43, %p44
      %p47 = scmp.ne.s32.totalorder %s30, %s46
      %p48 = scmp.eq.s32.totalorder %s22, 0
      %p49 = por %p47, %p48
      %s51 = sadd.s32 %s50, 1
      %p54 = scmp.eq.s32.totalorder %s16, 1
      %p55 = scmp.ne.s32.totalorder %s50, %s52
      %p56 = scmp.eq.s32.totalorder %s16, 0
      %p57 = por %p55, %p56
      %p58 = scmp.ne.s32.totalorder %s50, %s52
      %p59 = scmp.eq.s32.totalorder %s21, 1
      %p60 = por %p58, %p59
      %p61 = scmp.ne.s32.totalorder %s52, %s53
      %p62 = scmp.eq.s32.totalorder %s21, 0
      %p63 = por %p61, %p62
      %p64 = scmp.ne.s32.totalorder %s52, %s53
      %p65 = scmp.eq.s32.totalorder %s22, 1
      %p66 = por %p64, %p65
      %p68 = scmp.ne.s32.totalorder %s53, %s67
      %p69 = scmp.eq.s32.totalorder %s22, 0
      %p70 = por %p68, %p69
      %s72 = sadd.s32 %s71, 1
      %p75 = scmp.eq.s32.totalorder %s16, 1
      %p76 = scmp.ne.s32.totalorder %s71, %s73
      %p77 = scmp.eq.s32.totalorder %s16, 0
      %p78 = por %p76, %p77
      %p79 = scmp.ne.s32.totalorder %s71, %s73
      %p80 = scmp.eq.s32.totalorder %s21, 1
      %p81 = por %p79, %p80
      %p82 = scmp.ne.s32.totalorder %s73, %s74
      %p83 = scmp.eq.s32.totalorder %s21, 0
      %p84 = por %p82, %p83
      %p85 = scmp.ne.s32.totalorder %s73, %s74
      %p86 = scmp.eq.s32.totalorder %s22, 1
      %p87 = por %p85, %p86
      %p89 = scmp.ne.s32.totalorder %s74, %s88
      %p90 = scmp.eq.s32.totalorder %s22, 0
      %p91 = por %p89, %p90
      %s93 = sadd.s32 %s92, 1
      %p96 = scmp.eq.s32.totalorder %s16, 1
      %p97 = scmp.ne.s32.totalorder %s92, %s94
      %p98 = scmp.eq.s32.totalorder %s16, 0
      %p99 = por %p97, %p98
      %p100 = scmp.ne.s32.totalorder %s92, %s94
      %p101 = scmp.eq.s32.totalorder %s21, 1
      %p102 = por %p100, %p101
      %p103 = scmp.ne.s32.totalorder %s94, %s95
      %p104 = scmp.eq.s32.totalorder %s21, 0
      %p105 = por %p103, %p104
      %p106 = scmp.ne.s32.totalorder %s94, %s95
      %p107 = scmp.eq.s32.totalorder %s22, 1
      %p108 = por %p106, %p107
      %p110 = scmp.ne.s32.totalorder %s95, %s109
      %p111 = scmp.eq.s32.totalorder %s22, 0
      %p112 = por %p110, %p111
      %s114 = sadd.s32 %s113, 1
      %p117 = scmp.eq.s32.totalorder %s16, 1
      %p118 = scmp.ne.s32.totalorder %s113, %s115
      %p119 = scmp.eq.s32.totalorder %s16, 0
      %p120 = por %p118, %p119
      %p121 = scmp.ne.s32.totalorder %s113, %s115
      %p122 = scmp.eq.s32.totalorder %s21, 1
      %p123 = por %p121, %p122
      %p124 = scmp.ne.s32.totalorder %s115, %s116
      %p125 = scmp.eq.s32.totalorder %s21, 0
      %p126 = por %p124, %p125
      %p127 = scmp.ne.s32.totalorder %s115, %s116
      %p128 = scmp.eq.s32.totalorder %s22, 1
      %p129 = por %p127, %p128
      %p131 = scmp.ne.s32.totalorder %s116, %s130
      %p132 = scmp.eq.s32.totalorder %s22, 0
      %p133 = por %p131, %p132
      %s135 = sadd.s32 %s134, 1
      %p138 = scmp.eq.s32.totalorder %s16, 1
      %p139 = scmp.ne.s32.totalorder %s134, %s136
      %p140 = scmp.eq.s32.totalorder %s16, 0
      %p141 = por %p139, %p140
      %p142 = scmp.ne.s32.totalorder %s134, %s136
      %p143 = scmp.eq.s32.totalorder %s21, 1
      %p144 = por %p142, %p143
      %p145 = scmp.ne.s32.totalorder %s136, %s137
      %p146 = scmp.eq.s32.totalorder %s21, 0
      %p147 = por %p145, %p146
      %p148 = scmp.ne.s32.totalorder %s136, %s137
      %p149 = scmp.eq.s32.totalorder %s22, 1
      %p150 = por %p148, %p149
      %p152 = scmp.ne.s32.totalorder %s137, %s151
      %p153 = scmp.eq.s32.totalorder %s22, 0
      %p154 = por %p152, %p153
      %s156 = sadd.s32 %s155, 1
      %p159 = scmp.eq.s32.totalorder %s16, 1
      %p160 = scmp.ne.s32.totalorder %s155, %s157
      %p161 = scmp.eq.s32.totalorder %s16, 0
      %p162 = por %p160, %p161
      %p163 = scmp.ne.s32.totalorder %s155, %s157
      %p164 = scmp.eq.s32.totalorder %s21, 1
      %p165 = por %p163, %p164
      %p166 = scmp.ne.s32.totalorder %s157, %s158
      %p167 = scmp.eq.s32.totalorder %s21, 0
      %p168 = por %p166, %p167
      %p169 = scmp.ne.s32.totalorder %s157, %s158
      %p170 = scmp.eq.s32.totalorder %s22, 1
      %p171 = por %p169, %p170
      %p173 = scmp.ne.s32.totalorder %s158, %s172
      %p174 = scmp.eq.s32.totalorder %s22, 0
      %p175 = por %p173, %p174
      %s176 = ssub.s32 %s16, %s23
      %p177 = scmp.eq.s32.totalorder %s176, 0
      %s179 = sadd.s32 %s178, 1
      %s180 = scalar_select %p177, %s178, %s179
      %p183 = pneg %p177
      %p184 = scmp.eq.s32.totalorder %s16, 1
      %p185 = por %p183, %p184
      %p186 = scmp.ne.s32.totalorder %s178, %s181
      %p187 = scmp.eq.s32.totalorder %s16, 0
      %p188 = por %p186, %p187
      %p189 = scmp.ne.s32.totalorder %s178, %s181
      %p190 = scmp.eq.s32.totalorder %s21, 1
      %p191 = por %p189, %p190
      %p192 = scmp.ne.s32.totalorder %s181, %s182
      %p193 = scmp.eq.s32.totalorder %s21, 0
      %p194 = por %p192, %p193
      %p195 = scmp.ne.s32.totalorder %s181, %s182
      %p196 = scmp.eq.s32.totalorder %s22, 1
      %p197 = por %p195, %p196
      %p199 = scmp.ne.s32.totalorder %s182, %s198
      %p200 = scmp.eq.s32.totalorder %s22, 0
      %p201 = por %p199, %p200
      %p202 = scmp.le.s32.totalorder 1, %s16
      %p203 = scmp.lt.s32.totalorder %s16, 3
      %p204 = pnand %p202, %p203
      %p205 = pneg %p204
      // Predicated region
      $region9: #{model_forward.1} parent=5 // pred_check
        _
      $region10: #{model_forward.1} parent=5 // pred_check_branch
        %207 = sbr.rel (%p204) target = $region12
      $region11: #{model_forward.1} parent=5 // pred_region
        %s208 = ssub.s32 %s16, 1
        // Predicated region
        $region13: #{model_forward.1} parent=11 // pred_check
          %p209 = pneg %p63
        $region14: #{model_forward.1} parent=11 // pred_check_branch
          %211 = sbr.rel (%p209) target = $region16
        $region15: #{model_forward.1} parent=11 // pred_region
          _
        $region16: #{model_forward.1} parent=11 // pred_fallthru
          _
        // Predicated region
        $region17: #{model_forward.1} parent=11 // pred_check
          %p212 = pneg %p84
        $region18: #{model_forward.1} parent=11 // pred_check_branch
          %214 = sbr.rel (%p212) target = $region20
        $region19: #{model_forward.1} parent=11 // pred_region
          _
        $region20: #{model_forward.1} parent=11 // pred_fallthru
          _
        // Predicated region
        $region21: #{model_forward.1} parent=11 // pred_check
          %p215 = pneg %p105
        $region22: #{model_forward.1} parent=11 // pred_check_branch
          %217 = sbr.rel (%p215) target = $region24
        $region23: #{model_forward.1} parent=11 // pred_region
          _
        $region24: #{model_forward.1} parent=11 // pred_fallthru
          _
        // Predicated region
        $region25: #{model_forward.1} parent=11 // pred_check
          %p218 = pneg %p126
        $region26: #{model_forward.1} parent=11 // pred_check_branch
          %220 = sbr.rel (%p218) target = $region28
        $region27: #{model_forward.1} parent=11 // pred_region
          _
        $region28: #{model_forward.1} parent=11 // pred_fallthru
          _
        // Predicated region
        $region29: #{model_forward.1} parent=11 // pred_check
          %p221 = pneg %p147
        $region30: #{model_forward.1} parent=11 // pred_check_branch
          %223 = sbr.rel (%p221) target = $region32
        $region31: #{model_forward.1} parent=11 // pred_region
          _
        $region32: #{model_forward.1} parent=11 // pred_fallthru
          _
        // Predicated region
        $region33: #{model_forward.1} parent=11 // pred_check
          %p224 = pneg %p168
        $region34: #{model_forward.1} parent=11 // pred_check_branch
          %226 = sbr.rel (%p224) target = $region36
        $region35: #{model_forward.1} parent=11 // pred_region
          _
        $region36: #{model_forward.1} parent=11 // pred_fallthru
          _
      $region12: #{model_forward.1} parent=5 // pred_fallthru
        _
      %p227 = scmp.lt.s32.totalorder %s16, 2
      // Predicated region
      $region37: #{model_forward.1} parent=5 // pred_check
        %p228 = pneg %p227
      $region38: #{model_forward.1} parent=5 // pred_check_branch
        %230 = sbr.rel (%p228) target = $region40
      $region39: #{model_forward.1} parent=5 // pred_region
        // Predicated region
        $region41: #{model_forward.1} parent=39 // pred_check
          %p231 = pneg %p36
        $region42: #{model_forward.1} parent=39 // pred_check_branch
          %233 = sbr.rel (%p231) target = $region44
        $region43: #{model_forward.1} parent=39 // pred_region
          %p234 = scmp.lt.s32.totalorder %s16, 1
          %s235 = scalar_select %p234, %s16, 1
          %s236 = smul.addr %s235, 22
          %s237 = smul.addr %s236, 4
          %s238 = scalar_lea.vmem %s0, %s237
        $region44: #{model_forward.1} parent=39 // pred_fallthru
          _
      $region40: #{model_forward.1} parent=5 // pred_fallthru
        _
      %p239 = scmp.le.s32.totalorder 1, %s16
      %p240 = scmp.lt.s32.totalorder %s16, 3
      %p241 = pnand %p239, %p240
      %p242 = pneg %p241
      // Predicated region
      $region45: #{model_forward.1} parent=5 // pred_check
        _
      $region46: #{model_forward.1} parent=5 // pred_check_branch
        %244 = sbr.rel (%p241) target = $region48
      $region47: #{model_forward.1} parent=5 // pred_region
        %s245 = ssub.s32 %s16, 1
        %p246 = scmp.lt.s32.totalorder %s21, 1
        %s247 = scalar_select %p246, %s21, 1
        %s248 = smul.addr %s247, 22
        %s249 = smul.addr %s248, 4
        %s250 = scalar_lea.vmem %s0, %s249
        %p251 = pneg %p42
        %p252 = pneg %p39
        %p253 = pneg %p63
        %p254 = pneg %p60
        %p255 = pneg %p84
        %p256 = pneg %p81
        %p257 = pneg %p105
        %p258 = pneg %p102
        %p259 = pneg %p126
        %p260 = pneg %p123
        %p261 = pneg %p147
        %p262 = pneg %p144
        %p263 = pneg %p168
        %p264 = pneg %p165
        %p265 = pneg %p194
        %p266 = pneg %p191
        %s267 = sand.u32 %s181, 1
        %s268 = scalar_lea.sflag [#allocation7], %s267
        %s269 = sand.u32 %s181, 1
        %s270 = scalar_lea.vmem [#allocation6], %s269
        %p271 = scmp.lt.s32.totalorder %s21, 1
        %s272 = scalar_select %p271, %s21, 1
        %s273 = smul.addr %s272, 22
        %s274 = smul.addr %s273, 4
        %s275 = scalar_lea.vmem %s0, %s274
        %vm277 = vcmask 261120
        %278 = vst.msk [vmem:[#allocation2] sm:$0xff] %vm277, 0.0
        %279 = vst.msk [vmem:[#allocation2 + $0x8] sm:$0xff] %vm277, 0.0
        %280 = vst.msk [vmem:[#allocation2 + $0x10] sm:$0xff] %vm277, 0.0
        %281 = vst.msk [vmem:[#allocation2 + $0x18] sm:$0xff] %vm277, 0.0
        %282 = vst.msk [vmem:[#allocation2 + $0x20] sm:$0xff] %vm277, 0.0
        %283 = vst.msk [vmem:[#allocation2 + $0x28] sm:$0xff] %vm277, 0.0
        %284 = vst.msk [vmem:[#allocation2 + $0x30] sm:$0xff] %vm277, 0.0
        %285 = vst.msk [vmem:[#allocation2 + $0x38] sm:$0xff] %vm277, 0.0
        %286 = vst.msk [vmem:[#allocation2 + $0x40] sm:$0xff] %vm277, 0.0
        %287 = vst.msk [vmem:[#allocation2 + $0x48] sm:$0xff] %vm277, 0.0
        %288 = vst.msk [vmem:[#allocation2 + $0x50] sm:$0xff] %vm277, 0.0
        %289 = vst.msk [vmem:[#allocation2 + $0x58] sm:$0xff] %vm277, 0.0
        %290 = vst.msk [vmem:[#allocation2 + $0x60] sm:$0xff] %vm277, 0.0
        %291 = vst.msk [vmem:[#allocation2 + $0x68] sm:$0xff] %vm277, 0.0
        %292 = vst.msk [vmem:[#allocation2 + $0x70] sm:$0xff] %vm277, 0.0
        %293 = vst.msk [vmem:[#allocation2 + $0x78] sm:$0xff] %vm277, 0.0
        %294 = vst.msk [vmem:[#allocation2 + $0x80] sm:$0xff] %vm277, 0.0
        %295 = vst.msk [vmem:[#allocation2 + $0x88] sm:$0xff] %vm277, 0.0
        %296 = vst.msk [vmem:[#allocation2 + $0x90] sm:$0xff] %vm277, 0.0
        %297 = vst.msk [vmem:[#allocation2 + $0x98] sm:$0xff] %vm277, 0.0
        %298 = vst.msk [vmem:[#allocation2 + $0xa0] sm:$0xff] %vm277, 0.0
        %299 = vst.msk [vmem:[#allocation2 + $0xa8] sm:$0xff] %vm277, 0.0
        %300 = vst.msk [vmem:[#allocation2 + $0xb0] sm:$0xff] %vm277, 0.0
        %301 = vst.msk [vmem:[#allocation2 + $0xb8] sm:$0xff] %vm277, 0.0
        %302 = vst.msk [vmem:[#allocation2 + $0xc0] sm:$0xff] %vm277, 0.0
        %303 = vst.msk [vmem:[#allocation2 + $0xc8] sm:$0xff] %vm277, 0.0
        %304 = vst.msk [vmem:[#allocation2 + $0xd0] sm:$0xff] %vm277, 0.0
        %305 = vst.msk [vmem:[#allocation2 + $0xd8] sm:$0xff] %vm277, 0.0
        %vm306 = vcmask 253952
        %307 = vst.msk [vmem:[#allocation2 + $0xe0] sm:$0x1] %vm306, 0.0
        %308 = vst.msk [vmem:[#allocation3] sm:$0xff] %vm277, 0.0
        %309 = vst.msk [vmem:[#allocation3 + $0x8] sm:$0xff] %vm277, 0.0
        %310 = vst.msk [vmem:[#allocation3 + $0x10] sm:$0xff] %vm277, 0.0
        %311 = vst.msk [vmem:[#allocation3 + $0x18] sm:$0xff] %vm277, 0.0
        %312 = vst.msk [vmem:[#allocation3 + $0x20] sm:$0xff] %vm277, 0.0
        %313 = vst.msk [vmem:[#allocation3 + $0x28] sm:$0xff] %vm277, 0.0
        %314 = vst.msk [vmem:[#allocation3 + $0x30] sm:$0xff] %vm277, 0.0
        %315 = vst.msk [vmem:[#allocation3 + $0x38] sm:$0xff] %vm277, 0.0
        %316 = vst.msk [vmem:[#allocation3 + $0x40] sm:$0xff] %vm277, 0.0
        %317 = vst.msk [vmem:[#allocation3 + $0x48] sm:$0xff] %vm277, 0.0
        %318 = vst.msk [vmem:[#allocation3 + $0x50] sm:$0xff] %vm277, 0.0
        %319 = vst.msk [vmem:[#allocation3 + $0x58] sm:$0xff] %vm277, 0.0
        %320 = vst.msk [vmem:[#allocation3 + $0x60] sm:$0xff] %vm277, 0.0
        %321 = vst.msk [vmem:[#allocation3 + $0x68] sm:$0xff] %vm277, 0.0
        %322 = vst.msk [vmem:[#allocation3 + $0x70] sm:$0xff] %vm277, 0.0
        %323 = vst.msk [vmem:[#allocation3 + $0x78] sm:$0xff] %vm277, 0.0
        %324 = vst.msk [vmem:[#allocation3 + $0x80] sm:$0xff] %vm277, 0.0
        %325 = vst.msk [vmem:[#allocation3 + $0x88] sm:$0xff] %vm277, 0.0
        %v326 = vld [vmem:[%s275] sm:$0xf]
        %v327 = vld [vmem:[%s275 + $0x4] sm:$0xf]
        %v328 = vld [vmem:[%s275 + $0x8] sm:$0xf]
        %v329 = vld [vmem:[%s275 + $0xc] sm:$0xf]
        %v330 = vld [vmem:[%s275 + $0x10] sm:$0xf]
        %v331 = vld [vmem:[%s275 + $0x14] sm:$0xf]
        %v332 = vld [vmem:[%s275 + $0x18] sm:$0xf]
        %v333 = vld [vmem:[%s275 + $0x1c] sm:$0xf]
        %v334 = vld [vmem:[%s275 + $0x20] sm:$0xf]
        %v335 = vld [vmem:[%s275 + $0x24] sm:$0xf]
        %v336 = vld [vmem:[%s275 + $0x28] sm:$0xf]
        %v337 = vld [vmem:[%s275 + $0x2c] sm:$0xf]
        %v338 = vld [vmem:[%s275 + $0x30] sm:$0xf]
        %v339 = vld [vmem:[%s275 + $0x34] sm:$0xf]
        %v340 = vld [vmem:[%s275 + $0x38] sm:$0xf]
        %v341 = vld [vmem:[%s275 + $0x3c] sm:$0xf]
        %v342 = vld [vmem:[%s275 + $0x40] sm:$0xf]
        %v343 = vld [vmem:[%s275 + $0x44] sm:$0xf]
        %v344 = vld [vmem:[%s275 + $0x48] sm:$0xf]
        %v345 = vld [vmem:[%s275 + $0x4c] sm:$0xf]
        %v346 = vld [vmem:[%s275 + $0x50] sm:$0xf]
        %v347 = vld [vmem:[%s275 + $0x54] sm:$0x1]
        %v348 = vld [vmem:[%s1] sm:$0xf]
        %v349 = vld [vmem:[%s1 + $0x4] sm:$0xf]
        %v350 = vld [vmem:[%s1 + $0x8] sm:$0xf]
        %v351 = vld [vmem:[%s1 + $0xc] sm:$0xf]
        %v352 = vld [vmem:[%s1 + $0x10] sm:$0xf]
        %v353 = vld [vmem:[%s1 + $0x14] sm:$0xf]
        %v354 = vld [vmem:[%s1 + $0x18] sm:$0xf]
        %v355 = vld [vmem:[%s1 + $0x1c] sm:$0xf]
        %v356 = vld [vmem:[%s1 + $0x20] sm:$0xf]
        %v357 = vld [vmem:[%s1 + $0x24] sm:$0xf]
        %v358 = vld [vmem:[%s1 + $0x28] sm:$0xf]
        %v359 = vld [vmem:[%s1 + $0x2c] sm:$0xf]
        %v360 = vld [vmem:[%s1 + $0x30] sm:$0xf]
        %v361 = vld [vmem:[%s1 + $0x34] sm:$0x3]
        %v362 = vld [vmem:[%s2] sm:$0x1]
        %v364 = vlaneseq
        %v365 = vshrl.u32 %v364, 7
        %v366 = vsub.s32 0, %v365
        %v367 = vrot.slane %v362, %v366
        %v391 = vunpack.c.l.b16 %v326
        %v392 = vunpack.c.l.b16 %v327
        %v393 = vunpack.c.l.b16 %v328
        %v394 = vunpack.c.l.b16 %v329
        %v395 = vunpack.c.l.b16 %v330
        %v396 = vunpack.c.l.b16 %v331
        %v397 = vunpack.c.l.b16 %v332
        %v398 = vunpack.c.l.b16 %v333
        %v399 = vunpack.c.l.b16 %v334
        %v400 = vunpack.c.l.b16 %v335
        %v401 = vunpack.c.l.b16 %v336
        %v402 = vunpack.c.l.b16 %v337
        %v403 = vunpack.c.l.b16 %v338
        %v404 = vunpack.c.l.b16 %v339
        %v405 = vunpack.c.l.b16 %v340
        %v406 = vunpack.c.l.b16 %v341
        %v407 = vunpack.c.l.b16 %v342
        %v408 = vunpack.c.l.b16 %v343
        %v409 = vunpack.c.l.b16 %v344
        %v410 = vunpack.c.l.b16 %v345
        %v411 = vunpack.c.l.b16 %v346
        %v412 = vunpack.c.l.b16 %v347
        %v413 = vpack.c.b16 %v392, %v391
        %v414 = vpack.c.b16 %v394, %v393
        %v415 = vpack.c.b16 %v396, %v395
        %v416 = vpack.c.b16 %v398, %v397
        %v417 = vpack.c.b16 %v400, %v399
        %v418 = vpack.c.b16 %v402, %v401
        %v419 = vpack.c.b16 %v404, %v403
        %v420 = vpack.c.b16 %v406, %v405
        %v421 = vpack.c.b16 %v408, %v407
        %v422 = vpack.c.b16 %v410, %v409
        %v423 = vpack.c.b16 %v412, %v411
        %v438 = vunpack.c.l.b16 %v348
        %v439 = vunpack.c.l.b16 %v349
        %v440 = vunpack.c.l.b16 %v350
        %v441 = vunpack.c.l.b16 %v351
        %v442 = vunpack.c.l.b16 %v352
        %v443 = vunpack.c.l.b16 %v353
        %v444 = vunpack.c.l.b16 %v354
        %v445 = vunpack.c.l.b16 %v355
        %v446 = vunpack.c.l.b16 %v356
        %v447 = vunpack.c.l.b16 %v357
        %v448 = vunpack.c.l.b16 %v358
        %v449 = vunpack.c.l.b16 %v359
        %v450 = vunpack.c.l.b16 %v360
        %v451 = vunpack.c.l.b16 %v361
        %v452 = vpack.c.b16 %v439, %v438
        %v453 = vpack.c.b16 %v441, %v440
        %v454 = vpack.c.b16 %v443, %v442
        %v455 = vpack.c.b16 %v445, %v444
        %v456 = vpack.c.b16 %v447, %v446
        %v457 = vpack.c.b16 %v449, %v448
        %v458 = vpack.c.b16 %v451, %v450
        %vm465 = vcmask 883712
        %v467 = vsel %vm465, %v413, 0
        %v470 = vsel %vm465, %v414, 0
        %v473 = vsel %vm465, %v415, 0
        %v476 = vsel %vm465, %v416, 0
        %v479 = vsel %vm465, %v417, 0
        %v482 = vsel %vm465, %v418, 0
        %v485 = vsel %vm465, %v419, 0
        %v488 = vsel %vm465, %v420, 0
        %v491 = vsel %vm465, %v421, 0
        %v494 = vsel %vm465, %v422, 0
        %v497 = vsel %vm465, %v423, 0
        %vm499 = vcmask 1045504
        %v501 = vsel %vm499, %v458, 0
        %503 = vmatprep.subr.bf16.mxu0 0
        %504 = vmatpush1.bf16.msra.mxu0 0
        %505 = vmatprep.subr.bf16.mxu0 0
        %506 = vmatpush1.bf16.msra.mxu0 %v501
        %507 = vmatprep.subr.bf16.mxu0 0
        %508 = vmatpush1.bf16.msra.mxu0 %v457
        %509 = vmatprep.subr.bf16.mxu0 0
        %510 = vmatpush1.bf16.msra.mxu0 %v456
        %511 = vmatprep.subr.bf16.mxu0 0
        %512 = vmatpush1.bf16.msra.mxu0 %v455
        %513 = vmatprep.subr.bf16.mxu0 0
        %514 = vmatpush1.bf16.msra.mxu0 %v454
        %515 = vmatprep.subr.bf16.mxu0 0
        %516 = vmatpush1.bf16.msra.mxu0 %v453
        %517 = vmatprep.subr.bf16.mxu0 0
        %518 = vmatpush1.bf16.msra.mxu0 %v452
        %519 = vmatprep.subr.bf16.mxu0 0
        %520 = vmatpush2.bf16.msra.mxu0 0
        %521 = vmatprep.subr.bf16.mxu0 0
        %522 = vmatpush2.bf16.msra.mxu0 0
        %523 = vmatprep.subr.bf16.mxu0 0
        %524 = vmatpush2.bf16.msra.mxu0 0
        %525 = vmatprep.subr.bf16.mxu0 0
        %526 = vmatpush2.bf16.msra.mxu0 0
        %527 = vmatprep.subr.bf16.mxu0 0
        %528 = vmatpush2.bf16.msra.mxu0 0
        %529 = vmatprep.subr.bf16.mxu0 0
        %530 = vmatpush2.bf16.msra.mxu0 0
        %531 = vmatprep.subr.bf16.mxu0 0
        %532 = vmatpush2.bf16.msra.mxu0 0
        %533 = vmatprep.subr.bf16.mxu0 0
        %534 = vmatpush2.bf16.msra.mxu0 0
        %535 = vmatprep.mubr.bf16.mxu0 0
        %536 = vmatmul.mubr.bf16.gmra.mxu0 %v467
        %v537 = vpop.f32.mrf.mxu0
        %v538 = vadd.f32 %v367, %v537
        %v539 = vpop.f32.mrf.mxu0
        %v540 = vpop.f32.mrf.mxu0
        %v541 = vadd.f32 %v367, %v540
        %v542 = vpop.f32.mrf.mxu0
        %543 = vmatprep.mubr.bf16.mxu0 0
        %544 = vmatmul.mubr.bf16.gmra.mxu0 %v470
        %v545 = vpop.f32.mrf.mxu0
        %v546 = vadd.f32 %v367, %v545
        %v547 = vpop.f32.mrf.mxu0
        %v548 = vpop.f32.mrf.mxu0
        %v549 = vadd.f32 %v367, %v548
        %v550 = vpop.f32.mrf.mxu0
        %551 = vmatprep.mubr.bf16.mxu0 0
        %552 = vmatmul.mubr.bf16.gmra.mxu0 %v473
        %v553 = vpop.f32.mrf.mxu0
        %v554 = vadd.f32 %v367, %v553
        %v555 = vpop.f32.mrf.mxu0
        %v556 = vpop.f32.mrf.mxu0
        %v557 = vadd.f32 %v367, %v556
        %v558 = vpop.f32.mrf.mxu0
        %559 = vmatprep.mubr.bf16.mxu0 0
        %560 = vmatmul.mubr.bf16.gmra.mxu0 %v476
        %v561 = vpop.f32.mrf.mxu0
        %v562 = vadd.f32 %v367, %v561
        %v563 = vpop.f32.mrf.mxu0
        %v564 = vpop.f32.mrf.mxu0
        %v565 = vadd.f32 %v367, %v564
        %v566 = vpop.f32.mrf.mxu0
        %567 = vmatprep.mubr.bf16.mxu0 0
        %568 = vmatmul.mubr.bf16.gmra.mxu0 %v479
        %v569 = vpop.f32.mrf.mxu0
        %v570 = vadd.f32 %v367, %v569
        %v571 = vpop.f32.mrf.mxu0
        %v572 = vpop.f32.mrf.mxu0
        %v573 = vadd.f32 %v367, %v572
        %v574 = vpop.f32.mrf.mxu0
        %575 = vmatprep.mubr.bf16.mxu0 0
        %576 = vmatmul.mubr.bf16.gmra.mxu0 %v482
        %v577 = vpop.f32.mrf.mxu0
        %v578 = vadd.f32 %v367, %v577
        %v579 = vpop.f32.mrf.mxu0
        %v580 = vpop.f32.mrf.mxu0
        %v581 = vadd.f32 %v367, %v580
        %v582 = vpop.f32.mrf.mxu0
        %583 = vmatprep.mubr.bf16.mxu0 0
        %584 = vmatmul.mubr.bf16.gmra.mxu0 %v485
        %v585 = vpop.f32.mrf.mxu0
        %v586 = vadd.f32 %v367, %v585
        %v587 = vpop.f32.mrf.mxu0
        %v588 = vpop.f32.mrf.mxu0
        %v589 = vadd.f32 %v367, %v588
        %v590 = vpop.f32.mrf.mxu0
        %591 = vmatprep.mubr.bf16.mxu0 0
        %592 = vmatmul.mubr.bf16.gmra.mxu0 %v488
        %v593 = vpop.f32.mrf.mxu0
        %v594 = vadd.f32 %v367, %v593
        %v595 = vpop.f32.mrf.mxu0
        %v596 = vpop.f32.mrf.mxu0
        %v597 = vadd.f32 %v367, %v596
        %v598 = vpop.f32.mrf.mxu0
        %599 = vmatprep.mubr.bf16.mxu0 0
        %600 = vmatmul.mubr.bf16.gmra.mxu0 %v491
        %v601 = vpop.f32.mrf.mxu0
        %v602 = vadd.f32 %v367, %v601
        %v603 = vpop.f32.mrf.mxu0
        %v604 = vpop.f32.mrf.mxu0
        %v605 = vadd.f32 %v367, %v604
        %v606 = vpop.f32.mrf.mxu0
        %607 = vmatprep.mubr.bf16.mxu0 0
        %608 = vmatmul.mubr.bf16.gmra.mxu0 %v494
        %v609 = vpop.f32.mrf.mxu0
        %v610 = vadd.f32 %v367, %v609
        %v611 = vpop.f32.mrf.mxu0
        %v612 = vpop.f32.mrf.mxu0
        %v613 = vadd.f32 %v367, %v612
        %v614 = vpop.f32.mrf.mxu0
        %615 = vmatprep.mubr.bf16.mxu0 0
        %616 = vmatmul.mubr.bf16.gmra.mxu0 %v497
        %v617 = vpop.f32.mrf.mxu0
        %v618 = vadd.f32 %v367, %v617
        %v619 = vpop.f32.mrf.mxu0
        %v620 = vpop.f32.mrf.mxu0
        %v621 = vadd.f32 %v367, %v620
        %v622 = vpop.f32.mrf.mxu0
        %623 = vdwg.mxu0
        %v624 = vmax.f32 %v538, 0.0
        %v625 = vmax.f32 %v541, 0.0
        %v626 = vmax.f32 %v546, 0.0
        %v627 = vmax.f32 %v549, 0.0
        %v628 = vmax.f32 %v554, 0.0
        %v629 = vmax.f32 %v557, 0.0
        %v630 = vmax.f32 %v562, 0.0
        %v631 = vmax.f32 %v565, 0.0
        %v632 = vmax.f32 %v570, 0.0
        %v633 = vmax.f32 %v573, 0.0
        %v634 = vmax.f32 %v578, 0.0
        %v635 = vmax.f32 %v581, 0.0
        %v636 = vmax.f32 %v586, 0.0
        %v637 = vmax.f32 %v589, 0.0
        %v638 = vmax.f32 %v594, 0.0
        %v639 = vmax.f32 %v597, 0.0
        %v640 = vmax.f32 %v602, 0.0
        %v641 = vmax.f32 %v605, 0.0
        %v642 = vmax.f32 %v610, 0.0
        %v643 = vmax.f32 %v613, 0.0
        %v644 = vmax.f32 %v618, 0.0
        %v645 = vmax.f32 %v621, 0.0
        %646 = vst.msk [vmem:[#allocation2 + $0x10] sm:$0xff] %vm277, %v624
        %vm647 = vcmask 258048
        %648 = vst.msk [vmem:[#allocation2 + $0x18] sm:$0x1f] %vm647, %v625
        %vm649 = vcmask 261125
        %650 = vst.msk [vmem:[#allocation2 + $0x1a] sm:$0xe0] %vm649, %v625
        %651 = vst.msk [vmem:[#allocation2 + $0x22] sm:$0xff] %vm277, %v626
        %vm652 = vcmask 254976
        %653 = vst.msk [vmem:[#allocation2 + $0x2a] sm:$0x3] %vm652, %v627
        %vm654 = vcmask 261122
        %655 = vst.msk [vmem:[#allocation2 + $0x2c] sm:$0xfc] %vm654, %v627
        %vm656 = vcmask 260096
        %657 = vst.msk [vmem:[#allocation2 + $0x34] sm:$0x7f] %vm656, %v628
        %vm658 = vcmask 261127
        %659 = vst.msk [vmem:[#allocation2 + $0x36] sm:$0x80] %vm658, %v628
        %660 = vst.msk [vmem:[#allocation2 + $0x3e] sm:$0xff] %vm277, %v629
        %vm661 = vcmask 257024
        %662 = vst.msk [vmem:[#allocation2 + $0x46] sm:$0xf] %vm661, %v630
        %vm663 = vcmask 261124
        %664 = vst.msk [vmem:[#allocation2 + $0x48] sm:$0xf0] %vm663, %v630
        %665 = vst.msk [vmem:[#allocation2 + $0x50] sm:$0xff] %vm277, %v631
        %666 = vst.msk [vmem:[#allocation2 + $0x58] sm:$0x1] %vm306, %v632
        %vm667 = vcmask 261121
        %668 = vst.msk [vmem:[#allocation2 + $0x5a] sm:$0xfe] %vm667, %v632
        %vm669 = vcmask 259072
        %670 = vst.msk [vmem:[#allocation2 + $0x62] sm:$0x3f] %vm669, %v633
        %vm671 = vcmask 261126
        %672 = vst.msk [vmem:[#allocation2 + $0x64] sm:$0xc0] %vm671, %v633
        %673 = vst.msk [vmem:[#allocation2 + $0x6c] sm:$0xff] %vm277, %v634
        %vm674 = vcmask 256000
        %675 = vst.msk [vmem:[#allocation2 + $0x74] sm:$0x7] %vm674, %v635
        %vm676 = vcmask 261123
        %677 = vst.msk [vmem:[#allocation2 + $0x76] sm:$0xf8] %vm676, %v635
        %678 = vst.msk [vmem:[#allocation2 + $0x7e] sm:$0xff] %vm277, %v636
        %679 = vst.msk [vmem:[#allocation2 + $0x88] sm:$0xff] %vm277, %v637
        %680 = vst.msk [vmem:[#allocation2 + $0x90] sm:$0x1f] %vm647, %v638
        %681 = vst.msk [vmem:[#allocation2 + $0x92] sm:$0xe0] %vm649, %v638
        %682 = vst.msk [vmem:[#allocation2 + $0x9a] sm:$0xff] %vm277, %v639
        %683 = vst.msk [vmem:[#allocation2 + $0xa2] sm:$0x3] %vm652, %v640
        %684 = vst.msk [vmem:[#allocation2 + $0xa4] sm:$0xfc] %vm654, %v640
        %685 = vst.msk [vmem:[#allocation2 + $0xac] sm:$0x7f] %vm656, %v641
        %686 = vst.msk [vmem:[#allocation2 + $0xae] sm:$0x80] %vm658, %v641
        %687 = vst.msk [vmem:[#allocation2 + $0xb6] sm:$0xff] %vm277, %v642
        %688 = vst.msk [vmem:[#allocation2 + $0xbe] sm:$0xf] %vm661, %v643
        %689 = vst.msk [vmem:[#allocation2 + $0xc0] sm:$0xf0] %vm663, %v643
        %690 = vst.msk [vmem:[#allocation2 + $0xc8] sm:$0xff] %vm277, %v644
        %691 = vst.msk [vmem:[#allocation2 + $0xd0] sm:$0x1] %vm306, %v645
        %v692 = vld [vmem:[#allocation2] sm:$0xff]
        %v693 = vld [vmem:[#allocation2 + $0x8] sm:$0xff]
        %v694 = vld [vmem:[#allocation2 + $0x10] sm:$0xff]
        %v695 = vld [vmem:[#allocation2 + $0x18] sm:$0xff]
        %v696 = vld [vmem:[#allocation2 + $0x20] sm:$0xff]
        %v697 = vld [vmem:[#allocation2 + $0x28] sm:$0xff]
        %v698 = vld [vmem:[#allocation2 + $0x30] sm:$0xff]
        %v699 = vld [vmem:[#allocation2 + $0x38] sm:$0xff]
        %v700 = vld [vmem:[#allocation2 + $0x40] sm:$0xff]
        %v701 = vld [vmem:[#allocation2 + $0x48] sm:$0xff]
        %v702 = vld [vmem:[#allocation2 + $0x50] sm:$0xff]
        %v703 = vld [vmem:[#allocation2 + $0x58] sm:$0xff]
        %v704 = vld [vmem:[#allocation2 + $0x60] sm:$0xff]
        %v705 = vld [vmem:[#allocation2 + $0x68] sm:$0xff]
        %v706 = vld [vmem:[#allocation2 + $0x70] sm:$0xff]
        %v707 = vld [vmem:[#allocation2 + $0x78] sm:$0xff]
        %v708 = vld [vmem:[#allocation2 + $0x80] sm:$0xff]
        %v709 = vld [vmem:[#allocation2 + $0x88] sm:$0xff]
        %v710 = vld [vmem:[#allocation2 + $0x90] sm:$0x1]
        %v711 = vpack.c.bf16 %v693, %v692
        %v712 = vpack.c.bf16 %v695, %v694
        %v713 = vpack.c.bf16 %v697, %v696
        %v714 = vpack.c.bf16 %v699, %v698
        %v715 = vpack.c.bf16 %v701, %v700
        %v716 = vpack.c.bf16 %v703, %v702
        %v717 = vpack.c.bf16 %v705, %v704
        %v718 = vpack.c.bf16 %v707, %v706
        %v719 = vpack.c.bf16 %v709, %v708
        %v720 = vpack.c.bf16 %v710, %v710
        %v721 = vld [vmem:[#allocation2 + $0x1] sm:$0xff]
        %v722 = vld [vmem:[#allocation2 + $0x9] sm:$0xff]
        %v723 = vld [vmem:[#allocation2 + $0x11] sm:$0xff]
        %v724 = vld [vmem:[#allocation2 + $0x19] sm:$0xff]
        %v725 = vld [vmem:[#allocation2 + $0x21] sm:$0xff]
        %v726 = vld [vmem:[#allocation2 + $0x29] sm:$0xff]
        %v727 = vld [vmem:[#allocation2 + $0x31] sm:$0xff]
        %v728 = vld [vmem:[#allocation2 + $0x39] sm:$0xff]
        %v729 = vld [vmem:[#allocation2 + $0x41] sm:$0xff]
        %v730 = vld [vmem:[#allocation2 + $0x49] sm:$0xff]
        %v731 = vld [vmem:[#allocation2 + $0x51] sm:$0xff]
        %v732 = vld [vmem:[#allocation2 + $0x59] sm:$0xff]
        %v733 = vld [vmem:[#allocation2 + $0x61] sm:$0xff]
        %v734 = vld [vmem:[#allocation2 + $0x69] sm:$0xff]
        %v735 = vld [vmem:[#allocation2 + $0x71] sm:$0xff]
        %v736 = vld [vmem:[#allocation2 + $0x79] sm:$0xff]
        %v737 = vld [vmem:[#allocation2 + $0x81] sm:$0xff]
        %v738 = vld [vmem:[#allocation2 + $0x89] sm:$0xff]
        %v739 = vld [vmem:[#allocation2 + $0x91] sm:$0x1]
        %v740 = vpack.c.bf16 %v722, %v721
        %v741 = vpack.c.bf16 %v724, %v723
        %v742 = vpack.c.bf16 %v726, %v725
        %v743 = vpack.c.bf16 %v728, %v727
        %v744 = vpack.c.bf16 %v730, %v729
        %v745 = vpack.c.bf16 %v732, %v731
        %v746 = vpack.c.bf16 %v734, %v733
        %v747 = vpack.c.bf16 %v736, %v735
        %v748 = vpack.c.bf16 %v738, %v737
        %v749 = vpack.c.bf16 %v739, %v739
        %v750 = vld [vmem:[#allocation2 + $0x2] sm:$0xff]
        %v751 = vld [vmem:[#allocation2 + $0xa] sm:$0xff]
        %v752 = vld [vmem:[#allocation2 + $0x12] sm:$0xff]
        %v753 = vld [vmem:[#allocation2 + $0x1a] sm:$0xff]
        %v754 = vld [vmem:[#allocation2 + $0x22] sm:$0xff]
        %v755 = vld [vmem:[#allocation2 + $0x2a] sm:$0xff]
        %v756 = vld [vmem:[#allocation2 + $0x32] sm:$0xff]
        %v757 = vld [vmem:[#allocation2 + $0x3a] sm:$0xff]
        %v758 = vld [vmem:[#allocation2 + $0x42] sm:$0xff]
        %v759 = vld [vmem:[#allocation2 + $0x4a] sm:$0xff]
        %v760 = vld [vmem:[#allocation2 + $0x52] sm:$0xff]
        %v761 = vld [vmem:[#allocation2 + $0x5a] sm:$0xff]
        %v762 = vld [vmem:[#allocation2 + $0x62] sm:$0xff]
        %v763 = vld [vmem:[#allocation2 + $0x6a] sm:$0xff]
        %v764 = vld [vmem:[#allocation2 + $0x72] sm:$0xff]
        %v765 = vld [vmem:[#allocation2 + $0x7a] sm:$0xff]
        %v766 = vld [vmem:[#allocation2 + $0x82] sm:$0xff]
        %v767 = vld [vmem:[#allocation2 + $0x8a] sm:$0xff]
        %v768 = vld [vmem:[#allocation2 + $0x92] sm:$0x1]
        %v769 = vpack.c.bf16 %v751, %v750
        %v770 = vpack.c.bf16 %v753, %v752
        %v771 = vpack.c.bf16 %v755, %v754
        %v772 = vpack.c.bf16 %v757, %v756
        %v773 = vpack.c.bf16 %v759, %v758
        %v774 = vpack.c.bf16 %v761, %v760
        %v775 = vpack.c.bf16 %v763, %v762
        %v776 = vpack.c.bf16 %v765, %v764
        %v777 = vpack.c.bf16 %v767, %v766
        %v778 = vpack.c.bf16 %v768, %v768
        %v779 = vld [vmem:[#allocation2 + $0x3] sm:$0xff]
        %v780 = vld [vmem:[#allocation2 + $0xb] sm:$0xff]
        %v781 = vld [vmem:[#allocation2 + $0x13] sm:$0xff]
        %v782 = vld [vmem:[#allocation2 + $0x1b] sm:$0xff]
        %v783 = vld [vmem:[#allocation2 + $0x23] sm:$0xff]
        %v784 = vld [vmem:[#allocation2 + $0x2b] sm:$0xff]
        %v785 = vld [vmem:[#allocation2 + $0x33] sm:$0xff]
        %v786 = vld [vmem:[#allocation2 + $0x3b] sm:$0xff]
        %v787 = vld [vmem:[#allocation2 + $0x43] sm:$0xff]
        %v788 = vld [vmem:[#allocation2 + $0x4b] sm:$0xff]
        %v789 = vld [vmem:[#allocation2 + $0x53] sm:$0xff]
        %v790 = vld [vmem:[#allocation2 + $0x5b] sm:$0xff]
        %v791 = vld [vmem:[#allocation2 + $0x63] sm:$0xff]
        %v792 = vld [vmem:[#allocation2 + $0x6b] sm:$0xff]
        %v793 = vld [vmem:[#allocation2 + $0x73] sm:$0xff]
        %v794 = vld [vmem:[#allocation2 + $0x7b] sm:$0xff]
        %v795 = vld [vmem:[#allocation2 + $0x83] sm:$0xff]
        %v796 = vld [vmem:[#allocation2 + $0x8b] sm:$0xff]
        %v797 = vld [vmem:[#allocation2 + $0x93] sm:$0x1]
        %v798 = vpack.c.bf16 %v780, %v779
        %v799 = vpack.c.bf16 %v782, %v781
        %v800 = vpack.c.bf16 %v784, %v783
        %v801 = vpack.c.bf16 %v786, %v785
        %v802 = vpack.c.bf16 %v788, %v787
        %v803 = vpack.c.bf16 %v790, %v789
        %v804 = vpack.c.bf16 %v792, %v791
        %v805 = vpack.c.bf16 %v794, %v793
        %v806 = vpack.c.bf16 %v796, %v795
        %v807 = vpack.c.bf16 %v797, %v797
        %818 = vrot.lane.b32.xlu0 %v740, 32
        %v819 = vpop.permute.xlu0 %818
        %820 = vrot.lane.b32.xlu0 %v741, 32
        %v821 = vpop.permute.xlu0 %820
        %822 = vrot.lane.b32.xlu0 %v742, 32
        %v823 = vpop.permute.xlu0 %822
        %824 = vrot.lane.b32.xlu0 %v743, 32
        %v825 = vpop.permute.xlu0 %824
        %826 = vrot.lane.b32.xlu0 %v744, 32
        %v827 = vpop.permute.xlu0 %826
        %828 = vrot.lane.b32.xlu0 %v745, 32
        %v829 = vpop.permute.xlu0 %828
        %830 = vrot.lane.b32.xlu0 %v746, 32
        %v831 = vpop.permute.xlu0 %830
        %832 = vrot.lane.b32.xlu0 %v747, 32
        %v833 = vpop.permute.xlu0 %832
        %834 = vrot.lane.b32.xlu0 %v748, 32
        %v835 = vpop.permute.xlu0 %834
        %836 = vrot.lane.b32.xlu0 %v749, 32
        %v837 = vpop.permute.xlu0 %836
        %848 = vrot.lane.b32.xlu0 %v769, 64
        %v849 = vpop.permute.xlu0 %848
        %850 = vrot.lane.b32.xlu0 %v770, 64
        %v851 = vpop.permute.xlu0 %850
        %852 = vrot.lane.b32.xlu0 %v771, 64
        %v853 = vpop.permute.xlu0 %852
        %854 = vrot.lane.b32.xlu0 %v772, 64
        %v855 = vpop.permute.xlu0 %854
        %856 = vrot.lane.b32.xlu0 %v773, 64
        %v857 = vpop.permute.xlu0 %856
        %858 = vrot.lane.b32.xlu0 %v774, 64
        %v859 = vpop.permute.xlu0 %858
        %860 = vrot.lane.b32.xlu0 %v775, 64
        %v861 = vpop.permute.xlu0 %860
        %862 = vrot.lane.b32.xlu0 %v776, 64
        %v863 = vpop.permute.xlu0 %862
        %864 = vrot.lane.b32.xlu0 %v777, 64
        %v865 = vpop.permute.xlu0 %864
        %866 = vrot.lane.b32.xlu0 %v778, 64
        %v867 = vpop.permute.xlu0 %866
        %878 = vrot.lane.b32.xlu0 %v798, 96
        %v879 = vpop.permute.xlu0 %878
        %880 = vrot.lane.b32.xlu0 %v799, 96
        %v881 = vpop.permute.xlu0 %880
        %882 = vrot.lane.b32.xlu0 %v800, 96
        %v883 = vpop.permute.xlu0 %882
        %884 = vrot.lane.b32.xlu0 %v801, 96
        %v885 = vpop.permute.xlu0 %884
        %886 = vrot.lane.b32.xlu0 %v802, 96
        %v887 = vpop.permute.xlu0 %886
        %888 = vrot.lane.b32.xlu0 %v803, 96
        %v889 = vpop.permute.xlu0 %888
        %890 = vrot.lane.b32.xlu0 %v804, 96
        %v891 = vpop.permute.xlu0 %890
        %892 = vrot.lane.b32.xlu0 %v805, 96
        %v893 = vpop.permute.xlu0 %892
        %894 = vrot.lane.b32.xlu0 %v806, 96
        %v895 = vpop.permute.xlu0 %894
        %896 = vrot.lane.b32.xlu0 %v807, 96
        %v897 = vpop.permute.xlu0 %896
        %v900 = vsel %vm277, %v711, %v819
        %v903 = vsel %vm277, %v712, %v821
        %v906 = vsel %vm277, %v713, %v823
        %v909 = vsel %vm277, %v714, %v825
        %v912 = vsel %vm277, %v715, %v827
        %v915 = vsel %vm277, %v716, %v829
        %v918 = vsel %vm277, %v717, %v831
        %v921 = vsel %vm277, %v718, %v833
        %v924 = vsel %vm277, %v719, %v835
        %v927 = vsel %vm277, %v720, %v837
        %vm928 = vcmask 523264
        %v930 = vsel %vm928, %v900, %v849
        %v932 = vsel %vm928, %v903, %v851
        %v934 = vsel %vm928, %v906, %v853
        %v936 = vsel %vm928, %v909, %v855
        %v938 = vsel %vm928, %v912, %v857
        %v940 = vsel %vm928, %v915, %v859
        %v942 = vsel %vm928, %v918, %v861
        %v944 = vsel %vm928, %v921, %v863
        %v946 = vsel %vm928, %v924, %v865
        %v948 = vsel %vm928, %v927, %v867
        %vm949 = vcmask 785408
        %v951 = vsel %vm949, %v930, %v879
        %v953 = vsel %vm949, %v932, %v881
        %v955 = vsel %vm949, %v934, %v883
        %v957 = vsel %vm949, %v936, %v885
        %v959 = vsel %vm949, %v938, %v887
        %v961 = vsel %vm949, %v940, %v889
        %v963 = vsel %vm949, %v942, %v891
        %v965 = vsel %vm949, %v944, %v893
        %v967 = vsel %vm949, %v946, %v895
        %v969 = vsel %vm949, %v948, %v897
        %v980 = vunpack.c.l.b16 %v951
        %v981 = vunpack.c.h.b16 %v951
        %v982 = vunpack.c.l.b16 %v953
        %v983 = vunpack.c.h.b16 %v953
        %v984 = vunpack.c.l.b16 %v955
        %v985 = vunpack.c.h.b16 %v955
        %v986 = vunpack.c.l.b16 %v957
        %v987 = vunpack.c.h.b16 %v957
        %v988 = vunpack.c.l.b16 %v959
        %v989 = vunpack.c.h.b16 %v959
        %v990 = vunpack.c.l.b16 %v961
        %v991 = vunpack.c.h.b16 %v961
        %v992 = vunpack.c.l.b16 %v963
        %v993 = vunpack.c.h.b16 %v963
        %v994 = vunpack.c.l.b16 %v965
        %v995 = vunpack.c.h.b16 %v965
        %v996 = vunpack.c.l.b16 %v967
        %v997 = vunpack.c.h.b16 %v967
        %v998 = vunpack.c.l.b16 %v969
        %v999 = vpack.c.b16 %v980, %v980
        %v1000 = vpack.c.b16 %v981, %v981
        %v1001 = vpack.c.b16 %v982, %v982
        %v1002 = vpack.c.b16 %v983, %v983
        %v1003 = vpack.c.b16 %v984, %v984
        %v1004 = vpack.c.b16 %v985, %v985
        %v1005 = vpack.c.b16 %v986, %v986
        %v1006 = vpack.c.b16 %v987, %v987
        %v1007 = vpack.c.b16 %v988, %v988
        %v1008 = vpack.c.b16 %v989, %v989
        %v1009 = vpack.c.b16 %v990, %v990
        %v1010 = vpack.c.b16 %v991, %v991
        %v1011 = vpack.c.b16 %v992, %v992
        %v1012 = vpack.c.b16 %v993, %v993
        %v1013 = vpack.c.b16 %v994, %v994
        %v1014 = vpack.c.b16 %v995, %v995
        %v1015 = vpack.c.b16 %v996, %v996
        %v1016 = vpack.c.b16 %v997, %v997
        %v1017 = vpack.c.b16 %v998, %v998
        %1037 = vst [vmem:[#allocation4] sm:$0xf] %v999
        %1038 = vst [vmem:[#allocation4 + $0x24] sm:$0xf] %v1000
        %1039 = vst [vmem:[#allocation4 + $0x48] sm:$0xf] %v1001
        %1040 = vst [vmem:[#allocation4 + $0x6c] sm:$0xf] %v1002
        %1041 = vst [vmem:[#allocation4 + $0x90] sm:$0xf] %v1003
        %1042 = vst [vmem:[#allocation4 + $0xb4] sm:$0xf] %v1004
        %1043 = vst [vmem:[#allocation4 + $0xd8] sm:$0xf] %v1005
        %1044 = vst [vmem:[#allocation4 + $0xfc] sm:$0xf] %v1006
        %1045 = vst [vmem:[#allocation4 + $0x120] sm:$0xf] %v1007
        %1046 = vst [vmem:[#allocation4 + $0x144] sm:$0xf] %v1008
        %1047 = vst [vmem:[#allocation4 + $0x168] sm:$0xf] %v1009
        %1048 = vst [vmem:[#allocation4 + $0x18c] sm:$0xf] %v1010
        %1049 = vst [vmem:[#allocation4 + $0x1b0] sm:$0xf] %v1011
        %1050 = vst [vmem:[#allocation4 + $0x1d4] sm:$0xf] %v1012
        %1051 = vst [vmem:[#allocation4 + $0x1f8] sm:$0xf] %v1013
        %1052 = vst [vmem:[#allocation4 + $0x21c] sm:$0xf] %v1014
        %1053 = vst [vmem:[#allocation4 + $0x240] sm:$0xf] %v1015
        %1054 = vst [vmem:[#allocation4 + $0x264] sm:$0xf] %v1016
        %vm1055 = vcmask 1040384
        %vm1056 = vsmask.f32 256
        %vm1057 = vmand %vm1055, %vm1056
        %v1058 = vld [vmem:[#allocation4 + $0x288] sm:$0x1]
        %v1059 = vsel %vm1057, %v1017, %v1058
        %1060 = vst [vmem:[#allocation4 + $0x288] sm:$0x1] %v1059
        %v1061 = vld [vmem:[#allocation2 + $0x4] sm:$0xff]
        %v1062 = vld [vmem:[#allocation2 + $0xc] sm:$0xff]
        %v1063 = vld [vmem:[#allocation2 + $0x14] sm:$0xff]
        %v1064 = vld [vmem:[#allocation2 + $0x1c] sm:$0xff]
        %v1065 = vld [vmem:[#allocation2 + $0x24] sm:$0xff]
        %v1066 = vld [vmem:[#allocation2 + $0x2c] sm:$0xff]
        %v1067 = vld [vmem:[#allocation2 + $0x34] sm:$0xff]
        %v1068 = vld [vmem:[#allocation2 + $0x3c] sm:$0xff]
        %v1069 = vld [vmem:[#allocation2 + $0x44] sm:$0xff]
        %v1070 = vld [vmem:[#allocation2 + $0x4c] sm:$0xff]
        %v1071 = vld [vmem:[#allocation2 + $0x54] sm:$0xff]
        %v1072 = vld [vmem:[#allocation2 + $0x5c] sm:$0xff]
        %v1073 = vld [vmem:[#allocation2 + $0x64] sm:$0xff]
        %v1074 = vld [vmem:[#allocation2 + $0x6c] sm:$0xff]
        %v1075 = vld [vmem:[#allocation2 + $0x74] sm:$0xff]
        %v1076 = vld [vmem:[#allocation2 + $0x7c] sm:$0xff]
        %v1077 = vld [vmem:[#allocation2 + $0x84] sm:$0xff]
        %v1078 = vld [vmem:[#allocation2 + $0x8c] sm:$0xff]
        %v1079 = vld [vmem:[#allocation2 + $0x94] sm:$0x1]
        %v1080 = vpack.c.bf16 %v1062, %v1061
        %v1081 = vpack.c.bf16 %v1064, %v1063
        %v1082 = vpack.c.bf16 %v1066, %v1065
        %v1083 = vpack.c.bf16 %v1068, %v1067
        %v1084 = vpack.c.bf16 %v1070, %v1069
        %v1085 = vpack.c.bf16 %v1072, %v1071
        %v1086 = vpack.c.bf16 %v1074, %v1073
        %v1087 = vpack.c.bf16 %v1076, %v1075
        %v1088 = vpack.c.bf16 %v1078, %v1077
        %v1089 = vpack.c.bf16 %v1079, %v1079
        %v1090 = vld [vmem:[#allocation2 + $0x5] sm:$0xff]
        %v1091 = vld [vmem:[#allocation2 + $0xd] sm:$0xff]
        %v1092 = vld [vmem:[#allocation2 + $0x15] sm:$0xff]
        %v1093 = vld [vmem:[#allocation2 + $0x1d] sm:$0xff]
        %v1094 = vld [vmem:[#allocation2 + $0x25] sm:$0xff]
        %v1095 = vld [vmem:[#allocation2 + $0x2d] sm:$0xff]
        %v1096 = vld [vmem:[#allocation2 + $0x35] sm:$0xff]
        %v1097 = vld [vmem:[#allocation2 + $0x3d] sm:$0xff]
        %v1098 = vld [vmem:[#allocation2 + $0x45] sm:$0xff]
        %v1099 = vld [vmem:[#allocation2 + $0x4d] sm:$0xff]
        %v1100 = vld [vmem:[#allocation2 + $0x55] sm:$0xff]
        %v1101 = vld [vmem:[#allocation2 + $0x5d] sm:$0xff]
        %v1102 = vld [vmem:[#allocation2 + $0x65] sm:$0xff]
        %v1103 = vld [vmem:[#allocation2 + $0x6d] sm:$0xff]
        %v1104 = vld [vmem:[#allocation2 + $0x75] sm:$0xff]
        %v1105 = vld [vmem:[#allocation2 + $0x7d] sm:$0xff]
        %v1106 = vld [vmem:[#allocation2 + $0x85] sm:$0xff]
        %v1107 = vld [vmem:[#allocation2 + $0x8d] sm:$0xff]
        %v1108 = vld [vmem:[#allocation2 + $0x95] sm:$0x1]
        %v1109 = vpack.c.bf16 %v1091, %v1090
        %v1110 = vpack.c.bf16 %v1093, %v1092
        %v1111 = vpack.c.bf16 %v1095, %v1094
        %v1112 = vpack.c.bf16 %v1097, %v1096
        %v1113 = vpack.c.bf16 %v1099, %v1098
        %v1114 = vpack.c.bf16 %v1101, %v1100
        %v1115 = vpack.c.bf16 %v1103, %v1102
        %v1116 = vpack.c.bf16 %v1105, %v1104
        %v1117 = vpack.c.bf16 %v1107, %v1106
        %v1118 = vpack.c.bf16 %v1108, %v1108
        %v1119 = vld [vmem:[#allocation2 + $0xf] sm:$0xff]
        %v1120 = vld [vmem:[#allocation2 + $0x17] sm:$0xff]
        %v1121 = vld [vmem:[#allocation2 + $0x1f] sm:$0xff]
        %v1122 = vld [vmem:[#allocation2 + $0x27] sm:$0xff]
        %v1123 = vld [vmem:[#allocation2 + $0x2f] sm:$0xff]
        %v1124 = vld [vmem:[#allocation2 + $0x37] sm:$0xff]
        %v1125 = vld [vmem:[#allocation2 + $0x3f] sm:$0xff]
        %v1126 = vld [vmem:[#allocation2 + $0x47] sm:$0xff]
        %v1127 = vld [vmem:[#allocation2 + $0x4f] sm:$0xff]
        %v1128 = vld [vmem:[#allocation2 + $0x57] sm:$0xff]
        %v1129 = vld [vmem:[#allocation2 + $0x5f] sm:$0xff]
        %v1130 = vld [vmem:[#allocation2 + $0x67] sm:$0xff]
        %v1131 = vld [vmem:[#allocation2 + $0x6f] sm:$0xff]
        %v1132 = vld [vmem:[#allocation2 + $0x77] sm:$0xff]
        %v1133 = vld [vmem:[#allocation2 + $0x7f] sm:$0xff]
        %v1134 = vld [vmem:[#allocation2 + $0x87] sm:$0xff]
        %v1135 = vld [vmem:[#allocation2 + $0x8f] sm:$0xff]
        %v1136 = vld [vmem:[#allocation2 + $0x97] sm:$0xff]
        %v1137 = vld [vmem:[#allocation2 + $0x9f] sm:$0x1]
        %v1138 = vpack.c.bf16 %v1120, %v1119
        %v1139 = vpack.c.bf16 %v1122, %v1121
        %v1140 = vpack.c.bf16 %v1124, %v1123
        %v1141 = vpack.c.bf16 %v1126, %v1125
        %v1142 = vpack.c.bf16 %v1128, %v1127
        %v1143 = vpack.c.bf16 %v1130, %v1129
        %v1144 = vpack.c.bf16 %v1132, %v1131
        %v1145 = vpack.c.bf16 %v1134, %v1133
        %v1146 = vpack.c.bf16 %v1136, %v1135
        %v1147 = vpack.c.bf16 %v1137, %v1137
        %v1148 = vld [vmem:[#allocation2 + $0x10] sm:$0xff]
        %v1149 = vld [vmem:[#allocation2 + $0x18] sm:$0xff]
        %v1150 = vld [vmem:[#allocation2 + $0x20] sm:$0xff]
        %v1151 = vld [vmem:[#allocation2 + $0x28] sm:$0xff]
        %v1152 = vld [vmem:[#allocation2 + $0x30] sm:$0xff]
        %v1153 = vld [vmem:[#allocation2 + $0x38] sm:$0xff]
        %v1154 = vld [vmem:[#allocation2 + $0x40] sm:$0xff]
        %v1155 = vld [vmem:[#allocation2 + $0x48] sm:$0xff]
        %v1156 = vld [vmem:[#allocation2 + $0x50] sm:$0xff]
        %v1157 = vld [vmem:[#allocation2 + $0x58] sm:$0xff]
        %v1158 = vld [vmem:[#allocation2 + $0x60] sm:$0xff]
        %v1159 = vld [vmem:[#allocation2 + $0x68] sm:$0xff]
        %v1160 = vld [vmem:[#allocation2 + $0x70] sm:$0xff]
        %v1161 = vld [vmem:[#allocation2 + $0x78] sm:$0xff]
        %v1162 = vld [vmem:[#allocation2 + $0x80] sm:$0xff]
        %v1163 = vld [vmem:[#allocation2 + $0x88] sm:$0xff]
        %v1164 = vld [vmem:[#allocation2 + $0x90] sm:$0xff]
        %v1165 = vld [vmem:[#allocation2 + $0x98] sm:$0xff]
        %v1166 = vld [vmem:[#allocation2 + $0xa0] sm:$0x1]
        %v1167 = vpack.c.bf16 %v1149, %v1148
        %v1168 = vpack.c.bf16 %v1151, %v1150
        %v1169 = vpack.c.bf16 %v1153, %v1152
        %v1170 = vpack.c.bf16 %v1155, %v1154
        %v1171 = vpack.c.bf16 %v1157, %v1156
        %v1172 = vpack.c.bf16 %v1159, %v1158
        %v1173 = vpack.c.bf16 %v1161, %v1160
        %v1174 = vpack.c.bf16 %v1163, %v1162
        %v1175 = vpack.c.bf16 %v1165, %v1164
        %v1176 = vpack.c.bf16 %v1166, %v1166
        %1187 = vrot.lane.b32.xlu0 %v1109, 32
        %v1188 = vpop.permute.xlu0 %1187
        %1189 = vrot.lane.b32.xlu0 %v1110, 32
        %v1190 = vpop.permute.xlu0 %1189
        %1191 = vrot.lane.b32.xlu0 %v1111, 32
        %v1192 = vpop.permute.xlu0 %1191
        %1193 = vrot.lane.b32.xlu0 %v1112, 32
        %v1194 = vpop.permute.xlu0 %1193
        %1195 = vrot.lane.b32.xlu0 %v1113, 32
        %v1196 = vpop.permute.xlu0 %1195
        %1197 = vrot.lane.b32.xlu0 %v1114, 32
        %v1198 = vpop.permute.xlu0 %1197
        %1199 = vrot.lane.b32.xlu0 %v1115, 32
        %v1200 = vpop.permute.xlu0 %1199
        %1201 = vrot.lane.b32.xlu0 %v1116, 32
        %v1202 = vpop.permute.xlu0 %1201
        %1203 = vrot.lane.b32.xlu0 %v1117, 32
        %v1204 = vpop.permute.xlu0 %1203
        %1205 = vrot.lane.b32.xlu0 %v1118, 32
        %v1206 = vpop.permute.xlu0 %1205
        %1217 = vrot.lane.b32.xlu0 %v1138, 64
        %v1218 = vpop.permute.xlu0 %1217
        %1219 = vrot.lane.b32.xlu0 %v1139, 64
        %v1220 = vpop.permute.xlu0 %1219
        %1221 = vrot.lane.b32.xlu0 %v1140, 64
        %v1222 = vpop.permute.xlu0 %1221
        %1223 = vrot.lane.b32.xlu0 %v1141, 64
        %v1224 = vpop.permute.xlu0 %1223
        %1225 = vrot.lane.b32.xlu0 %v1142, 64
        %v1226 = vpop.permute.xlu0 %1225
        %1227 = vrot.lane.b32.xlu0 %v1143, 64
        %v1228 = vpop.permute.xlu0 %1227
        %1229 = vrot.lane.b32.xlu0 %v1144, 64
        %v1230 = vpop.permute.xlu0 %1229
        %1231 = vrot.lane.b32.xlu0 %v1145, 64
        %v1232 = vpop.permute.xlu0 %1231
        %1233 = vrot.lane.b32.xlu0 %v1146, 64
        %v1234 = vpop.permute.xlu0 %1233
        %1235 = vrot.lane.b32.xlu0 %v1147, 64
        %v1236 = vpop.permute.xlu0 %1235
        %1247 = vrot.lane.b32.xlu0 %v1167, 96
        %v1248 = vpop.permute.xlu0 %1247
        %1249 = vrot.lane.b32.xlu0 %v1168, 96
        %v1250 = vpop.permute.xlu0 %1249
        %1251 = vrot.lane.b32.xlu0 %v1169, 96
        %v1252 = vpop.permute.xlu0 %1251
        %1253 = vrot.lane.b32.xlu0 %v1170, 96
        %v1254 = vpop.permute.xlu0 %1253
        %1255 = vrot.lane.b32.xlu0 %v1171, 96
        %v1256 = vpop.permute.xlu0 %1255
        %1257 = vrot.lane.b32.xlu0 %v1172, 96
        %v1258 = vpop.permute.xlu0 %1257
        %1259 = vrot.lane.b32.xlu0 %v1173, 96
        %v1260 = vpop.permute.xlu0 %1259
        %1261 = vrot.lane.b32.xlu0 %v1174, 96
        %v1262 = vpop.permute.xlu0 %1261
        %1263 = vrot.lane.b32.xlu0 %v1175, 96
        %v1264 = vpop.permute.xlu0 %1263
        %1265 = vrot.lane.b32.xlu0 %v1176, 96
        %v1266 = vpop.permute.xlu0 %1265
        %v1269 = vsel %vm277, %v1080, %v1188
        %v1272 = vsel %vm277, %v1081, %v1190
        %v1275 = vsel %vm277, %v1082, %v1192
        %v1278 = vsel %vm277, %v1083, %v1194
        %v1281 = vsel %vm277, %v1084, %v1196
        %v1284 = vsel %vm277, %v1085, %v1198
        %v1287 = vsel %vm277, %v1086, %v1200
        %v1290 = vsel %vm277, %v1087, %v1202
        %v1293 = vsel %vm277, %v1088, %v1204
        %v1296 = vsel %vm277, %v1089, %v1206
        %v1298 = vsel %vm928, %v1269, %v1218
        %v1300 = vsel %vm928, %v1272, %v1220
        %v1302 = vsel %vm928, %v1275, %v1222
        %v1304 = vsel %vm928, %v1278, %v1224
        %v1306 = vsel %vm928, %v1281, %v1226
        %v1308 = vsel %vm928, %v1284, %v1228
        %v1310 = vsel %vm928, %v1287, %v1230
        %v1312 = vsel %vm928, %v1290, %v1232
        %v1314 = vsel %vm928, %v1293, %v1234
        %v1316 = vsel %vm928, %v1296, %v1236
        %v1318 = vsel %vm949, %v1298, %v1248
        %v1320 = vsel %vm949, %v1300, %v1250
        %v1322 = vsel %vm949, %v1302, %v1252
        %v1324 = vsel %vm949, %v1304, %v1254
        %v1326 = vsel %vm949, %v1306, %v1256
        %v1328 = vsel %vm949, %v1308, %v1258
        %v1330 = vsel %vm949, %v1310, %v1260
        %v1332 = vsel %vm949, %v1312, %v1262
        %v1334 = vsel %vm949, %v1314, %v1264
        %v1336 = vsel %vm949, %v1316, %v1266
        %v1347 = vunpack.c.l.b16 %v1318
        %v1348 = vunpack.c.h.b16 %v1318
        %v1349 = vunpack.c.l.b16 %v1320
        %v1350 = vunpack.c.h.b16 %v1320
        %v1351 = vunpack.c.l.b16 %v1322
        %v1352 = vunpack.c.h.b16 %v1322
        %v1353 = vunpack.c.l.b16 %v1324
        %v1354 = vunpack.c.h.b16 %v1324
        %v1355 = vunpack.c.l.b16 %v1326
        %v1356 = vunpack.c.h.b16 %v1326
        %v1357 = vunpack.c.l.b16 %v1328
        %v1358 = vunpack.c.h.b16 %v1328
        %v1359 = vunpack.c.l.b16 %v1330
        %v1360 = vunpack.c.h.b16 %v1330
        %v1361 = vunpack.c.l.b16 %v1332
        %v1362 = vunpack.c.h.b16 %v1332
        %v1363 = vunpack.c.l.b16 %v1334
        %v1364 = vunpack.c.h.b16 %v1334
        %v1365 = vunpack.c.l.b16 %v1336
        %v1366 = vpack.c.b16 %v1347, %v1347
        %v1367 = vpack.c.b16 %v1348, %v1348
        %v1368 = vpack.c.b16 %v1349, %v1349
        %v1369 = vpack.c.b16 %v1350, %v1350
        %v1370 = vpack.c.b16 %v1351, %v1351
        %v1371 = vpack.c.b16 %v1352, %v1352
        %v1372 = vpack.c.b16 %v1353, %v1353
        %v1373 = vpack.c.b16 %v1354, %v1354
        %v1374 = vpack.c.b16 %v1355, %v1355
        %v1375 = vpack.c.b16 %v1356, %v1356
        %v1376 = vpack.c.b16 %v1357, %v1357
        %v1377 = vpack.c.b16 %v1358, %v1358
        %v1378 = vpack.c.b16 %v1359, %v1359
        %v1379 = vpack.c.b16 %v1360, %v1360
        %v1380 = vpack.c.b16 %v1361, %v1361
        %v1381 = vpack.c.b16 %v1362, %v1362
        %v1382 = vpack.c.b16 %v1363, %v1363
        %v1383 = vpack.c.b16 %v1364, %v1364
        %v1384 = vpack.c.b16 %v1365, %v1365
        %1404 = vst [vmem:[#allocation4 + $0x4] sm:$0xf] %v1366
        %1405 = vst [vmem:[#allocation4 + $0x28] sm:$0xf] %v1367
        %1406 = vst [vmem:[#allocation4 + $0x4c] sm:$0xf] %v1368
        %1407 = vst [vmem:[#allocation4 + $0x70] sm:$0xf] %v1369
        %1408 = vst [vmem:[#allocation4 + $0x94] sm:$0xf] %v1370
        %1409 = vst [vmem:[#allocation4 + $0xb8] sm:$0xf] %v1371
        %1410 = vst [vmem:[#allocation4 + $0xdc] sm:$0xf] %v1372
        %1411 = vst [vmem:[#allocation4 + $0x100] sm:$0xf] %v1373
        %1412 = vst [vmem:[#allocation4 + $0x124] sm:$0xf] %v1374
        %1413 = vst [vmem:[#allocation4 + $0x148] sm:$0xf] %v1375
        %1414 = vst [vmem:[#allocation4 + $0x16c] sm:$0xf] %v1376
        %1415 = vst [vmem:[#allocation4 + $0x190] sm:$0xf] %v1377
        %1416 = vst [vmem:[#allocation4 + $0x1b4] sm:$0xf] %v1378
        %1417 = vst [vmem:[#allocation4 + $0x1d8] sm:$0xf] %v1379
        %1418 = vst [vmem:[#allocation4 + $0x1fc] sm:$0xf] %v1380
        %1419 = vst [vmem:[#allocation4 + $0x220] sm:$0xf] %v1381
        %1420 = vst [vmem:[#allocation4 + $0x244] sm:$0xf] %v1382
        %1421 = vst [vmem:[#allocation4 + $0x268] sm:$0xf] %v1383
        %v1422 = vld [vmem:[#allocation4 + $0x28c] sm:$0x1]
        %v1423 = vsel %vm1057, %v1384, %v1422
        %1424 = vst [vmem:[#allocation4 + $0x28c] sm:$0x1] %v1423
        %v1425 = vld [vmem:[#allocation2 + $0x11] sm:$0xff]
        %v1426 = vld [vmem:[#allocation2 + $0x19] sm:$0xff]
        %v1427 = vld [vmem:[#allocation2 + $0x21] sm:$0xff]
        %v1428 = vld [vmem:[#allocation2 + $0x29] sm:$0xff]
        %v1429 = vld [vmem:[#allocation2 + $0x31] sm:$0xff]
        %v1430 = vld [vmem:[#allocation2 + $0x39] sm:$0xff]
        %v1431 = vld [vmem:[#allocation2 + $0x41] sm:$0xff]
        %v1432 = vld [vmem:[#allocation2 + $0x49] sm:$0xff]
        %v1433 = vld [vmem:[#allocation2 + $0x51] sm:$0xff]
        %v1434 = vld [vmem:[#allocation2 + $0x59] sm:$0xff]
        %v1435 = vld [vmem:[#allocation2 + $0x61] sm:$0xff]
        %v1436 = vld [vmem:[#allocation2 + $0x69] sm:$0xff]
        %v1437 = vld [vmem:[#allocation2 + $0x71] sm:$0xff]
        %v1438 = vld [vmem:[#allocation2 + $0x79] sm:$0xff]
        %v1439 = vld [vmem:[#allocation2 + $0x81] sm:$0xff]
        %v1440 = vld [vmem:[#allocation2 + $0x89] sm:$0xff]
        %v1441 = vld [vmem:[#allocation2 + $0x91] sm:$0xff]
        %v1442 = vld [vmem:[#allocation2 + $0x99] sm:$0xff]
        %v1443 = vld [vmem:[#allocation2 + $0xa1] sm:$0x1]
        %v1444 = vpack.c.bf16 %v1426, %v1425
        %v1445 = vpack.c.bf16 %v1428, %v1427
        %v1446 = vpack.c.bf16 %v1430, %v1429
        %v1447 = vpack.c.bf16 %v1432, %v1431
        %v1448 = vpack.c.bf16 %v1434, %v1433
        %v1449 = vpack.c.bf16 %v1436, %v1435
        %v1450 = vpack.c.bf16 %v1438, %v1437
        %v1451 = vpack.c.bf16 %v1440, %v1439
        %v1452 = vpack.c.bf16 %v1442, %v1441
        %v1453 = vpack.c.bf16 %v1443, %v1443
        %v1454 = vld [vmem:[#allocation2 + $0x12] sm:$0xff]
        %v1455 = vld [vmem:[#allocation2 + $0x1a] sm:$0xff]
        %v1456 = vld [vmem:[#allocation2 + $0x22] sm:$0xff]
        %v1457 = vld [vmem:[#allocation2 + $0x2a] sm:$0xff]
        %v1458 = vld [vmem:[#allocation2 + $0x32] sm:$0xff]
        %v1459 = vld [vmem:[#allocation2 + $0x3a] sm:$0xff]
        %v1460 = vld [vmem:[#allocation2 + $0x42] sm:$0xff]
        %v1461 = vld [vmem:[#allocation2 + $0x4a] sm:$0xff]
        %v1462 = vld [vmem:[#allocation2 + $0x52] sm:$0xff]
        %v1463 = vld [vmem:[#allocation2 + $0x5a] sm:$0xff]
        %v1464 = vld [vmem:[#allocation2 + $0x62] sm:$0xff]
        %v1465 = vld [vmem:[#allocation2 + $0x6a] sm:$0xff]
        %v1466 = vld [vmem:[#allocation2 + $0x72] sm:$0xff]
        %v1467 = vld [vmem:[#allocation2 + $0x7a] sm:$0xff]
        %v1468 = vld [vmem:[#allocation2 + $0x82] sm:$0xff]
        %v1469 = vld [vmem:[#allocation2 + $0x8a] sm:$0xff]
        %v1470 = vld [vmem:[#allocation2 + $0x92] sm:$0xff]
        %v1471 = vld [vmem:[#allocation2 + $0x9a] sm:$0xff]
        %v1472 = vld [vmem:[#allocation2 + $0xa2] sm:$0x1]
        %v1473 = vpack.c.bf16 %v1455, %v1454
        %v1474 = vpack.c.bf16 %v1457, %v1456
        %v1475 = vpack.c.bf16 %v1459, %v1458
        %v1476 = vpack.c.bf16 %v1461, %v1460
        %v1477 = vpack.c.bf16 %v1463, %v1462
        %v1478 = vpack.c.bf16 %v1465, %v1464
        %v1479 = vpack.c.bf16 %v1467, %v1466
        %v1480 = vpack.c.bf16 %v1469, %v1468
        %v1481 = vpack.c.bf16 %v1471, %v1470
        %v1482 = vpack.c.bf16 %v1472, %v1472
        %v1483 = vld [vmem:[#allocation2 + $0x13] sm:$0xff]
        %v1484 = vld [vmem:[#allocation2 + $0x1b] sm:$0xff]
        %v1485 = vld [vmem:[#allocation2 + $0x23] sm:$0xff]
        %v1486 = vld [vmem:[#allocation2 + $0x2b] sm:$0xff]
        %v1487 = vld [vmem:[#allocation2 + $0x33] sm:$0xff]
        %v1488 = vld [vmem:[#allocation2 + $0x3b] sm:$0xff]
        %v1489 = vld [vmem:[#allocation2 + $0x43] sm:$0xff]
        %v1490 = vld [vmem:[#allocation2 + $0x4b] sm:$0xff]
        %v1491 = vld [vmem:[#allocation2 + $0x53] sm:$0xff]
        %v1492 = vld [vmem:[#allocation2 + $0x5b] sm:$0xff]
        %v1493 = vld [vmem:[#allocation2 + $0x63] sm:$0xff]
        %v1494 = vld [vmem:[#allocation2 + $0x6b] sm:$0xff]
        %v1495 = vld [vmem:[#allocation2 + $0x73] sm:$0xff]
        %v1496 = vld [vmem:[#allocation2 + $0x7b] sm:$0xff]
        %v1497 = vld [vmem:[#allocation2 + $0x83] sm:$0xff]
        %v1498 = vld [vmem:[#allocation2 + $0x8b] sm:$0xff]
        %v1499 = vld [vmem:[#allocation2 + $0x93] sm:$0xff]
        %v1500 = vld [vmem:[#allocation2 + $0x9b] sm:$0xff]
        %v1501 = vld [vmem:[#allocation2 + $0xa3] sm:$0x1]
        %v1502 = vpack.c.bf16 %v1484, %v1483
        %v1503 = vpack.c.bf16 %v1486, %v1485
        %v1504 = vpack.c.bf16 %v1488, %v1487
        %v1505 = vpack.c.bf16 %v1490, %v1489
        %v1506 = vpack.c.bf16 %v1492, %v1491
        %v1507 = vpack.c.bf16 %v1494, %v1493
        %v1508 = vpack.c.bf16 %v1496, %v1495
        %v1509 = vpack.c.bf16 %v1498, %v1497
        %v1510 = vpack.c.bf16 %v1500, %v1499
        %v1511 = vpack.c.bf16 %v1501, %v1501
        %v1512 = vld [vmem:[#allocation2 + $0x14] sm:$0xff]
        %v1513 = vld [vmem:[#allocation2 + $0x1c] sm:$0xff]
        %v1514 = vld [vmem:[#allocation2 + $0x24] sm:$0xff]
        %v1515 = vld [vmem:[#allocation2 + $0x2c] sm:$0xff]
        %v1516 = vld [vmem:[#allocation2 + $0x34] sm:$0xff]
        %v1517 = vld [vmem:[#allocation2 + $0x3c] sm:$0xff]
        %v1518 = vld [vmem:[#allocation2 + $0x44] sm:$0xff]
        %v1519 = vld [vmem:[#allocation2 + $0x4c] sm:$0xff]
        %v1520 = vld [vmem:[#allocation2 + $0x54] sm:$0xff]
        %v1521 = vld [vmem:[#allocation2 + $0x5c] sm:$0xff]
        %v1522 = vld [vmem:[#allocation2 + $0x64] sm:$0xff]
        %v1523 = vld [vmem:[#allocation2 + $0x6c] sm:$0xff]
        %v1524 = vld [vmem:[#allocation2 + $0x74] sm:$0xff]
        %v1525 = vld [vmem:[#allocation2 + $0x7c] sm:$0xff]
        %v1526 = vld [vmem:[#allocation2 + $0x84] sm:$0xff]
        %v1527 = vld [vmem:[#allocation2 + $0x8c] sm:$0xff]
        %v1528 = vld [vmem:[#allocation2 + $0x94] sm:$0xff]
        %v1529 = vld [vmem:[#allocation2 + $0x9c] sm:$0xff]
        %v1530 = vld [vmem:[#allocation2 + $0xa4] sm:$0x1]
        %v1531 = vpack.c.bf16 %v1513, %v1512
        %v1532 = vpack.c.bf16 %v1515, %v1514
        %v1533 = vpack.c.bf16 %v1517, %v1516
        %v1534 = vpack.c.bf16 %v1519, %v1518
        %v1535 = vpack.c.bf16 %v1521, %v1520
        %v1536 = vpack.c.bf16 %v1523, %v1522
        %v1537 = vpack.c.bf16 %v1525, %v1524
        %v1538 = vpack.c.bf16 %v1527, %v1526
        %v1539 = vpack.c.bf16 %v1529, %v1528
        %v1540 = vpack.c.bf16 %v1530, %v1530
        %1551 = vrot.lane.b32.xlu0 %v1473, 32
        %v1552 = vpop.permute.xlu0 %1551
        %1553 = vrot.lane.b32.xlu0 %v1474, 32
        %v1554 = vpop.permute.xlu0 %1553
        %1555 = vrot.lane.b32.xlu0 %v1475, 32
        %v1556 = vpop.permute.xlu0 %1555
        %1557 = vrot.lane.b32.xlu0 %v1476, 32
        %v1558 = vpop.permute.xlu0 %1557
        %1559 = vrot.lane.b32.xlu0 %v1477, 32
        %v1560 = vpop.permute.xlu0 %1559
        %1561 = vrot.lane.b32.xlu0 %v1478, 32
        %v1562 = vpop.permute.xlu0 %1561
        %1563 = vrot.lane.b32.xlu0 %v1479, 32
        %v1564 = vpop.permute.xlu0 %1563
        %1565 = vrot.lane.b32.xlu0 %v1480, 32
        %v1566 = vpop.permute.xlu0 %1565
        %1567 = vrot.lane.b32.xlu0 %v1481, 32
        %v1568 = vpop.permute.xlu0 %1567
        %1569 = vrot.lane.b32.xlu0 %v1482, 32
        %v1570 = vpop.permute.xlu0 %1569
        %1581 = vrot.lane.b32.xlu0 %v1502, 64
        %v1582 = vpop.permute.xlu0 %1581
        %1583 = vrot.lane.b32.xlu0 %v1503, 64
        %v1584 = vpop.permute.xlu0 %1583
        %1585 = vrot.lane.b32.xlu0 %v1504, 64
        %v1586 = vpop.permute.xlu0 %1585
        %1587 = vrot.lane.b32.xlu0 %v1505, 64
        %v1588 = vpop.permute.xlu0 %1587
        %1589 = vrot.lane.b32.xlu0 %v1506, 64
        %v1590 = vpop.permute.xlu0 %1589
        %1591 = vrot.lane.b32.xlu0 %v1507, 64
        %v1592 = vpop.permute.xlu0 %1591
        %1593 = vrot.lane.b32.xlu0 %v1508, 64
        %v1594 = vpop.permute.xlu0 %1593
        %1595 = vrot.lane.b32.xlu0 %v1509, 64
        %v1596 = vpop.permute.xlu0 %1595
        %1597 = vrot.lane.b32.xlu0 %v1510, 64
        %v1598 = vpop.permute.xlu0 %1597
        %1599 = vrot.lane.b32.xlu0 %v1511, 64
        %v1600 = vpop.permute.xlu0 %1599
        %1611 = vrot.lane.b32.xlu0 %v1531, 96
        %v1612 = vpop.permute.xlu0 %1611
        %1613 = vrot.lane.b32.xlu0 %v1532, 96
        %v1614 = vpop.permute.xlu0 %1613
        %1615 = vrot.lane.b32.xlu0 %v1533, 96
        %v1616 = vpop.permute.xlu0 %1615
        %1617 = vrot.lane.b32.xlu0 %v1534, 96
        %v1618 = vpop.permute.xlu0 %1617
        %1619 = vrot.lane.b32.xlu0 %v1535, 96
        %v1620 = vpop.permute.xlu0 %1619
        %1621 = vrot.lane.b32.xlu0 %v1536, 96
        %v1622 = vpop.permute.xlu0 %1621
        %1623 = vrot.lane.b32.xlu0 %v1537, 96
        %v1624 = vpop.permute.xlu0 %1623
        %1625 = vrot.lane.b32.xlu0 %v1538, 96
        %v1626 = vpop.permute.xlu0 %1625
        %1627 = vrot.lane.b32.xlu0 %v1539, 96
        %v1628 = vpop.permute.xlu0 %1627
        %1629 = vrot.lane.b32.xlu0 %v1540, 96
        %v1630 = vpop.permute.xlu0 %1629
        %v1633 = vsel %vm277, %v1444, %v1552
        %v1636 = vsel %vm277, %v1445, %v1554
        %v1639 = vsel %vm277, %v1446, %v1556
        %v1642 = vsel %vm277, %v1447, %v1558
        %v1645 = vsel %vm277, %v1448, %v1560
        %v1648 = vsel %vm277, %v1449, %v1562
        %v1651 = vsel %vm277, %v1450, %v1564
        %v1654 = vsel %vm277, %v1451, %v1566
        %v1657 = vsel %vm277, %v1452, %v1568
        %v1660 = vsel %vm277, %v1453, %v1570
        %v1662 = vsel %vm928, %v1633, %v1582
        %v1664 = vsel %vm928, %v1636, %v1584
        %v1666 = vsel %vm928, %v1639, %v1586
        %v1668 = vsel %vm928, %v1642, %v1588
        %v1670 = vsel %vm928, %v1645, %v1590
        %v1672 = vsel %vm928, %v1648, %v1592
        %v1674 = vsel %vm928, %v1651, %v1594
        %v1676 = vsel %vm928, %v1654, %v1596
        %v1678 = vsel %vm928, %v1657, %v1598
        %v1680 = vsel %vm928, %v1660, %v1600
        %v1682 = vsel %vm949, %v1662, %v1612
        %v1684 = vsel %vm949, %v1664, %v1614
        %v1686 = vsel %vm949, %v1666, %v1616
        %v1688 = vsel %vm949, %v1668, %v1618
        %v1690 = vsel %vm949, %v1670, %v1620
        %v1692 = vsel %vm949, %v1672, %v1622
        %v1694 = vsel %vm949, %v1674, %v1624
        %v1696 = vsel %vm949, %v1676, %v1626
        %v1698 = vsel %vm949, %v1678, %v1628
        %v1700 = vsel %vm949, %v1680, %v1630
        %v1711 = vunpack.c.l.b16 %v1682
        %v1712 = vunpack.c.h.b16 %v1682
        %v1713 = vunpack.c.l.b16 %v1684
        %v1714 = vunpack.c.h.b16 %v1684
        %v1715 = vunpack.c.l.b16 %v1686
        %v1716 = vunpack.c.h.b16 %v1686
        %v1717 = vunpack.c.l.b16 %v1688
        %v1718 = vunpack.c.h.b16 %v1688
        %v1719 = vunpack.c.l.b16 %v1690
        %v1720 = vunpack.c.h.b16 %v1690
        %v1721 = vunpack.c.l.b16 %v1692
        %v1722 = vunpack.c.h.b16 %v1692
        %v1723 = vunpack.c.l.b16 %v1694
        %v1724 = vunpack.c.h.b16 %v1694
        %v1725 = vunpack.c.l.b16 %v1696
        %v1726 = vunpack.c.h.b16 %v1696
        %v1727 = vunpack.c.l.b16 %v1698
        %v1728 = vunpack.c.h.b16 %v1698
        %v1729 = vunpack.c.l.b16 %v1700
        %v1730 = vpack.c.b16 %v1711, %v1711
        %v1731 = vpack.c.b16 %v1712, %v1712
        %v1732 = vpack.c.b16 %v1713, %v1713
        %v1733 = vpack.c.b16 %v1714, %v1714
        %v1734 = vpack.c.b16 %v1715, %v1715
        %v1735 = vpack.c.b16 %v1716, %v1716
        %v1736 = vpack.c.b16 %v1717, %v1717
        %v1737 = vpack.c.b16 %v1718, %v1718
        %v1738 = vpack.c.b16 %v1719, %v1719
        %v1739 = vpack.c.b16 %v1720, %v1720
        %v1740 = vpack.c.b16 %v1721, %v1721
        %v1741 = vpack.c.b16 %v1722, %v1722
        %v1742 = vpack.c.b16 %v1723, %v1723
        %v1743 = vpack.c.b16 %v1724, %v1724
        %v1744 = vpack.c.b16 %v1725, %v1725
        %v1745 = vpack.c.b16 %v1726, %v1726
        %v1746 = vpack.c.b16 %v1727, %v1727
        %v1747 = vpack.c.b16 %v1728, %v1728
        %v1748 = vpack.c.b16 %v1729, %v1729
        %1768 = vst [vmem:[#allocation4 + $0x8] sm:$0xf] %v1730
        %1769 = vst [vmem:[#allocation4 + $0x2c] sm:$0xf] %v1731
        %1770 = vst [vmem:[#allocation4 + $0x50] sm:$0xf] %v1732
        %1771 = vst [vmem:[#allocation4 + $0x74] sm:$0xf] %v1733
        %1772 = vst [vmem:[#allocation4 + $0x98] sm:$0xf] %v1734
        %1773 = vst [vmem:[#allocation4 + $0xbc] sm:$0xf] %v1735
        %1774 = vst [vmem:[#allocation4 + $0xe0] sm:$0xf] %v1736
        %1775 = vst [vmem:[#allocation4 + $0x104] sm:$0xf] %v1737
        %1776 = vst [vmem:[#allocation4 + $0x128] sm:$0xf] %v1738
        %1777 = vst [vmem:[#allocation4 + $0x14c] sm:$0xf] %v1739
        %1778 = vst [vmem:[#allocation4 + $0x170] sm:$0xf] %v1740
        %1779 = vst [vmem:[#allocation4 + $0x194] sm:$0xf] %v1741
        %1780 = vst [vmem:[#allocation4 + $0x1b8] sm:$0xf] %v1742
        %1781 = vst [vmem:[#allocation4 + $0x1dc] sm:$0xf] %v1743
        %1782 = vst [vmem:[#allocation4 + $0x200] sm:$0xf] %v1744
        %1783 = vst [vmem:[#allocation4 + $0x224] sm:$0xf] %v1745
        %1784 = vst [vmem:[#allocation4 + $0x248] sm:$0xf] %v1746
        %1785 = vst [vmem:[#allocation4 + $0x26c] sm:$0xf] %v1747
        %v1786 = vld [vmem:[#allocation4 + $0x290] sm:$0x1]
        %v1787 = vsel %vm1057, %v1748, %v1786
        %1788 = vst [vmem:[#allocation4 + $0x290] sm:$0x1] %v1787
        %v1789 = vld [vmem:[#allocation2 + $0x1e] sm:$0xff]
        %v1790 = vld [vmem:[#allocation2 + $0x26] sm:$0xff]
        %v1791 = vld [vmem:[#allocation2 + $0x2e] sm:$0xff]
        %v1792 = vld [vmem:[#allocation2 + $0x36] sm:$0xff]
        %v1793 = vld [vmem:[#allocation2 + $0x3e] sm:$0xff]
        %v1794 = vld [vmem:[#allocation2 + $0x46] sm:$0xff]
        %v1795 = vld [vmem:[#allocation2 + $0x4e] sm:$0xff]
        %v1796 = vld [vmem:[#allocation2 + $0x56] sm:$0xff]
        %v1797 = vld [vmem:[#allocation2 + $0x5e] sm:$0xff]
        %v1798 = vld [vmem:[#allocation2 + $0x66] sm:$0xff]
        %v1799 = vld [vmem:[#allocation2 + $0x6e] sm:$0xff]
        %v1800 = vld [vmem:[#allocation2 + $0x76] sm:$0xff]
        %v1801 = vld [vmem:[#allocation2 + $0x7e] sm:$0xff]
        %v1802 = vld [vmem:[#allocation2 + $0x86] sm:$0xff]
        %v1803 = vld [vmem:[#allocation2 + $0x8e] sm:$0xff]
        %v1804 = vld [vmem:[#allocation2 + $0x96] sm:$0xff]
        %v1805 = vld [vmem:[#allocation2 + $0x9e] sm:$0xff]
        %v1806 = vld [vmem:[#allocation2 + $0xa6] sm:$0xff]
        %v1807 = vld [vmem:[#allocation2 + $0xae] sm:$0x1]
        %v1808 = vpack.c.bf16 %v1790, %v1789
        %v1809 = vpack.c.bf16 %v1792, %v1791
        %v1810 = vpack.c.bf16 %v1794, %v1793
        %v1811 = vpack.c.bf16 %v1796, %v1795
        %v1812 = vpack.c.bf16 %v1798, %v1797
        %v1813 = vpack.c.bf16 %v1800, %v1799
        %v1814 = vpack.c.bf16 %v1802, %v1801
        %v1815 = vpack.c.bf16 %v1804, %v1803
        %v1816 = vpack.c.bf16 %v1806, %v1805
        %v1817 = vpack.c.bf16 %v1807, %v1807
        %v1818 = vld [vmem:[#allocation2 + $0x1f] sm:$0xff]
        %v1819 = vld [vmem:[#allocation2 + $0x27] sm:$0xff]
        %v1820 = vld [vmem:[#allocation2 + $0x2f] sm:$0xff]
        %v1821 = vld [vmem:[#allocation2 + $0x37] sm:$0xff]
        %v1822 = vld [vmem:[#allocation2 + $0x3f] sm:$0xff]
        %v1823 = vld [vmem:[#allocation2 + $0x47] sm:$0xff]
        %v1824 = vld [vmem:[#allocation2 + $0x4f] sm:$0xff]
        %v1825 = vld [vmem:[#allocation2 + $0x57] sm:$0xff]
        %v1826 = vld [vmem:[#allocation2 + $0x5f] sm:$0xff]
        %v1827 = vld [vmem:[#allocation2 + $0x67] sm:$0xff]
        %v1828 = vld [vmem:[#allocation2 + $0x6f] sm:$0xff]
        %v1829 = vld [vmem:[#allocation2 + $0x77] sm:$0xff]
        %v1830 = vld [vmem:[#allocation2 + $0x7f] sm:$0xff]
        %v1831 = vld [vmem:[#allocation2 + $0x87] sm:$0xff]
        %v1832 = vld [vmem:[#allocation2 + $0x8f] sm:$0xff]
        %v1833 = vld [vmem:[#allocation2 + $0x97] sm:$0xff]
        %v1834 = vld [vmem:[#allocation2 + $0x9f] sm:$0xff]
        %v1835 = vld [vmem:[#allocation2 + $0xa7] sm:$0xff]
        %v1836 = vld [vmem:[#allocation2 + $0xaf] sm:$0x1]
        %v1837 = vpack.c.bf16 %v1819, %v1818
        %v1838 = vpack.c.bf16 %v1821, %v1820
        %v1839 = vpack.c.bf16 %v1823, %v1822
        %v1840 = vpack.c.bf16 %v1825, %v1824
        %v1841 = vpack.c.bf16 %v1827, %v1826
        %v1842 = vpack.c.bf16 %v1829, %v1828
        %v1843 = vpack.c.bf16 %v1831, %v1830
        %v1844 = vpack.c.bf16 %v1833, %v1832
        %v1845 = vpack.c.bf16 %v1835, %v1834
        %v1846 = vpack.c.bf16 %v1836, %v1836
        %v1847 = vld [vmem:[#allocation2 + $0x20] sm:$0xff]
        %v1848 = vld [vmem:[#allocation2 + $0x28] sm:$0xff]
        %v1849 = vld [vmem:[#allocation2 + $0x30] sm:$0xff]
        %v1850 = vld [vmem:[#allocation2 + $0x38] sm:$0xff]
        %v1851 = vld [vmem:[#allocation2 + $0x40] sm:$0xff]
        %v1852 = vld [vmem:[#allocation2 + $0x48] sm:$0xff]
        %v1853 = vld [vmem:[#allocation2 + $0x50] sm:$0xff]
        %v1854 = vld [vmem:[#allocation2 + $0x58] sm:$0xff]
        %v1855 = vld [vmem:[#allocation2 + $0x60] sm:$0xff]
        %v1856 = vld [vmem:[#allocation2 + $0x68] sm:$0xff]
        %v1857 = vld [vmem:[#allocation2 + $0x70] sm:$0xff]
        %v1858 = vld [vmem:[#allocation2 + $0x78] sm:$0xff]
        %v1859 = vld [vmem:[#allocation2 + $0x80] sm:$0xff]
        %v1860 = vld [vmem:[#allocation2 + $0x88] sm:$0xff]
        %v1861 = vld [vmem:[#allocation2 + $0x90] sm:$0xff]
        %v1862 = vld [vmem:[#allocation2 + $0x98] sm:$0xff]
        %v1863 = vld [vmem:[#allocation2 + $0xa0] sm:$0xff]
        %v1864 = vld [vmem:[#allocation2 + $0xa8] sm:$0xff]
        %v1865 = vld [vmem:[#allocation2 + $0xb0] sm:$0x1]
        %v1866 = vpack.c.bf16 %v1848, %v1847
        %v1867 = vpack.c.bf16 %v1850, %v1849
        %v1868 = vpack.c.bf16 %v1852, %v1851
        %v1869 = vpack.c.bf16 %v1854, %v1853
        %v1870 = vpack.c.bf16 %v1856, %v1855
        %v1871 = vpack.c.bf16 %v1858, %v1857
        %v1872 = vpack.c.bf16 %v1860, %v1859
        %v1873 = vpack.c.bf16 %v1862, %v1861
        %v1874 = vpack.c.bf16 %v1864, %v1863
        %v1875 = vpack.c.bf16 %v1865, %v1865
        %v1876 = vld [vmem:[#allocation2 + $0x21] sm:$0xff]
        %v1877 = vld [vmem:[#allocation2 + $0x29] sm:$0xff]
        %v1878 = vld [vmem:[#allocation2 + $0x31] sm:$0xff]
        %v1879 = vld [vmem:[#allocation2 + $0x39] sm:$0xff]
        %v1880 = vld [vmem:[#allocation2 + $0x41] sm:$0xff]
        %v1881 = vld [vmem:[#allocation2 + $0x49] sm:$0xff]
        %v1882 = vld [vmem:[#allocation2 + $0x51] sm:$0xff]
        %v1883 = vld [vmem:[#allocation2 + $0x59] sm:$0xff]
        %v1884 = vld [vmem:[#allocation2 + $0x61] sm:$0xff]
        %v1885 = vld [vmem:[#allocation2 + $0x69] sm:$0xff]
        %v1886 = vld [vmem:[#allocation2 + $0x71] sm:$0xff]
        %v1887 = vld [vmem:[#allocation2 + $0x79] sm:$0xff]
        %v1888 = vld [vmem:[#allocation2 + $0x81] sm:$0xff]
        %v1889 = vld [vmem:[#allocation2 + $0x89] sm:$0xff]
        %v1890 = vld [vmem:[#allocation2 + $0x91] sm:$0xff]
        %v1891 = vld [vmem:[#allocation2 + $0x99] sm:$0xff]
        %v1892 = vld [vmem:[#allocation2 + $0xa1] sm:$0xff]
        %v1893 = vld [vmem:[#allocation2 + $0xa9] sm:$0xff]
        %v1894 = vld [vmem:[#allocation2 + $0xb1] sm:$0x1]
        %v1895 = vpack.c.bf16 %v1877, %v1876
        %v1896 = vpack.c.bf16 %v1879, %v1878
        %v1897 = vpack.c.bf16 %v1881, %v1880
        %v1898 = vpack.c.bf16 %v1883, %v1882
        %v1899 = vpack.c.bf16 %v1885, %v1884
        %v1900 = vpack.c.bf16 %v1887, %v1886
        %v1901 = vpack.c.bf16 %v1889, %v1888
        %v1902 = vpack.c.bf16 %v1891, %v1890
        %v1903 = vpack.c.bf16 %v1893, %v1892
        %v1904 = vpack.c.bf16 %v1894, %v1894
        %1915 = vrot.lane.b32.xlu0 %v1837, 32
        %v1916 = vpop.permute.xlu0 %1915
        %1917 = vrot.lane.b32.xlu0 %v1838, 32
        %v1918 = vpop.permute.xlu0 %1917
        %1919 = vrot.lane.b32.xlu0 %v1839, 32
        %v1920 = vpop.permute.xlu0 %1919
        %1921 = vrot.lane.b32.xlu0 %v1840, 32
        %v1922 = vpop.permute.xlu0 %1921
        %1923 = vrot.lane.b32.xlu0 %v1841, 32
        %v1924 = vpop.permute.xlu0 %1923
        %1925 = vrot.lane.b32.xlu0 %v1842, 32
        %v1926 = vpop.permute.xlu0 %1925
        %1927 = vrot.lane.b32.xlu0 %v1843, 32
        %v1928 = vpop.permute.xlu0 %1927
        %1929 = vrot.lane.b32.xlu0 %v1844, 32
        %v1930 = vpop.permute.xlu0 %1929
        %1931 = vrot.lane.b32.xlu0 %v1845, 32
        %v1932 = vpop.permute.xlu0 %1931
        %1933 = vrot.lane.b32.xlu0 %v1846, 32
        %v1934 = vpop.permute.xlu0 %1933
        %1945 = vrot.lane.b32.xlu0 %v1866, 64
        %v1946 = vpop.permute.xlu0 %1945
        %1947 = vrot.lane.b32.xlu0 %v1867, 64
        %v1948 = vpop.permute.xlu0 %1947
        %1949 = vrot.lane.b32.xlu0 %v1868, 64
        %v1950 = vpop.permute.xlu0 %1949
        %1951 = vrot.lane.b32.xlu0 %v1869, 64
        %v1952 = vpop.permute.xlu0 %1951
        %1953 = vrot.lane.b32.xlu0 %v1870, 64
        %v1954 = vpop.permute.xlu0 %1953
        %1955 = vrot.lane.b32.xlu0 %v1871, 64
        %v1956 = vpop.permute.xlu0 %1955
        %1957 = vrot.lane.b32.xlu0 %v1872, 64
        %v1958 = vpop.permute.xlu0 %1957
        %1959 = vrot.lane.b32.xlu0 %v1873, 64
        %v1960 = vpop.permute.xlu0 %1959
        %1961 = vrot.lane.b32.xlu0 %v1874, 64
        %v1962 = vpop.permute.xlu0 %1961
        %1963 = vrot.lane.b32.xlu0 %v1875, 64
        %v1964 = vpop.permute.xlu0 %1963
        %1975 = vrot.lane.b32.xlu0 %v1895, 96
        %v1976 = vpop.permute.xlu0 %1975
        %1977 = vrot.lane.b32.xlu0 %v1896, 96
        %v1978 = vpop.permute.xlu0 %1977
        %1979 = vrot.lane.b32.xlu0 %v1897, 96
        %v1980 = vpop.permute.xlu0 %1979
        %1981 = vrot.lane.b32.xlu0 %v1898, 96
        %v1982 = vpop.permute.xlu0 %1981
        %1983 = vrot.lane.b32.xlu0 %v1899, 96
        %v1984 = vpop.permute.xlu0 %1983
        %1985 = vrot.lane.b32.xlu0 %v1900, 96
        %v1986 = vpop.permute.xlu0 %1985
        %1987 = vrot.lane.b32.xlu0 %v1901, 96
        %v1988 = vpop.permute.xlu0 %1987
        %1989 = vrot.lane.b32.xlu0 %v1902, 96
        %v1990 = vpop.permute.xlu0 %1989
        %1991 = vrot.lane.b32.xlu0 %v1903, 96
        %v1992 = vpop.permute.xlu0 %1991
        %1993 = vrot.lane.b32.xlu0 %v1904, 96
        %v1994 = vpop.permute.xlu0 %1993
        %v1997 = vsel %vm277, %v1808, %v1916
        %v2000 = vsel %vm277, %v1809, %v1918
        %v2003 = vsel %vm277, %v1810, %v1920
        %v2006 = vsel %vm277, %v1811, %v1922
        %v2009 = vsel %vm277, %v1812, %v1924
        %v2012 = vsel %vm277, %v1813, %v1926
        %v2015 = vsel %vm277, %v1814, %v1928
        %v2018 = vsel %vm277, %v1815, %v1930
        %v2021 = vsel %vm277, %v1816, %v1932
        %v2024 = vsel %vm277, %v1817, %v1934
        %v2026 = vsel %vm928, %v1997, %v1946
        %v2028 = vsel %vm928, %v2000, %v1948
        %v2030 = vsel %vm928, %v2003, %v1950
        %v2032 = vsel %vm928, %v2006, %v1952
        %v2034 = vsel %vm928, %v2009, %v1954
        %v2036 = vsel %vm928, %v2012, %v1956
        %v2038 = vsel %vm928, %v2015, %v1958
        %v2040 = vsel %vm928, %v2018, %v1960
        %v2042 = vsel %vm928, %v2021, %v1962
        %v2044 = vsel %vm928, %v2024, %v1964
        %v2046 = vsel %vm949, %v2026, %v1976
        %v2048 = vsel %vm949, %v2028, %v1978
        %v2050 = vsel %vm949, %v2030, %v1980
        %v2052 = vsel %vm949, %v2032, %v1982
        %v2054 = vsel %vm949, %v2034, %v1984
        %v2056 = vsel %vm949, %v2036, %v1986
        %v2058 = vsel %vm949, %v2038, %v1988
        %v2060 = vsel %vm949, %v2040, %v1990
        %v2062 = vsel %vm949, %v2042, %v1992
        %v2064 = vsel %vm949, %v2044, %v1994
        %v2075 = vunpack.c.l.b16 %v2046
        %v2076 = vunpack.c.h.b16 %v2046
        %v2077 = vunpack.c.l.b16 %v2048
        %v2078 = vunpack.c.h.b16 %v2048
        %v2079 = vunpack.c.l.b16 %v2050
        %v2080 = vunpack.c.h.b16 %v2050
        %v2081 = vunpack.c.l.b16 %v2052
        %v2082 = vunpack.c.h.b16 %v2052
        %v2083 = vunpack.c.l.b16 %v2054
        %v2084 = vunpack.c.h.b16 %v2054
        %v2085 = vunpack.c.l.b16 %v2056
        %v2086 = vunpack.c.h.b16 %v2056
        %v2087 = vunpack.c.l.b16 %v2058
        %v2088 = vunpack.c.h.b16 %v2058
        %v2089 = vunpack.c.l.b16 %v2060
        %v2090 = vunpack.c.h.b16 %v2060
        %v2091 = vunpack.c.l.b16 %v2062
        %v2092 = vunpack.c.h.b16 %v2062
        %v2093 = vunpack.c.l.b16 %v2064
        %v2094 = vpack.c.b16 %v2075, %v2075
        %v2095 = vpack.c.b16 %v2076, %v2076
        %v2096 = vpack.c.b16 %v2077, %v2077
        %v2097 = vpack.c.b16 %v2078, %v2078
        %v2098 = vpack.c.b16 %v2079, %v2079
        %v2099 = vpack.c.b16 %v2080, %v2080
        %v2100 = vpack.c.b16 %v2081, %v2081
        %v2101 = vpack.c.b16 %v2082, %v2082
        %v2102 = vpack.c.b16 %v2083, %v2083
        %v2103 = vpack.c.b16 %v2084, %v2084
        %v2104 = vpack.c.b16 %v2085, %v2085
        %v2105 = vpack.c.b16 %v2086, %v2086
        %v2106 = vpack.c.b16 %v2087, %v2087
        %v2107 = vpack.c.b16 %v2088, %v2088
        %v2108 = vpack.c.b16 %v2089, %v2089
        %v2109 = vpack.c.b16 %v2090, %v2090
        %v2110 = vpack.c.b16 %v2091, %v2091
        %v2111 = vpack.c.b16 %v2092, %v2092
        %v2112 = vpack.c.b16 %v2093, %v2093
        %2132 = vst [vmem:[#allocation4 + $0xc] sm:$0xf] %v2094
        %2133 = vst [vmem:[#allocation4 + $0x30] sm:$0xf] %v2095
        %2134 = vst [vmem:[#allocation4 + $0x54] sm:$0xf] %v2096
        %2135 = vst [vmem:[#allocation4 + $0x78] sm:$0xf] %v2097
        %2136 = vst [vmem:[#allocation4 + $0x9c] sm:$0xf] %v2098
        %2137 = vst [vmem:[#allocation4 + $0xc0] sm:$0xf] %v2099
        %2138 = vst [vmem:[#allocation4 + $0xe4] sm:$0xf] %v2100
        %2139 = vst [vmem:[#allocation4 + $0x108] sm:$0xf] %v2101
        %2140 = vst [vmem:[#allocation4 + $0x12c] sm:$0xf] %v2102
        %2141 = vst [vmem:[#allocation4 + $0x150] sm:$0xf] %v2103
        %2142 = vst [vmem:[#allocation4 + $0x174] sm:$0xf] %v2104
        %2143 = vst [vmem:[#allocation4 + $0x198] sm:$0xf] %v2105
        %2144 = vst [vmem:[#allocation4 + $0x1bc] sm:$0xf] %v2106
        %2145 = vst [vmem:[#allocation4 + $0x1e0] sm:$0xf] %v2107
        %2146 = vst [vmem:[#allocation4 + $0x204] sm:$0xf] %v2108
        %2147 = vst [vmem:[#allocation4 + $0x228] sm:$0xf] %v2109
        %2148 = vst [vmem:[#allocation4 + $0x24c] sm:$0xf] %v2110
        %2149 = vst [vmem:[#allocation4 + $0x270] sm:$0xf] %v2111
        %v2150 = vld [vmem:[#allocation4 + $0x294] sm:$0x1]
        %v2151 = vsel %vm1057, %v2112, %v2150
        %2152 = vst [vmem:[#allocation4 + $0x294] sm:$0x1] %v2151
        %v2153 = vld [vmem:[#allocation2 + $0x22] sm:$0xff]
        %v2154 = vld [vmem:[#allocation2 + $0x2a] sm:$0xff]
        %v2155 = vld [vmem:[#allocation2 + $0x32] sm:$0xff]
        %v2156 = vld [vmem:[#allocation2 + $0x3a] sm:$0xff]
        %v2157 = vld [vmem:[#allocation2 + $0x42] sm:$0xff]
        %v2158 = vld [vmem:[#allocation2 + $0x4a] sm:$0xff]
        %v2159 = vld [vmem:[#allocation2 + $0x52] sm:$0xff]
        %v2160 = vld [vmem:[#allocation2 + $0x5a] sm:$0xff]
        %v2161 = vld [vmem:[#allocation2 + $0x62] sm:$0xff]
        %v2162 = vld [vmem:[#allocation2 + $0x6a] sm:$0xff]
        %v2163 = vld [vmem:[#allocation2 + $0x72] sm:$0xff]
        %v2164 = vld [vmem:[#allocation2 + $0x7a] sm:$0xff]
        %v2165 = vld [vmem:[#allocation2 + $0x82] sm:$0xff]
        %v2166 = vld [vmem:[#allocation2 + $0x8a] sm:$0xff]
        %v2167 = vld [vmem:[#allocation2 + $0x92] sm:$0xff]
        %v2168 = vld [vmem:[#allocation2 + $0x9a] sm:$0xff]
        %v2169 = vld [vmem:[#allocation2 + $0xa2] sm:$0xff]
        %v2170 = vld [vmem:[#allocation2 + $0xaa] sm:$0xff]
        %v2171 = vld [vmem:[#allocation2 + $0xb2] sm:$0x1]
        %v2172 = vpack.c.bf16 %v2154, %v2153
        %v2173 = vpack.c.bf16 %v2156, %v2155
        %v2174 = vpack.c.bf16 %v2158, %v2157
        %v2175 = vpack.c.bf16 %v2160, %v2159
        %v2176 = vpack.c.bf16 %v2162, %v2161
        %v2177 = vpack.c.bf16 %v2164, %v2163
        %v2178 = vpack.c.bf16 %v2166, %v2165
        %v2179 = vpack.c.bf16 %v2168, %v2167
        %v2180 = vpack.c.bf16 %v2170, %v2169
        %v2181 = vpack.c.bf16 %v2171, %v2171
        %v2182 = vld [vmem:[#allocation2 + $0x23] sm:$0xff]
        %v2183 = vld [vmem:[#allocation2 + $0x2b] sm:$0xff]
        %v2184 = vld [vmem:[#allocation2 + $0x33] sm:$0xff]
        %v2185 = vld [vmem:[#allocation2 + $0x3b] sm:$0xff]
        %v2186 = vld [vmem:[#allocation2 + $0x43] sm:$0xff]
        %v2187 = vld [vmem:[#allocation2 + $0x4b] sm:$0xff]
        %v2188 = vld [vmem:[#allocation2 + $0x53] sm:$0xff]
        %v2189 = vld [vmem:[#allocation2 + $0x5b] sm:$0xff]
        %v2190 = vld [vmem:[#allocation2 + $0x63] sm:$0xff]
        %v2191 = vld [vmem:[#allocation2 + $0x6b] sm:$0xff]
        %v2192 = vld [vmem:[#allocation2 + $0x73] sm:$0xff]
        %v2193 = vld [vmem:[#allocation2 + $0x7b] sm:$0xff]
        %v2194 = vld [vmem:[#allocation2 + $0x83] sm:$0xff]
        %v2195 = vld [vmem:[#allocation2 + $0x8b] sm:$0xff]
        %v2196 = vld [vmem:[#allocation2 + $0x93] sm:$0xff]
        %v2197 = vld [vmem:[#allocation2 + $0x9b] sm:$0xff]
        %v2198 = vld [vmem:[#allocation2 + $0xa3] sm:$0xff]
        %v2199 = vld [vmem:[#allocation2 + $0xab] sm:$0xff]
        %v2200 = vld [vmem:[#allocation2 + $0xb3] sm:$0x1]
        %v2201 = vpack.c.bf16 %v2183, %v2182
        %v2202 = vpack.c.bf16 %v2185, %v2184
        %v2203 = vpack.c.bf16 %v2187, %v2186
        %v2204 = vpack.c.bf16 %v2189, %v2188
        %v2205 = vpack.c.bf16 %v2191, %v2190
        %v2206 = vpack.c.bf16 %v2193, %v2192
        %v2207 = vpack.c.bf16 %v2195, %v2194
        %v2208 = vpack.c.bf16 %v2197, %v2196
        %v2209 = vpack.c.bf16 %v2199, %v2198
        %v2210 = vpack.c.bf16 %v2200, %v2200
        %v2211 = vld [vmem:[#allocation2 + $0x2d] sm:$0xff]
        %v2212 = vld [vmem:[#allocation2 + $0x35] sm:$0xff]
        %v2213 = vld [vmem:[#allocation2 + $0x3d] sm:$0xff]
        %v2214 = vld [vmem:[#allocation2 + $0x45] sm:$0xff]
        %v2215 = vld [vmem:[#allocation2 + $0x4d] sm:$0xff]
        %v2216 = vld [vmem:[#allocation2 + $0x55] sm:$0xff]
        %v2217 = vld [vmem:[#allocation2 + $0x5d] sm:$0xff]
        %v2218 = vld [vmem:[#allocation2 + $0x65] sm:$0xff]
        %v2219 = vld [vmem:[#allocation2 + $0x6d] sm:$0xff]
        %v2220 = vld [vmem:[#allocation2 + $0x75] sm:$0xff]
        %v2221 = vld [vmem:[#allocation2 + $0x7d] sm:$0xff]
        %v2222 = vld [vmem:[#allocation2 + $0x85] sm:$0xff]
        %v2223 = vld [vmem:[#allocation2 + $0x8d] sm:$0xff]
        %v2224 = vld [vmem:[#allocation2 + $0x95] sm:$0xff]
        %v2225 = vld [vmem:[#allocation2 + $0x9d] sm:$0xff]
        %v2226 = vld [vmem:[#allocation2 + $0xa5] sm:$0xff]
        %v2227 = vld [vmem:[#allocation2 + $0xad] sm:$0xff]
        %v2228 = vld [vmem:[#allocation2 + $0xb5] sm:$0xff]
        %v2229 = vld [vmem:[#allocation2 + $0xbd] sm:$0x1]
        %v2230 = vpack.c.bf16 %v2212, %v2211
        %v2231 = vpack.c.bf16 %v2214, %v2213
        %v2232 = vpack.c.bf16 %v2216, %v2215
        %v2233 = vpack.c.bf16 %v2218, %v2217
        %v2234 = vpack.c.bf16 %v2220, %v2219
        %v2235 = vpack.c.bf16 %v2222, %v2221
        %v2236 = vpack.c.bf16 %v2224, %v2223
        %v2237 = vpack.c.bf16 %v2226, %v2225
        %v2238 = vpack.c.bf16 %v2228, %v2227
        %v2239 = vpack.c.bf16 %v2229, %v2229
        %v2240 = vld [vmem:[#allocation2 + $0x2e] sm:$0xff]
        %v2241 = vld [vmem:[#allocation2 + $0x36] sm:$0xff]
        %v2242 = vld [vmem:[#allocation2 + $0x3e] sm:$0xff]
        %v2243 = vld [vmem:[#allocation2 + $0x46] sm:$0xff]
        %v2244 = vld [vmem:[#allocation2 + $0x4e] sm:$0xff]
        %v2245 = vld [vmem:[#allocation2 + $0x56] sm:$0xff]
        %v2246 = vld [vmem:[#allocation2 + $0x5e] sm:$0xff]
        %v2247 = vld [vmem:[#allocation2 + $0x66] sm:$0xff]
        %v2248 = vld [vmem:[#allocation2 + $0x6e] sm:$0xff]
        %v2249 = vld [vmem:[#allocation2 + $0x76] sm:$0xff]
        %v2250 = vld [vmem:[#allocation2 + $0x7e] sm:$0xff]
        %v2251 = vld [vmem:[#allocation2 + $0x86] sm:$0xff]
        %v2252 = vld [vmem:[#allocation2 + $0x8e] sm:$0xff]
        %v2253 = vld [vmem:[#allocation2 + $0x96] sm:$0xff]
        %v2254 = vld [vmem:[#allocation2 + $0x9e] sm:$0xff]
        %v2255 = vld [vmem:[#allocation2 + $0xa6] sm:$0xff]
        %v2256 = vld [vmem:[#allocation2 + $0xae] sm:$0xff]
        %v2257 = vld [vmem:[#allocation2 + $0xb6] sm:$0xff]
        %v2258 = vld [vmem:[#allocation2 + $0xbe] sm:$0x1]
        %v2259 = vpack.c.bf16 %v2241, %v2240
        %v2260 = vpack.c.bf16 %v2243, %v2242
        %v2261 = vpack.c.bf16 %v2245, %v2244
        %v2262 = vpack.c.bf16 %v2247, %v2246
        %v2263 = vpack.c.bf16 %v2249, %v2248
        %v2264 = vpack.c.bf16 %v2251, %v2250
        %v2265 = vpack.c.bf16 %v2253, %v2252
        %v2266 = vpack.c.bf16 %v2255, %v2254
        %v2267 = vpack.c.bf16 %v2257, %v2256
        %v2268 = vpack.c.bf16 %v2258, %v2258
        %2279 = vrot.lane.b32.xlu0 %v2201, 32
        %v2280 = vpop.permute.xlu0 %2279
        %2281 = vrot.lane.b32.xlu0 %v2202, 32
        %v2282 = vpop.permute.xlu0 %2281
        %2283 = vrot.lane.b32.xlu0 %v2203, 32
        %v2284 = vpop.permute.xlu0 %2283
        %2285 = vrot.lane.b32.xlu0 %v2204, 32
        %v2286 = vpop.permute.xlu0 %2285
        %2287 = vrot.lane.b32.xlu0 %v2205, 32
        %v2288 = vpop.permute.xlu0 %2287
        %2289 = vrot.lane.b32.xlu0 %v2206, 32
        %v2290 = vpop.permute.xlu0 %2289
        %2291 = vrot.lane.b32.xlu0 %v2207, 32
        %v2292 = vpop.permute.xlu0 %2291
        %2293 = vrot.lane.b32.xlu0 %v2208, 32
        %v2294 = vpop.permute.xlu0 %2293
        %2295 = vrot.lane.b32.xlu0 %v2209, 32
        %v2296 = vpop.permute.xlu0 %2295
        %2297 = vrot.lane.b32.xlu0 %v2210, 32
        %v2298 = vpop.permute.xlu0 %2297
        %2309 = vrot.lane.b32.xlu0 %v2230, 64
        %v2310 = vpop.permute.xlu0 %2309
        %2311 = vrot.lane.b32.xlu0 %v2231, 64
        %v2312 = vpop.permute.xlu0 %2311
        %2313 = vrot.lane.b32.xlu0 %v2232, 64
        %v2314 = vpop.permute.xlu0 %2313
        %2315 = vrot.lane.b32.xlu0 %v2233, 64
        %v2316 = vpop.permute.xlu0 %2315
        %2317 = vrot.lane.b32.xlu0 %v2234, 64
        %v2318 = vpop.permute.xlu0 %2317
        %2319 = vrot.lane.b32.xlu0 %v2235, 64
        %v2320 = vpop.permute.xlu0 %2319
        %2321 = vrot.lane.b32.xlu0 %v2236, 64
        %v2322 = vpop.permute.xlu0 %2321
        %2323 = vrot.lane.b32.xlu0 %v2237, 64
        %v2324 = vpop.permute.xlu0 %2323
        %2325 = vrot.lane.b32.xlu0 %v2238, 64
        %v2326 = vpop.permute.xlu0 %2325
        %2327 = vrot.lane.b32.xlu0 %v2239, 64
        %v2328 = vpop.permute.xlu0 %2327
        %2339 = vrot.lane.b32.xlu0 %v2259, 96
        %v2340 = vpop.permute.xlu0 %2339
        %2341 = vrot.lane.b32.xlu0 %v2260, 96
        %v2342 = vpop.permute.xlu0 %2341
        %2343 = vrot.lane.b32.xlu0 %v2261, 96
        %v2344 = vpop.permute.xlu0 %2343
        %2345 = vrot.lane.b32.xlu0 %v2262, 96
        %v2346 = vpop.permute.xlu0 %2345
        %2347 = vrot.lane.b32.xlu0 %v2263, 96
        %v2348 = vpop.permute.xlu0 %2347
        %2349 = vrot.lane.b32.xlu0 %v2264, 96
        %v2350 = vpop.permute.xlu0 %2349
        %2351 = vrot.lane.b32.xlu0 %v2265, 96
        %v2352 = vpop.permute.xlu0 %2351
        %2353 = vrot.lane.b32.xlu0 %v2266, 96
        %v2354 = vpop.permute.xlu0 %2353
        %2355 = vrot.lane.b32.xlu0 %v2267, 96
        %v2356 = vpop.permute.xlu0 %2355
        %2357 = vrot.lane.b32.xlu0 %v2268, 96
        %v2358 = vpop.permute.xlu0 %2357
        %v2361 = vsel %vm277, %v2172, %v2280
        %v2364 = vsel %vm277, %v2173, %v2282
        %v2367 = vsel %vm277, %v2174, %v2284
        %v2370 = vsel %vm277, %v2175, %v2286
        %v2373 = vsel %vm277, %v2176, %v2288
        %v2376 = vsel %vm277, %v2177, %v2290
        %v2379 = vsel %vm277, %v2178, %v2292
        %v2382 = vsel %vm277, %v2179, %v2294
        %v2385 = vsel %vm277, %v2180, %v2296
        %v2388 = vsel %vm277, %v2181, %v2298
        %v2390 = vsel %vm928, %v2361, %v2310
        %v2392 = vsel %vm928, %v2364, %v2312
        %v2394 = vsel %vm928, %v2367, %v2314
        %v2396 = vsel %vm928, %v2370, %v2316
        %v2398 = vsel %vm928, %v2373, %v2318
        %v2400 = vsel %vm928, %v2376, %v2320
        %v2402 = vsel %vm928, %v2379, %v2322
        %v2404 = vsel %vm928, %v2382, %v2324
        %v2406 = vsel %vm928, %v2385, %v2326
        %v2408 = vsel %vm928, %v2388, %v2328
        %v2410 = vsel %vm949, %v2390, %v2340
        %v2412 = vsel %vm949, %v2392, %v2342
        %v2414 = vsel %vm949, %v2394, %v2344
        %v2416 = vsel %vm949, %v2396, %v2346
        %v2418 = vsel %vm949, %v2398, %v2348
        %v2420 = vsel %vm949, %v2400, %v2350
        %v2422 = vsel %vm949, %v2402, %v2352
        %v2424 = vsel %vm949, %v2404, %v2354
        %v2426 = vsel %vm949, %v2406, %v2356
        %v2428 = vsel %vm949, %v2408, %v2358
        %v2439 = vunpack.c.l.b16 %v2410
        %v2440 = vunpack.c.h.b16 %v2410
        %v2441 = vunpack.c.l.b16 %v2412
        %v2442 = vunpack.c.h.b16 %v2412
        %v2443 = vunpack.c.l.b16 %v2414
        %v2444 = vunpack.c.h.b16 %v2414
        %v2445 = vunpack.c.l.b16 %v2416
        %v2446 = vunpack.c.h.b16 %v2416
        %v2447 = vunpack.c.l.b16 %v2418
        %v2448 = vunpack.c.h.b16 %v2418
        %v2449 = vunpack.c.l.b16 %v2420
        %v2450 = vunpack.c.h.b16 %v2420
        %v2451 = vunpack.c.l.b16 %v2422
        %v2452 = vunpack.c.h.b16 %v2422
        %v2453 = vunpack.c.l.b16 %v2424
        %v2454 = vunpack.c.h.b16 %v2424
        %v2455 = vunpack.c.l.b16 %v2426
        %v2456 = vunpack.c.h.b16 %v2426
        %v2457 = vunpack.c.l.b16 %v2428
        %v2458 = vpack.c.b16 %v2439, %v2439
        %v2459 = vpack.c.b16 %v2440, %v2440
        %v2460 = vpack.c.b16 %v2441, %v2441
        %v2461 = vpack.c.b16 %v2442, %v2442
        %v2462 = vpack.c.b16 %v2443, %v2443
        %v2463 = vpack.c.b16 %v2444, %v2444
        %v2464 = vpack.c.b16 %v2445, %v2445
        %v2465 = vpack.c.b16 %v2446, %v2446
        %v2466 = vpack.c.b16 %v2447, %v2447
        %v2467 = vpack.c.b16 %v2448, %v2448
        %v2468 = vpack.c.b16 %v2449, %v2449
        %v2469 = vpack.c.b16 %v2450, %v2450
        %v2470 = vpack.c.b16 %v2451, %v2451
        %v2471 = vpack.c.b16 %v2452, %v2452
        %v2472 = vpack.c.b16 %v2453, %v2453
        %v2473 = vpack.c.b16 %v2454, %v2454
        %v2474 = vpack.c.b16 %v2455, %v2455
        %v2475 = vpack.c.b16 %v2456, %v2456
        %v2476 = vpack.c.b16 %v2457, %v2457
        %2496 = vst [vmem:[#allocation4 + $0x10] sm:$0xf] %v2458
        %2497 = vst [vmem:[#allocation4 + $0x34] sm:$0xf] %v2459
        %2498 = vst [vmem:[#allocation4 + $0x58] sm:$0xf] %v2460
        %2499 = vst [vmem:[#allocation4 + $0x7c] sm:$0xf] %v2461
        %2500 = vst [vmem:[#allocation4 + $0xa0] sm:$0xf] %v2462
        %2501 = vst [vmem:[#allocation4 + $0xc4] sm:$0xf] %v2463
        %2502 = vst [vmem:[#allocation4 + $0xe8] sm:$0xf] %v2464
        %2503 = vst [vmem:[#allocation4 + $0x10c] sm:$0xf] %v2465
        %2504 = vst [vmem:[#allocation4 + $0x130] sm:$0xf] %v2466
        %2505 = vst [vmem:[#allocation4 + $0x154] sm:$0xf] %v2467
        %2506 = vst [vmem:[#allocation4 + $0x178] sm:$0xf] %v2468
        %2507 = vst [vmem:[#allocation4 + $0x19c] sm:$0xf] %v2469
        %2508 = vst [vmem:[#allocation4 + $0x1c0] sm:$0xf] %v2470
        %2509 = vst [vmem:[#allocation4 + $0x1e4] sm:$0xf] %v2471
        %2510 = vst [vmem:[#allocation4 + $0x208] sm:$0xf] %v2472
        %2511 = vst [vmem:[#allocation4 + $0x22c] sm:$0xf] %v2473
        %2512 = vst [vmem:[#allocation4 + $0x250] sm:$0xf] %v2474
        %2513 = vst [vmem:[#allocation4 + $0x274] sm:$0xf] %v2475
        %v2514 = vld [vmem:[#allocation4 + $0x298] sm:$0x1]
        %v2515 = vsel %vm1057, %v2476, %v2514
        %2516 = vst [vmem:[#allocation4 + $0x298] sm:$0x1] %v2515
        %v2517 = vld [vmem:[#allocation2 + $0x2f] sm:$0xff]
        %v2518 = vld [vmem:[#allocation2 + $0x37] sm:$0xff]
        %v2519 = vld [vmem:[#allocation2 + $0x3f] sm:$0xff]
        %v2520 = vld [vmem:[#allocation2 + $0x47] sm:$0xff]
        %v2521 = vld [vmem:[#allocation2 + $0x4f] sm:$0xff]
        %v2522 = vld [vmem:[#allocation2 + $0x57] sm:$0xff]
        %v2523 = vld [vmem:[#allocation2 + $0x5f] sm:$0xff]
        %v2524 = vld [vmem:[#allocation2 + $0x67] sm:$0xff]
        %v2525 = vld [vmem:[#allocation2 + $0x6f] sm:$0xff]
        %v2526 = vld [vmem:[#allocation2 + $0x77] sm:$0xff]
        %v2527 = vld [vmem:[#allocation2 + $0x7f] sm:$0xff]
        %v2528 = vld [vmem:[#allocation2 + $0x87] sm:$0xff]
        %v2529 = vld [vmem:[#allocation2 + $0x8f] sm:$0xff]
        %v2530 = vld [vmem:[#allocation2 + $0x97] sm:$0xff]
        %v2531 = vld [vmem:[#allocation2 + $0x9f] sm:$0xff]
        %v2532 = vld [vmem:[#allocation2 + $0xa7] sm:$0xff]
        %v2533 = vld [vmem:[#allocation2 + $0xaf] sm:$0xff]
        %v2534 = vld [vmem:[#allocation2 + $0xb7] sm:$0xff]
        %v2535 = vld [vmem:[#allocation2 + $0xbf] sm:$0x1]
        %v2536 = vpack.c.bf16 %v2518, %v2517
        %v2537 = vpack.c.bf16 %v2520, %v2519
        %v2538 = vpack.c.bf16 %v2522, %v2521
        %v2539 = vpack.c.bf16 %v2524, %v2523
        %v2540 = vpack.c.bf16 %v2526, %v2525
        %v2541 = vpack.c.bf16 %v2528, %v2527
        %v2542 = vpack.c.bf16 %v2530, %v2529
        %v2543 = vpack.c.bf16 %v2532, %v2531
        %v2544 = vpack.c.bf16 %v2534, %v2533
        %v2545 = vpack.c.bf16 %v2535, %v2535
        %v2546 = vld [vmem:[#allocation2 + $0x30] sm:$0xff]
        %v2547 = vld [vmem:[#allocation2 + $0x38] sm:$0xff]
        %v2548 = vld [vmem:[#allocation2 + $0x40] sm:$0xff]
        %v2549 = vld [vmem:[#allocation2 + $0x48] sm:$0xff]
        %v2550 = vld [vmem:[#allocation2 + $0x50] sm:$0xff]
        %v2551 = vld [vmem:[#allocation2 + $0x58] sm:$0xff]
        %v2552 = vld [vmem:[#allocation2 + $0x60] sm:$0xff]
        %v2553 = vld [vmem:[#allocation2 + $0x68] sm:$0xff]
        %v2554 = vld [vmem:[#allocation2 + $0x70] sm:$0xff]
        %v2555 = vld [vmem:[#allocation2 + $0x78] sm:$0xff]
        %v2556 = vld [vmem:[#allocation2 + $0x80] sm:$0xff]
        %v2557 = vld [vmem:[#allocation2 + $0x88] sm:$0xff]
        %v2558 = vld [vmem:[#allocation2 + $0x90] sm:$0xff]
        %v2559 = vld [vmem:[#allocation2 + $0x98] sm:$0xff]
        %v2560 = vld [vmem:[#allocation2 + $0xa0] sm:$0xff]
        %v2561 = vld [vmem:[#allocation2 + $0xa8] sm:$0xff]
        %v2562 = vld [vmem:[#allocation2 + $0xb0] sm:$0xff]
        %v2563 = vld [vmem:[#allocation2 + $0xb8] sm:$0xff]
        %v2564 = vld [vmem:[#allocation2 + $0xc0] sm:$0x1]
        %v2565 = vpack.c.bf16 %v2547, %v2546
        %v2566 = vpack.c.bf16 %v2549, %v2548
        %v2567 = vpack.c.bf16 %v2551, %v2550
        %v2568 = vpack.c.bf16 %v2553, %v2552
        %v2569 = vpack.c.bf16 %v2555, %v2554
        %v2570 = vpack.c.bf16 %v2557, %v2556
        %v2571 = vpack.c.bf16 %v2559, %v2558
        %v2572 = vpack.c.bf16 %v2561, %v2560
        %v2573 = vpack.c.bf16 %v2563, %v2562
        %v2574 = vpack.c.bf16 %v2564, %v2564
        %v2575 = vld [vmem:[#allocation2 + $0x31] sm:$0xff]
        %v2576 = vld [vmem:[#allocation2 + $0x39] sm:$0xff]
        %v2577 = vld [vmem:[#allocation2 + $0x41] sm:$0xff]
        %v2578 = vld [vmem:[#allocation2 + $0x49] sm:$0xff]
        %v2579 = vld [vmem:[#allocation2 + $0x51] sm:$0xff]
        %v2580 = vld [vmem:[#allocation2 + $0x59] sm:$0xff]
        %v2581 = vld [vmem:[#allocation2 + $0x61] sm:$0xff]
        %v2582 = vld [vmem:[#allocation2 + $0x69] sm:$0xff]
        %v2583 = vld [vmem:[#allocation2 + $0x71] sm:$0xff]
        %v2584 = vld [vmem:[#allocation2 + $0x79] sm:$0xff]
        %v2585 = vld [vmem:[#allocation2 + $0x81] sm:$0xff]
        %v2586 = vld [vmem:[#allocation2 + $0x89] sm:$0xff]
        %v2587 = vld [vmem:[#allocation2 + $0x91] sm:$0xff]
        %v2588 = vld [vmem:[#allocation2 + $0x99] sm:$0xff]
        %v2589 = vld [vmem:[#allocation2 + $0xa1] sm:$0xff]
        %v2590 = vld [vmem:[#allocation2 + $0xa9] sm:$0xff]
        %v2591 = vld [vmem:[#allocation2 + $0xb1] sm:$0xff]
        %v2592 = vld [vmem:[#allocation2 + $0xb9] sm:$0xff]
        %v2593 = vld [vmem:[#allocation2 + $0xc1] sm:$0x1]
        %v2594 = vpack.c.bf16 %v2576, %v2575
        %v2595 = vpack.c.bf16 %v2578, %v2577
        %v2596 = vpack.c.bf16 %v2580, %v2579
        %v2597 = vpack.c.bf16 %v2582, %v2581
        %v2598 = vpack.c.bf16 %v2584, %v2583
        %v2599 = vpack.c.bf16 %v2586, %v2585
        %v2600 = vpack.c.bf16 %v2588, %v2587
        %v2601 = vpack.c.bf16 %v2590, %v2589
        %v2602 = vpack.c.bf16 %v2592, %v2591
        %v2603 = vpack.c.bf16 %v2593, %v2593
        %v2604 = vld [vmem:[#allocation2 + $0x32] sm:$0xff]
        %v2605 = vld [vmem:[#allocation2 + $0x3a] sm:$0xff]
        %v2606 = vld [vmem:[#allocation2 + $0x42] sm:$0xff]
        %v2607 = vld [vmem:[#allocation2 + $0x4a] sm:$0xff]
        %v2608 = vld [vmem:[#allocation2 + $0x52] sm:$0xff]
        %v2609 = vld [vmem:[#allocation2 + $0x5a] sm:$0xff]
        %v2610 = vld [vmem:[#allocation2 + $0x62] sm:$0xff]
        %v2611 = vld [vmem:[#allocation2 + $0x6a] sm:$0xff]
        %v2612 = vld [vmem:[#allocation2 + $0x72] sm:$0xff]
        %v2613 = vld [vmem:[#allocation2 + $0x7a] sm:$0xff]
        %v2614 = vld [vmem:[#allocation2 + $0x82] sm:$0xff]
        %v2615 = vld [vmem:[#allocation2 + $0x8a] sm:$0xff]
        %v2616 = vld [vmem:[#allocation2 + $0x92] sm:$0xff]
        %v2617 = vld [vmem:[#allocation2 + $0x9a] sm:$0xff]
        %v2618 = vld [vmem:[#allocation2 + $0xa2] sm:$0xff]
        %v2619 = vld [vmem:[#allocation2 + $0xaa] sm:$0xff]
        %v2620 = vld [vmem:[#allocation2 + $0xb2] sm:$0xff]
        %v2621 = vld [vmem:[#allocation2 + $0xba] sm:$0xff]
        %v2622 = vld [vmem:[#allocation2 + $0xc2] sm:$0x1]
        %v2623 = vpack.c.bf16 %v2605, %v2604
        %v2624 = vpack.c.bf16 %v2607, %v2606
        %v2625 = vpack.c.bf16 %v2609, %v2608
        %v2626 = vpack.c.bf16 %v2611, %v2610
        %v2627 = vpack.c.bf16 %v2613, %v2612
        %v2628 = vpack.c.bf16 %v2615, %v2614
        %v2629 = vpack.c.bf16 %v2617, %v2616
        %v2630 = vpack.c.bf16 %v2619, %v2618
        %v2631 = vpack.c.bf16 %v2621, %v2620
        %v2632 = vpack.c.bf16 %v2622, %v2622
        %2643 = vrot.lane.b32.xlu0 %v2565, 32
        %v2644 = vpop.permute.xlu0 %2643
        %2645 = vrot.lane.b32.xlu0 %v2566, 32
        %v2646 = vpop.permute.xlu0 %2645
        %2647 = vrot.lane.b32.xlu0 %v2567, 32
        %v2648 = vpop.permute.xlu0 %2647
        %2649 = vrot.lane.b32.xlu0 %v2568, 32
        %v2650 = vpop.permute.xlu0 %2649
        %2651 = vrot.lane.b32.xlu0 %v2569, 32
        %v2652 = vpop.permute.xlu0 %2651
        %2653 = vrot.lane.b32.xlu0 %v2570, 32
        %v2654 = vpop.permute.xlu0 %2653
        %2655 = vrot.lane.b32.xlu0 %v2571, 32
        %v2656 = vpop.permute.xlu0 %2655
        %2657 = vrot.lane.b32.xlu0 %v2572, 32
        %v2658 = vpop.permute.xlu0 %2657
        %2659 = vrot.lane.b32.xlu0 %v2573, 32
        %v2660 = vpop.permute.xlu0 %2659
        %2661 = vrot.lane.b32.xlu0 %v2574, 32
        %v2662 = vpop.permute.xlu0 %2661
        %2673 = vrot.lane.b32.xlu0 %v2594, 64
        %v2674 = vpop.permute.xlu0 %2673
        %2675 = vrot.lane.b32.xlu0 %v2595, 64
        %v2676 = vpop.permute.xlu0 %2675
        %2677 = vrot.lane.b32.xlu0 %v2596, 64
        %v2678 = vpop.permute.xlu0 %2677
        %2679 = vrot.lane.b32.xlu0 %v2597, 64
        %v2680 = vpop.permute.xlu0 %2679
        %2681 = vrot.lane.b32.xlu0 %v2598, 64
        %v2682 = vpop.permute.xlu0 %2681
        %2683 = vrot.lane.b32.xlu0 %v2599, 64
        %v2684 = vpop.permute.xlu0 %2683
        %2685 = vrot.lane.b32.xlu0 %v2600, 64
        %v2686 = vpop.permute.xlu0 %2685
        %2687 = vrot.lane.b32.xlu0 %v2601, 64
        %v2688 = vpop.permute.xlu0 %2687
        %2689 = vrot.lane.b32.xlu0 %v2602, 64
        %v2690 = vpop.permute.xlu0 %2689
        %2691 = vrot.lane.b32.xlu0 %v2603, 64
        %v2692 = vpop.permute.xlu0 %2691
        %2703 = vrot.lane.b32.xlu0 %v2623, 96
        %v2704 = vpop.permute.xlu0 %2703
        %2705 = vrot.lane.b32.xlu0 %v2624, 96
        %v2706 = vpop.permute.xlu0 %2705
        %2707 = vrot.lane.b32.xlu0 %v2625, 96
        %v2708 = vpop.permute.xlu0 %2707
        %2709 = vrot.lane.b32.xlu0 %v2626, 96
        %v2710 = vpop.permute.xlu0 %2709
        %2711 = vrot.lane.b32.xlu0 %v2627, 96
        %v2712 = vpop.permute.xlu0 %2711
        %2713 = vrot.lane.b32.xlu0 %v2628, 96
        %v2714 = vpop.permute.xlu0 %2713
        %2715 = vrot.lane.b32.xlu0 %v2629, 96
        %v2716 = vpop.permute.xlu0 %2715
        %2717 = vrot.lane.b32.xlu0 %v2630, 96
        %v2718 = vpop.permute.xlu0 %2717
        %2719 = vrot.lane.b32.xlu0 %v2631, 96
        %v2720 = vpop.permute.xlu0 %2719
        %2721 = vrot.lane.b32.xlu0 %v2632, 96
        %v2722 = vpop.permute.xlu0 %2721
        %v2725 = vsel %vm277, %v2536, %v2644
        %v2728 = vsel %vm277, %v2537, %v2646
        %v2731 = vsel %vm277, %v2538, %v2648
        %v2734 = vsel %vm277, %v2539, %v2650
        %v2737 = vsel %vm277, %v2540, %v2652
        %v2740 = vsel %vm277, %v2541, %v2654
        %v2743 = vsel %vm277, %v2542, %v2656
        %v2746 = vsel %vm277, %v2543, %v2658
        %v2749 = vsel %vm277, %v2544, %v2660
        %v2752 = vsel %vm277, %v2545, %v2662
        %v2754 = vsel %vm928, %v2725, %v2674
        %v2756 = vsel %vm928, %v2728, %v2676
        %v2758 = vsel %vm928, %v2731, %v2678
        %v2760 = vsel %vm928, %v2734, %v2680
        %v2762 = vsel %vm928, %v2737, %v2682
        %v2764 = vsel %vm928, %v2740, %v2684
        %v2766 = vsel %vm928, %v2743, %v2686
        %v2768 = vsel %vm928, %v2746, %v2688
        %v2770 = vsel %vm928, %v2749, %v2690
        %v2772 = vsel %vm928, %v2752, %v2692
        %v2774 = vsel %vm949, %v2754, %v2704
        %v2776 = vsel %vm949, %v2756, %v2706
        %v2778 = vsel %vm949, %v2758, %v2708
        %v2780 = vsel %vm949, %v2760, %v2710
        %v2782 = vsel %vm949, %v2762, %v2712
        %v2784 = vsel %vm949, %v2764, %v2714
        %v2786 = vsel %vm949, %v2766, %v2716
        %v2788 = vsel %vm949, %v2768, %v2718
        %v2790 = vsel %vm949, %v2770, %v2720
        %v2792 = vsel %vm949, %v2772, %v2722
        %v2803 = vunpack.c.l.b16 %v2774
        %v2804 = vunpack.c.h.b16 %v2774
        %v2805 = vunpack.c.l.b16 %v2776
        %v2806 = vunpack.c.h.b16 %v2776
        %v2807 = vunpack.c.l.b16 %v2778
        %v2808 = vunpack.c.h.b16 %v2778
        %v2809 = vunpack.c.l.b16 %v2780
        %v2810 = vunpack.c.h.b16 %v2780
        %v2811 = vunpack.c.l.b16 %v2782
        %v2812 = vunpack.c.h.b16 %v2782
        %v2813 = vunpack.c.l.b16 %v2784
        %v2814 = vunpack.c.h.b16 %v2784
        %v2815 = vunpack.c.l.b16 %v2786
        %v2816 = vunpack.c.h.b16 %v2786
        %v2817 = vunpack.c.l.b16 %v2788
        %v2818 = vunpack.c.h.b16 %v2788
        %v2819 = vunpack.c.l.b16 %v2790
        %v2820 = vunpack.c.h.b16 %v2790
        %v2821 = vunpack.c.l.b16 %v2792
        %v2822 = vpack.c.b16 %v2803, %v2803
        %v2823 = vpack.c.b16 %v2804, %v2804
        %v2824 = vpack.c.b16 %v2805, %v2805
        %v2825 = vpack.c.b16 %v2806, %v2806
        %v2826 = vpack.c.b16 %v2807, %v2807
        %v2827 = vpack.c.b16 %v2808, %v2808
        %v2828 = vpack.c.b16 %v2809, %v2809
        %v2829 = vpack.c.b16 %v2810, %v2810
        %v2830 = vpack.c.b16 %v2811, %v2811
        %v2831 = vpack.c.b16 %v2812, %v2812
        %v2832 = vpack.c.b16 %v2813, %v2813
        %v2833 = vpack.c.b16 %v2814, %v2814
        %v2834 = vpack.c.b16 %v2815, %v2815
        %v2835 = vpack.c.b16 %v2816, %v2816
        %v2836 = vpack.c.b16 %v2817, %v2817
        %v2837 = vpack.c.b16 %v2818, %v2818
        %v2838 = vpack.c.b16 %v2819, %v2819
        %v2839 = vpack.c.b16 %v2820, %v2820
        %v2840 = vpack.c.b16 %v2821, %v2821
        %2860 = vst [vmem:[#allocation4 + $0x14] sm:$0xf] %v2822
        %2861 = vst [vmem:[#allocation4 + $0x38] sm:$0xf] %v2823
        %2862 = vst [vmem:[#allocation4 + $0x5c] sm:$0xf] %v2824
        %2863 = vst [vmem:[#allocation4 + $0x80] sm:$0xf] %v2825
        %2864 = vst [vmem:[#allocation4 + $0xa4] sm:$0xf] %v2826
        %2865 = vst [vmem:[#allocation4 + $0xc8] sm:$0xf] %v2827
        %2866 = vst [vmem:[#allocation4 + $0xec] sm:$0xf] %v2828
        %2867 = vst [vmem:[#allocation4 + $0x110] sm:$0xf] %v2829
        %2868 = vst [vmem:[#allocation4 + $0x134] sm:$0xf] %v2830
        %2869 = vst [vmem:[#allocation4 + $0x158] sm:$0xf] %v2831
        %2870 = vst [vmem:[#allocation4 + $0x17c] sm:$0xf] %v2832
        %2871 = vst [vmem:[#allocation4 + $0x1a0] sm:$0xf] %v2833
        %2872 = vst [vmem:[#allocation4 + $0x1c4] sm:$0xf] %v2834
        %2873 = vst [vmem:[#allocation4 + $0x1e8] sm:$0xf] %v2835
        %2874 = vst [vmem:[#allocation4 + $0x20c] sm:$0xf] %v2836
        %2875 = vst [vmem:[#allocation4 + $0x230] sm:$0xf] %v2837
        %2876 = vst [vmem:[#allocation4 + $0x254] sm:$0xf] %v2838
        %2877 = vst [vmem:[#allocation4 + $0x278] sm:$0xf] %v2839
        %v2878 = vld [vmem:[#allocation4 + $0x29c] sm:$0x1]
        %v2879 = vsel %vm1057, %v2840, %v2878
        %2880 = vst [vmem:[#allocation4 + $0x29c] sm:$0x1] %v2879
        %v2881 = vld [vmem:[#allocation2 + $0x3c] sm:$0xff]
        %v2882 = vld [vmem:[#allocation2 + $0x44] sm:$0xff]
        %v2883 = vld [vmem:[#allocation2 + $0x4c] sm:$0xff]
        %v2884 = vld [vmem:[#allocation2 + $0x54] sm:$0xff]
        %v2885 = vld [vmem:[#allocation2 + $0x5c] sm:$0xff]
        %v2886 = vld [vmem:[#allocation2 + $0x64] sm:$0xff]
        %v2887 = vld [vmem:[#allocation2 + $0x6c] sm:$0xff]
        %v2888 = vld [vmem:[#allocation2 + $0x74] sm:$0xff]
        %v2889 = vld [vmem:[#allocation2 + $0x7c] sm:$0xff]
        %v2890 = vld [vmem:[#allocation2 + $0x84] sm:$0xff]
        %v2891 = vld [vmem:[#allocation2 + $0x8c] sm:$0xff]
        %v2892 = vld [vmem:[#allocation2 + $0x94] sm:$0xff]
        %v2893 = vld [vmem:[#allocation2 + $0x9c] sm:$0xff]
        %v2894 = vld [vmem:[#allocation2 + $0xa4] sm:$0xff]
        %v2895 = vld [vmem:[#allocation2 + $0xac] sm:$0xff]
        %v2896 = vld [vmem:[#allocation2 + $0xb4] sm:$0xff]
        %v2897 = vld [vmem:[#allocation2 + $0xbc] sm:$0xff]
        %v2898 = vld [vmem:[#allocation2 + $0xc4] sm:$0xff]
        %v2899 = vld [vmem:[#allocation2 + $0xcc] sm:$0x1]
        %v2900 = vpack.c.bf16 %v2882, %v2881
        %v2901 = vpack.c.bf16 %v2884, %v2883
        %v2902 = vpack.c.bf16 %v2886, %v2885
        %v2903 = vpack.c.bf16 %v2888, %v2887
        %v2904 = vpack.c.bf16 %v2890, %v2889
        %v2905 = vpack.c.bf16 %v2892, %v2891
        %v2906 = vpack.c.bf16 %v2894, %v2893
        %v2907 = vpack.c.bf16 %v2896, %v2895
        %v2908 = vpack.c.bf16 %v2898, %v2897
        %v2909 = vpack.c.bf16 %v2899, %v2899
        %v2910 = vld [vmem:[#allocation2 + $0x3d] sm:$0xff]
        %v2911 = vld [vmem:[#allocation2 + $0x45] sm:$0xff]
        %v2912 = vld [vmem:[#allocation2 + $0x4d] sm:$0xff]
        %v2913 = vld [vmem:[#allocation2 + $0x55] sm:$0xff]
        %v2914 = vld [vmem:[#allocation2 + $0x5d] sm:$0xff]
        %v2915 = vld [vmem:[#allocation2 + $0x65] sm:$0xff]
        %v2916 = vld [vmem:[#allocation2 + $0x6d] sm:$0xff]
        %v2917 = vld [vmem:[#allocation2 + $0x75] sm:$0xff]
        %v2918 = vld [vmem:[#allocation2 + $0x7d] sm:$0xff]
        %v2919 = vld [vmem:[#allocation2 + $0x85] sm:$0xff]
        %v2920 = vld [vmem:[#allocation2 + $0x8d] sm:$0xff]
        %v2921 = vld [vmem:[#allocation2 + $0x95] sm:$0xff]
        %v2922 = vld [vmem:[#allocation2 + $0x9d] sm:$0xff]
        %v2923 = vld [vmem:[#allocation2 + $0xa5] sm:$0xff]
        %v2924 = vld [vmem:[#allocation2 + $0xad] sm:$0xff]
        %v2925 = vld [vmem:[#allocation2 + $0xb5] sm:$0xff]
        %v2926 = vld [vmem:[#allocation2 + $0xbd] sm:$0xff]
        %v2927 = vld [vmem:[#allocation2 + $0xc5] sm:$0xff]
        %v2928 = vld [vmem:[#allocation2 + $0xcd] sm:$0x1]
        %v2929 = vpack.c.bf16 %v2911, %v2910
        %v2930 = vpack.c.bf16 %v2913, %v2912
        %v2931 = vpack.c.bf16 %v2915, %v2914
        %v2932 = vpack.c.bf16 %v2917, %v2916
        %v2933 = vpack.c.bf16 %v2919, %v2918
        %v2934 = vpack.c.bf16 %v2921, %v2920
        %v2935 = vpack.c.bf16 %v2923, %v2922
        %v2936 = vpack.c.bf16 %v2925, %v2924
        %v2937 = vpack.c.bf16 %v2927, %v2926
        %v2938 = vpack.c.bf16 %v2928, %v2928
        %v2939 = vld [vmem:[#allocation2 + $0x3e] sm:$0xff]
        %v2940 = vld [vmem:[#allocation2 + $0x46] sm:$0xff]
        %v2941 = vld [vmem:[#allocation2 + $0x4e] sm:$0xff]
        %v2942 = vld [vmem:[#allocation2 + $0x56] sm:$0xff]
        %v2943 = vld [vmem:[#allocation2 + $0x5e] sm:$0xff]
        %v2944 = vld [vmem:[#allocation2 + $0x66] sm:$0xff]
        %v2945 = vld [vmem:[#allocation2 + $0x6e] sm:$0xff]
        %v2946 = vld [vmem:[#allocation2 + $0x76] sm:$0xff]
        %v2947 = vld [vmem:[#allocation2 + $0x7e] sm:$0xff]
        %v2948 = vld [vmem:[#allocation2 + $0x86] sm:$0xff]
        %v2949 = vld [vmem:[#allocation2 + $0x8e] sm:$0xff]
        %v2950 = vld [vmem:[#allocation2 + $0x96] sm:$0xff]
        %v2951 = vld [vmem:[#allocation2 + $0x9e] sm:$0xff]
        %v2952 = vld [vmem:[#allocation2 + $0xa6] sm:$0xff]
        %v2953 = vld [vmem:[#allocation2 + $0xae] sm:$0xff]
        %v2954 = vld [vmem:[#allocation2 + $0xb6] sm:$0xff]
        %v2955 = vld [vmem:[#allocation2 + $0xbe] sm:$0xff]
        %v2956 = vld [vmem:[#allocation2 + $0xc6] sm:$0xff]
        %v2957 = vld [vmem:[#allocation2 + $0xce] sm:$0x1]
        %v2958 = vpack.c.bf16 %v2940, %v2939
        %v2959 = vpack.c.bf16 %v2942, %v2941
        %v2960 = vpack.c.bf16 %v2944, %v2943
        %v2961 = vpack.c.bf16 %v2946, %v2945
        %v2962 = vpack.c.bf16 %v2948, %v2947
        %v2963 = vpack.c.bf16 %v2950, %v2949
        %v2964 = vpack.c.bf16 %v2952, %v2951
        %v2965 = vpack.c.bf16 %v2954, %v2953
        %v2966 = vpack.c.bf16 %v2956, %v2955
        %v2967 = vpack.c.bf16 %v2957, %v2957
        %v2968 = vld [vmem:[#allocation2 + $0x3f] sm:$0xff]
        %v2969 = vld [vmem:[#allocation2 + $0x47] sm:$0xff]
        %v2970 = vld [vmem:[#allocation2 + $0x4f] sm:$0xff]
        %v2971 = vld [vmem:[#allocation2 + $0x57] sm:$0xff]
        %v2972 = vld [vmem:[#allocation2 + $0x5f] sm:$0xff]
        %v2973 = vld [vmem:[#allocation2 + $0x67] sm:$0xff]
        %v2974 = vld [vmem:[#allocation2 + $0x6f] sm:$0xff]
        %v2975 = vld [vmem:[#allocation2 + $0x77] sm:$0xff]
        %v2976 = vld [vmem:[#allocation2 + $0x7f] sm:$0xff]
        %v2977 = vld [vmem:[#allocation2 + $0x87] sm:$0xff]
        %v2978 = vld [vmem:[#allocation2 + $0x8f] sm:$0xff]
        %v2979 = vld [vmem:[#allocation2 + $0x97] sm:$0xff]
        %v2980 = vld [vmem:[#allocation2 + $0x9f] sm:$0xff]
        %v2981 = vld [vmem:[#allocation2 + $0xa7] sm:$0xff]
        %v2982 = vld [vmem:[#allocation2 + $0xaf] sm:$0xff]
        %v2983 = vld [vmem:[#allocation2 + $0xb7] sm:$0xff]
        %v2984 = vld [vmem:[#allocation2 + $0xbf] sm:$0xff]
        %v2985 = vld [vmem:[#allocation2 + $0xc7] sm:$0xff]
        %v2986 = vld [vmem:[#allocation2 + $0xcf] sm:$0x1]
        %v2987 = vpack.c.bf16 %v2969, %v2968
        %v2988 = vpack.c.bf16 %v2971, %v2970
        %v2989 = vpack.c.bf16 %v2973, %v2972
        %v2990 = vpack.c.bf16 %v2975, %v2974
        %v2991 = vpack.c.bf16 %v2977, %v2976
        %v2992 = vpack.c.bf16 %v2979, %v2978
        %v2993 = vpack.c.bf16 %v2981, %v2980
        %v2994 = vpack.c.bf16 %v2983, %v2982
        %v2995 = vpack.c.bf16 %v2985, %v2984
        %v2996 = vpack.c.bf16 %v2986, %v2986
        %3007 = vrot.lane.b32.xlu0 %v2929, 32
        %v3008 = vpop.permute.xlu0 %3007
        %3009 = vrot.lane.b32.xlu0 %v2930, 32
        %v3010 = vpop.permute.xlu0 %3009
        %3011 = vrot.lane.b32.xlu0 %v2931, 32
        %v3012 = vpop.permute.xlu0 %3011
        %3013 = vrot.lane.b32.xlu0 %v2932, 32
        %v3014 = vpop.permute.xlu0 %3013
        %3015 = vrot.lane.b32.xlu0 %v2933, 32
        %v3016 = vpop.permute.xlu0 %3015
        %3017 = vrot.lane.b32.xlu0 %v2934, 32
        %v3018 = vpop.permute.xlu0 %3017
        %3019 = vrot.lane.b32.xlu0 %v2935, 32
        %v3020 = vpop.permute.xlu0 %3019
        %3021 = vrot.lane.b32.xlu0 %v2936, 32
        %v3022 = vpop.permute.xlu0 %3021
        %3023 = vrot.lane.b32.xlu0 %v2937, 32
        %v3024 = vpop.permute.xlu0 %3023
        %3025 = vrot.lane.b32.xlu0 %v2938, 32
        %v3026 = vpop.permute.xlu0 %3025
        %3037 = vrot.lane.b32.xlu0 %v2958, 64
        %v3038 = vpop.permute.xlu0 %3037
        %3039 = vrot.lane.b32.xlu0 %v2959, 64
        %v3040 = vpop.permute.xlu0 %3039
        %3041 = vrot.lane.b32.xlu0 %v2960, 64
        %v3042 = vpop.permute.xlu0 %3041
        %3043 = vrot.lane.b32.xlu0 %v2961, 64
        %v3044 = vpop.permute.xlu0 %3043
        %3045 = vrot.lane.b32.xlu0 %v2962, 64
        %v3046 = vpop.permute.xlu0 %3045
        %3047 = vrot.lane.b32.xlu0 %v2963, 64
        %v3048 = vpop.permute.xlu0 %3047
        %3049 = vrot.lane.b32.xlu0 %v2964, 64
        %v3050 = vpop.permute.xlu0 %3049
        %3051 = vrot.lane.b32.xlu0 %v2965, 64
        %v3052 = vpop.permute.xlu0 %3051
        %3053 = vrot.lane.b32.xlu0 %v2966, 64
        %v3054 = vpop.permute.xlu0 %3053
        %3055 = vrot.lane.b32.xlu0 %v2967, 64
        %v3056 = vpop.permute.xlu0 %3055
        %3067 = vrot.lane.b32.xlu0 %v2987, 96
        %v3068 = vpop.permute.xlu0 %3067
        %3069 = vrot.lane.b32.xlu0 %v2988, 96
        %v3070 = vpop.permute.xlu0 %3069
        %3071 = vrot.lane.b32.xlu0 %v2989, 96
        %v3072 = vpop.permute.xlu0 %3071
        %3073 = vrot.lane.b32.xlu0 %v2990, 96
        %v3074 = vpop.permute.xlu0 %3073
        %3075 = vrot.lane.b32.xlu0 %v2991, 96
        %v3076 = vpop.permute.xlu0 %3075
        %3077 = vrot.lane.b32.xlu0 %v2992, 96
        %v3078 = vpop.permute.xlu0 %3077
        %3079 = vrot.lane.b32.xlu0 %v2993, 96
        %v3080 = vpop.permute.xlu0 %3079
        %3081 = vrot.lane.b32.xlu0 %v2994, 96
        %v3082 = vpop.permute.xlu0 %3081
        %3083 = vrot.lane.b32.xlu0 %v2995, 96
        %v3084 = vpop.permute.xlu0 %3083
        %3085 = vrot.lane.b32.xlu0 %v2996, 96
        %v3086 = vpop.permute.xlu0 %3085
        %v3089 = vsel %vm277, %v2900, %v3008
        %v3092 = vsel %vm277, %v2901, %v3010
        %v3095 = vsel %vm277, %v2902, %v3012
        %v3098 = vsel %vm277, %v2903, %v3014
        %v3101 = vsel %vm277, %v2904, %v3016
        %v3104 = vsel %vm277, %v2905, %v3018
        %v3107 = vsel %vm277, %v2906, %v3020
        %v3110 = vsel %vm277, %v2907, %v3022
        %v3113 = vsel %vm277, %v2908, %v3024
        %v3116 = vsel %vm277, %v2909, %v3026
        %v3118 = vsel %vm928, %v3089, %v3038
        %v3120 = vsel %vm928, %v3092, %v3040
        %v3122 = vsel %vm928, %v3095, %v3042
        %v3124 = vsel %vm928, %v3098, %v3044
        %v3126 = vsel %vm928, %v3101, %v3046
        %v3128 = vsel %vm928, %v3104, %v3048
        %v3130 = vsel %vm928, %v3107, %v3050
        %v3132 = vsel %vm928, %v3110, %v3052
        %v3134 = vsel %vm928, %v3113, %v3054
        %v3136 = vsel %vm928, %v3116, %v3056
        %v3138 = vsel %vm949, %v3118, %v3068
        %v3140 = vsel %vm949, %v3120, %v3070
        %v3142 = vsel %vm949, %v3122, %v3072
        %v3144 = vsel %vm949, %v3124, %v3074
        %v3146 = vsel %vm949, %v3126, %v3076
        %v3148 = vsel %vm949, %v3128, %v3078
        %v3150 = vsel %vm949, %v3130, %v3080
        %v3152 = vsel %vm949, %v3132, %v3082
        %v3154 = vsel %vm949, %v3134, %v3084
        %v3156 = vsel %vm949, %v3136, %v3086
        %v3167 = vunpack.c.l.b16 %v3138
        %v3168 = vunpack.c.h.b16 %v3138
        %v3169 = vunpack.c.l.b16 %v3140
        %v3170 = vunpack.c.h.b16 %v3140
        %v3171 = vunpack.c.l.b16 %v3142
        %v3172 = vunpack.c.h.b16 %v3142
        %v3173 = vunpack.c.l.b16 %v3144
        %v3174 = vunpack.c.h.b16 %v3144
        %v3175 = vunpack.c.l.b16 %v3146
        %v3176 = vunpack.c.h.b16 %v3146
        %v3177 = vunpack.c.l.b16 %v3148
        %v3178 = vunpack.c.h.b16 %v3148
        %v3179 = vunpack.c.l.b16 %v3150
        %v3180 = vunpack.c.h.b16 %v3150
        %v3181 = vunpack.c.l.b16 %v3152
        %v3182 = vunpack.c.h.b16 %v3152
        %v3183 = vunpack.c.l.b16 %v3154
        %v3184 = vunpack.c.h.b16 %v3154
        %v3185 = vunpack.c.l.b16 %v3156
        %v3186 = vpack.c.b16 %v3167, %v3167
        %v3187 = vpack.c.b16 %v3168, %v3168
        %v3188 = vpack.c.b16 %v3169, %v3169
        %v3189 = vpack.c.b16 %v3170, %v3170
        %v3190 = vpack.c.b16 %v3171, %v3171
        %v3191 = vpack.c.b16 %v3172, %v3172
        %v3192 = vpack.c.b16 %v3173, %v3173
        %v3193 = vpack.c.b16 %v3174, %v3174
        %v3194 = vpack.c.b16 %v3175, %v3175
        %v3195 = vpack.c.b16 %v3176, %v3176
        %v3196 = vpack.c.b16 %v3177, %v3177
        %v3197 = vpack.c.b16 %v3178, %v3178
        %v3198 = vpack.c.b16 %v3179, %v3179
        %v3199 = vpack.c.b16 %v3180, %v3180
        %v3200 = vpack.c.b16 %v3181, %v3181
        %v3201 = vpack.c.b16 %v3182, %v3182
        %v3202 = vpack.c.b16 %v3183, %v3183
        %v3203 = vpack.c.b16 %v3184, %v3184
        %v3204 = vpack.c.b16 %v3185, %v3185
        %3224 = vst [vmem:[#allocation4 + $0x18] sm:$0xf] %v3186
        %3225 = vst [vmem:[#allocation4 + $0x3c] sm:$0xf] %v3187
        %3226 = vst [vmem:[#allocation4 + $0x60] sm:$0xf] %v3188
        %3227 = vst [vmem:[#allocation4 + $0x84] sm:$0xf] %v3189
        %3228 = vst [vmem:[#allocation4 + $0xa8] sm:$0xf] %v3190
        %3229 = vst [vmem:[#allocation4 + $0xcc] sm:$0xf] %v3191
        %3230 = vst [vmem:[#allocation4 + $0xf0] sm:$0xf] %v3192
        %3231 = vst [vmem:[#allocation4 + $0x114] sm:$0xf] %v3193
        %3232 = vst [vmem:[#allocation4 + $0x138] sm:$0xf] %v3194
        %3233 = vst [vmem:[#allocation4 + $0x15c] sm:$0xf] %v3195
        %3234 = vst [vmem:[#allocation4 + $0x180] sm:$0xf] %v3196
        %3235 = vst [vmem:[#allocation4 + $0x1a4] sm:$0xf] %v3197
        %3236 = vst [vmem:[#allocation4 + $0x1c8] sm:$0xf] %v3198
        %3237 = vst [vmem:[#allocation4 + $0x1ec] sm:$0xf] %v3199
        %3238 = vst [vmem:[#allocation4 + $0x210] sm:$0xf] %v3200
        %3239 = vst [vmem:[#allocation4 + $0x234] sm:$0xf] %v3201
        %3240 = vst [vmem:[#allocation4 + $0x258] sm:$0xf] %v3202
        %3241 = vst [vmem:[#allocation4 + $0x27c] sm:$0xf] %v3203
        %v3242 = vld [vmem:[#allocation4 + $0x2a0] sm:$0x1]
        %v3243 = vsel %vm1057, %v3204, %v3242
        %3244 = vst [vmem:[#allocation4 + $0x2a0] sm:$0x1] %v3243
        %v3245 = vld [vmem:[#allocation2 + $0x40] sm:$0xff]
        %v3246 = vld [vmem:[#allocation2 + $0x48] sm:$0xff]
        %v3247 = vld [vmem:[#allocation2 + $0x50] sm:$0xff]
        %v3248 = vld [vmem:[#allocation2 + $0x58] sm:$0xff]
        %v3249 = vld [vmem:[#allocation2 + $0x60] sm:$0xff]
        %v3250 = vld [vmem:[#allocation2 + $0x68] sm:$0xff]
        %v3251 = vld [vmem:[#allocation2 + $0x70] sm:$0xff]
        %v3252 = vld [vmem:[#allocation2 + $0x78] sm:$0xff]
        %v3253 = vld [vmem:[#allocation2 + $0x80] sm:$0xff]
        %v3254 = vld [vmem:[#allocation2 + $0x88] sm:$0xff]
        %v3255 = vld [vmem:[#allocation2 + $0x90] sm:$0xff]
        %v3256 = vld [vmem:[#allocation2 + $0x98] sm:$0xff]
        %v3257 = vld [vmem:[#allocation2 + $0xa0] sm:$0xff]
        %v3258 = vld [vmem:[#allocation2 + $0xa8] sm:$0xff]
        %v3259 = vld [vmem:[#allocation2 + $0xb0] sm:$0xff]
        %v3260 = vld [vmem:[#allocation2 + $0xb8] sm:$0xff]
        %v3261 = vld [vmem:[#allocation2 + $0xc0] sm:$0xff]
        %v3262 = vld [vmem:[#allocation2 + $0xc8] sm:$0xff]
        %v3263 = vld [vmem:[#allocation2 + $0xd0] sm:$0x1]
        %v3264 = vpack.c.bf16 %v3246, %v3245
        %v3265 = vpack.c.bf16 %v3248, %v3247
        %v3266 = vpack.c.bf16 %v3250, %v3249
        %v3267 = vpack.c.bf16 %v3252, %v3251
        %v3268 = vpack.c.bf16 %v3254, %v3253
        %v3269 = vpack.c.bf16 %v3256, %v3255
        %v3270 = vpack.c.bf16 %v3258, %v3257
        %v3271 = vpack.c.bf16 %v3260, %v3259
        %v3272 = vpack.c.bf16 %v3262, %v3261
        %v3273 = vpack.c.bf16 %v3263, %v3263
        %v3274 = vld [vmem:[#allocation2 + $0x41] sm:$0xff]
        %v3275 = vld [vmem:[#allocation2 + $0x49] sm:$0xff]
        %v3276 = vld [vmem:[#allocation2 + $0x51] sm:$0xff]
        %v3277 = vld [vmem:[#allocation2 + $0x59] sm:$0xff]
        %v3278 = vld [vmem:[#allocation2 + $0x61] sm:$0xff]
        %v3279 = vld [vmem:[#allocation2 + $0x69] sm:$0xff]
        %v3280 = vld [vmem:[#allocation2 + $0x71] sm:$0xff]
        %v3281 = vld [vmem:[#allocation2 + $0x79] sm:$0xff]
        %v3282 = vld [vmem:[#allocation2 + $0x81] sm:$0xff]
        %v3283 = vld [vmem:[#allocation2 + $0x89] sm:$0xff]
        %v3284 = vld [vmem:[#allocation2 + $0x91] sm:$0xff]
        %v3285 = vld [vmem:[#allocation2 + $0x99] sm:$0xff]
        %v3286 = vld [vmem:[#allocation2 + $0xa1] sm:$0xff]
        %v3287 = vld [vmem:[#allocation2 + $0xa9] sm:$0xff]
        %v3288 = vld [vmem:[#allocation2 + $0xb1] sm:$0xff]
        %v3289 = vld [vmem:[#allocation2 + $0xb9] sm:$0xff]
        %v3290 = vld [vmem:[#allocation2 + $0xc1] sm:$0xff]
        %v3291 = vld [vmem:[#allocation2 + $0xc9] sm:$0xff]
        %v3292 = vld [vmem:[#allocation2 + $0xd1] sm:$0x1]
        %v3293 = vpack.c.bf16 %v3275, %v3274
        %v3294 = vpack.c.bf16 %v3277, %v3276
        %v3295 = vpack.c.bf16 %v3279, %v3278
        %v3296 = vpack.c.bf16 %v3281, %v3280
        %v3297 = vpack.c.bf16 %v3283, %v3282
        %v3298 = vpack.c.bf16 %v3285, %v3284
        %v3299 = vpack.c.bf16 %v3287, %v3286
        %v3300 = vpack.c.bf16 %v3289, %v3288
        %v3301 = vpack.c.bf16 %v3291, %v3290
        %v3302 = vpack.c.bf16 %v3292, %v3292
        %v3303 = vld [vmem:[#allocation2 + $0x4b] sm:$0xff]
        %v3304 = vld [vmem:[#allocation2 + $0x53] sm:$0xff]
        %v3305 = vld [vmem:[#allocation2 + $0x5b] sm:$0xff]
        %v3306 = vld [vmem:[#allocation2 + $0x63] sm:$0xff]
        %v3307 = vld [vmem:[#allocation2 + $0x6b] sm:$0xff]
        %v3308 = vld [vmem:[#allocation2 + $0x73] sm:$0xff]
        %v3309 = vld [vmem:[#allocation2 + $0x7b] sm:$0xff]
        %v3310 = vld [vmem:[#allocation2 + $0x83] sm:$0xff]
        %v3311 = vld [vmem:[#allocation2 + $0x8b] sm:$0xff]
        %v3312 = vld [vmem:[#allocation2 + $0x93] sm:$0xff]
        %v3313 = vld [vmem:[#allocation2 + $0x9b] sm:$0xff]
        %v3314 = vld [vmem:[#allocation2 + $0xa3] sm:$0xff]
        %v3315 = vld [vmem:[#allocation2 + $0xab] sm:$0xff]
        %v3316 = vld [vmem:[#allocation2 + $0xb3] sm:$0xff]
        %v3317 = vld [vmem:[#allocation2 + $0xbb] sm:$0xff]
        %v3318 = vld [vmem:[#allocation2 + $0xc3] sm:$0xff]
        %v3319 = vld [vmem:[#allocation2 + $0xcb] sm:$0xff]
        %v3320 = vld [vmem:[#allocation2 + $0xd3] sm:$0xff]
        %v3321 = vld [vmem:[#allocation2 + $0xdb] sm:$0x1]
        %v3322 = vpack.c.bf16 %v3304, %v3303
        %v3323 = vpack.c.bf16 %v3306, %v3305
        %v3324 = vpack.c.bf16 %v3308, %v3307
        %v3325 = vpack.c.bf16 %v3310, %v3309
        %v3326 = vpack.c.bf16 %v3312, %v3311
        %v3327 = vpack.c.bf16 %v3314, %v3313
        %v3328 = vpack.c.bf16 %v3316, %v3315
        %v3329 = vpack.c.bf16 %v3318, %v3317
        %v3330 = vpack.c.bf16 %v3320, %v3319
        %v3331 = vpack.c.bf16 %v3321, %v3321
        %v3332 = vld [vmem:[#allocation2 + $0x4c] sm:$0xff]
        %v3333 = vld [vmem:[#allocation2 + $0x54] sm:$0xff]
        %v3334 = vld [vmem:[#allocation2 + $0x5c] sm:$0xff]
        %v3335 = vld [vmem:[#allocation2 + $0x64] sm:$0xff]
        %v3336 = vld [vmem:[#allocation2 + $0x6c] sm:$0xff]
        %v3337 = vld [vmem:[#allocation2 + $0x74] sm:$0xff]
        %v3338 = vld [vmem:[#allocation2 + $0x7c] sm:$0xff]
        %v3339 = vld [vmem:[#allocation2 + $0x84] sm:$0xff]
        %v3340 = vld [vmem:[#allocation2 + $0x8c] sm:$0xff]
        %v3341 = vld [vmem:[#allocation2 + $0x94] sm:$0xff]
        %v3342 = vld [vmem:[#allocation2 + $0x9c] sm:$0xff]
        %v3343 = vld [vmem:[#allocation2 + $0xa4] sm:$0xff]
        %v3344 = vld [vmem:[#allocation2 + $0xac] sm:$0xff]
        %v3345 = vld [vmem:[#allocation2 + $0xb4] sm:$0xff]
        %v3346 = vld [vmem:[#allocation2 + $0xbc] sm:$0xff]
        %v3347 = vld [vmem:[#allocation2 + $0xc4] sm:$0xff]
        %v3348 = vld [vmem:[#allocation2 + $0xcc] sm:$0xff]
        %v3349 = vld [vmem:[#allocation2 + $0xd4] sm:$0xff]
        %v3350 = vld [vmem:[#allocation2 + $0xdc] sm:$0x1]
        %v3351 = vpack.c.bf16 %v3333, %v3332
        %v3352 = vpack.c.bf16 %v3335, %v3334
        %v3353 = vpack.c.bf16 %v3337, %v3336
        %v3354 = vpack.c.bf16 %v3339, %v3338
        %v3355 = vpack.c.bf16 %v3341, %v3340
        %v3356 = vpack.c.bf16 %v3343, %v3342
        %v3357 = vpack.c.bf16 %v3345, %v3344
        %v3358 = vpack.c.bf16 %v3347, %v3346
        %v3359 = vpack.c.bf16 %v3349, %v3348
        %v3360 = vpack.c.bf16 %v3350, %v3350
        %3371 = vrot.lane.b32.xlu0 %v3293, 32
        %v3372 = vpop.permute.xlu0 %3371
        %3373 = vrot.lane.b32.xlu0 %v3294, 32
        %v3374 = vpop.permute.xlu0 %3373
        %3375 = vrot.lane.b32.xlu0 %v3295, 32
        %v3376 = vpop.permute.xlu0 %3375
        %3377 = vrot.lane.b32.xlu0 %v3296, 32
        %v3378 = vpop.permute.xlu0 %3377
        %3379 = vrot.lane.b32.xlu0 %v3297, 32
        %v3380 = vpop.permute.xlu0 %3379
        %3381 = vrot.lane.b32.xlu0 %v3298, 32
        %v3382 = vpop.permute.xlu0 %3381
        %3383 = vrot.lane.b32.xlu0 %v3299, 32
        %v3384 = vpop.permute.xlu0 %3383
        %3385 = vrot.lane.b32.xlu0 %v3300, 32
        %v3386 = vpop.permute.xlu0 %3385
        %3387 = vrot.lane.b32.xlu0 %v3301, 32
        %v3388 = vpop.permute.xlu0 %3387
        %3389 = vrot.lane.b32.xlu0 %v3302, 32
        %v3390 = vpop.permute.xlu0 %3389
        %3401 = vrot.lane.b32.xlu0 %v3322, 64
        %v3402 = vpop.permute.xlu0 %3401
        %3403 = vrot.lane.b32.xlu0 %v3323, 64
        %v3404 = vpop.permute.xlu0 %3403
        %3405 = vrot.lane.b32.xlu0 %v3324, 64
        %v3406 = vpop.permute.xlu0 %3405
        %3407 = vrot.lane.b32.xlu0 %v3325, 64
        %v3408 = vpop.permute.xlu0 %3407
        %3409 = vrot.lane.b32.xlu0 %v3326, 64
        %v3410 = vpop.permute.xlu0 %3409
        %3411 = vrot.lane.b32.xlu0 %v3327, 64
        %v3412 = vpop.permute.xlu0 %3411
        %3413 = vrot.lane.b32.xlu0 %v3328, 64
        %v3414 = vpop.permute.xlu0 %3413
        %3415 = vrot.lane.b32.xlu0 %v3329, 64
        %v3416 = vpop.permute.xlu0 %3415
        %3417 = vrot.lane.b32.xlu0 %v3330, 64
        %v3418 = vpop.permute.xlu0 %3417
        %3419 = vrot.lane.b32.xlu0 %v3331, 64
        %v3420 = vpop.permute.xlu0 %3419
        %3431 = vrot.lane.b32.xlu0 %v3351, 96
        %v3432 = vpop.permute.xlu0 %3431
        %3433 = vrot.lane.b32.xlu0 %v3352, 96
        %v3434 = vpop.permute.xlu0 %3433
        %3435 = vrot.lane.b32.xlu0 %v3353, 96
        %v3436 = vpop.permute.xlu0 %3435
        %3437 = vrot.lane.b32.xlu0 %v3354, 96
        %v3438 = vpop.permute.xlu0 %3437
        %3439 = vrot.lane.b32.xlu0 %v3355, 96
        %v3440 = vpop.permute.xlu0 %3439
        %3441 = vrot.lane.b32.xlu0 %v3356, 96
        %v3442 = vpop.permute.xlu0 %3441
        %3443 = vrot.lane.b32.xlu0 %v3357, 96
        %v3444 = vpop.permute.xlu0 %3443
        %3445 = vrot.lane.b32.xlu0 %v3358, 96
        %v3446 = vpop.permute.xlu0 %3445
        %3447 = vrot.lane.b32.xlu0 %v3359, 96
        %v3448 = vpop.permute.xlu0 %3447
        %3449 = vrot.lane.b32.xlu0 %v3360, 96
        %v3450 = vpop.permute.xlu0 %3449
        %v3453 = vsel %vm277, %v3264, %v3372
        %v3456 = vsel %vm277, %v3265, %v3374
        %v3459 = vsel %vm277, %v3266, %v3376
        %v3462 = vsel %vm277, %v3267, %v3378
        %v3465 = vsel %vm277, %v3268, %v3380
        %v3468 = vsel %vm277, %v3269, %v3382
        %v3471 = vsel %vm277, %v3270, %v3384
        %v3474 = vsel %vm277, %v3271, %v3386
        %v3477 = vsel %vm277, %v3272, %v3388
        %v3480 = vsel %vm277, %v3273, %v3390
        %v3482 = vsel %vm928, %v3453, %v3402
        %v3484 = vsel %vm928, %v3456, %v3404
        %v3486 = vsel %vm928, %v3459, %v3406
        %v3488 = vsel %vm928, %v3462, %v3408
        %v3490 = vsel %vm928, %v3465, %v3410
        %v3492 = vsel %vm928, %v3468, %v3412
        %v3494 = vsel %vm928, %v3471, %v3414
        %v3496 = vsel %vm928, %v3474, %v3416
        %v3498 = vsel %vm928, %v3477, %v3418
        %v3500 = vsel %vm928, %v3480, %v3420
        %v3502 = vsel %vm949, %v3482, %v3432
        %v3504 = vsel %vm949, %v3484, %v3434
        %v3506 = vsel %vm949, %v3486, %v3436
        %v3508 = vsel %vm949, %v3488, %v3438
        %v3510 = vsel %vm949, %v3490, %v3440
        %v3512 = vsel %vm949, %v3492, %v3442
        %v3514 = vsel %vm949, %v3494, %v3444
        %v3516 = vsel %vm949, %v3496, %v3446
        %v3518 = vsel %vm949, %v3498, %v3448
        %v3520 = vsel %vm949, %v3500, %v3450
        %v3531 = vunpack.c.l.b16 %v3502
        %v3532 = vunpack.c.h.b16 %v3502
        %v3533 = vunpack.c.l.b16 %v3504
        %v3534 = vunpack.c.h.b16 %v3504
        %v3535 = vunpack.c.l.b16 %v3506
        %v3536 = vunpack.c.h.b16 %v3506
        %v3537 = vunpack.c.l.b16 %v3508
        %v3538 = vunpack.c.h.b16 %v3508
        %v3539 = vunpack.c.l.b16 %v3510
        %v3540 = vunpack.c.h.b16 %v3510
        %v3541 = vunpack.c.l.b16 %v3512
        %v3542 = vunpack.c.h.b16 %v3512
        %v3543 = vunpack.c.l.b16 %v3514
        %v3544 = vunpack.c.h.b16 %v3514
        %v3545 = vunpack.c.l.b16 %v3516
        %v3546 = vunpack.c.h.b16 %v3516
        %v3547 = vunpack.c.l.b16 %v3518
        %v3548 = vunpack.c.h.b16 %v3518
        %v3549 = vunpack.c.l.b16 %v3520
        %v3550 = vpack.c.b16 %v3531, %v3531
        %v3551 = vpack.c.b16 %v3532, %v3532
        %v3552 = vpack.c.b16 %v3533, %v3533
        %v3553 = vpack.c.b16 %v3534, %v3534
        %v3554 = vpack.c.b16 %v3535, %v3535
        %v3555 = vpack.c.b16 %v3536, %v3536
        %v3556 = vpack.c.b16 %v3537, %v3537
        %v3557 = vpack.c.b16 %v3538, %v3538
        %v3558 = vpack.c.b16 %v3539, %v3539
        %v3559 = vpack.c.b16 %v3540, %v3540
        %v3560 = vpack.c.b16 %v3541, %v3541
        %v3561 = vpack.c.b16 %v3542, %v3542
        %v3562 = vpack.c.b16 %v3543, %v3543
        %v3563 = vpack.c.b16 %v3544, %v3544
        %v3564 = vpack.c.b16 %v3545, %v3545
        %v3565 = vpack.c.b16 %v3546, %v3546
        %v3566 = vpack.c.b16 %v3547, %v3547
        %v3567 = vpack.c.b16 %v3548, %v3548
        %v3568 = vpack.c.b16 %v3549, %v3549
        %3588 = vst [vmem:[#allocation4 + $0x1c] sm:$0xf] %v3550
        %3589 = vst [vmem:[#allocation4 + $0x40] sm:$0xf] %v3551
        %3590 = vst [vmem:[#allocation4 + $0x64] sm:$0xf] %v3552
        %3591 = vst [vmem:[#allocation4 + $0x88] sm:$0xf] %v3553
        %3592 = vst [vmem:[#allocation4 + $0xac] sm:$0xf] %v3554
        %3593 = vst [vmem:[#allocation4 + $0xd0] sm:$0xf] %v3555
        %3594 = vst [vmem:[#allocation4 + $0xf4] sm:$0xf] %v3556
        %3595 = vst [vmem:[#allocation4 + $0x118] sm:$0xf] %v3557
        %3596 = vst [vmem:[#allocation4 + $0x13c] sm:$0xf] %v3558
        %3597 = vst [vmem:[#allocation4 + $0x160] sm:$0xf] %v3559
        %3598 = vst [vmem:[#allocation4 + $0x184] sm:$0xf] %v3560
        %3599 = vst [vmem:[#allocation4 + $0x1a8] sm:$0xf] %v3561
        %3600 = vst [vmem:[#allocation4 + $0x1cc] sm:$0xf] %v3562
        %3601 = vst [vmem:[#allocation4 + $0x1f0] sm:$0xf] %v3563
        %3602 = vst [vmem:[#allocation4 + $0x214] sm:$0xf] %v3564
        %3603 = vst [vmem:[#allocation4 + $0x238] sm:$0xf] %v3565
        %3604 = vst [vmem:[#allocation4 + $0x25c] sm:$0xf] %v3566
        %3605 = vst [vmem:[#allocation4 + $0x280] sm:$0xf] %v3567
        %v3606 = vld [vmem:[#allocation4 + $0x2a4] sm:$0x1]
        %v3607 = vsel %vm1057, %v3568, %v3606
        %3608 = vst [vmem:[#allocation4 + $0x2a4] sm:$0x1] %v3607
        %v3609 = vld [vmem:[#allocation2 + $0x4d] sm:$0xff]
        %v3610 = vld [vmem:[#allocation2 + $0x55] sm:$0xff]
        %v3611 = vld [vmem:[#allocation2 + $0x5d] sm:$0xff]
        %v3612 = vld [vmem:[#allocation2 + $0x65] sm:$0xff]
        %v3613 = vld [vmem:[#allocation2 + $0x6d] sm:$0xff]
        %v3614 = vld [vmem:[#allocation2 + $0x75] sm:$0xff]
        %v3615 = vld [vmem:[#allocation2 + $0x7d] sm:$0xff]
        %v3616 = vld [vmem:[#allocation2 + $0x85] sm:$0xff]
        %v3617 = vld [vmem:[#allocation2 + $0x8d] sm:$0xff]
        %v3618 = vld [vmem:[#allocation2 + $0x95] sm:$0xff]
        %v3619 = vld [vmem:[#allocation2 + $0x9d] sm:$0xff]
        %v3620 = vld [vmem:[#allocation2 + $0xa5] sm:$0xff]
        %v3621 = vld [vmem:[#allocation2 + $0xad] sm:$0xff]
        %v3622 = vld [vmem:[#allocation2 + $0xb5] sm:$0xff]
        %v3623 = vld [vmem:[#allocation2 + $0xbd] sm:$0xff]
        %v3624 = vld [vmem:[#allocation2 + $0xc5] sm:$0xff]
        %v3625 = vld [vmem:[#allocation2 + $0xcd] sm:$0xff]
        %v3626 = vld [vmem:[#allocation2 + $0xd5] sm:$0xff]
        %v3627 = vld [vmem:[#allocation2 + $0xdd] sm:$0x1]
        %v3628 = vpack.c.bf16 %v3610, %v3609
        %v3629 = vpack.c.bf16 %v3612, %v3611
        %v3630 = vpack.c.bf16 %v3614, %v3613
        %v3631 = vpack.c.bf16 %v3616, %v3615
        %v3632 = vpack.c.bf16 %v3618, %v3617
        %v3633 = vpack.c.bf16 %v3620, %v3619
        %v3634 = vpack.c.bf16 %v3622, %v3621
        %v3635 = vpack.c.bf16 %v3624, %v3623
        %v3636 = vpack.c.bf16 %v3626, %v3625
        %v3637 = vpack.c.bf16 %v3627, %v3627
        %v3638 = vld [vmem:[#allocation2 + $0x4e] sm:$0xff]
        %v3639 = vld [vmem:[#allocation2 + $0x56] sm:$0xff]
        %v3640 = vld [vmem:[#allocation2 + $0x5e] sm:$0xff]
        %v3641 = vld [vmem:[#allocation2 + $0x66] sm:$0xff]
        %v3642 = vld [vmem:[#allocation2 + $0x6e] sm:$0xff]
        %v3643 = vld [vmem:[#allocation2 + $0x76] sm:$0xff]
        %v3644 = vld [vmem:[#allocation2 + $0x7e] sm:$0xff]
        %v3645 = vld [vmem:[#allocation2 + $0x86] sm:$0xff]
        %v3646 = vld [vmem:[#allocation2 + $0x8e] sm:$0xff]
        %v3647 = vld [vmem:[#allocation2 + $0x96] sm:$0xff]
        %v3648 = vld [vmem:[#allocation2 + $0x9e] sm:$0xff]
        %v3649 = vld [vmem:[#allocation2 + $0xa6] sm:$0xff]
        %v3650 = vld [vmem:[#allocation2 + $0xae] sm:$0xff]
        %v3651 = vld [vmem:[#allocation2 + $0xb6] sm:$0xff]
        %v3652 = vld [vmem:[#allocation2 + $0xbe] sm:$0xff]
        %v3653 = vld [vmem:[#allocation2 + $0xc6] sm:$0xff]
        %v3654 = vld [vmem:[#allocation2 + $0xce] sm:$0xff]
        %v3655 = vld [vmem:[#allocation2 + $0xd6] sm:$0xff]
        %v3656 = vld [vmem:[#allocation2 + $0xde] sm:$0x1]
        %v3657 = vpack.c.bf16 %v3639, %v3638
        %v3658 = vpack.c.bf16 %v3641, %v3640
        %v3659 = vpack.c.bf16 %v3643, %v3642
        %v3660 = vpack.c.bf16 %v3645, %v3644
        %v3661 = vpack.c.bf16 %v3647, %v3646
        %v3662 = vpack.c.bf16 %v3649, %v3648
        %v3663 = vpack.c.bf16 %v3651, %v3650
        %v3664 = vpack.c.bf16 %v3653, %v3652
        %v3665 = vpack.c.bf16 %v3655, %v3654
        %v3666 = vpack.c.bf16 %v3656, %v3656
        %v3667 = vld [vmem:[#allocation2 + $0x4f] sm:$0xff]
        %v3668 = vld [vmem:[#allocation2 + $0x57] sm:$0xff]
        %v3669 = vld [vmem:[#allocation2 + $0x5f] sm:$0xff]
        %v3670 = vld [vmem:[#allocation2 + $0x67] sm:$0xff]
        %v3671 = vld [vmem:[#allocation2 + $0x6f] sm:$0xff]
        %v3672 = vld [vmem:[#allocation2 + $0x77] sm:$0xff]
        %v3673 = vld [vmem:[#allocation2 + $0x7f] sm:$0xff]
        %v3674 = vld [vmem:[#allocation2 + $0x87] sm:$0xff]
        %v3675 = vld [vmem:[#allocation2 + $0x8f] sm:$0xff]
        %v3676 = vld [vmem:[#allocation2 + $0x97] sm:$0xff]
        %v3677 = vld [vmem:[#allocation2 + $0x9f] sm:$0xff]
        %v3678 = vld [vmem:[#allocation2 + $0xa7] sm:$0xff]
        %v3679 = vld [vmem:[#allocation2 + $0xaf] sm:$0xff]
        %v3680 = vld [vmem:[#allocation2 + $0xb7] sm:$0xff]
        %v3681 = vld [vmem:[#allocation2 + $0xbf] sm:$0xff]
        %v3682 = vld [vmem:[#allocation2 + $0xc7] sm:$0xff]
        %v3683 = vld [vmem:[#allocation2 + $0xcf] sm:$0xff]
        %v3684 = vld [vmem:[#allocation2 + $0xd7] sm:$0xff]
        %v3685 = vld [vmem:[#allocation2 + $0xdf] sm:$0x1]
        %v3686 = vpack.c.bf16 %v3668, %v3667
        %v3687 = vpack.c.bf16 %v3670, %v3669
        %v3688 = vpack.c.bf16 %v3672, %v3671
        %v3689 = vpack.c.bf16 %v3674, %v3673
        %v3690 = vpack.c.bf16 %v3676, %v3675
        %v3691 = vpack.c.bf16 %v3678, %v3677
        %v3692 = vpack.c.bf16 %v3680, %v3679
        %v3693 = vpack.c.bf16 %v3682, %v3681
        %v3694 = vpack.c.bf16 %v3684, %v3683
        %v3695 = vpack.c.bf16 %v3685, %v3685
        %v3696 = vld [vmem:[#allocation2 + $0x50] sm:$0xff]
        %v3697 = vld [vmem:[#allocation2 + $0x58] sm:$0xff]
        %v3698 = vld [vmem:[#allocation2 + $0x60] sm:$0xff]
        %v3699 = vld [vmem:[#allocation2 + $0x68] sm:$0xff]
        %v3700 = vld [vmem:[#allocation2 + $0x70] sm:$0xff]
        %v3701 = vld [vmem:[#allocation2 + $0x78] sm:$0xff]
        %v3702 = vld [vmem:[#allocation2 + $0x80] sm:$0xff]
        %v3703 = vld [vmem:[#allocation2 + $0x88] sm:$0xff]
        %v3704 = vld [vmem:[#allocation2 + $0x90] sm:$0xff]
        %v3705 = vld [vmem:[#allocation2 + $0x98] sm:$0xff]
        %v3706 = vld [vmem:[#allocation2 + $0xa0] sm:$0xff]
        %v3707 = vld [vmem:[#allocation2 + $0xa8] sm:$0xff]
        %v3708 = vld [vmem:[#allocation2 + $0xb0] sm:$0xff]
        %v3709 = vld [vmem:[#allocation2 + $0xb8] sm:$0xff]
        %v3710 = vld [vmem:[#allocation2 + $0xc0] sm:$0xff]
        %v3711 = vld [vmem:[#allocation2 + $0xc8] sm:$0xff]
        %v3712 = vld [vmem:[#allocation2 + $0xd0] sm:$0xff]
        %v3713 = vld [vmem:[#allocation2 + $0xd8] sm:$0xff]
        %v3714 = vld [vmem:[#allocation2 + $0xe0] sm:$0x1]
        %v3715 = vpack.c.bf16 %v3697, %v3696
        %v3716 = vpack.c.bf16 %v3699, %v3698
        %v3717 = vpack.c.bf16 %v3701, %v3700
        %v3718 = vpack.c.bf16 %v3703, %v3702
        %v3719 = vpack.c.bf16 %v3705, %v3704
        %v3720 = vpack.c.bf16 %v3707, %v3706
        %v3721 = vpack.c.bf16 %v3709, %v3708
        %v3722 = vpack.c.bf16 %v3711, %v3710
        %v3723 = vpack.c.bf16 %v3713, %v3712
        %v3724 = vpack.c.bf16 %v3714, %v3714
        %3735 = vrot.lane.b32.xlu0 %v3657, 32
        %v3736 = vpop.permute.xlu0 %3735
        %3737 = vrot.lane.b32.xlu0 %v3658, 32
        %v3738 = vpop.permute.xlu0 %3737
        %3739 = vrot.lane.b32.xlu0 %v3659, 32
        %v3740 = vpop.permute.xlu0 %3739
        %3741 = vrot.lane.b32.xlu0 %v3660, 32
        %v3742 = vpop.permute.xlu0 %3741
        %3743 = vrot.lane.b32.xlu0 %v3661, 32
        %v3744 = vpop.permute.xlu0 %3743
        %3745 = vrot.lane.b32.xlu0 %v3662, 32
        %v3746 = vpop.permute.xlu0 %3745
        %3747 = vrot.lane.b32.xlu0 %v3663, 32
        %v3748 = vpop.permute.xlu0 %3747
        %3749 = vrot.lane.b32.xlu0 %v3664, 32
        %v3750 = vpop.permute.xlu0 %3749
        %3751 = vrot.lane.b32.xlu0 %v3665, 32
        %v3752 = vpop.permute.xlu0 %3751
        %3753 = vrot.lane.b32.xlu0 %v3666, 32
        %v3754 = vpop.permute.xlu0 %3753
        %3765 = vrot.lane.b32.xlu0 %v3686, 64
        %v3766 = vpop.permute.xlu0 %3765
        %3767 = vrot.lane.b32.xlu0 %v3687, 64
        %v3768 = vpop.permute.xlu0 %3767
        %3769 = vrot.lane.b32.xlu0 %v3688, 64
        %v3770 = vpop.permute.xlu0 %3769
        %3771 = vrot.lane.b32.xlu0 %v3689, 64
        %v3772 = vpop.permute.xlu0 %3771
        %3773 = vrot.lane.b32.xlu0 %v3690, 64
        %v3774 = vpop.permute.xlu0 %3773
        %3775 = vrot.lane.b32.xlu0 %v3691, 64
        %v3776 = vpop.permute.xlu0 %3775
        %3777 = vrot.lane.b32.xlu0 %v3692, 64
        %v3778 = vpop.permute.xlu0 %3777
        %3779 = vrot.lane.b32.xlu0 %v3693, 64
        %v3780 = vpop.permute.xlu0 %3779
        %3781 = vrot.lane.b32.xlu0 %v3694, 64
        %v3782 = vpop.permute.xlu0 %3781
        %3783 = vrot.lane.b32.xlu0 %v3695, 64
        %v3784 = vpop.permute.xlu0 %3783
        %3795 = vrot.lane.b32.xlu0 %v3715, 96
        %v3796 = vpop.permute.xlu0 %3795
        %3797 = vrot.lane.b32.xlu0 %v3716, 96
        %v3798 = vpop.permute.xlu0 %3797
        %3799 = vrot.lane.b32.xlu0 %v3717, 96
        %v3800 = vpop.permute.xlu0 %3799
        %3801 = vrot.lane.b32.xlu0 %v3718, 96
        %v3802 = vpop.permute.xlu0 %3801
        %3803 = vrot.lane.b32.xlu0 %v3719, 96
        %v3804 = vpop.permute.xlu0 %3803
        %3805 = vrot.lane.b32.xlu0 %v3720, 96
        %v3806 = vpop.permute.xlu0 %3805
        %3807 = vrot.lane.b32.xlu0 %v3721, 96
        %v3808 = vpop.permute.xlu0 %3807
        %3809 = vrot.lane.b32.xlu0 %v3722, 96
        %v3810 = vpop.permute.xlu0 %3809
        %3811 = vrot.lane.b32.xlu0 %v3723, 96
        %v3812 = vpop.permute.xlu0 %3811
        %3813 = vrot.lane.b32.xlu0 %v3724, 96
        %v3814 = vpop.permute.xlu0 %3813
        %v3817 = vsel %vm277, %v3628, %v3736
        %v3820 = vsel %vm277, %v3629, %v3738
        %v3823 = vsel %vm277, %v3630, %v3740
        %v3826 = vsel %vm277, %v3631, %v3742
        %v3829 = vsel %vm277, %v3632, %v3744
        %v3832 = vsel %vm277, %v3633, %v3746
        %v3835 = vsel %vm277, %v3634, %v3748
        %v3838 = vsel %vm277, %v3635, %v3750
        %v3841 = vsel %vm277, %v3636, %v3752
        %v3844 = vsel %vm277, %v3637, %v3754
        %v3846 = vsel %vm928, %v3817, %v3766
        %v3848 = vsel %vm928, %v3820, %v3768
        %v3850 = vsel %vm928, %v3823, %v3770
        %v3852 = vsel %vm928, %v3826, %v3772
        %v3854 = vsel %vm928, %v3829, %v3774
        %v3856 = vsel %vm928, %v3832, %v3776
        %v3858 = vsel %vm928, %v3835, %v3778
        %v3860 = vsel %vm928, %v3838, %v3780
        %v3862 = vsel %vm928, %v3841, %v3782
        %v3864 = vsel %vm928, %v3844, %v3784
        %v3866 = vsel %vm949, %v3846, %v3796
        %v3868 = vsel %vm949, %v3848, %v3798
        %v3870 = vsel %vm949, %v3850, %v3800
        %v3872 = vsel %vm949, %v3852, %v3802
        %v3874 = vsel %vm949, %v3854, %v3804
        %v3876 = vsel %vm949, %v3856, %v3806
        %v3878 = vsel %vm949, %v3858, %v3808
        %v3880 = vsel %vm949, %v3860, %v3810
        %v3882 = vsel %vm949, %v3862, %v3812
        %v3884 = vsel %vm949, %v3864, %v3814
        %v3895 = vunpack.c.l.b16 %v3866
        %v3896 = vunpack.c.h.b16 %v3866
        %v3897 = vunpack.c.l.b16 %v3868
        %v3898 = vunpack.c.h.b16 %v3868
        %v3899 = vunpack.c.l.b16 %v3870
        %v3900 = vunpack.c.h.b16 %v3870
        %v3901 = vunpack.c.l.b16 %v3872
        %v3902 = vunpack.c.h.b16 %v3872
        %v3903 = vunpack.c.l.b16 %v3874
        %v3904 = vunpack.c.h.b16 %v3874
        %v3905 = vunpack.c.l.b16 %v3876
        %v3906 = vunpack.c.h.b16 %v3876
        %v3907 = vunpack.c.l.b16 %v3878
        %v3908 = vunpack.c.h.b16 %v3878
        %v3909 = vunpack.c.l.b16 %v3880
        %v3910 = vunpack.c.h.b16 %v3880
        %v3911 = vunpack.c.l.b16 %v3882
        %v3912 = vunpack.c.h.b16 %v3882
        %v3913 = vunpack.c.l.b16 %v3884
        %v3914 = vpack.c.b16 %v3895, %v3895
        %v3915 = vpack.c.b16 %v3896, %v3896
        %v3916 = vpack.c.b16 %v3897, %v3897
        %v3917 = vpack.c.b16 %v3898, %v3898
        %v3918 = vpack.c.b16 %v3899, %v3899
        %v3919 = vpack.c.b16 %v3900, %v3900
        %v3920 = vpack.c.b16 %v3901, %v3901
        %v3921 = vpack.c.b16 %v3902, %v3902
        %v3922 = vpack.c.b16 %v3903, %v3903
        %v3923 = vpack.c.b16 %v3904, %v3904
        %v3924 = vpack.c.b16 %v3905, %v3905
        %v3925 = vpack.c.b16 %v3906, %v3906
        %v3926 = vpack.c.b16 %v3907, %v3907
        %v3927 = vpack.c.b16 %v3908, %v3908
        %v3928 = vpack.c.b16 %v3909, %v3909
        %v3929 = vpack.c.b16 %v3910, %v3910
        %v3930 = vpack.c.b16 %v3911, %v3911
        %v3931 = vpack.c.b16 %v3912, %v3912
        %v3932 = vpack.c.b16 %v3913, %v3913
        %3952 = vst [vmem:[#allocation4 + $0x20] sm:$0xf] %v3914
        %3953 = vst [vmem:[#allocation4 + $0x44] sm:$0xf] %v3915
        %3954 = vst [vmem:[#allocation4 + $0x68] sm:$0xf] %v3916
        %3955 = vst [vmem:[#allocation4 + $0x8c] sm:$0xf] %v3917
        %3956 = vst [vmem:[#allocation4 + $0xb0] sm:$0xf] %v3918
        %3957 = vst [vmem:[#allocation4 + $0xd4] sm:$0xf] %v3919
        %3958 = vst [vmem:[#allocation4 + $0xf8] sm:$0xf] %v3920
        %3959 = vst [vmem:[#allocation4 + $0x11c] sm:$0xf] %v3921
        %3960 = vst [vmem:[#allocation4 + $0x140] sm:$0xf] %v3922
        %3961 = vst [vmem:[#allocation4 + $0x164] sm:$0xf] %v3923
        %3962 = vst [vmem:[#allocation4 + $0x188] sm:$0xf] %v3924
        %3963 = vst [vmem:[#allocation4 + $0x1ac] sm:$0xf] %v3925
        %3964 = vst [vmem:[#allocation4 + $0x1d0] sm:$0xf] %v3926
        %3965 = vst [vmem:[#allocation4 + $0x1f4] sm:$0xf] %v3927
        %3966 = vst [vmem:[#allocation4 + $0x218] sm:$0xf] %v3928
        %3967 = vst [vmem:[#allocation4 + $0x23c] sm:$0xf] %v3929
        %3968 = vst [vmem:[#allocation4 + $0x260] sm:$0xf] %v3930
        %3969 = vst [vmem:[#allocation4 + $0x284] sm:$0xf] %v3931
        %v3970 = vld [vmem:[#allocation4 + $0x2a8] sm:$0x1]
        %v3971 = vsel %vm1057, %v3932, %v3970
        %3972 = vst [vmem:[#allocation4 + $0x2a8] sm:$0x1] %v3971
        %v3973 = vld [vmem:[#allocation4] sm:$0xff]
        %v3974 = vld [vmem:[#allocation4 + $0x8] sm:$0xff]
        %v3975 = vld [vmem:[#allocation4 + $0x10] sm:$0xff]
        %v3976 = vld [vmem:[#allocation4 + $0x18] sm:$0xff]
        %v3977 = vld [vmem:[#allocation4 + $0x20] sm:$0xf]
        %v3978 = vld [vmem:[#allocation4 + $0x24] sm:$0xff]
        %v3979 = vld [vmem:[#allocation4 + $0x2c] sm:$0xff]
        %v3980 = vld [vmem:[#allocation4 + $0x34] sm:$0xff]
        %v3981 = vld [vmem:[#allocation4 + $0x3c] sm:$0xff]
        %v3982 = vld [vmem:[#allocation4 + $0x44] sm:$0xf]
        %v3983 = vld [vmem:[#allocation4 + $0x48] sm:$0xff]
        %v3984 = vld [vmem:[#allocation4 + $0x50] sm:$0xff]
        %v3985 = vld [vmem:[#allocation4 + $0x58] sm:$0xff]
        %v3986 = vld [vmem:[#allocation4 + $0x60] sm:$0xff]
        %v3987 = vld [vmem:[#allocation4 + $0x68] sm:$0xf]
        %v3988 = vld [vmem:[#allocation4 + $0x6c] sm:$0xff]
        %v3989 = vld [vmem:[#allocation4 + $0x74] sm:$0xff]
        %v3990 = vld [vmem:[#allocation4 + $0x7c] sm:$0xff]
        %v3991 = vld [vmem:[#allocation4 + $0x84] sm:$0xff]
        %v3992 = vld [vmem:[#allocation4 + $0x8c] sm:$0xf]
        %v3993 = vld [vmem:[#allocation4 + $0x90] sm:$0xff]
        %v3994 = vld [vmem:[#allocation4 + $0x98] sm:$0xff]
        %v3995 = vld [vmem:[#allocation4 + $0xa0] sm:$0xff]
        %v3996 = vld [vmem:[#allocation4 + $0xa8] sm:$0xff]
        %v3997 = vld [vmem:[#allocation4 + $0xb0] sm:$0xf]
        %v3998 = vld [vmem:[#allocation4 + $0xb4] sm:$0xff]
        %v3999 = vld [vmem:[#allocation4 + $0xbc] sm:$0xff]
        %v4000 = vld [vmem:[#allocation4 + $0xc4] sm:$0xff]
        %v4001 = vld [vmem:[#allocation4 + $0xcc] sm:$0xff]
        %v4002 = vld [vmem:[#allocation4 + $0xd4] sm:$0xf]
        %v4003 = vld [vmem:[#allocation4 + $0xd8] sm:$0xff]
        %v4004 = vld [vmem:[#allocation4 + $0xe0] sm:$0xff]
        %v4005 = vld [vmem:[#allocation4 + $0xe8] sm:$0xff]
        %v4006 = vld [vmem:[#allocation4 + $0xf0] sm:$0xff]
        %v4007 = vld [vmem:[#allocation4 + $0xf8] sm:$0xf]
        %v4008 = vld [vmem:[#allocation4 + $0xfc] sm:$0xff]
        %v4009 = vld [vmem:[#allocation4 + $0x104] sm:$0xff]
        %v4010 = vld [vmem:[#allocation4 + $0x10c] sm:$0xff]
        %v4011 = vld [vmem:[#allocation4 + $0x114] sm:$0xff]
        %v4012 = vld [vmem:[#allocation4 + $0x11c] sm:$0xf]
        %v4013 = vld [vmem:[#allocation4 + $0x120] sm:$0xff]
        %v4014 = vld [vmem:[#allocation4 + $0x128] sm:$0xff]
        %v4015 = vld [vmem:[#allocation4 + $0x130] sm:$0xff]
        %v4016 = vld [vmem:[#allocation4 + $0x138] sm:$0xff]
        %v4017 = vld [vmem:[#allocation4 + $0x140] sm:$0xf]
        %v4018 = vld [vmem:[#allocation4 + $0x144] sm:$0xff]
        %v4019 = vld [vmem:[#allocation4 + $0x14c] sm:$0xff]
        %v4020 = vld [vmem:[#allocation4 + $0x154] sm:$0xff]
        %v4021 = vld [vmem:[#allocation4 + $0x15c] sm:$0xff]
        %v4022 = vld [vmem:[#allocation4 + $0x164] sm:$0xf]
        %v4023 = vld [vmem:[#allocation4 + $0x168] sm:$0xff]
        %v4024 = vld [vmem:[#allocation4 + $0x170] sm:$0xff]
        %v4025 = vld [vmem:[#allocation4 + $0x178] sm:$0xff]
        %v4026 = vld [vmem:[#allocation4 + $0x180] sm:$0xff]
        %v4027 = vld [vmem:[#allocation4 + $0x188] sm:$0xf]
        %v4028 = vld [vmem:[#allocation4 + $0x18c] sm:$0xff]
        %v4029 = vld [vmem:[#allocation4 + $0x194] sm:$0xff]
        %v4030 = vld [vmem:[#allocation4 + $0x19c] sm:$0xff]
        %v4031 = vld [vmem:[#allocation4 + $0x1a4] sm:$0xff]
        %v4032 = vld [vmem:[#allocation4 + $0x1ac] sm:$0xf]
        %v4033 = vld [vmem:[#allocation4 + $0x1b0] sm:$0xff]
        %v4034 = vld [vmem:[#allocation4 + $0x1b8] sm:$0xff]
        %v4035 = vld [vmem:[#allocation4 + $0x1c0] sm:$0xff]
        %v4036 = vld [vmem:[#allocation4 + $0x1c8] sm:$0xff]
        %v4037 = vld [vmem:[#allocation4 + $0x1d0] sm:$0xf]
        %v4038 = vld [vmem:[#allocation4 + $0x1d4] sm:$0xff]
        %v4039 = vld [vmem:[#allocation4 + $0x1dc] sm:$0xff]
        %v4040 = vld [vmem:[#allocation4 + $0x1e4] sm:$0xff]
        %v4041 = vld [vmem:[#allocation4 + $0x1ec] sm:$0xff]
        %v4042 = vld [vmem:[#allocation4 + $0x1f4] sm:$0xf]
        %v4043 = vld [vmem:[#allocation4 + $0x1f8] sm:$0xff]
        %v4044 = vld [vmem:[#allocation4 + $0x200] sm:$0xff]
        %v4045 = vld [vmem:[#allocation4 + $0x208] sm:$0xff]
        %v4046 = vld [vmem:[#allocation4 + $0x210] sm:$0xff]
        %v4047 = vld [vmem:[#allocation4 + $0x218] sm:$0xf]
        %v4048 = vld [vmem:[#allocation4 + $0x21c] sm:$0xff]
        %v4049 = vld [vmem:[#allocation4 + $0x224] sm:$0xff]
        %v4050 = vld [vmem:[#allocation4 + $0x22c] sm:$0xff]
        %v4051 = vld [vmem:[#allocation4 + $0x234] sm:$0xff]
        %v4052 = vld [vmem:[#allocation4 + $0x23c] sm:$0xf]
        %v4053 = vld [vmem:[#allocation4 + $0x240] sm:$0xff]
        %v4054 = vld [vmem:[#allocation4 + $0x248] sm:$0xff]
        %v4055 = vld [vmem:[#allocation4 + $0x250] sm:$0xff]
        %v4056 = vld [vmem:[#allocation4 + $0x258] sm:$0xff]
        %v4057 = vld [vmem:[#allocation4 + $0x260] sm:$0xf]
        %v4058 = vld [vmem:[#allocation4 + $0x264] sm:$0xff]
        %v4059 = vld [vmem:[#allocation4 + $0x26c] sm:$0xff]
        %v4060 = vld [vmem:[#allocation4 + $0x274] sm:$0xff]
        %v4061 = vld [vmem:[#allocation4 + $0x27c] sm:$0xff]
        %v4062 = vld [vmem:[#allocation4 + $0x284] sm:$0xf]
        %v4063 = vld [vmem:[#allocation4 + $0x288] sm:$0x11]
        %v4064 = vld [vmem:[#allocation4 + $0x290] sm:$0x11]
        %v4065 = vld [vmem:[#allocation4 + $0x298] sm:$0x11]
        %v4066 = vld [vmem:[#allocation4 + $0x2a0] sm:$0x11]
        %v4067 = vld [vmem:[#allocation4 + $0x2a8] sm:$0x1]
        %v4068 = vld [vmem:[%s3] sm:$0xf]
        %v4069 = vld [vmem:[%s3 + $0x4] sm:$0xf]
        %v4070 = vld [vmem:[%s3 + $0x8] sm:$0xf]
        %v4071 = vld [vmem:[%s3 + $0xc] sm:$0xf]
        %v4072 = vld [vmem:[%s3 + $0x10] sm:$0xf]
        %v4073 = vld [vmem:[%s3 + $0x14] sm:$0xf]
        %v4074 = vld [vmem:[%s3 + $0x18] sm:$0xf]
        %v4075 = vld [vmem:[%s3 + $0x1c] sm:$0xf]
        %v4076 = vld [vmem:[%s3 + $0x20] sm:$0xf]
        %v4077 = vld [vmem:[%s3 + $0x24] sm:$0xf]
        %v4078 = vld [vmem:[%s3 + $0x28] sm:$0xf]
        %v4079 = vld [vmem:[%s3 + $0x2c] sm:$0xf]
        %v4080 = vld [vmem:[%s3 + $0x30] sm:$0xf]
        %v4081 = vld [vmem:[%s3 + $0x34] sm:$0xf]
        %v4082 = vld [vmem:[%s3 + $0x38] sm:$0xf]
        %v4083 = vld [vmem:[%s3 + $0x3c] sm:$0xf]
        %v4084 = vld [vmem:[%s3 + $0x40] sm:$0xf]
        %v4085 = vld [vmem:[%s3 + $0x44] sm:$0xf]
        %v4086 = vld [vmem:[%s3 + $0x48] sm:$0xf]
        %v4087 = vld [vmem:[%s3 + $0x4c] sm:$0xf]
        %v4088 = vld [vmem:[%s3 + $0x50] sm:$0xf]
        %v4089 = vld [vmem:[%s3 + $0x54] sm:$0xf]
        %v4090 = vld [vmem:[%s3 + $0x58] sm:$0xf]
        %v4091 = vld [vmem:[%s3 + $0x5c] sm:$0xf]
        %v4092 = vld [vmem:[%s3 + $0x60] sm:$0xf]
        %v4093 = vld [vmem:[%s3 + $0x64] sm:$0xf]
        %v4094 = vld [vmem:[%s3 + $0x68] sm:$0xf]
        %v4095 = vld [vmem:[%s3 + $0x6c] sm:$0xf]
        %v4096 = vld [vmem:[%s3 + $0x70] sm:$0xf]
        %v4097 = vld [vmem:[%s3 + $0x74] sm:$0xf]
        %v4098 = vld [vmem:[%s3 + $0x78] sm:$0xf]
        %v4099 = vld [vmem:[%s3 + $0x7c] sm:$0xf]
        %v4100 = vld [vmem:[%s3 + $0x80] sm:$0xf]
        %v4101 = vld [vmem:[%s3 + $0x84] sm:$0xf]
        %v4102 = vld [vmem:[%s3 + $0x88] sm:$0xf]
        %v4103 = vld [vmem:[%s3 + $0x8c] sm:$0xf]
        %v4104 = vld [vmem:[%s3 + $0x90] sm:$0xf]
        %v4105 = vld [vmem:[%s3 + $0x94] sm:$0xf]
        %v4106 = vld [vmem:[%s3 + $0x98] sm:$0xf]
        %v4107 = vld [vmem:[%s3 + $0x9c] sm:$0xf]
        %v4108 = vld [vmem:[%s3 + $0xa0] sm:$0xf]
        %v4109 = vld [vmem:[%s3 + $0xa4] sm:$0xf]
        %v4110 = vld [vmem:[%s3 + $0xa8] sm:$0xf]
        %v4111 = vld [vmem:[%s3 + $0xac] sm:$0xf]
        %v4112 = vld [vmem:[%s3 + $0xb0] sm:$0xf]
        %v4113 = vld [vmem:[%s3 + $0xb4] sm:$0xf]
        %v4114 = vld [vmem:[%s3 + $0xb8] sm:$0xf]
        %v4115 = vld [vmem:[%s3 + $0xbc] sm:$0xf]
        %v4116 = vld [vmem:[%s3 + $0xc0] sm:$0xf]
        %v4117 = vld [vmem:[%s3 + $0xc4] sm:$0xf]
        %v4118 = vld [vmem:[%s3 + $0xc8] sm:$0xf]
        %v4119 = vld [vmem:[%s3 + $0xcc] sm:$0xf]
        %v4120 = vld [vmem:[%s3 + $0xd0] sm:$0xf]
        %v4121 = vld [vmem:[%s3 + $0xd4] sm:$0xf]
        %v4122 = vld [vmem:[%s3 + $0xd8] sm:$0xf]
        %v4123 = vld [vmem:[%s3 + $0xdc] sm:$0xf]
        %v4124 = vld [vmem:[%s3 + $0xe0] sm:$0xf]
        %v4125 = vld [vmem:[%s3 + $0xe4] sm:$0xf]
        %v4126 = vld [vmem:[%s3 + $0xe8] sm:$0xf]
        %v4127 = vld [vmem:[%s3 + $0xec] sm:$0xf]
        %v4128 = vld [vmem:[%s3 + $0xf0] sm:$0xf]
        %v4129 = vld [vmem:[%s3 + $0xf4] sm:$0xf]
        %v4130 = vld [vmem:[%s3 + $0xf8] sm:$0xf]
        %v4131 = vld [vmem:[%s3 + $0xfc] sm:$0xf]
        %v4132 = vld [vmem:[%s3 + $0x100] sm:$0xf]
        %v4133 = vld [vmem:[%s3 + $0x104] sm:$0xf]
        %v4134 = vld [vmem:[%s3 + $0x108] sm:$0xf]
        %v4135 = vld [vmem:[%s3 + $0x10c] sm:$0xf]
        %v4136 = vld [vmem:[%s3 + $0x110] sm:$0xf]
        %v4137 = vld [vmem:[%s3 + $0x114] sm:$0xf]
        %v4138 = vld [vmem:[%s3 + $0x118] sm:$0xf]
        %v4139 = vld [vmem:[%s3 + $0x11c] sm:$0xf]
        %v4140 = vld [vmem:[%s3 + $0x120] sm:$0xf]
        %v4141 = vld [vmem:[%s3 + $0x124] sm:$0xf]
        %v4142 = vld [vmem:[%s3 + $0x128] sm:$0xf]
        %v4143 = vld [vmem:[%s3 + $0x12c] sm:$0xf]
        %v4144 = vld [vmem:[%s3 + $0x130] sm:$0xf]
        %v4145 = vld [vmem:[%s3 + $0x134] sm:$0xf]
        %v4146 = vld [vmem:[%s3 + $0x138] sm:$0xf]
        %v4147 = vld [vmem:[%s3 + $0x13c] sm:$0xf]
        %v4148 = vld [vmem:[%s3 + $0x140] sm:$0xf]
        %v4149 = vld [vmem:[%s3 + $0x144] sm:$0xf]
        %v4150 = vld [vmem:[%s3 + $0x148] sm:$0xf]
        %v4151 = vld [vmem:[%s3 + $0x14c] sm:$0xf]
        %v4152 = vld [vmem:[%s3 + $0x150] sm:$0xf]
        %v4153 = vld [vmem:[%s3 + $0x154] sm:$0xf]
        %v4154 = vld [vmem:[%s3 + $0x158] sm:$0xf]
        %v4155 = vld [vmem:[%s3 + $0x15c] sm:$0xf]
        %v4156 = vld [vmem:[%s3 + $0x160] sm:$0xf]
        %v4157 = vld [vmem:[%s3 + $0x164] sm:$0xf]
        %v4158 = vld [vmem:[%s3 + $0x168] sm:$0xf]
        %v4159 = vld [vmem:[%s3 + $0x16c] sm:$0xf]
        %v4160 = vld [vmem:[%s3 + $0x170] sm:$0xf]
        %v4161 = vld [vmem:[%s3 + $0x174] sm:$0xf]
        %v4162 = vld [vmem:[%s3 + $0x178] sm:$0xf]
        %v4163 = vld [vmem:[%s3 + $0x17c] sm:$0xf]
        %v4164 = vld [vmem:[%s3 + $0x180] sm:$0xf]
        %v4165 = vld [vmem:[%s3 + $0x184] sm:$0xf]
        %v4166 = vld [vmem:[%s3 + $0x188] sm:$0xf]
        %v4167 = vld [vmem:[%s3 + $0x18c] sm:$0xf]
        %v4168 = vld [vmem:[%s3 + $0x190] sm:$0xf]
        %v4169 = vld [vmem:[%s3 + $0x194] sm:$0xf]
        %v4170 = vld [vmem:[%s3 + $0x198] sm:$0xf]
        %v4171 = vld [vmem:[%s3 + $0x19c] sm:$0xf]
        %v4172 = vld [vmem:[%s3 + $0x1a0] sm:$0xf]
        %v4173 = vld [vmem:[%s3 + $0x1a4] sm:$0xf]
        %v4174 = vld [vmem:[%s3 + $0x1a8] sm:$0xf]
        %v4175 = vld [vmem:[%s3 + $0x1ac] sm:$0xf]
        %v4176 = vld [vmem:[%s3 + $0x1b0] sm:$0xf]
        %v4177 = vld [vmem:[%s3 + $0x1b4] sm:$0xf]
        %v4178 = vld [vmem:[%s3 + $0x1b8] sm:$0xf]
        %v4179 = vld [vmem:[%s3 + $0x1bc] sm:$0xf]
        %v4180 = vld [vmem:[%s3 + $0x1c0] sm:$0xf]
        %v4181 = vld [vmem:[%s3 + $0x1c4] sm:$0xf]
        %v4182 = vld [vmem:[%s3 + $0x1c8] sm:$0xf]
        %v4183 = vld [vmem:[%s3 + $0x1cc] sm:$0xf]
        %v4184 = vld [vmem:[%s3 + $0x1d0] sm:$0xf]
        %v4185 = vld [vmem:[%s3 + $0x1d4] sm:$0xf]
        %v4186 = vld [vmem:[%s3 + $0x1d8] sm:$0xf]
        %v4187 = vld [vmem:[%s3 + $0x1dc] sm:$0xf]
        %v4188 = vld [vmem:[%s3 + $0x1e0] sm:$0xf]
        %v4189 = vld [vmem:[%s3 + $0x1e4] sm:$0xf]
        %v4190 = vld [vmem:[%s3 + $0x1e8] sm:$0xf]
        %v4191 = vld [vmem:[%s3 + $0x1ec] sm:$0xf]
        %v4192 = vld [vmem:[%s3 + $0x1f0] sm:$0xf]
        %v4193 = vld [vmem:[%s3 + $0x1f4] sm:$0xf]
        %v4194 = vld [vmem:[%s3 + $0x1f8] sm:$0xf]
        %v4195 = vld [vmem:[%s3 + $0x1fc] sm:$0xf]
        %v4196 = vld [vmem:[%s3 + $0x200] sm:$0xf]
        %v4197 = vld [vmem:[%s3 + $0x204] sm:$0xf]
        %v4198 = vld [vmem:[%s3 + $0x208] sm:$0xf]
        %v4199 = vld [vmem:[%s3 + $0x20c] sm:$0xf]
        %v4200 = vld [vmem:[%s3 + $0x210] sm:$0xf]
        %v4201 = vld [vmem:[%s3 + $0x214] sm:$0xf]
        %v4202 = vld [vmem:[%s3 + $0x218] sm:$0xf]
        %v4203 = vld [vmem:[%s3 + $0x21c] sm:$0xf]
        %v4204 = vld [vmem:[%s3 + $0x220] sm:$0xf]
        %v4205 = vld [vmem:[%s3 + $0x224] sm:$0xf]
        %v4206 = vld [vmem:[%s3 + $0x228] sm:$0xf]
        %v4207 = vld [vmem:[%s3 + $0x22c] sm:$0xf]
        %v4208 = vld [vmem:[%s3 + $0x230] sm:$0xf]
        %v4209 = vld [vmem:[%s3 + $0x234] sm:$0xf]
        %v4210 = vld [vmem:[%s3 + $0x238] sm:$0xf]
        %v4211 = vld [vmem:[%s3 + $0x23c] sm:$0xf]
        %v4212 = vld [vmem:[%s4] sm:$0x1]
        %v4214 = vlaneseq
        %v4215 = vshrl.u32 %v4214, 7
        %v4216 = vsub.s32 0, %v4215
        %v4217 = vrot.slane %v4212, %v4216
        %v4314 = vunpack.c.l.b16 %v3973
        %v4315 = vunpack.c.h.b16 %v3973
        %v4316 = vunpack.c.l.b16 %v3974
        %v4317 = vunpack.c.h.b16 %v3974
        %v4318 = vunpack.c.l.b16 %v3975
        %v4319 = vunpack.c.h.b16 %v3975
        %v4320 = vunpack.c.l.b16 %v3976
        %v4321 = vunpack.c.h.b16 %v3976
        %v4322 = vunpack.c.l.b16 %v3977
        %v4323 = vunpack.c.l.b16 %v3978
        %v4324 = vunpack.c.h.b16 %v3978
        %v4325 = vunpack.c.l.b16 %v3979
        %v4326 = vunpack.c.h.b16 %v3979
        %v4327 = vunpack.c.l.b16 %v3980
        %v4328 = vunpack.c.h.b16 %v3980
        %v4329 = vunpack.c.l.b16 %v3981
        %v4330 = vunpack.c.h.b16 %v3981
        %v4331 = vunpack.c.l.b16 %v3982
        %v4332 = vunpack.c.l.b16 %v3983
        %v4333 = vunpack.c.h.b16 %v3983
        %v4334 = vunpack.c.l.b16 %v3984
        %v4335 = vunpack.c.h.b16 %v3984
        %v4336 = vunpack.c.l.b16 %v3985
        %v4337 = vunpack.c.h.b16 %v3985
        %v4338 = vunpack.c.l.b16 %v3986
        %v4339 = vunpack.c.h.b16 %v3986
        %v4340 = vunpack.c.l.b16 %v3987
        %v4341 = vunpack.c.l.b16 %v3988
        %v4342 = vunpack.c.h.b16 %v3988
        %v4343 = vunpack.c.l.b16 %v3989
        %v4344 = vunpack.c.h.b16 %v3989
        %v4345 = vunpack.c.l.b16 %v3990
        %v4346 = vunpack.c.h.b16 %v3990
        %v4347 = vunpack.c.l.b16 %v3991
        %v4348 = vunpack.c.h.b16 %v3991
        %v4349 = vunpack.c.l.b16 %v3992
        %v4350 = vunpack.c.l.b16 %v3993
        %v4351 = vunpack.c.h.b16 %v3993
        %v4352 = vunpack.c.l.b16 %v3994
        %v4353 = vunpack.c.h.b16 %v3994
        %v4354 = vunpack.c.l.b16 %v3995
        %v4355 = vunpack.c.h.b16 %v3995
        %v4356 = vunpack.c.l.b16 %v3996
        %v4357 = vunpack.c.h.b16 %v3996
        %v4358 = vunpack.c.l.b16 %v3997
        %v4359 = vunpack.c.l.b16 %v3998
        %v4360 = vunpack.c.h.b16 %v3998
        %v4361 = vunpack.c.l.b16 %v3999
        %v4362 = vunpack.c.h.b16 %v3999
        %v4363 = vunpack.c.l.b16 %v4000
        %v4364 = vunpack.c.h.b16 %v4000
        %v4365 = vunpack.c.l.b16 %v4001
        %v4366 = vunpack.c.h.b16 %v4001
        %v4367 = vunpack.c.l.b16 %v4002
        %v4368 = vunpack.c.l.b16 %v4003
        %v4369 = vunpack.c.h.b16 %v4003
        %v4370 = vunpack.c.l.b16 %v4004
        %v4371 = vunpack.c.h.b16 %v4004
        %v4372 = vunpack.c.l.b16 %v4005
        %v4373 = vunpack.c.h.b16 %v4005
        %v4374 = vunpack.c.l.b16 %v4006
        %v4375 = vunpack.c.h.b16 %v4006
        %v4376 = vunpack.c.l.b16 %v4007
        %v4377 = vunpack.c.l.b16 %v4008
        %v4378 = vunpack.c.h.b16 %v4008
        %v4379 = vunpack.c.l.b16 %v4009
        %v4380 = vunpack.c.h.b16 %v4009
        %v4381 = vunpack.c.l.b16 %v4010
        %v4382 = vunpack.c.h.b16 %v4010
        %v4383 = vunpack.c.l.b16 %v4011
        %v4384 = vunpack.c.h.b16 %v4011
        %v4385 = vunpack.c.l.b16 %v4012
        %v4386 = vunpack.c.l.b16 %v4013
        %v4387 = vunpack.c.h.b16 %v4013
        %v4388 = vunpack.c.l.b16 %v4014
        %v4389 = vunpack.c.h.b16 %v4014
        %v4390 = vunpack.c.l.b16 %v4015
        %v4391 = vunpack.c.h.b16 %v4015
        %v4392 = vunpack.c.l.b16 %v4016
        %v4393 = vunpack.c.h.b16 %v4016
        %v4394 = vunpack.c.l.b16 %v4017
        %v4395 = vunpack.c.l.b16 %v4018
        %v4396 = vunpack.c.h.b16 %v4018
        %v4397 = vunpack.c.l.b16 %v4019
        %v4398 = vunpack.c.h.b16 %v4019
        %v4399 = vunpack.c.l.b16 %v4020
        %v4400 = vunpack.c.h.b16 %v4020
        %v4401 = vunpack.c.l.b16 %v4021
        %v4402 = vunpack.c.h.b16 %v4021
        %v4403 = vunpack.c.l.b16 %v4022
        %v4404 = vunpack.c.l.b16 %v4023
        %v4405 = vunpack.c.h.b16 %v4023
        %v4406 = vunpack.c.l.b16 %v4024
        %v4407 = vunpack.c.h.b16 %v4024
        %v4408 = vunpack.c.l.b16 %v4025
        %v4409 = vunpack.c.h.b16 %v4025
        %v4410 = vunpack.c.l.b16 %v4026
        %v4411 = vunpack.c.h.b16 %v4026
        %v4412 = vunpack.c.l.b16 %v4027
        %v4413 = vunpack.c.l.b16 %v4028
        %v4414 = vunpack.c.h.b16 %v4028
        %v4415 = vunpack.c.l.b16 %v4029
        %v4416 = vunpack.c.h.b16 %v4029
        %v4417 = vunpack.c.l.b16 %v4030
        %v4418 = vunpack.c.h.b16 %v4030
        %v4419 = vunpack.c.l.b16 %v4031
        %v4420 = vunpack.c.h.b16 %v4031
        %v4421 = vunpack.c.l.b16 %v4032
        %v4422 = vunpack.c.l.b16 %v4033
        %v4423 = vunpack.c.h.b16 %v4033
        %v4424 = vunpack.c.l.b16 %v4034
        %v4425 = vunpack.c.h.b16 %v4034
        %v4426 = vunpack.c.l.b16 %v4035
        %v4427 = vunpack.c.h.b16 %v4035
        %v4428 = vunpack.c.l.b16 %v4036
        %v4429 = vunpack.c.h.b16 %v4036
        %v4430 = vunpack.c.l.b16 %v4037
        %v4431 = vunpack.c.l.b16 %v4038
        %v4432 = vunpack.c.h.b16 %v4038
        %v4433 = vunpack.c.l.b16 %v4039
        %v4434 = vunpack.c.h.b16 %v4039
        %v4435 = vunpack.c.l.b16 %v4040
        %v4436 = vunpack.c.h.b16 %v4040
        %v4437 = vunpack.c.l.b16 %v4041
        %v4438 = vunpack.c.h.b16 %v4041
        %v4439 = vunpack.c.l.b16 %v4042
        %v4440 = vunpack.c.l.b16 %v4043
        %v4441 = vunpack.c.h.b16 %v4043
        %v4442 = vunpack.c.l.b16 %v4044
        %v4443 = vunpack.c.h.b16 %v4044
        %v4444 = vunpack.c.l.b16 %v4045
        %v4445 = vunpack.c.h.b16 %v4045
        %v4446 = vunpack.c.l.b16 %v4046
        %v4447 = vunpack.c.h.b16 %v4046
        %v4448 = vunpack.c.l.b16 %v4047
        %v4449 = vunpack.c.l.b16 %v4048
        %v4450 = vunpack.c.h.b16 %v4048
        %v4451 = vunpack.c.l.b16 %v4049
        %v4452 = vunpack.c.h.b16 %v4049
        %v4453 = vunpack.c.l.b16 %v4050
        %v4454 = vunpack.c.h.b16 %v4050
        %v4455 = vunpack.c.l.b16 %v4051
        %v4456 = vunpack.c.h.b16 %v4051
        %v4457 = vunpack.c.l.b16 %v4052
        %v4458 = vunpack.c.l.b16 %v4053
        %v4459 = vunpack.c.h.b16 %v4053
        %v4460 = vunpack.c.l.b16 %v4054
        %v4461 = vunpack.c.h.b16 %v4054
        %v4462 = vunpack.c.l.b16 %v4055
        %v4463 = vunpack.c.h.b16 %v4055
        %v4464 = vunpack.c.l.b16 %v4056
        %v4465 = vunpack.c.h.b16 %v4056
        %v4466 = vunpack.c.l.b16 %v4057
        %v4467 = vunpack.c.l.b16 %v4058
        %v4468 = vunpack.c.h.b16 %v4058
        %v4469 = vunpack.c.l.b16 %v4059
        %v4470 = vunpack.c.h.b16 %v4059
        %v4471 = vunpack.c.l.b16 %v4060
        %v4472 = vunpack.c.h.b16 %v4060
        %v4473 = vunpack.c.l.b16 %v4061
        %v4474 = vunpack.c.h.b16 %v4061
        %v4475 = vunpack.c.l.b16 %v4062
        %v4476 = vunpack.c.l.b16 %v4063
        %v4477 = vunpack.c.h.b16 %v4063
        %v4478 = vunpack.c.l.b16 %v4064
        %v4479 = vunpack.c.h.b16 %v4064
        %v4480 = vunpack.c.l.b16 %v4065
        %v4481 = vunpack.c.h.b16 %v4065
        %v4482 = vunpack.c.l.b16 %v4066
        %v4483 = vunpack.c.h.b16 %v4066
        %v4484 = vunpack.c.l.b16 %v4067
        %v4485 = vpack.c.b16 %v4323, %v4314
        %v4486 = vpack.c.b16 %v4324, %v4315
        %v4487 = vpack.c.b16 %v4325, %v4316
        %v4488 = vpack.c.b16 %v4326, %v4317
        %v4489 = vpack.c.b16 %v4327, %v4318
        %v4490 = vpack.c.b16 %v4328, %v4319
        %v4491 = vpack.c.b16 %v4329, %v4320
        %v4492 = vpack.c.b16 %v4330, %v4321
        %v4493 = vpack.c.b16 %v4331, %v4322
        %v4494 = vpack.c.b16 %v4341, %v4332
        %v4495 = vpack.c.b16 %v4342, %v4333
        %v4496 = vpack.c.b16 %v4343, %v4334
        %v4497 = vpack.c.b16 %v4344, %v4335
        %v4498 = vpack.c.b16 %v4345, %v4336
        %v4499 = vpack.c.b16 %v4346, %v4337
        %v4500 = vpack.c.b16 %v4347, %v4338
        %v4501 = vpack.c.b16 %v4348, %v4339
        %v4502 = vpack.c.b16 %v4349, %v4340
        %v4503 = vpack.c.b16 %v4359, %v4350
        %v4504 = vpack.c.b16 %v4360, %v4351
        %v4505 = vpack.c.b16 %v4361, %v4352
        %v4506 = vpack.c.b16 %v4362, %v4353
        %v4507 = vpack.c.b16 %v4363, %v4354
        %v4508 = vpack.c.b16 %v4364, %v4355
        %v4509 = vpack.c.b16 %v4365, %v4356
        %v4510 = vpack.c.b16 %v4366, %v4357
        %v4511 = vpack.c.b16 %v4367, %v4358
        %v4512 = vpack.c.b16 %v4377, %v4368
        %v4513 = vpack.c.b16 %v4378, %v4369
        %v4514 = vpack.c.b16 %v4379, %v4370
        %v4515 = vpack.c.b16 %v4380, %v4371
        %v4516 = vpack.c.b16 %v4381, %v4372
        %v4517 = vpack.c.b16 %v4382, %v4373
        %v4518 = vpack.c.b16 %v4383, %v4374
        %v4519 = vpack.c.b16 %v4384, %v4375
        %v4520 = vpack.c.b16 %v4385, %v4376
        %v4521 = vpack.c.b16 %v4395, %v4386
        %v4522 = vpack.c.b16 %v4396, %v4387
        %v4523 = vpack.c.b16 %v4397, %v4388
        %v4524 = vpack.c.b16 %v4398, %v4389
        %v4525 = vpack.c.b16 %v4399, %v4390
        %v4526 = vpack.c.b16 %v4400, %v4391
        %v4527 = vpack.c.b16 %v4401, %v4392
        %v4528 = vpack.c.b16 %v4402, %v4393
        %v4529 = vpack.c.b16 %v4403, %v4394
        %v4530 = vpack.c.b16 %v4413, %v4404
        %v4531 = vpack.c.b16 %v4414, %v4405
        %v4532 = vpack.c.b16 %v4415, %v4406
        %v4533 = vpack.c.b16 %v4416, %v4407
        %v4534 = vpack.c.b16 %v4417, %v4408
        %v4535 = vpack.c.b16 %v4418, %v4409
        %v4536 = vpack.c.b16 %v4419, %v4410
        %v4537 = vpack.c.b16 %v4420, %v4411
        %v4538 = vpack.c.b16 %v4421, %v4412
        %v4539 = vpack.c.b16 %v4431, %v4422
        %v4540 = vpack.c.b16 %v4432, %v4423
        %v4541 = vpack.c.b16 %v4433, %v4424
        %v4542 = vpack.c.b16 %v4434, %v4425
        %v4543 = vpack.c.b16 %v4435, %v4426
        %v4544 = vpack.c.b16 %v4436, %v4427
        %v4545 = vpack.c.b16 %v4437, %v4428
        %v4546 = vpack.c.b16 %v4438, %v4429
        %v4547 = vpack.c.b16 %v4439, %v4430
        %v4548 = vpack.c.b16 %v4449, %v4440
        %v4549 = vpack.c.b16 %v4450, %v4441
        %v4550 = vpack.c.b16 %v4451, %v4442
        %v4551 = vpack.c.b16 %v4452, %v4443
        %v4552 = vpack.c.b16 %v4453, %v4444
        %v4553 = vpack.c.b16 %v4454, %v4445
        %v4554 = vpack.c.b16 %v4455, %v4446
        %v4555 = vpack.c.b16 %v4456, %v4447
        %v4556 = vpack.c.b16 %v4457, %v4448
        %v4557 = vpack.c.b16 %v4467, %v4458
        %v4558 = vpack.c.b16 %v4468, %v4459
        %v4559 = vpack.c.b16 %v4469, %v4460
        %v4560 = vpack.c.b16 %v4470, %v4461
        %v4561 = vpack.c.b16 %v4471, %v4462
        %v4562 = vpack.c.b16 %v4472, %v4463
        %v4563 = vpack.c.b16 %v4473, %v4464
        %v4564 = vpack.c.b16 %v4474, %v4465
        %v4565 = vpack.c.b16 %v4475, %v4466
        %v4566 = vpack.c.b16 %v4476, %v4476
        %v4567 = vpack.c.b16 %v4477, %v4477
        %v4568 = vpack.c.b16 %v4478, %v4478
        %v4569 = vpack.c.b16 %v4479, %v4479
        %v4570 = vpack.c.b16 %v4480, %v4480
        %v4571 = vpack.c.b16 %v4481, %v4481
        %v4572 = vpack.c.b16 %v4482, %v4482
        %v4573 = vpack.c.b16 %v4483, %v4483
        %v4574 = vpack.c.b16 %v4484, %v4484
        %v4809 = vunpack.c.l.b16 %v4068
        %v4810 = vunpack.c.l.b16 %v4069
        %v4811 = vunpack.c.l.b16 %v4070
        %v4812 = vunpack.c.l.b16 %v4071
        %v4813 = vunpack.c.l.b16 %v4072
        %v4814 = vunpack.c.l.b16 %v4073
        %v4815 = vunpack.c.l.b16 %v4074
        %v4816 = vunpack.c.l.b16 %v4075
        %v4817 = vunpack.c.l.b16 %v4076
        %v4818 = vunpack.c.l.b16 %v4077
        %v4819 = vunpack.c.l.b16 %v4078
        %v4820 = vunpack.c.l.b16 %v4079
        %v4821 = vunpack.c.l.b16 %v4080
        %v4822 = vunpack.c.l.b16 %v4081
        %v4823 = vunpack.c.l.b16 %v4082
        %v4824 = vunpack.c.l.b16 %v4083
        %v4825 = vunpack.c.l.b16 %v4084
        %v4826 = vunpack.c.l.b16 %v4085
        %v4827 = vunpack.c.l.b16 %v4086
        %v4828 = vunpack.c.l.b16 %v4087
        %v4829 = vunpack.c.l.b16 %v4088
        %v4830 = vunpack.c.l.b16 %v4089
        %v4831 = vunpack.c.l.b16 %v4090
        %v4832 = vunpack.c.l.b16 %v4091
        %v4833 = vunpack.c.l.b16 %v4092
        %v4834 = vunpack.c.l.b16 %v4093
        %v4835 = vunpack.c.l.b16 %v4094
        %v4836 = vunpack.c.l.b16 %v4095
        %v4837 = vunpack.c.l.b16 %v4096
        %v4838 = vunpack.c.l.b16 %v4097
        %v4839 = vunpack.c.l.b16 %v4098
        %v4840 = vunpack.c.l.b16 %v4099
        %v4841 = vunpack.c.l.b16 %v4100
        %v4842 = vunpack.c.l.b16 %v4101
        %v4843 = vunpack.c.l.b16 %v4102
        %v4844 = vunpack.c.l.b16 %v4103
        %v4845 = vunpack.c.l.b16 %v4104
        %v4846 = vunpack.c.l.b16 %v4105
        %v4847 = vunpack.c.l.b16 %v4106
        %v4848 = vunpack.c.l.b16 %v4107
        %v4849 = vunpack.c.l.b16 %v4108
        %v4850 = vunpack.c.l.b16 %v4109
        %v4851 = vunpack.c.l.b16 %v4110
        %v4852 = vunpack.c.l.b16 %v4111
        %v4853 = vunpack.c.l.b16 %v4112
        %v4854 = vunpack.c.l.b16 %v4113
        %v4855 = vunpack.c.l.b16 %v4114
        %v4856 = vunpack.c.l.b16 %v4115
        %v4857 = vunpack.c.l.b16 %v4116
        %v4858 = vunpack.c.l.b16 %v4117
        %v4859 = vunpack.c.l.b16 %v4118
        %v4860 = vunpack.c.l.b16 %v4119
        %v4861 = vunpack.c.l.b16 %v4120
        %v4862 = vunpack.c.l.b16 %v4121
        %v4863 = vunpack.c.l.b16 %v4122
        %v4864 = vunpack.c.l.b16 %v4123
        %v4865 = vunpack.c.l.b16 %v4124
        %v4866 = vunpack.c.l.b16 %v4125
        %v4867 = vunpack.c.l.b16 %v4126
        %v4868 = vunpack.c.l.b16 %v4127
        %v4869 = vunpack.c.l.b16 %v4128
        %v4870 = vunpack.c.l.b16 %v4129
        %v4871 = vunpack.c.l.b16 %v4130
        %v4872 = vunpack.c.l.b16 %v4131
        %v4873 = vunpack.c.l.b16 %v4132
        %v4874 = vunpack.c.l.b16 %v4133
        %v4875 = vunpack.c.l.b16 %v4134
        %v4876 = vunpack.c.l.b16 %v4135
        %v4877 = vunpack.c.l.b16 %v4136
        %v4878 = vunpack.c.l.b16 %v4137
        %v4879 = vunpack.c.l.b16 %v4138
        %v4880 = vunpack.c.l.b16 %v4139
        %v4881 = vunpack.c.l.b16 %v4140
        %v4882 = vunpack.c.l.b16 %v4141
        %v4883 = vunpack.c.l.b16 %v4142
        %v4884 = vunpack.c.l.b16 %v4143
        %v4885 = vunpack.c.l.b16 %v4144
        %v4886 = vunpack.c.l.b16 %v4145
        %v4887 = vunpack.c.l.b16 %v4146
        %v4888 = vunpack.c.l.b16 %v4147
        %v4889 = vunpack.c.l.b16 %v4148
        %v4890 = vunpack.c.l.b16 %v4149
        %v4891 = vunpack.c.l.b16 %v4150
        %v4892 = vunpack.c.l.b16 %v4151
        %v4893 = vunpack.c.l.b16 %v4152
        %v4894 = vunpack.c.l.b16 %v4153
        %v4895 = vunpack.c.l.b16 %v4154
        %v4896 = vunpack.c.l.b16 %v4155
        %v4897 = vunpack.c.l.b16 %v4156
        %v4898 = vunpack.c.l.b16 %v4157
        %v4899 = vunpack.c.l.b16 %v4158
        %v4900 = vunpack.c.l.b16 %v4159
        %v4901 = vunpack.c.l.b16 %v4160
        %v4902 = vunpack.c.l.b16 %v4161
        %v4903 = vunpack.c.l.b16 %v4162
        %v4904 = vunpack.c.l.b16 %v4163
        %v4905 = vunpack.c.l.b16 %v4164
        %v4906 = vunpack.c.l.b16 %v4165
        %v4907 = vunpack.c.l.b16 %v4166
        %v4908 = vunpack.c.l.b16 %v4167
        %v4909 = vunpack.c.l.b16 %v4168
        %v4910 = vunpack.c.l.b16 %v4169
        %v4911 = vunpack.c.l.b16 %v4170
        %v4912 = vunpack.c.l.b16 %v4171
        %v4913 = vunpack.c.l.b16 %v4172
        %v4914 = vunpack.c.l.b16 %v4173
        %v4915 = vunpack.c.l.b16 %v4174
        %v4916 = vunpack.c.l.b16 %v4175
        %v4917 = vunpack.c.l.b16 %v4176
        %v4918 = vunpack.c.l.b16 %v4177
        %v4919 = vunpack.c.l.b16 %v4178
        %v4920 = vunpack.c.l.b16 %v4179
        %v4921 = vunpack.c.l.b16 %v4180
        %v4922 = vunpack.c.l.b16 %v4181
        %v4923 = vunpack.c.l.b16 %v4182
        %v4924 = vunpack.c.l.b16 %v4183
        %v4925 = vunpack.c.l.b16 %v4184
        %v4926 = vunpack.c.l.b16 %v4185
        %v4927 = vunpack.c.l.b16 %v4186
        %v4928 = vunpack.c.l.b16 %v4187
        %v4929 = vunpack.c.l.b16 %v4188
        %v4930 = vunpack.c.l.b16 %v4189
        %v4931 = vunpack.c.l.b16 %v4190
        %v4932 = vunpack.c.l.b16 %v4191
        %v4933 = vunpack.c.l.b16 %v4192
        %v4934 = vunpack.c.l.b16 %v4193
        %v4935 = vunpack.c.l.b16 %v4194
        %v4936 = vunpack.c.l.b16 %v4195
        %v4937 = vunpack.c.l.b16 %v4196
        %v4938 = vunpack.c.l.b16 %v4197
        %v4939 = vunpack.c.l.b16 %v4198
        %v4940 = vunpack.c.l.b16 %v4199
        %v4941 = vunpack.c.l.b16 %v4200
        %v4942 = vunpack.c.l.b16 %v4201
        %v4943 = vunpack.c.l.b16 %v4202
        %v4944 = vunpack.c.l.b16 %v4203
        %v4945 = vunpack.c.l.b16 %v4204
        %v4946 = vunpack.c.l.b16 %v4205
        %v4947 = vunpack.c.l.b16 %v4206
        %v4948 = vunpack.c.l.b16 %v4207
        %v4949 = vunpack.c.l.b16 %v4208
        %v4950 = vunpack.c.l.b16 %v4209
        %v4951 = vunpack.c.l.b16 %v4210
        %v4952 = vunpack.c.l.b16 %v4211
        %v4953 = vpack.c.b16 %v4810, %v4809
        %v4954 = vpack.c.b16 %v4812, %v4811
        %v4955 = vpack.c.b16 %v4814, %v4813
        %v4956 = vpack.c.b16 %v4816, %v4815
        %v4957 = vpack.c.b16 %v4818, %v4817
        %v4958 = vpack.c.b16 %v4820, %v4819
        %v4959 = vpack.c.b16 %v4822, %v4821
        %v4960 = vpack.c.b16 %v4824, %v4823
        %v4961 = vpack.c.b16 %v4826, %v4825
        %v4962 = vpack.c.b16 %v4828, %v4827
        %v4963 = vpack.c.b16 %v4830, %v4829
        %v4964 = vpack.c.b16 %v4832, %v4831
        %v4965 = vpack.c.b16 %v4834, %v4833
        %v4966 = vpack.c.b16 %v4836, %v4835
        %v4967 = vpack.c.b16 %v4838, %v4837
        %v4968 = vpack.c.b16 %v4840, %v4839
        %v4969 = vpack.c.b16 %v4842, %v4841
        %v4970 = vpack.c.b16 %v4844, %v4843
        %v4971 = vpack.c.b16 %v4846, %v4845
        %v4972 = vpack.c.b16 %v4848, %v4847
        %v4973 = vpack.c.b16 %v4850, %v4849
        %v4974 = vpack.c.b16 %v4852, %v4851
        %v4975 = vpack.c.b16 %v4854, %v4853
        %v4976 = vpack.c.b16 %v4856, %v4855
        %v4977 = vpack.c.b16 %v4858, %v4857
        %v4978 = vpack.c.b16 %v4860, %v4859
        %v4979 = vpack.c.b16 %v4862, %v4861
        %v4980 = vpack.c.b16 %v4864, %v4863
        %v4981 = vpack.c.b16 %v4866, %v4865
        %v4982 = vpack.c.b16 %v4868, %v4867
        %v4983 = vpack.c.b16 %v4870, %v4869
        %v4984 = vpack.c.b16 %v4872, %v4871
        %v4985 = vpack.c.b16 %v4874, %v4873
        %v4986 = vpack.c.b16 %v4876, %v4875
        %v4987 = vpack.c.b16 %v4878, %v4877
        %v4988 = vpack.c.b16 %v4880, %v4879
        %v4989 = vpack.c.b16 %v4882, %v4881
        %v4990 = vpack.c.b16 %v4884, %v4883
        %v4991 = vpack.c.b16 %v4886, %v4885
        %v4992 = vpack.c.b16 %v4888, %v4887
        %v4993 = vpack.c.b16 %v4890, %v4889
        %v4994 = vpack.c.b16 %v4892, %v4891
        %v4995 = vpack.c.b16 %v4894, %v4893
        %v4996 = vpack.c.b16 %v4896, %v4895
        %v4997 = vpack.c.b16 %v4898, %v4897
        %v4998 = vpack.c.b16 %v4900, %v4899
        %v4999 = vpack.c.b16 %v4902, %v4901
        %v5000 = vpack.c.b16 %v4904, %v4903
        %v5001 = vpack.c.b16 %v4906, %v4905
        %v5002 = vpack.c.b16 %v4908, %v4907
        %v5003 = vpack.c.b16 %v4910, %v4909
        %v5004 = vpack.c.b16 %v4912, %v4911
        %v5005 = vpack.c.b16 %v4914, %v4913
        %v5006 = vpack.c.b16 %v4916, %v4915
        %v5007 = vpack.c.b16 %v4918, %v4917
        %v5008 = vpack.c.b16 %v4920, %v4919
        %v5009 = vpack.c.b16 %v4922, %v4921
        %v5010 = vpack.c.b16 %v4924, %v4923
        %v5011 = vpack.c.b16 %v4926, %v4925
        %v5012 = vpack.c.b16 %v4928, %v4927
        %v5013 = vpack.c.b16 %v4930, %v4929
        %v5014 = vpack.c.b16 %v4932, %v4931
        %v5015 = vpack.c.b16 %v4934, %v4933
        %v5016 = vpack.c.b16 %v4936, %v4935
        %v5017 = vpack.c.b16 %v4938, %v4937
        %v5018 = vpack.c.b16 %v4940, %v4939
        %v5019 = vpack.c.b16 %v4942, %v4941
        %v5020 = vpack.c.b16 %v4944, %v4943
        %v5021 = vpack.c.b16 %v4946, %v4945
        %v5022 = vpack.c.b16 %v4948, %v4947
        %v5023 = vpack.c.b16 %v4950, %v4949
        %v5024 = vpack.c.b16 %v4952, %v4951
        %5097 = vmatprep.subr.bf16.mxu0 0
        %5098 = vmatpush1.bf16.msra.mxu0 %v4960
        %5099 = vmatprep.subr.bf16.mxu0 0
        %5100 = vmatpush1.bf16.msra.mxu0 %v4959
        %5101 = vmatprep.subr.bf16.mxu0 0
        %5102 = vmatpush1.bf16.msra.mxu0 %v4958
        %5103 = vmatprep.subr.bf16.mxu0 0
        %5104 = vmatpush1.bf16.msra.mxu0 %v4957
        %5105 = vmatprep.subr.bf16.mxu0 0
        %5106 = vmatpush1.bf16.msra.mxu0 %v4956
        %5107 = vmatprep.subr.bf16.mxu0 0
        %5108 = vmatpush1.bf16.msra.mxu0 %v4955
        %5109 = vmatprep.subr.bf16.mxu0 0
        %5110 = vmatpush1.bf16.msra.mxu0 %v4954
        %5111 = vmatprep.subr.bf16.mxu0 0
        %5112 = vmatpush1.bf16.msra.mxu0 %v4953
        %5113 = vmatprep.subr.bf16.mxu0 0
        %5114 = vmatpush2.bf16.msra.mxu0 %v4968
        %5115 = vmatprep.subr.bf16.mxu0 0
        %5116 = vmatpush2.bf16.msra.mxu0 %v4967
        %5117 = vmatprep.subr.bf16.mxu0 0
        %5118 = vmatpush2.bf16.msra.mxu0 %v4966
        %5119 = vmatprep.subr.bf16.mxu0 0
        %5120 = vmatpush2.bf16.msra.mxu0 %v4965
        %5121 = vmatprep.subr.bf16.mxu0 0
        %5122 = vmatpush2.bf16.msra.mxu0 %v4964
        %5123 = vmatprep.subr.bf16.mxu0 0
        %5124 = vmatpush2.bf16.msra.mxu0 %v4963
        %5125 = vmatprep.subr.bf16.mxu0 0
        %5126 = vmatpush2.bf16.msra.mxu0 %v4962
        %5127 = vmatprep.subr.bf16.mxu0 0
        %5128 = vmatpush2.bf16.msra.mxu0 %v4961
        %5129 = vmatprep.mubr.bf16.mxu0 %v4486
        %5130 = vmatmul.mubr.bf16.gmra.mxu0 %v4485
        %v5131 = vpop.f32.mrf.mxu0
        %v5132 = vadd.f32 %v4217, %v5131
        %v5133 = vpop.f32.mrf.mxu0
        %v5134 = vpop.f32.mrf.mxu0
        %v5135 = vadd.f32 %v4217, %v5134
        %v5136 = vpop.f32.mrf.mxu0
        %5137 = vmatprep.mubr.bf16.mxu0 %v4495
        %5138 = vmatmul.mubr.bf16.gmra.mxu0 %v4494
        %v5139 = vpop.f32.mrf.mxu0
        %v5140 = vadd.f32 %v4217, %v5139
        %v5141 = vpop.f32.mrf.mxu0
        %v5142 = vpop.f32.mrf.mxu0
        %v5143 = vadd.f32 %v4217, %v5142
        %v5144 = vpop.f32.mrf.mxu0
        %5145 = vmatprep.mubr.bf16.mxu0 %v4504
        %5146 = vmatmul.mubr.bf16.gmra.mxu0 %v4503
        %v5147 = vpop.f32.mrf.mxu0
        %v5148 = vadd.f32 %v4217, %v5147
        %v5149 = vpop.f32.mrf.mxu0
        %v5150 = vpop.f32.mrf.mxu0
        %v5151 = vadd.f32 %v4217, %v5150
        %v5152 = vpop.f32.mrf.mxu0
        %5153 = vmatprep.mubr.bf16.mxu0 %v4513
        %5154 = vmatmul.mubr.bf16.gmra.mxu0 %v4512
        %v5155 = vpop.f32.mrf.mxu0
        %v5156 = vadd.f32 %v4217, %v5155
        %v5157 = vpop.f32.mrf.mxu0
        %v5158 = vpop.f32.mrf.mxu0
        %v5159 = vadd.f32 %v4217, %v5158
        %v5160 = vpop.f32.mrf.mxu0
        %5161 = vmatprep.mubr.bf16.mxu0 %v4522
        %5162 = vmatmul.mubr.bf16.gmra.mxu0 %v4521
        %v5163 = vpop.f32.mrf.mxu0
        %v5164 = vadd.f32 %v4217, %v5163
        %v5165 = vpop.f32.mrf.mxu0
        %v5166 = vpop.f32.mrf.mxu0
        %v5167 = vadd.f32 %v4217, %v5166
        %v5168 = vpop.f32.mrf.mxu0
        %5169 = vmatprep.mubr.bf16.mxu0 %v4531
        %5170 = vmatmul.mubr.bf16.gmra.mxu0 %v4530
        %v5171 = vpop.f32.mrf.mxu0
        %v5172 = vadd.f32 %v4217, %v5171
        %v5173 = vpop.f32.mrf.mxu0
        %v5174 = vpop.f32.mrf.mxu0
        %v5175 = vadd.f32 %v4217, %v5174
        %v5176 = vpop.f32.mrf.mxu0
        %5177 = vmatprep.mubr.bf16.mxu0 %v4540
        %5178 = vmatmul.mubr.bf16.gmra.mxu0 %v4539
        %v5179 = vpop.f32.mrf.mxu0
        %v5180 = vadd.f32 %v4217, %v5179
        %v5181 = vpop.f32.mrf.mxu0
        %v5182 = vpop.f32.mrf.mxu0
        %v5183 = vadd.f32 %v4217, %v5182
        %v5184 = vpop.f32.mrf.mxu0
        %5185 = vmatprep.mubr.bf16.mxu0 %v4549
        %5186 = vmatmul.mubr.bf16.gmra.mxu0 %v4548
        %v5187 = vpop.f32.mrf.mxu0
        %v5188 = vadd.f32 %v4217, %v5187
        %v5189 = vpop.f32.mrf.mxu0
        %v5190 = vpop.f32.mrf.mxu0
        %v5191 = vadd.f32 %v4217, %v5190
        %v5192 = vpop.f32.mrf.mxu0
        %5193 = vmatprep.mubr.bf16.mxu0 %v4558
        %5194 = vmatmul.mubr.bf16.gmra.mxu0 %v4557
        %v5195 = vpop.f32.mrf.mxu0
        %v5196 = vadd.f32 %v4217, %v5195
        %v5197 = vpop.f32.mrf.mxu0
        %v5198 = vpop.f32.mrf.mxu0
        %v5199 = vadd.f32 %v4217, %v5198
        %v5200 = vpop.f32.mrf.mxu0
        %5201 = vmatprep.mubr.bf16.mxu0 %v4567
        %5202 = vmatmul.mubr.bf16.gmra.mxu0 %v4566
        %v5203 = vpop.f32.mrf.mxu0
        %v5204 = vadd.f32 %v4217, %v5203
        %v5205 = vpop.f32.mrf.mxu0
        %v5206 = vpop.f32.mrf.mxu0
        %v5207 = vpop.f32.mrf.mxu0
        %5208 = vdwg.mxu0
        %5209 = vmatprep.subr.bf16.mxu0 0
        %5210 = vmatpush1.bf16.msra.mxu0 %v4976
        %5211 = vmatprep.subr.bf16.mxu0 0
        %5212 = vmatpush1.bf16.msra.mxu0 %v4975
        %5213 = vmatprep.subr.bf16.mxu0 0
        %5214 = vmatpush1.bf16.msra.mxu0 %v4974
        %5215 = vmatprep.subr.bf16.mxu0 0
        %5216 = vmatpush1.bf16.msra.mxu0 %v4973
        %5217 = vmatprep.subr.bf16.mxu0 0
        %5218 = vmatpush1.bf16.msra.mxu0 %v4972
        %5219 = vmatprep.subr.bf16.mxu0 0
        %5220 = vmatpush1.bf16.msra.mxu0 %v4971
        %5221 = vmatprep.subr.bf16.mxu0 0
        %5222 = vmatpush1.bf16.msra.mxu0 %v4970
        %5223 = vmatprep.subr.bf16.mxu0 0
        %5224 = vmatpush1.bf16.msra.mxu0 %v4969
        %5225 = vmatprep.subr.bf16.mxu0 0
        %5226 = vmatpush2.bf16.msra.mxu0 %v4984
        %5227 = vmatprep.subr.bf16.mxu0 0
        %5228 = vmatpush2.bf16.msra.mxu0 %v4983
        %5229 = vmatprep.subr.bf16.mxu0 0
        %5230 = vmatpush2.bf16.msra.mxu0 %v4982
        %5231 = vmatprep.subr.bf16.mxu0 0
        %5232 = vmatpush2.bf16.msra.mxu0 %v4981
        %5233 = vmatprep.subr.bf16.mxu0 0
        %5234 = vmatpush2.bf16.msra.mxu0 %v4980
        %5235 = vmatprep.subr.bf16.mxu0 0
        %5236 = vmatpush2.bf16.msra.mxu0 %v4979
        %5237 = vmatprep.subr.bf16.mxu0 0
        %5238 = vmatpush2.bf16.msra.mxu0 %v4978
        %5239 = vmatprep.subr.bf16.mxu0 0
        %5240 = vmatpush2.bf16.msra.mxu0 %v4977
        %5241 = vmatprep.mubr.bf16.mxu0 %v4488
        %5242 = vmatmul.mubr.bf16.gmra.mxu0 %v4487
        %v5243 = vpop.f32.mrf.mxu0
        %v5244 = vadd.f32 %v5132, %v5243
        %v5245 = vpop.f32.mrf.mxu0
        %v5246 = vpop.f32.mrf.mxu0
        %v5247 = vadd.f32 %v5135, %v5246
        %v5248 = vpop.f32.mrf.mxu0
        %5249 = vmatprep.mubr.bf16.mxu0 %v4497
        %5250 = vmatmul.mubr.bf16.gmra.mxu0 %v4496
        %v5251 = vpop.f32.mrf.mxu0
        %v5252 = vadd.f32 %v5140, %v5251
        %v5253 = vpop.f32.mrf.mxu0
        %v5254 = vpop.f32.mrf.mxu0
        %v5255 = vadd.f32 %v5143, %v5254
        %v5256 = vpop.f32.mrf.mxu0
        %5257 = vmatprep.mubr.bf16.mxu0 %v4506
        %5258 = vmatmul.mubr.bf16.gmra.mxu0 %v4505
        %v5259 = vpop.f32.mrf.mxu0
        %v5260 = vadd.f32 %v5148, %v5259
        %v5261 = vpop.f32.mrf.mxu0
        %v5262 = vpop.f32.mrf.mxu0
        %v5263 = vadd.f32 %v5151, %v5262
        %v5264 = vpop.f32.mrf.mxu0
        %5265 = vmatprep.mubr.bf16.mxu0 %v4515
        %5266 = vmatmul.mubr.bf16.gmra.mxu0 %v4514
        %v5267 = vpop.f32.mrf.mxu0
        %v5268 = vadd.f32 %v5156, %v5267
        %v5269 = vpop.f32.mrf.mxu0
        %v5270 = vpop.f32.mrf.mxu0
        %v5271 = vadd.f32 %v5159, %v5270
        %v5272 = vpop.f32.mrf.mxu0
        %5273 = vmatprep.mubr.bf16.mxu0 %v4524
        %5274 = vmatmul.mubr.bf16.gmra.mxu0 %v4523
        %v5275 = vpop.f32.mrf.mxu0
        %v5276 = vadd.f32 %v5164, %v5275
        %v5277 = vpop.f32.mrf.mxu0
        %v5278 = vpop.f32.mrf.mxu0
        %v5279 = vadd.f32 %v5167, %v5278
        %v5280 = vpop.f32.mrf.mxu0
        %5281 = vmatprep.mubr.bf16.mxu0 %v4533
        %5282 = vmatmul.mubr.bf16.gmra.mxu0 %v4532
        %v5283 = vpop.f32.mrf.mxu0
        %v5284 = vadd.f32 %v5172, %v5283
        %v5285 = vpop.f32.mrf.mxu0
        %v5286 = vpop.f32.mrf.mxu0
        %v5287 = vadd.f32 %v5175, %v5286
        %v5288 = vpop.f32.mrf.mxu0
        %5289 = vmatprep.mubr.bf16.mxu0 %v4542
        %5290 = vmatmul.mubr.bf16.gmra.mxu0 %v4541
        %v5291 = vpop.f32.mrf.mxu0
        %v5292 = vadd.f32 %v5180, %v5291
        %v5293 = vpop.f32.mrf.mxu0
        %v5294 = vpop.f32.mrf.mxu0
        %v5295 = vadd.f32 %v5183, %v5294
        %v5296 = vpop.f32.mrf.mxu0
        %5297 = vmatprep.mubr.bf16.mxu0 %v4551
        %5298 = vmatmul.mubr.bf16.gmra.mxu0 %v4550
        %v5299 = vpop.f32.mrf.mxu0
        %v5300 = vadd.f32 %v5188, %v5299
        %v5301 = vpop.f32.mrf.mxu0
        %v5302 = vpop.f32.mrf.mxu0
        %v5303 = vadd.f32 %v5191, %v5302
        %v5304 = vpop.f32.mrf.mxu0
        %5305 = vmatprep.mubr.bf16.mxu0 %v4560
        %5306 = vmatmul.mubr.bf16.gmra.mxu0 %v4559
        %v5307 = vpop.f32.mrf.mxu0
        %v5308 = vadd.f32 %v5196, %v5307
        %v5309 = vpop.f32.mrf.mxu0
        %v5310 = vpop.f32.mrf.mxu0
        %v5311 = vadd.f32 %v5199, %v5310
        %v5312 = vpop.f32.mrf.mxu0
        %5313 = vmatprep.mubr.bf16.mxu0 %v4569
        %5314 = vmatmul.mubr.bf16.gmra.mxu0 %v4568
        %v5315 = vpop.f32.mrf.mxu0
        %v5316 = vadd.f32 %v5204, %v5315
        %v5317 = vpop.f32.mrf.mxu0
        %v5318 = vpop.f32.mrf.mxu0
        %v5319 = vpop.f32.mrf.mxu0
        %5320 = vdwg.mxu0
        %5321 = vmatprep.subr.bf16.mxu0 0
        %5322 = vmatpush1.bf16.msra.mxu0 %v4992
        %5323 = vmatprep.subr.bf16.mxu0 0
        %5324 = vmatpush1.bf16.msra.mxu0 %v4991
        %5325 = vmatprep.subr.bf16.mxu0 0
        %5326 = vmatpush1.bf16.msra.mxu0 %v4990
        %5327 = vmatprep.subr.bf16.mxu0 0
        %5328 = vmatpush1.bf16.msra.mxu0 %v4989
        %5329 = vmatprep.subr.bf16.mxu0 0
        %5330 = vmatpush1.bf16.msra.mxu0 %v4988
        %5331 = vmatprep.subr.bf16.mxu0 0
        %5332 = vmatpush1.bf16.msra.mxu0 %v4987
        %5333 = vmatprep.subr.bf16.mxu0 0
        %5334 = vmatpush1.bf16.msra.mxu0 %v4986
        %5335 = vmatprep.subr.bf16.mxu0 0
        %5336 = vmatpush1.bf16.msra.mxu0 %v4985
        %5337 = vmatprep.subr.bf16.mxu0 0
        %5338 = vmatpush2.bf16.msra.mxu0 %v5000
        %5339 = vmatprep.subr.bf16.mxu0 0
        %5340 = vmatpush2.bf16.msra.mxu0 %v4999
        %5341 = vmatprep.subr.bf16.mxu0 0
        %5342 = vmatpush2.bf16.msra.mxu0 %v4998
        %5343 = vmatprep.subr.bf16.mxu0 0
        %5344 = vmatpush2.bf16.msra.mxu0 %v4997
        %5345 = vmatprep.subr.bf16.mxu0 0
        %5346 = vmatpush2.bf16.msra.mxu0 %v4996
        %5347 = vmatprep.subr.bf16.mxu0 0
        %5348 = vmatpush2.bf16.msra.mxu0 %v4995
        %5349 = vmatprep.subr.bf16.mxu0 0
        %5350 = vmatpush2.bf16.msra.mxu0 %v4994
        %5351 = vmatprep.subr.bf16.mxu0 0
        %5352 = vmatpush2.bf16.msra.mxu0 %v4993
        %5353 = vmatprep.mubr.bf16.mxu0 %v4490
        %5354 = vmatmul.mubr.bf16.gmra.mxu0 %v4489
        %v5355 = vpop.f32.mrf.mxu0
        %v5356 = vadd.f32 %v5244, %v5355
        %v5357 = vpop.f32.mrf.mxu0
        %v5358 = vpop.f32.mrf.mxu0
        %v5359 = vadd.f32 %v5247, %v5358
        %v5360 = vpop.f32.mrf.mxu0
        %5361 = vmatprep.mubr.bf16.mxu0 %v4499
        %5362 = vmatmul.mubr.bf16.gmra.mxu0 %v4498
        %v5363 = vpop.f32.mrf.mxu0
        %v5364 = vadd.f32 %v5252, %v5363
        %v5365 = vpop.f32.mrf.mxu0
        %v5366 = vpop.f32.mrf.mxu0
        %v5367 = vadd.f32 %v5255, %v5366
        %v5368 = vpop.f32.mrf.mxu0
        %5369 = vmatprep.mubr.bf16.mxu0 %v4508
        %5370 = vmatmul.mubr.bf16.gmra.mxu0 %v4507
        %v5371 = vpop.f32.mrf.mxu0
        %v5372 = vadd.f32 %v5260, %v5371
        %v5373 = vpop.f32.mrf.mxu0
        %v5374 = vpop.f32.mrf.mxu0
        %v5375 = vadd.f32 %v5263, %v5374
        %v5376 = vpop.f32.mrf.mxu0
        %5377 = vmatprep.mubr.bf16.mxu0 %v4517
        %5378 = vmatmul.mubr.bf16.gmra.mxu0 %v4516
        %v5379 = vpop.f32.mrf.mxu0
        %v5380 = vadd.f32 %v5268, %v5379
        %v5381 = vpop.f32.mrf.mxu0
        %v5382 = vpop.f32.mrf.mxu0
        %v5383 = vadd.f32 %v5271, %v5382
        %v5384 = vpop.f32.mrf.mxu0
        %5385 = vmatprep.mubr.bf16.mxu0 %v4526
        %5386 = vmatmul.mubr.bf16.gmra.mxu0 %v4525
        %v5387 = vpop.f32.mrf.mxu0
        %v5388 = vadd.f32 %v5276, %v5387
        %v5389 = vpop.f32.mrf.mxu0
        %v5390 = vpop.f32.mrf.mxu0
        %v5391 = vadd.f32 %v5279, %v5390
        %v5392 = vpop.f32.mrf.mxu0
        %5393 = vmatprep.mubr.bf16.mxu0 %v4535
        %5394 = vmatmul.mubr.bf16.gmra.mxu0 %v4534
        %v5395 = vpop.f32.mrf.mxu0
        %v5396 = vadd.f32 %v5284, %v5395
        %v5397 = vpop.f32.mrf.mxu0
        %v5398 = vpop.f32.mrf.mxu0
        %v5399 = vadd.f32 %v5287, %v5398
        %v5400 = vpop.f32.mrf.mxu0
        %5401 = vmatprep.mubr.bf16.mxu0 %v4544
        %5402 = vmatmul.mubr.bf16.gmra.mxu0 %v4543
        %v5403 = vpop.f32.mrf.mxu0
        %v5404 = vadd.f32 %v5292, %v5403
        %v5405 = vpop.f32.mrf.mxu0
        %v5406 = vpop.f32.mrf.mxu0
        %v5407 = vadd.f32 %v5295, %v5406
        %v5408 = vpop.f32.mrf.mxu0
        %5409 = vmatprep.mubr.bf16.mxu0 %v4553
        %5410 = vmatmul.mubr.bf16.gmra.mxu0 %v4552
        %v5411 = vpop.f32.mrf.mxu0
        %v5412 = vadd.f32 %v5300, %v5411
        %v5413 = vpop.f32.mrf.mxu0
        %v5414 = vpop.f32.mrf.mxu0
        %v5415 = vadd.f32 %v5303, %v5414
        %v5416 = vpop.f32.mrf.mxu0
        %5417 = vmatprep.mubr.bf16.mxu0 %v4562
        %5418 = vmatmul.mubr.bf16.gmra.mxu0 %v4561
        %v5419 = vpop.f32.mrf.mxu0
        %v5420 = vadd.f32 %v5308, %v5419
        %v5421 = vpop.f32.mrf.mxu0
        %v5422 = vpop.f32.mrf.mxu0
        %v5423 = vadd.f32 %v5311, %v5422
        %v5424 = vpop.f32.mrf.mxu0
        %5425 = vmatprep.mubr.bf16.mxu0 %v4571
        %5426 = vmatmul.mubr.bf16.gmra.mxu0 %v4570
        %v5427 = vpop.f32.mrf.mxu0
        %v5428 = vadd.f32 %v5316, %v5427
        %v5429 = vpop.f32.mrf.mxu0
        %v5430 = vpop.f32.mrf.mxu0
        %v5431 = vpop.f32.mrf.mxu0
        %5432 = vdwg.mxu0
        %5433 = vmatprep.subr.bf16.mxu0 0
        %5434 = vmatpush1.bf16.msra.mxu0 %v5008
        %5435 = vmatprep.subr.bf16.mxu0 0
        %5436 = vmatpush1.bf16.msra.mxu0 %v5007
        %5437 = vmatprep.subr.bf16.mxu0 0
        %5438 = vmatpush1.bf16.msra.mxu0 %v5006
        %5439 = vmatprep.subr.bf16.mxu0 0
        %5440 = vmatpush1.bf16.msra.mxu0 %v5005
        %5441 = vmatprep.subr.bf16.mxu0 0
        %5442 = vmatpush1.bf16.msra.mxu0 %v5004
        %5443 = vmatprep.subr.bf16.mxu0 0
        %5444 = vmatpush1.bf16.msra.mxu0 %v5003
        %5445 = vmatprep.subr.bf16.mxu0 0
        %5446 = vmatpush1.bf16.msra.mxu0 %v5002
        %5447 = vmatprep.subr.bf16.mxu0 0
        %5448 = vmatpush1.bf16.msra.mxu0 %v5001
        %5449 = vmatprep.subr.bf16.mxu0 0
        %5450 = vmatpush2.bf16.msra.mxu0 %v5016
        %5451 = vmatprep.subr.bf16.mxu0 0
        %5452 = vmatpush2.bf16.msra.mxu0 %v5015
        %5453 = vmatprep.subr.bf16.mxu0 0
        %5454 = vmatpush2.bf16.msra.mxu0 %v5014
        %5455 = vmatprep.subr.bf16.mxu0 0
        %5456 = vmatpush2.bf16.msra.mxu0 %v5013
        %5457 = vmatprep.subr.bf16.mxu0 0
        %5458 = vmatpush2.bf16.msra.mxu0 %v5012
        %5459 = vmatprep.subr.bf16.mxu0 0
        %5460 = vmatpush2.bf16.msra.mxu0 %v5011
        %5461 = vmatprep.subr.bf16.mxu0 0
        %5462 = vmatpush2.bf16.msra.mxu0 %v5010
        %5463 = vmatprep.subr.bf16.mxu0 0
        %5464 = vmatpush2.bf16.msra.mxu0 %v5009
        %5465 = vmatprep.mubr.bf16.mxu0 %v4492
        %5466 = vmatmul.mubr.bf16.gmra.mxu0 %v4491
        %v5467 = vpop.f32.mrf.mxu0
        %v5468 = vadd.f32 %v5356, %v5467
        %v5469 = vpop.f32.mrf.mxu0
        %v5470 = vpop.f32.mrf.mxu0
        %v5471 = vadd.f32 %v5359, %v5470
        %v5472 = vpop.f32.mrf.mxu0
        %5473 = vmatprep.mubr.bf16.mxu0 %v4501
        %5474 = vmatmul.mubr.bf16.gmra.mxu0 %v4500
        %v5475 = vpop.f32.mrf.mxu0
        %v5476 = vadd.f32 %v5364, %v5475
        %v5477 = vpop.f32.mrf.mxu0
        %v5478 = vpop.f32.mrf.mxu0
        %v5479 = vadd.f32 %v5367, %v5478
        %v5480 = vpop.f32.mrf.mxu0
        %5481 = vmatprep.mubr.bf16.mxu0 %v4510
        %5482 = vmatmul.mubr.bf16.gmra.mxu0 %v4509
        %v5483 = vpop.f32.mrf.mxu0
        %v5484 = vadd.f32 %v5372, %v5483
        %v5485 = vpop.f32.mrf.mxu0
        %v5486 = vpop.f32.mrf.mxu0
        %v5487 = vadd.f32 %v5375, %v5486
        %v5488 = vpop.f32.mrf.mxu0
        %5489 = vmatprep.mubr.bf16.mxu0 %v4519
        %5490 = vmatmul.mubr.bf16.gmra.mxu0 %v4518
        %v5491 = vpop.f32.mrf.mxu0
        %v5492 = vadd.f32 %v5380, %v5491
        %v5493 = vpop.f32.mrf.mxu0
        %v5494 = vpop.f32.mrf.mxu0
        %v5495 = vadd.f32 %v5383, %v5494
        %v5496 = vpop.f32.mrf.mxu0
        %5497 = vmatprep.mubr.bf16.mxu0 %v4528
        %5498 = vmatmul.mubr.bf16.gmra.mxu0 %v4527
        %v5499 = vpop.f32.mrf.mxu0
        %v5500 = vadd.f32 %v5388, %v5499
        %v5501 = vpop.f32.mrf.mxu0
        %v5502 = vpop.f32.mrf.mxu0
        %v5503 = vadd.f32 %v5391, %v5502
        %v5504 = vpop.f32.mrf.mxu0
        %5505 = vmatprep.mubr.bf16.mxu0 %v4537
        %5506 = vmatmul.mubr.bf16.gmra.mxu0 %v4536
        %v5507 = vpop.f32.mrf.mxu0
        %v5508 = vadd.f32 %v5396, %v5507
        %v5509 = vpop.f32.mrf.mxu0
        %v5510 = vpop.f32.mrf.mxu0
        %v5511 = vadd.f32 %v5399, %v5510
        %v5512 = vpop.f32.mrf.mxu0
        %5513 = vmatprep.mubr.bf16.mxu0 %v4546
        %5514 = vmatmul.mubr.bf16.gmra.mxu0 %v4545
        %v5515 = vpop.f32.mrf.mxu0
        %v5516 = vadd.f32 %v5404, %v5515
        %v5517 = vpop.f32.mrf.mxu0
        %v5518 = vpop.f32.mrf.mxu0
        %v5519 = vadd.f32 %v5407, %v5518
        %v5520 = vpop.f32.mrf.mxu0
        %5521 = vmatprep.mubr.bf16.mxu0 %v4555
        %5522 = vmatmul.mubr.bf16.gmra.mxu0 %v4554
        %v5523 = vpop.f32.mrf.mxu0
        %v5524 = vadd.f32 %v5412, %v5523
        %v5525 = vpop.f32.mrf.mxu0
        %v5526 = vpop.f32.mrf.mxu0
        %v5527 = vadd.f32 %v5415, %v5526
        %v5528 = vpop.f32.mrf.mxu0
        %5529 = vmatprep.mubr.bf16.mxu0 %v4564
        %5530 = vmatmul.mubr.bf16.gmra.mxu0 %v4563
        %v5531 = vpop.f32.mrf.mxu0
        %v5532 = vadd.f32 %v5420, %v5531
        %v5533 = vpop.f32.mrf.mxu0
        %v5534 = vpop.f32.mrf.mxu0
        %v5535 = vadd.f32 %v5423, %v5534
        %v5536 = vpop.f32.mrf.mxu0
        %5537 = vmatprep.mubr.bf16.mxu0 %v4573
        %5538 = vmatmul.mubr.bf16.gmra.mxu0 %v4572
        %v5539 = vpop.f32.mrf.mxu0
        %v5540 = vadd.f32 %v5428, %v5539
        %v5541 = vpop.f32.mrf.mxu0
        %v5542 = vpop.f32.mrf.mxu0
        %v5543 = vpop.f32.mrf.mxu0
        %5544 = vdwg.mxu0
        %5545 = vmatprep.subr.bf16.mxu0 0
        %5546 = vmatpush1.bf16.msra.mxu0 %v5024
        %5547 = vmatprep.subr.bf16.mxu0 0
        %5548 = vmatpush1.bf16.msra.mxu0 %v5023
        %5549 = vmatprep.subr.bf16.mxu0 0
        %5550 = vmatpush1.bf16.msra.mxu0 %v5022
        %5551 = vmatprep.subr.bf16.mxu0 0
        %5552 = vmatpush1.bf16.msra.mxu0 %v5021
        %5553 = vmatprep.subr.bf16.mxu0 0
        %5554 = vmatpush1.bf16.msra.mxu0 %v5020
        %5555 = vmatprep.subr.bf16.mxu0 0
        %5556 = vmatpush1.bf16.msra.mxu0 %v5019
        %5557 = vmatprep.subr.bf16.mxu0 0
        %5558 = vmatpush1.bf16.msra.mxu0 %v5018
        %5559 = vmatprep.subr.bf16.mxu0 0
        %5560 = vmatpush1.bf16.msra.mxu0 %v5017
        %5561 = vmatprep.subr.bf16.mxu0 0
        %5562 = vmatpush2.bf16.msra.mxu0 0
        %5563 = vmatprep.subr.bf16.mxu0 0
        %5564 = vmatpush2.bf16.msra.mxu0 0
        %5565 = vmatprep.subr.bf16.mxu0 0
        %5566 = vmatpush2.bf16.msra.mxu0 0
        %5567 = vmatprep.subr.bf16.mxu0 0
        %5568 = vmatpush2.bf16.msra.mxu0 0
        %5569 = vmatprep.subr.bf16.mxu0 0
        %5570 = vmatpush2.bf16.msra.mxu0 0
        %5571 = vmatprep.subr.bf16.mxu0 0
        %5572 = vmatpush2.bf16.msra.mxu0 0
        %5573 = vmatprep.subr.bf16.mxu0 0
        %5574 = vmatpush2.bf16.msra.mxu0 0
        %5575 = vmatprep.subr.bf16.mxu0 0
        %5576 = vmatpush2.bf16.msra.mxu0 0
        %5577 = vmatprep.mubr.bf16.mxu0 0
        %5578 = vmatmul.mubr.bf16.gmra.mxu0 %v4493
        %v5579 = vpop.f32.mrf.mxu0
        %v5580 = vadd.f32 %v5468, %v5579
        %v5581 = vpop.f32.mrf.mxu0
        %v5582 = vpop.f32.mrf.mxu0
        %v5583 = vadd.f32 %v5471, %v5582
        %v5584 = vpop.f32.mrf.mxu0
        %5585 = vmatprep.mubr.bf16.mxu0 0
        %5586 = vmatmul.mubr.bf16.gmra.mxu0 %v4502
        %v5587 = vpop.f32.mrf.mxu0
        %v5588 = vadd.f32 %v5476, %v5587
        %v5589 = vpop.f32.mrf.mxu0
        %v5590 = vpop.f32.mrf.mxu0
        %v5591 = vadd.f32 %v5479, %v5590
        %v5592 = vpop.f32.mrf.mxu0
        %5593 = vmatprep.mubr.bf16.mxu0 0
        %5594 = vmatmul.mubr.bf16.gmra.mxu0 %v4511
        %v5595 = vpop.f32.mrf.mxu0
        %v5596 = vadd.f32 %v5484, %v5595
        %v5597 = vpop.f32.mrf.mxu0
        %v5598 = vpop.f32.mrf.mxu0
        %v5599 = vadd.f32 %v5487, %v5598
        %v5600 = vpop.f32.mrf.mxu0
        %5601 = vmatprep.mubr.bf16.mxu0 0
        %5602 = vmatmul.mubr.bf16.gmra.mxu0 %v4520
        %v5603 = vpop.f32.mrf.mxu0
        %v5604 = vadd.f32 %v5492, %v5603
        %v5605 = vpop.f32.mrf.mxu0
        %v5606 = vpop.f32.mrf.mxu0
        %v5607 = vadd.f32 %v5495, %v5606
        %v5608 = vpop.f32.mrf.mxu0
        %5609 = vmatprep.mubr.bf16.mxu0 0
        %5610 = vmatmul.mubr.bf16.gmra.mxu0 %v4529
        %v5611 = vpop.f32.mrf.mxu0
        %v5612 = vadd.f32 %v5500, %v5611
        %v5613 = vpop.f32.mrf.mxu0
        %v5614 = vpop.f32.mrf.mxu0
        %v5615 = vadd.f32 %v5503, %v5614
        %v5616 = vpop.f32.mrf.mxu0
        %5617 = vmatprep.mubr.bf16.mxu0 0
        %5618 = vmatmul.mubr.bf16.gmra.mxu0 %v4538
        %v5619 = vpop.f32.mrf.mxu0
        %v5620 = vadd.f32 %v5508, %v5619
        %v5621 = vpop.f32.mrf.mxu0
        %v5622 = vpop.f32.mrf.mxu0
        %v5623 = vadd.f32 %v5511, %v5622
        %v5624 = vpop.f32.mrf.mxu0
        %5625 = vmatprep.mubr.bf16.mxu0 0
        %5626 = vmatmul.mubr.bf16.gmra.mxu0 %v4547
        %v5627 = vpop.f32.mrf.mxu0
        %v5628 = vadd.f32 %v5516, %v5627
        %v5629 = vpop.f32.mrf.mxu0
        %v5630 = vpop.f32.mrf.mxu0
        %v5631 = vadd.f32 %v5519, %v5630
        %v5632 = vpop.f32.mrf.mxu0
        %5633 = vmatprep.mubr.bf16.mxu0 0
        %5634 = vmatmul.mubr.bf16.gmra.mxu0 %v4556
        %v5635 = vpop.f32.mrf.mxu0
        %v5636 = vadd.f32 %v5524, %v5635
        %v5637 = vpop.f32.mrf.mxu0
        %v5638 = vpop.f32.mrf.mxu0
        %v5639 = vadd.f32 %v5527, %v5638
        %v5640 = vpop.f32.mrf.mxu0
        %5641 = vmatprep.mubr.bf16.mxu0 0
        %5642 = vmatmul.mubr.bf16.gmra.mxu0 %v4565
        %v5643 = vpop.f32.mrf.mxu0
        %v5644 = vadd.f32 %v5532, %v5643
        %v5645 = vpop.f32.mrf.mxu0
        %v5646 = vpop.f32.mrf.mxu0
        %v5647 = vadd.f32 %v5535, %v5646
        %v5648 = vpop.f32.mrf.mxu0
        %5649 = vmatprep.mubr.bf16.mxu0 0
        %5650 = vmatmul.mubr.bf16.gmra.mxu0 %v4574
        %v5651 = vpop.f32.mrf.mxu0
        %v5652 = vadd.f32 %v5540, %v5651
        %v5653 = vpop.f32.mrf.mxu0
        %v5654 = vpop.f32.mrf.mxu0
        %v5655 = vpop.f32.mrf.mxu0
        %5656 = vdwg.mxu0
        %v5657 = vmax.f32 %v5580, 0.0
        %v5658 = vmax.f32 %v5583, 0.0
        %v5659 = vmax.f32 %v5588, 0.0
        %v5660 = vmax.f32 %v5591, 0.0
        %v5661 = vmax.f32 %v5596, 0.0
        %v5662 = vmax.f32 %v5599, 0.0
        %v5663 = vmax.f32 %v5604, 0.0
        %v5664 = vmax.f32 %v5607, 0.0
        %v5665 = vmax.f32 %v5612, 0.0
        %v5666 = vmax.f32 %v5615, 0.0
        %v5667 = vmax.f32 %v5620, 0.0
        %v5668 = vmax.f32 %v5623, 0.0
        %v5669 = vmax.f32 %v5628, 0.0
        %v5670 = vmax.f32 %v5631, 0.0
        %v5671 = vmax.f32 %v5636, 0.0
        %v5672 = vmax.f32 %v5639, 0.0
        %v5673 = vmax.f32 %v5644, 0.0
        %v5674 = vmax.f32 %v5647, 0.0
        %v5675 = vmax.f32 %v5652, 0.0
        %5676 = vst.msk [vmem:[#allocation3 + $0xd] sm:$0xff] %vm277, %v5657
        %5677 = vst.msk [vmem:[#allocation3 + $0x15] sm:$0x3] %vm652, %v5658
        %5678 = vst.msk [vmem:[#allocation3 + $0x12] sm:$0x80] %vm658, %v5658
        %5679 = vst.msk [vmem:[#allocation3 + $0x1a] sm:$0xff] %vm277, %v5659
        %5680 = vst.msk [vmem:[#allocation3 + $0x22] sm:$0x1] %vm306, %v5660
        %5681 = vst.msk [vmem:[#allocation3 + $0x1f] sm:$0xc0] %vm671, %v5660
        %5682 = vst.msk [vmem:[#allocation3 + $0x27] sm:$0xff] %vm277, %v5661
        %5683 = vst.msk [vmem:[#allocation3 + $0x2c] sm:$0xe0] %vm649, %v5662
        %5684 = vst.msk [vmem:[#allocation3 + $0x34] sm:$0x7f] %vm656, %v5663
        %5685 = vst.msk [vmem:[#allocation3 + $0x39] sm:$0xf0] %vm663, %v5664
        %5686 = vst.msk [vmem:[#allocation3 + $0x41] sm:$0x3f] %vm669, %v5665
        %5687 = vst.msk [vmem:[#allocation3 + $0x46] sm:$0xf8] %vm676, %v5666
        %5688 = vst.msk [vmem:[#allocation3 + $0x4e] sm:$0x1f] %vm647, %v5667
        %5689 = vst.msk [vmem:[#allocation3 + $0x53] sm:$0xfc] %vm654, %v5668
        %5690 = vst.msk [vmem:[#allocation3 + $0x5b] sm:$0xf] %vm661, %v5669
        %5691 = vst.msk [vmem:[#allocation3 + $0x60] sm:$0xfe] %vm667, %v5670
        %5692 = vst.msk [vmem:[#allocation3 + $0x68] sm:$0x7] %vm674, %v5671
        %5693 = vst.msk [vmem:[#allocation3 + $0x6d] sm:$0xff] %vm277, %v5672
        %5694 = vst.msk [vmem:[#allocation3 + $0x75] sm:$0x3] %vm652, %v5673
        %5695 = vst.msk [vmem:[#allocation3 + $0x72] sm:$0x80] %vm658, %v5673
        %5696 = vst.msk [vmem:[#allocation3 + $0x7a] sm:$0xff] %vm277, %v5674
        %5697 = vst.msk [vmem:[#allocation3 + $0x82] sm:$0x1] %vm306, %v5675
        %v5698 = vld [vmem:[#allocation3] sm:$0xff]
        %v5699 = vld [vmem:[#allocation3 + $0x8] sm:$0xff]
        %v5700 = vld [vmem:[#allocation3 + $0x10] sm:$0xff]
        %v5701 = vld [vmem:[#allocation3 + $0x18] sm:$0xff]
        %v5702 = vld [vmem:[#allocation3 + $0x20] sm:$0xff]
        %v5703 = vld [vmem:[#allocation3 + $0x28] sm:$0xff]
        %v5704 = vld [vmem:[#allocation3 + $0x30] sm:$0xff]
        %v5705 = vld [vmem:[#allocation3 + $0x38] sm:$0xff]
        %v5706 = vld [vmem:[#allocation3 + $0x40] sm:$0xff]
        %v5707 = vld [vmem:[#allocation3 + $0x48] sm:$0x7f]
        %v5708 = vpack.c.bf16 %v5699, %v5698
        %v5709 = vpack.c.bf16 %v5701, %v5700
        %v5710 = vpack.c.bf16 %v5703, %v5702
        %v5711 = vpack.c.bf16 %v5705, %v5704
        %v5712 = vpack.c.bf16 %v5707, %v5706
        %v5713 = vld [vmem:[#allocation3 + $0x1] sm:$0xff]
        %v5714 = vld [vmem:[#allocation3 + $0x9] sm:$0xff]
        %v5715 = vld [vmem:[#allocation3 + $0x11] sm:$0xff]
        %v5716 = vld [vmem:[#allocation3 + $0x19] sm:$0xff]
        %v5717 = vld [vmem:[#allocation3 + $0x21] sm:$0xff]
        %v5718 = vld [vmem:[#allocation3 + $0x29] sm:$0xff]
        %v5719 = vld [vmem:[#allocation3 + $0x31] sm:$0xff]
        %v5720 = vld [vmem:[#allocation3 + $0x39] sm:$0xff]
        %v5721 = vld [vmem:[#allocation3 + $0x41] sm:$0xff]
        %v5722 = vld [vmem:[#allocation3 + $0x49] sm:$0x7f]
        %v5723 = vpack.c.bf16 %v5714, %v5713
        %v5724 = vpack.c.bf16 %v5716, %v5715
        %v5725 = vpack.c.bf16 %v5718, %v5717
        %v5726 = vpack.c.bf16 %v5720, %v5719
        %v5727 = vpack.c.bf16 %v5722, %v5721
        %v5728 = vld [vmem:[#allocation3 + $0x2] sm:$0xff]
        %v5729 = vld [vmem:[#allocation3 + $0xa] sm:$0xff]
        %v5730 = vld [vmem:[#allocation3 + $0x12] sm:$0xff]
        %v5731 = vld [vmem:[#allocation3 + $0x1a] sm:$0xff]
        %v5732 = vld [vmem:[#allocation3 + $0x22] sm:$0xff]
        %v5733 = vld [vmem:[#allocation3 + $0x2a] sm:$0xff]
        %v5734 = vld [vmem:[#allocation3 + $0x32] sm:$0xff]
        %v5735 = vld [vmem:[#allocation3 + $0x3a] sm:$0xff]
        %v5736 = vld [vmem:[#allocation3 + $0x42] sm:$0xff]
        %v5737 = vld [vmem:[#allocation3 + $0x4a] sm:$0x7f]
        %v5738 = vpack.c.bf16 %v5729, %v5728
        %v5739 = vpack.c.bf16 %v5731, %v5730
        %v5740 = vpack.c.bf16 %v5733, %v5732
        %v5741 = vpack.c.bf16 %v5735, %v5734
        %v5742 = vpack.c.bf16 %v5737, %v5736
        %v5743 = vld [vmem:[#allocation3 + $0x3] sm:$0xff]
        %v5744 = vld [vmem:[#allocation3 + $0xb] sm:$0xff]
        %v5745 = vld [vmem:[#allocation3 + $0x13] sm:$0xff]
        %v5746 = vld [vmem:[#allocation3 + $0x1b] sm:$0xff]
        %v5747 = vld [vmem:[#allocation3 + $0x23] sm:$0xff]
        %v5748 = vld [vmem:[#allocation3 + $0x2b] sm:$0xff]
        %v5749 = vld [vmem:[#allocation3 + $0x33] sm:$0xff]
        %v5750 = vld [vmem:[#allocation3 + $0x3b] sm:$0xff]
        %v5751 = vld [vmem:[#allocation3 + $0x43] sm:$0xff]
        %v5752 = vld [vmem:[#allocation3 + $0x4b] sm:$0x7f]
        %v5753 = vpack.c.bf16 %v5744, %v5743
        %v5754 = vpack.c.bf16 %v5746, %v5745
        %v5755 = vpack.c.bf16 %v5748, %v5747
        %v5756 = vpack.c.bf16 %v5750, %v5749
        %v5757 = vpack.c.bf16 %v5752, %v5751
        %5763 = vrot.lane.b32.xlu0 %v5723, 32
        %v5764 = vpop.permute.xlu0 %5763
        %5765 = vrot.lane.b32.xlu0 %v5724, 32
        %v5766 = vpop.permute.xlu0 %5765
        %5767 = vrot.lane.b32.xlu0 %v5725, 32
        %v5768 = vpop.permute.xlu0 %5767
        %5769 = vrot.lane.b32.xlu0 %v5726, 32
        %v5770 = vpop.permute.xlu0 %5769
        %5771 = vrot.lane.b32.xlu0 %v5727, 32
        %v5772 = vpop.permute.xlu0 %5771
        %5778 = vrot.lane.b32.xlu0 %v5738, 64
        %v5779 = vpop.permute.xlu0 %5778
        %5780 = vrot.lane.b32.xlu0 %v5739, 64
        %v5781 = vpop.permute.xlu0 %5780
        %5782 = vrot.lane.b32.xlu0 %v5740, 64
        %v5783 = vpop.permute.xlu0 %5782
        %5784 = vrot.lane.b32.xlu0 %v5741, 64
        %v5785 = vpop.permute.xlu0 %5784
        %5786 = vrot.lane.b32.xlu0 %v5742, 64
        %v5787 = vpop.permute.xlu0 %5786
        %5793 = vrot.lane.b32.xlu0 %v5753, 96
        %v5794 = vpop.permute.xlu0 %5793
        %5795 = vrot.lane.b32.xlu0 %v5754, 96
        %v5796 = vpop.permute.xlu0 %5795
        %5797 = vrot.lane.b32.xlu0 %v5755, 96
        %v5798 = vpop.permute.xlu0 %5797
        %5799 = vrot.lane.b32.xlu0 %v5756, 96
        %v5800 = vpop.permute.xlu0 %5799
        %5801 = vrot.lane.b32.xlu0 %v5757, 96
        %v5802 = vpop.permute.xlu0 %5801
        %v5805 = vsel %vm277, %v5708, %v5764
        %v5808 = vsel %vm277, %v5709, %v5766
        %v5811 = vsel %vm277, %v5710, %v5768
        %v5814 = vsel %vm277, %v5711, %v5770
        %v5817 = vsel %vm277, %v5712, %v5772
        %v5819 = vsel %vm928, %v5805, %v5779
        %v5821 = vsel %vm928, %v5808, %v5781
        %v5823 = vsel %vm928, %v5811, %v5783
        %v5825 = vsel %vm928, %v5814, %v5785
        %v5827 = vsel %vm928, %v5817, %v5787
        %v5829 = vsel %vm949, %v5819, %v5794
        %v5831 = vsel %vm949, %v5821, %v5796
        %v5833 = vsel %vm949, %v5823, %v5798
        %v5835 = vsel %vm949, %v5825, %v5800
        %v5837 = vsel %vm949, %v5827, %v5802
        %v5843 = vunpack.c.l.b16 %v5829
        %v5844 = vunpack.c.h.b16 %v5829
        %v5845 = vunpack.c.l.b16 %v5831
        %v5846 = vunpack.c.h.b16 %v5831
        %v5847 = vunpack.c.l.b16 %v5833
        %v5848 = vunpack.c.h.b16 %v5833
        %v5849 = vunpack.c.l.b16 %v5835
        %v5850 = vunpack.c.h.b16 %v5835
        %v5851 = vunpack.c.l.b16 %v5837
        %v5852 = vunpack.c.h.b16 %v5837
        %v5853 = vpack.c.b16 %v5843, %v5843
        %v5854 = vpack.c.b16 %v5844, %v5844
        %v5855 = vpack.c.b16 %v5845, %v5845
        %v5856 = vpack.c.b16 %v5846, %v5846
        %v5857 = vpack.c.b16 %v5847, %v5847
        %v5858 = vpack.c.b16 %v5848, %v5848
        %v5859 = vpack.c.b16 %v5849, %v5849
        %v5860 = vpack.c.b16 %v5850, %v5850
        %v5861 = vpack.c.b16 %v5851, %v5851
        %v5862 = vpack.c.b16 %v5852, %v5852
        %5873 = vst [vmem:[#allocation5] sm:$0xf] %v5853
        %5874 = vst [vmem:[#allocation5 + $0x24] sm:$0xf] %v5854
        %5875 = vst [vmem:[#allocation5 + $0x48] sm:$0xf] %v5855
        %5876 = vst [vmem:[#allocation5 + $0x6c] sm:$0xf] %v5856
        %5877 = vst [vmem:[#allocation5 + $0x90] sm:$0xf] %v5857
        %5878 = vst [vmem:[#allocation5 + $0xb4] sm:$0xf] %v5858
        %5879 = vst [vmem:[#allocation5 + $0xd8] sm:$0xf] %v5859
        %5880 = vst [vmem:[#allocation5 + $0xfc] sm:$0xf] %v5860
        %5881 = vst [vmem:[#allocation5 + $0x120] sm:$0xf] %v5861
        %vm5882 = vcmask 1043456
        %vm5883 = vsmask.f32 3328
        %vm5884 = vmand %vm5882, %vm5883
        %v5885 = vld [vmem:[#allocation5 + $0x144] sm:$0xf]
        %v5886 = vsel %vm5884, %v5862, %v5885
        %5887 = vst [vmem:[#allocation5 + $0x144] sm:$0xf] %v5886
        %v5888 = vld [vmem:[#allocation3 + $0x4] sm:$0xff]
        %v5889 = vld [vmem:[#allocation3 + $0xc] sm:$0xff]
        %v5890 = vld [vmem:[#allocation3 + $0x14] sm:$0xff]
        %v5891 = vld [vmem:[#allocation3 + $0x1c] sm:$0xff]
        %v5892 = vld [vmem:[#allocation3 + $0x24] sm:$0xff]
        %v5893 = vld [vmem:[#allocation3 + $0x2c] sm:$0xff]
        %v5894 = vld [vmem:[#allocation3 + $0x34] sm:$0xff]
        %v5895 = vld [vmem:[#allocation3 + $0x3c] sm:$0xff]
        %v5896 = vld [vmem:[#allocation3 + $0x44] sm:$0xff]
        %v5897 = vld [vmem:[#allocation3 + $0x4c] sm:$0x7f]
        %v5898 = vpack.c.bf16 %v5889, %v5888
        %v5899 = vpack.c.bf16 %v5891, %v5890
        %v5900 = vpack.c.bf16 %v5893, %v5892
        %v5901 = vpack.c.bf16 %v5895, %v5894
        %v5902 = vpack.c.bf16 %v5897, %v5896
        %v5903 = vld [vmem:[#allocation3 + $0x5] sm:$0xff]
        %v5904 = vld [vmem:[#allocation3 + $0xd] sm:$0xff]
        %v5905 = vld [vmem:[#allocation3 + $0x15] sm:$0xff]
        %v5906 = vld [vmem:[#allocation3 + $0x1d] sm:$0xff]
        %v5907 = vld [vmem:[#allocation3 + $0x25] sm:$0xff]
        %v5908 = vld [vmem:[#allocation3 + $0x2d] sm:$0xff]
        %v5909 = vld [vmem:[#allocation3 + $0x35] sm:$0xff]
        %v5910 = vld [vmem:[#allocation3 + $0x3d] sm:$0xff]
        %v5911 = vld [vmem:[#allocation3 + $0x45] sm:$0xff]
        %v5912 = vld [vmem:[#allocation3 + $0x4d] sm:$0x7f]
        %v5913 = vpack.c.bf16 %v5904, %v5903
        %v5914 = vpack.c.bf16 %v5906, %v5905
        %v5915 = vpack.c.bf16 %v5908, %v5907
        %v5916 = vpack.c.bf16 %v5910, %v5909
        %v5917 = vpack.c.bf16 %v5912, %v5911
        %v5918 = vld [vmem:[#allocation3 + $0x4c] sm:$0xff]
        %v5919 = vld [vmem:[#allocation3 + $0x54] sm:$0x7f]
        %v5920 = vpack.c.bf16 %v5890, %v5889
        %v5921 = vpack.c.bf16 %v5892, %v5891
        %v5922 = vpack.c.bf16 %v5894, %v5893
        %v5923 = vpack.c.bf16 %v5896, %v5895
        %v5924 = vpack.c.bf16 %v5919, %v5918
        %v5925 = vld [vmem:[#allocation3 + $0x4d] sm:$0xff]
        %v5926 = vld [vmem:[#allocation3 + $0x55] sm:$0x7f]
        %v5927 = vpack.c.bf16 %v5905, %v5904
        %v5928 = vpack.c.bf16 %v5907, %v5906
        %v5929 = vpack.c.bf16 %v5909, %v5908
        %v5930 = vpack.c.bf16 %v5911, %v5910
        %v5931 = vpack.c.bf16 %v5926, %v5925
        %5937 = vrot.lane.b32.xlu0 %v5913, 32
        %v5938 = vpop.permute.xlu0 %5937
        %5939 = vrot.lane.b32.xlu0 %v5914, 32
        %v5940 = vpop.permute.xlu0 %5939
        %5941 = vrot.lane.b32.xlu0 %v5915, 32
        %v5942 = vpop.permute.xlu0 %5941
        %5943 = vrot.lane.b32.xlu0 %v5916, 32
        %v5944 = vpop.permute.xlu0 %5943
        %5945 = vrot.lane.b32.xlu0 %v5917, 32
        %v5946 = vpop.permute.xlu0 %5945
        %5952 = vrot.lane.b32.xlu0 %v5920, 64
        %v5953 = vpop.permute.xlu0 %5952
        %5954 = vrot.lane.b32.xlu0 %v5921, 64
        %v5955 = vpop.permute.xlu0 %5954
        %5956 = vrot.lane.b32.xlu0 %v5922, 64
        %v5957 = vpop.permute.xlu0 %5956
        %5958 = vrot.lane.b32.xlu0 %v5923, 64
        %v5959 = vpop.permute.xlu0 %5958
        %5960 = vrot.lane.b32.xlu0 %v5924, 64
        %v5961 = vpop.permute.xlu0 %5960
        %5967 = vrot.lane.b32.xlu0 %v5927, 96
        %v5968 = vpop.permute.xlu0 %5967
        %5969 = vrot.lane.b32.xlu0 %v5928, 96
        %v5970 = vpop.permute.xlu0 %5969
        %5971 = vrot.lane.b32.xlu0 %v5929, 96
        %v5972 = vpop.permute.xlu0 %5971
        %5973 = vrot.lane.b32.xlu0 %v5930, 96
        %v5974 = vpop.permute.xlu0 %5973
        %5975 = vrot.lane.b32.xlu0 %v5931, 96
        %v5976 = vpop.permute.xlu0 %5975
        %v5979 = vsel %vm277, %v5898, %v5938
        %v5982 = vsel %vm277, %v5899, %v5940
        %v5985 = vsel %vm277, %v5900, %v5942
        %v5988 = vsel %vm277, %v5901, %v5944
        %v5991 = vsel %vm277, %v5902, %v5946
        %v5993 = vsel %vm928, %v5979, %v5953
        %v5995 = vsel %vm928, %v5982, %v5955
        %v5997 = vsel %vm928, %v5985, %v5957
        %v5999 = vsel %vm928, %v5988, %v5959
        %v6001 = vsel %vm928, %v5991, %v5961
        %v6003 = vsel %vm949, %v5993, %v5968
        %v6005 = vsel %vm949, %v5995, %v5970
        %v6007 = vsel %vm949, %v5997, %v5972
        %v6009 = vsel %vm949, %v5999, %v5974
        %v6011 = vsel %vm949, %v6001, %v5976
        %v6017 = vunpack.c.l.b16 %v6003
        %v6018 = vunpack.c.h.b16 %v6003
        %v6019 = vunpack.c.l.b16 %v6005
        %v6020 = vunpack.c.h.b16 %v6005
        %v6021 = vunpack.c.l.b16 %v6007
        %v6022 = vunpack.c.h.b16 %v6007
        %v6023 = vunpack.c.l.b16 %v6009
        %v6024 = vunpack.c.h.b16 %v6009
        %v6025 = vunpack.c.l.b16 %v6011
        %v6026 = vunpack.c.h.b16 %v6011
        %v6027 = vpack.c.b16 %v6017, %v6017
        %v6028 = vpack.c.b16 %v6018, %v6018
        %v6029 = vpack.c.b16 %v6019, %v6019
        %v6030 = vpack.c.b16 %v6020, %v6020
        %v6031 = vpack.c.b16 %v6021, %v6021
        %v6032 = vpack.c.b16 %v6022, %v6022
        %v6033 = vpack.c.b16 %v6023, %v6023
        %v6034 = vpack.c.b16 %v6024, %v6024
        %v6035 = vpack.c.b16 %v6025, %v6025
        %v6036 = vpack.c.b16 %v6026, %v6026
        %6047 = vst [vmem:[#allocation5 + $0x4] sm:$0xf] %v6027
        %6048 = vst [vmem:[#allocation5 + $0x28] sm:$0xf] %v6028
        %6049 = vst [vmem:[#allocation5 + $0x4c] sm:$0xf] %v6029
        %6050 = vst [vmem:[#allocation5 + $0x70] sm:$0xf] %v6030
        %6051 = vst [vmem:[#allocation5 + $0x94] sm:$0xf] %v6031
        %6052 = vst [vmem:[#allocation5 + $0xb8] sm:$0xf] %v6032
        %6053 = vst [vmem:[#allocation5 + $0xdc] sm:$0xf] %v6033
        %6054 = vst [vmem:[#allocation5 + $0x100] sm:$0xf] %v6034
        %6055 = vst [vmem:[#allocation5 + $0x124] sm:$0xf] %v6035
        %v6056 = vld [vmem:[#allocation5 + $0x148] sm:$0xf]
        %v6057 = vsel %vm5884, %v6036, %v6056
        %6058 = vst [vmem:[#allocation5 + $0x148] sm:$0xf] %v6057
        %v6059 = vld [vmem:[#allocation3 + $0xe] sm:$0xff]
        %v6060 = vld [vmem:[#allocation3 + $0x16] sm:$0xff]
        %v6061 = vld [vmem:[#allocation3 + $0x1e] sm:$0xff]
        %v6062 = vld [vmem:[#allocation3 + $0x26] sm:$0xff]
        %v6063 = vld [vmem:[#allocation3 + $0x2e] sm:$0xff]
        %v6064 = vld [vmem:[#allocation3 + $0x36] sm:$0xff]
        %v6065 = vld [vmem:[#allocation3 + $0x3e] sm:$0xff]
        %v6066 = vld [vmem:[#allocation3 + $0x46] sm:$0xff]
        %v6067 = vld [vmem:[#allocation3 + $0x4e] sm:$0xff]
        %v6068 = vld [vmem:[#allocation3 + $0x56] sm:$0x7f]
        %v6069 = vpack.c.bf16 %v6060, %v6059
        %v6070 = vpack.c.bf16 %v6062, %v6061
        %v6071 = vpack.c.bf16 %v6064, %v6063
        %v6072 = vpack.c.bf16 %v6066, %v6065
        %v6073 = vpack.c.bf16 %v6068, %v6067
        %v6074 = vld [vmem:[#allocation3 + $0xf] sm:$0xff]
        %v6075 = vld [vmem:[#allocation3 + $0x17] sm:$0xff]
        %v6076 = vld [vmem:[#allocation3 + $0x1f] sm:$0xff]
        %v6077 = vld [vmem:[#allocation3 + $0x27] sm:$0xff]
        %v6078 = vld [vmem:[#allocation3 + $0x2f] sm:$0xff]
        %v6079 = vld [vmem:[#allocation3 + $0x37] sm:$0xff]
        %v6080 = vld [vmem:[#allocation3 + $0x3f] sm:$0xff]
        %v6081 = vld [vmem:[#allocation3 + $0x47] sm:$0xff]
        %v6082 = vld [vmem:[#allocation3 + $0x4f] sm:$0xff]
        %v6083 = vld [vmem:[#allocation3 + $0x57] sm:$0x7f]
        %v6084 = vpack.c.bf16 %v6075, %v6074
        %v6085 = vpack.c.bf16 %v6077, %v6076
        %v6086 = vpack.c.bf16 %v6079, %v6078
        %v6087 = vpack.c.bf16 %v6081, %v6080
        %v6088 = vpack.c.bf16 %v6083, %v6082
        %v6089 = vld [vmem:[#allocation3 + $0x10] sm:$0xff]
        %v6090 = vld [vmem:[#allocation3 + $0x18] sm:$0xff]
        %v6091 = vld [vmem:[#allocation3 + $0x20] sm:$0xff]
        %v6092 = vld [vmem:[#allocation3 + $0x28] sm:$0xff]
        %v6093 = vld [vmem:[#allocation3 + $0x30] sm:$0xff]
        %v6094 = vld [vmem:[#allocation3 + $0x38] sm:$0xff]
        %v6095 = vld [vmem:[#allocation3 + $0x40] sm:$0xff]
        %v6096 = vld [vmem:[#allocation3 + $0x48] sm:$0xff]
        %v6097 = vld [vmem:[#allocation3 + $0x50] sm:$0xff]
        %v6098 = vld [vmem:[#allocation3 + $0x58] sm:$0x7f]
        %v6099 = vpack.c.bf16 %v6090, %v6089
        %v6100 = vpack.c.bf16 %v6092, %v6091
        %v6101 = vpack.c.bf16 %v6094, %v6093
        %v6102 = vpack.c.bf16 %v6096, %v6095
        %v6103 = vpack.c.bf16 %v6098, %v6097
        %v6104 = vld [vmem:[#allocation3 + $0x11] sm:$0xff]
        %v6105 = vld [vmem:[#allocation3 + $0x19] sm:$0xff]
        %v6106 = vld [vmem:[#allocation3 + $0x21] sm:$0xff]
        %v6107 = vld [vmem:[#allocation3 + $0x29] sm:$0xff]
        %v6108 = vld [vmem:[#allocation3 + $0x31] sm:$0xff]
        %v6109 = vld [vmem:[#allocation3 + $0x39] sm:$0xff]
        %v6110 = vld [vmem:[#allocation3 + $0x41] sm:$0xff]
        %v6111 = vld [vmem:[#allocation3 + $0x49] sm:$0xff]
        %v6112 = vld [vmem:[#allocation3 + $0x51] sm:$0xff]
        %v6113 = vld [vmem:[#allocation3 + $0x59] sm:$0x7f]
        %v6114 = vpack.c.bf16 %v6105, %v6104
        %v6115 = vpack.c.bf16 %v6107, %v6106
        %v6116 = vpack.c.bf16 %v6109, %v6108
        %v6117 = vpack.c.bf16 %v6111, %v6110
        %v6118 = vpack.c.bf16 %v6113, %v6112
        %6124 = vrot.lane.b32.xlu0 %v6084, 32
        %v6125 = vpop.permute.xlu0 %6124
        %6126 = vrot.lane.b32.xlu0 %v6085, 32
        %v6127 = vpop.permute.xlu0 %6126
        %6128 = vrot.lane.b32.xlu0 %v6086, 32
        %v6129 = vpop.permute.xlu0 %6128
        %6130 = vrot.lane.b32.xlu0 %v6087, 32
        %v6131 = vpop.permute.xlu0 %6130
        %6132 = vrot.lane.b32.xlu0 %v6088, 32
        %v6133 = vpop.permute.xlu0 %6132
        %6139 = vrot.lane.b32.xlu0 %v6099, 64
        %v6140 = vpop.permute.xlu0 %6139
        %6141 = vrot.lane.b32.xlu0 %v6100, 64
        %v6142 = vpop.permute.xlu0 %6141
        %6143 = vrot.lane.b32.xlu0 %v6101, 64
        %v6144 = vpop.permute.xlu0 %6143
        %6145 = vrot.lane.b32.xlu0 %v6102, 64
        %v6146 = vpop.permute.xlu0 %6145
        %6147 = vrot.lane.b32.xlu0 %v6103, 64
        %v6148 = vpop.permute.xlu0 %6147
        %6154 = vrot.lane.b32.xlu0 %v6114, 96
        %v6155 = vpop.permute.xlu0 %6154
        %6156 = vrot.lane.b32.xlu0 %v6115, 96
        %v6157 = vpop.permute.xlu0 %6156
        %6158 = vrot.lane.b32.xlu0 %v6116, 96
        %v6159 = vpop.permute.xlu0 %6158
        %6160 = vrot.lane.b32.xlu0 %v6117, 96
        %v6161 = vpop.permute.xlu0 %6160
        %6162 = vrot.lane.b32.xlu0 %v6118, 96
        %v6163 = vpop.permute.xlu0 %6162
        %v6166 = vsel %vm277, %v6069, %v6125
        %v6169 = vsel %vm277, %v6070, %v6127
        %v6172 = vsel %vm277, %v6071, %v6129
        %v6175 = vsel %vm277, %v6072, %v6131
        %v6178 = vsel %vm277, %v6073, %v6133
        %v6180 = vsel %vm928, %v6166, %v6140
        %v6182 = vsel %vm928, %v6169, %v6142
        %v6184 = vsel %vm928, %v6172, %v6144
        %v6186 = vsel %vm928, %v6175, %v6146
        %v6188 = vsel %vm928, %v6178, %v6148
        %v6190 = vsel %vm949, %v6180, %v6155
        %v6192 = vsel %vm949, %v6182, %v6157
        %v6194 = vsel %vm949, %v6184, %v6159
        %v6196 = vsel %vm949, %v6186, %v6161
        %v6198 = vsel %vm949, %v6188, %v6163
        %v6204 = vunpack.c.l.b16 %v6190
        %v6205 = vunpack.c.h.b16 %v6190
        %v6206 = vunpack.c.l.b16 %v6192
        %v6207 = vunpack.c.h.b16 %v6192
        %v6208 = vunpack.c.l.b16 %v6194
        %v6209 = vunpack.c.h.b16 %v6194
        %v6210 = vunpack.c.l.b16 %v6196
        %v6211 = vunpack.c.h.b16 %v6196
        %v6212 = vunpack.c.l.b16 %v6198
        %v6213 = vunpack.c.h.b16 %v6198
        %v6214 = vpack.c.b16 %v6204, %v6204
        %v6215 = vpack.c.b16 %v6205, %v6205
        %v6216 = vpack.c.b16 %v6206, %v6206
        %v6217 = vpack.c.b16 %v6207, %v6207
        %v6218 = vpack.c.b16 %v6208, %v6208
        %v6219 = vpack.c.b16 %v6209, %v6209
        %v6220 = vpack.c.b16 %v6210, %v6210
        %v6221 = vpack.c.b16 %v6211, %v6211
        %v6222 = vpack.c.b16 %v6212, %v6212
        %v6223 = vpack.c.b16 %v6213, %v6213
        %6234 = vst [vmem:[#allocation5 + $0x8] sm:$0xf] %v6214
        %6235 = vst [vmem:[#allocation5 + $0x2c] sm:$0xf] %v6215
        %6236 = vst [vmem:[#allocation5 + $0x50] sm:$0xf] %v6216
        %6237 = vst [vmem:[#allocation5 + $0x74] sm:$0xf] %v6217
        %6238 = vst [vmem:[#allocation5 + $0x98] sm:$0xf] %v6218
        %6239 = vst [vmem:[#allocation5 + $0xbc] sm:$0xf] %v6219
        %6240 = vst [vmem:[#allocation5 + $0xe0] sm:$0xf] %v6220
        %6241 = vst [vmem:[#allocation5 + $0x104] sm:$0xf] %v6221
        %6242 = vst [vmem:[#allocation5 + $0x128] sm:$0xf] %v6222
        %v6243 = vld [vmem:[#allocation5 + $0x14c] sm:$0xf]
        %v6244 = vsel %vm5884, %v6223, %v6243
        %6245 = vst [vmem:[#allocation5 + $0x14c] sm:$0xf] %v6244
        %v6246 = vld [vmem:[#allocation3 + $0x18] sm:$0xff]
        %v6247 = vld [vmem:[#allocation3 + $0x20] sm:$0xff]
        %v6248 = vld [vmem:[#allocation3 + $0x28] sm:$0xff]
        %v6249 = vld [vmem:[#allocation3 + $0x30] sm:$0xff]
        %v6250 = vld [vmem:[#allocation3 + $0x38] sm:$0xff]
        %v6251 = vld [vmem:[#allocation3 + $0x40] sm:$0xff]
        %v6252 = vld [vmem:[#allocation3 + $0x48] sm:$0xff]
        %v6253 = vld [vmem:[#allocation3 + $0x50] sm:$0xff]
        %v6254 = vld [vmem:[#allocation3 + $0x58] sm:$0xff]
        %v6255 = vld [vmem:[#allocation3 + $0x60] sm:$0x7f]
        %v6256 = vpack.c.bf16 %v6247, %v6246
        %v6257 = vpack.c.bf16 %v6249, %v6248
        %v6258 = vpack.c.bf16 %v6251, %v6250
        %v6259 = vpack.c.bf16 %v6253, %v6252
        %v6260 = vpack.c.bf16 %v6255, %v6254
        %v6261 = vld [vmem:[#allocation3 + $0x19] sm:$0xff]
        %v6262 = vld [vmem:[#allocation3 + $0x21] sm:$0xff]
        %v6263 = vld [vmem:[#allocation3 + $0x29] sm:$0xff]
        %v6264 = vld [vmem:[#allocation3 + $0x31] sm:$0xff]
        %v6265 = vld [vmem:[#allocation3 + $0x39] sm:$0xff]
        %v6266 = vld [vmem:[#allocation3 + $0x41] sm:$0xff]
        %v6267 = vld [vmem:[#allocation3 + $0x49] sm:$0xff]
        %v6268 = vld [vmem:[#allocation3 + $0x51] sm:$0xff]
        %v6269 = vld [vmem:[#allocation3 + $0x59] sm:$0xff]
        %v6270 = vld [vmem:[#allocation3 + $0x61] sm:$0x7f]
        %v6271 = vpack.c.bf16 %v6262, %v6261
        %v6272 = vpack.c.bf16 %v6264, %v6263
        %v6273 = vpack.c.bf16 %v6266, %v6265
        %v6274 = vpack.c.bf16 %v6268, %v6267
        %v6275 = vpack.c.bf16 %v6270, %v6269
        %v6276 = vld [vmem:[#allocation3 + $0x1a] sm:$0xff]
        %v6277 = vld [vmem:[#allocation3 + $0x22] sm:$0xff]
        %v6278 = vld [vmem:[#allocation3 + $0x2a] sm:$0xff]
        %v6279 = vld [vmem:[#allocation3 + $0x32] sm:$0xff]
        %v6280 = vld [vmem:[#allocation3 + $0x3a] sm:$0xff]
        %v6281 = vld [vmem:[#allocation3 + $0x42] sm:$0xff]
        %v6282 = vld [vmem:[#allocation3 + $0x4a] sm:$0xff]
        %v6283 = vld [vmem:[#allocation3 + $0x52] sm:$0xff]
        %v6284 = vld [vmem:[#allocation3 + $0x5a] sm:$0xff]
        %v6285 = vld [vmem:[#allocation3 + $0x62] sm:$0x7f]
        %v6286 = vpack.c.bf16 %v6277, %v6276
        %v6287 = vpack.c.bf16 %v6279, %v6278
        %v6288 = vpack.c.bf16 %v6281, %v6280
        %v6289 = vpack.c.bf16 %v6283, %v6282
        %v6290 = vpack.c.bf16 %v6285, %v6284
        %v6291 = vld [vmem:[#allocation3 + $0x1b] sm:$0xff]
        %v6292 = vld [vmem:[#allocation3 + $0x23] sm:$0xff]
        %v6293 = vld [vmem:[#allocation3 + $0x2b] sm:$0xff]
        %v6294 = vld [vmem:[#allocation3 + $0x33] sm:$0xff]
        %v6295 = vld [vmem:[#allocation3 + $0x3b] sm:$0xff]
        %v6296 = vld [vmem:[#allocation3 + $0x43] sm:$0xff]
        %v6297 = vld [vmem:[#allocation3 + $0x4b] sm:$0xff]
        %v6298 = vld [vmem:[#allocation3 + $0x53] sm:$0xff]
        %v6299 = vld [vmem:[#allocation3 + $0x5b] sm:$0xff]
        %v6300 = vld [vmem:[#allocation3 + $0x63] sm:$0x7f]
        %v6301 = vpack.c.bf16 %v6292, %v6291
        %v6302 = vpack.c.bf16 %v6294, %v6293
        %v6303 = vpack.c.bf16 %v6296, %v6295
        %v6304 = vpack.c.bf16 %v6298, %v6297
        %v6305 = vpack.c.bf16 %v6300, %v6299
        %6311 = vrot.lane.b32.xlu0 %v6271, 32
        %v6312 = vpop.permute.xlu0 %6311
        %6313 = vrot.lane.b32.xlu0 %v6272, 32
        %v6314 = vpop.permute.xlu0 %6313
        %6315 = vrot.lane.b32.xlu0 %v6273, 32
        %v6316 = vpop.permute.xlu0 %6315
        %6317 = vrot.lane.b32.xlu0 %v6274, 32
        %v6318 = vpop.permute.xlu0 %6317
        %6319 = vrot.lane.b32.xlu0 %v6275, 32
        %v6320 = vpop.permute.xlu0 %6319
        %6326 = vrot.lane.b32.xlu0 %v6286, 64
        %v6327 = vpop.permute.xlu0 %6326
        %6328 = vrot.lane.b32.xlu0 %v6287, 64
        %v6329 = vpop.permute.xlu0 %6328
        %6330 = vrot.lane.b32.xlu0 %v6288, 64
        %v6331 = vpop.permute.xlu0 %6330
        %6332 = vrot.lane.b32.xlu0 %v6289, 64
        %v6333 = vpop.permute.xlu0 %6332
        %6334 = vrot.lane.b32.xlu0 %v6290, 64
        %v6335 = vpop.permute.xlu0 %6334
        %6341 = vrot.lane.b32.xlu0 %v6301, 96
        %v6342 = vpop.permute.xlu0 %6341
        %6343 = vrot.lane.b32.xlu0 %v6302, 96
        %v6344 = vpop.permute.xlu0 %6343
        %6345 = vrot.lane.b32.xlu0 %v6303, 96
        %v6346 = vpop.permute.xlu0 %6345
        %6347 = vrot.lane.b32.xlu0 %v6304, 96
        %v6348 = vpop.permute.xlu0 %6347
        %6349 = vrot.lane.b32.xlu0 %v6305, 96
        %v6350 = vpop.permute.xlu0 %6349
        %v6353 = vsel %vm277, %v6256, %v6312
        %v6356 = vsel %vm277, %v6257, %v6314
        %v6359 = vsel %vm277, %v6258, %v6316
        %v6362 = vsel %vm277, %v6259, %v6318
        %v6365 = vsel %vm277, %v6260, %v6320
        %v6367 = vsel %vm928, %v6353, %v6327
        %v6369 = vsel %vm928, %v6356, %v6329
        %v6371 = vsel %vm928, %v6359, %v6331
        %v6373 = vsel %vm928, %v6362, %v6333
        %v6375 = vsel %vm928, %v6365, %v6335
        %v6377 = vsel %vm949, %v6367, %v6342
        %v6379 = vsel %vm949, %v6369, %v6344
        %v6381 = vsel %vm949, %v6371, %v6346
        %v6383 = vsel %vm949, %v6373, %v6348
        %v6385 = vsel %vm949, %v6375, %v6350
        %v6391 = vunpack.c.l.b16 %v6377
        %v6392 = vunpack.c.h.b16 %v6377
        %v6393 = vunpack.c.l.b16 %v6379
        %v6394 = vunpack.c.h.b16 %v6379
        %v6395 = vunpack.c.l.b16 %v6381
        %v6396 = vunpack.c.h.b16 %v6381
        %v6397 = vunpack.c.l.b16 %v6383
        %v6398 = vunpack.c.h.b16 %v6383
        %v6399 = vunpack.c.l.b16 %v6385
        %v6400 = vunpack.c.h.b16 %v6385
        %v6401 = vpack.c.b16 %v6391, %v6391
        %v6402 = vpack.c.b16 %v6392, %v6392
        %v6403 = vpack.c.b16 %v6393, %v6393
        %v6404 = vpack.c.b16 %v6394, %v6394
        %v6405 = vpack.c.b16 %v6395, %v6395
        %v6406 = vpack.c.b16 %v6396, %v6396
        %v6407 = vpack.c.b16 %v6397, %v6397
        %v6408 = vpack.c.b16 %v6398, %v6398
        %v6409 = vpack.c.b16 %v6399, %v6399
        %v6410 = vpack.c.b16 %v6400, %v6400
        %6421 = vst [vmem:[#allocation5 + $0xc] sm:$0xf] %v6401
        %6422 = vst [vmem:[#allocation5 + $0x30] sm:$0xf] %v6402
        %6423 = vst [vmem:[#allocation5 + $0x54] sm:$0xf] %v6403
        %6424 = vst [vmem:[#allocation5 + $0x78] sm:$0xf] %v6404
        %6425 = vst [vmem:[#allocation5 + $0x9c] sm:$0xf] %v6405
        %6426 = vst [vmem:[#allocation5 + $0xc0] sm:$0xf] %v6406
        %6427 = vst [vmem:[#allocation5 + $0xe4] sm:$0xf] %v6407
        %6428 = vst [vmem:[#allocation5 + $0x108] sm:$0xf] %v6408
        %6429 = vst [vmem:[#allocation5 + $0x12c] sm:$0xf] %v6409
        %v6430 = vld [vmem:[#allocation5 + $0x150] sm:$0xf]
        %v6431 = vsel %vm5884, %v6410, %v6430
        %6432 = vst [vmem:[#allocation5 + $0x150] sm:$0xf] %v6431
        %v6433 = vld [vmem:[#allocation3 + $0x1c] sm:$0xff]
        %v6434 = vld [vmem:[#allocation3 + $0x24] sm:$0xff]
        %v6435 = vld [vmem:[#allocation3 + $0x2c] sm:$0xff]
        %v6436 = vld [vmem:[#allocation3 + $0x34] sm:$0xff]
        %v6437 = vld [vmem:[#allocation3 + $0x3c] sm:$0xff]
        %v6438 = vld [vmem:[#allocation3 + $0x44] sm:$0xff]
        %v6439 = vld [vmem:[#allocation3 + $0x4c] sm:$0xff]
        %v6440 = vld [vmem:[#allocation3 + $0x54] sm:$0xff]
        %v6441 = vld [vmem:[#allocation3 + $0x5c] sm:$0xff]
        %v6442 = vld [vmem:[#allocation3 + $0x64] sm:$0x7f]
        %v6443 = vpack.c.bf16 %v6434, %v6433
        %v6444 = vpack.c.bf16 %v6436, %v6435
        %v6445 = vpack.c.bf16 %v6438, %v6437
        %v6446 = vpack.c.bf16 %v6440, %v6439
        %v6447 = vpack.c.bf16 %v6442, %v6441
        %v6448 = vld [vmem:[#allocation3 + $0x1d] sm:$0xff]
        %v6449 = vld [vmem:[#allocation3 + $0x25] sm:$0xff]
        %v6450 = vld [vmem:[#allocation3 + $0x2d] sm:$0xff]
        %v6451 = vld [vmem:[#allocation3 + $0x35] sm:$0xff]
        %v6452 = vld [vmem:[#allocation3 + $0x3d] sm:$0xff]
        %v6453 = vld [vmem:[#allocation3 + $0x45] sm:$0xff]
        %v6454 = vld [vmem:[#allocation3 + $0x4d] sm:$0xff]
        %v6455 = vld [vmem:[#allocation3 + $0x55] sm:$0xff]
        %v6456 = vld [vmem:[#allocation3 + $0x5d] sm:$0xff]
        %v6457 = vld [vmem:[#allocation3 + $0x65] sm:$0x7f]
        %v6458 = vpack.c.bf16 %v6449, %v6448
        %v6459 = vpack.c.bf16 %v6451, %v6450
        %v6460 = vpack.c.bf16 %v6453, %v6452
        %v6461 = vpack.c.bf16 %v6455, %v6454
        %v6462 = vpack.c.bf16 %v6457, %v6456
        %v6463 = vld [vmem:[#allocation3 + $0x64] sm:$0xff]
        %v6464 = vld [vmem:[#allocation3 + $0x6c] sm:$0x7f]
        %v6465 = vpack.c.bf16 %v6435, %v6434
        %v6466 = vpack.c.bf16 %v6437, %v6436
        %v6467 = vpack.c.bf16 %v6439, %v6438
        %v6468 = vpack.c.bf16 %v6441, %v6440
        %v6469 = vpack.c.bf16 %v6464, %v6463
        %v6470 = vld [vmem:[#allocation3 + $0x65] sm:$0xff]
        %v6471 = vld [vmem:[#allocation3 + $0x6d] sm:$0x7f]
        %v6472 = vpack.c.bf16 %v6450, %v6449
        %v6473 = vpack.c.bf16 %v6452, %v6451
        %v6474 = vpack.c.bf16 %v6454, %v6453
        %v6475 = vpack.c.bf16 %v6456, %v6455
        %v6476 = vpack.c.bf16 %v6471, %v6470
        %6482 = vrot.lane.b32.xlu0 %v6458, 32
        %v6483 = vpop.permute.xlu0 %6482
        %6484 = vrot.lane.b32.xlu0 %v6459, 32
        %v6485 = vpop.permute.xlu0 %6484
        %6486 = vrot.lane.b32.xlu0 %v6460, 32
        %v6487 = vpop.permute.xlu0 %6486
        %6488 = vrot.lane.b32.xlu0 %v6461, 32
        %v6489 = vpop.permute.xlu0 %6488
        %6490 = vrot.lane.b32.xlu0 %v6462, 32
        %v6491 = vpop.permute.xlu0 %6490
        %6497 = vrot.lane.b32.xlu0 %v6465, 64
        %v6498 = vpop.permute.xlu0 %6497
        %6499 = vrot.lane.b32.xlu0 %v6466, 64
        %v6500 = vpop.permute.xlu0 %6499
        %6501 = vrot.lane.b32.xlu0 %v6467, 64
        %v6502 = vpop.permute.xlu0 %6501
        %6503 = vrot.lane.b32.xlu0 %v6468, 64
        %v6504 = vpop.permute.xlu0 %6503
        %6505 = vrot.lane.b32.xlu0 %v6469, 64
        %v6506 = vpop.permute.xlu0 %6505
        %6512 = vrot.lane.b32.xlu0 %v6472, 96
        %v6513 = vpop.permute.xlu0 %6512
        %6514 = vrot.lane.b32.xlu0 %v6473, 96
        %v6515 = vpop.permute.xlu0 %6514
        %6516 = vrot.lane.b32.xlu0 %v6474, 96
        %v6517 = vpop.permute.xlu0 %6516
        %6518 = vrot.lane.b32.xlu0 %v6475, 96
        %v6519 = vpop.permute.xlu0 %6518
        %6520 = vrot.lane.b32.xlu0 %v6476, 96
        %v6521 = vpop.permute.xlu0 %6520
        %v6524 = vsel %vm277, %v6443, %v6483
        %v6527 = vsel %vm277, %v6444, %v6485
        %v6530 = vsel %vm277, %v6445, %v6487
        %v6533 = vsel %vm277, %v6446, %v6489
        %v6536 = vsel %vm277, %v6447, %v6491
        %v6538 = vsel %vm928, %v6524, %v6498
        %v6540 = vsel %vm928, %v6527, %v6500
        %v6542 = vsel %vm928, %v6530, %v6502
        %v6544 = vsel %vm928, %v6533, %v6504
        %v6546 = vsel %vm928, %v6536, %v6506
        %v6548 = vsel %vm949, %v6538, %v6513
        %v6550 = vsel %vm949, %v6540, %v6515
        %v6552 = vsel %vm949, %v6542, %v6517
        %v6554 = vsel %vm949, %v6544, %v6519
        %v6556 = vsel %vm949, %v6546, %v6521
        %v6562 = vunpack.c.l.b16 %v6548
        %v6563 = vunpack.c.h.b16 %v6548
        %v6564 = vunpack.c.l.b16 %v6550
        %v6565 = vunpack.c.h.b16 %v6550
        %v6566 = vunpack.c.l.b16 %v6552
        %v6567 = vunpack.c.h.b16 %v6552
        %v6568 = vunpack.c.l.b16 %v6554
        %v6569 = vunpack.c.h.b16 %v6554
        %v6570 = vunpack.c.l.b16 %v6556
        %v6571 = vunpack.c.h.b16 %v6556
        %v6572 = vpack.c.b16 %v6562, %v6562
        %v6573 = vpack.c.b16 %v6563, %v6563
        %v6574 = vpack.c.b16 %v6564, %v6564
        %v6575 = vpack.c.b16 %v6565, %v6565
        %v6576 = vpack.c.b16 %v6566, %v6566
        %v6577 = vpack.c.b16 %v6567, %v6567
        %v6578 = vpack.c.b16 %v6568, %v6568
        %v6579 = vpack.c.b16 %v6569, %v6569
        %v6580 = vpack.c.b16 %v6570, %v6570
        %v6581 = vpack.c.b16 %v6571, %v6571
        %6592 = vst [vmem:[#allocation5 + $0x10] sm:$0xf] %v6572
        %6593 = vst [vmem:[#allocation5 + $0x34] sm:$0xf] %v6573
        %6594 = vst [vmem:[#allocation5 + $0x58] sm:$0xf] %v6574
        %6595 = vst [vmem:[#allocation5 + $0x7c] sm:$0xf] %v6575
        %6596 = vst [vmem:[#allocation5 + $0xa0] sm:$0xf] %v6576
        %6597 = vst [vmem:[#allocation5 + $0xc4] sm:$0xf] %v6577
        %6598 = vst [vmem:[#allocation5 + $0xe8] sm:$0xf] %v6578
        %6599 = vst [vmem:[#allocation5 + $0x10c] sm:$0xf] %v6579
        %6600 = vst [vmem:[#allocation5 + $0x130] sm:$0xf] %v6580
        %v6601 = vld [vmem:[#allocation5 + $0x154] sm:$0xf]
        %v6602 = vsel %vm5884, %v6581, %v6601
        %6603 = vst [vmem:[#allocation5 + $0x154] sm:$0xf] %v6602
        %v6604 = vld [vmem:[#allocation3 + $0x26] sm:$0xff]
        %v6605 = vld [vmem:[#allocation3 + $0x2e] sm:$0xff]
        %v6606 = vld [vmem:[#allocation3 + $0x36] sm:$0xff]
        %v6607 = vld [vmem:[#allocation3 + $0x3e] sm:$0xff]
        %v6608 = vld [vmem:[#allocation3 + $0x46] sm:$0xff]
        %v6609 = vld [vmem:[#allocation3 + $0x4e] sm:$0xff]
        %v6610 = vld [vmem:[#allocation3 + $0x56] sm:$0xff]
        %v6611 = vld [vmem:[#allocation3 + $0x5e] sm:$0xff]
        %v6612 = vld [vmem:[#allocation3 + $0x66] sm:$0xff]
        %v6613 = vld [vmem:[#allocation3 + $0x6e] sm:$0x7f]
        %v6614 = vpack.c.bf16 %v6605, %v6604
        %v6615 = vpack.c.bf16 %v6607, %v6606
        %v6616 = vpack.c.bf16 %v6609, %v6608
        %v6617 = vpack.c.bf16 %v6611, %v6610
        %v6618 = vpack.c.bf16 %v6613, %v6612
        %v6619 = vld [vmem:[#allocation3 + $0x27] sm:$0xff]
        %v6620 = vld [vmem:[#allocation3 + $0x2f] sm:$0xff]
        %v6621 = vld [vmem:[#allocation3 + $0x37] sm:$0xff]
        %v6622 = vld [vmem:[#allocation3 + $0x3f] sm:$0xff]
        %v6623 = vld [vmem:[#allocation3 + $0x47] sm:$0xff]
        %v6624 = vld [vmem:[#allocation3 + $0x4f] sm:$0xff]
        %v6625 = vld [vmem:[#allocation3 + $0x57] sm:$0xff]
        %v6626 = vld [vmem:[#allocation3 + $0x5f] sm:$0xff]
        %v6627 = vld [vmem:[#allocation3 + $0x67] sm:$0xff]
        %v6628 = vld [vmem:[#allocation3 + $0x6f] sm:$0x7f]
        %v6629 = vpack.c.bf16 %v6620, %v6619
        %v6630 = vpack.c.bf16 %v6622, %v6621
        %v6631 = vpack.c.bf16 %v6624, %v6623
        %v6632 = vpack.c.bf16 %v6626, %v6625
        %v6633 = vpack.c.bf16 %v6628, %v6627
        %v6634 = vld [vmem:[#allocation3 + $0x28] sm:$0xff]
        %v6635 = vld [vmem:[#allocation3 + $0x30] sm:$0xff]
        %v6636 = vld [vmem:[#allocation3 + $0x38] sm:$0xff]
        %v6637 = vld [vmem:[#allocation3 + $0x40] sm:$0xff]
        %v6638 = vld [vmem:[#allocation3 + $0x48] sm:$0xff]
        %v6639 = vld [vmem:[#allocation3 + $0x50] sm:$0xff]
        %v6640 = vld [vmem:[#allocation3 + $0x58] sm:$0xff]
        %v6641 = vld [vmem:[#allocation3 + $0x60] sm:$0xff]
        %v6642 = vld [vmem:[#allocation3 + $0x68] sm:$0xff]
        %v6643 = vld [vmem:[#allocation3 + $0x70] sm:$0x7f]
        %v6644 = vpack.c.bf16 %v6635, %v6634
        %v6645 = vpack.c.bf16 %v6637, %v6636
        %v6646 = vpack.c.bf16 %v6639, %v6638
        %v6647 = vpack.c.bf16 %v6641, %v6640
        %v6648 = vpack.c.bf16 %v6643, %v6642
        %v6649 = vld [vmem:[#allocation3 + $0x29] sm:$0xff]
        %v6650 = vld [vmem:[#allocation3 + $0x31] sm:$0xff]
        %v6651 = vld [vmem:[#allocation3 + $0x39] sm:$0xff]
        %v6652 = vld [vmem:[#allocation3 + $0x41] sm:$0xff]
        %v6653 = vld [vmem:[#allocation3 + $0x49] sm:$0xff]
        %v6654 = vld [vmem:[#allocation3 + $0x51] sm:$0xff]
        %v6655 = vld [vmem:[#allocation3 + $0x59] sm:$0xff]
        %v6656 = vld [vmem:[#allocation3 + $0x61] sm:$0xff]
        %v6657 = vld [vmem:[#allocation3 + $0x69] sm:$0xff]
        %v6658 = vld [vmem:[#allocation3 + $0x71] sm:$0x7f]
        %v6659 = vpack.c.bf16 %v6650, %v6649
        %v6660 = vpack.c.bf16 %v6652, %v6651
        %v6661 = vpack.c.bf16 %v6654, %v6653
        %v6662 = vpack.c.bf16 %v6656, %v6655
        %v6663 = vpack.c.bf16 %v6658, %v6657
        %6669 = vrot.lane.b32.xlu0 %v6629, 32
        %v6670 = vpop.permute.xlu0 %6669
        %6671 = vrot.lane.b32.xlu0 %v6630, 32
        %v6672 = vpop.permute.xlu0 %6671
        %6673 = vrot.lane.b32.xlu0 %v6631, 32
        %v6674 = vpop.permute.xlu0 %6673
        %6675 = vrot.lane.b32.xlu0 %v6632, 32
        %v6676 = vpop.permute.xlu0 %6675
        %6677 = vrot.lane.b32.xlu0 %v6633, 32
        %v6678 = vpop.permute.xlu0 %6677
        %6684 = vrot.lane.b32.xlu0 %v6644, 64
        %v6685 = vpop.permute.xlu0 %6684
        %6686 = vrot.lane.b32.xlu0 %v6645, 64
        %v6687 = vpop.permute.xlu0 %6686
        %6688 = vrot.lane.b32.xlu0 %v6646, 64
        %v6689 = vpop.permute.xlu0 %6688
        %6690 = vrot.lane.b32.xlu0 %v6647, 64
        %v6691 = vpop.permute.xlu0 %6690
        %6692 = vrot.lane.b32.xlu0 %v6648, 64
        %v6693 = vpop.permute.xlu0 %6692
        %6699 = vrot.lane.b32.xlu0 %v6659, 96
        %v6700 = vpop.permute.xlu0 %6699
        %6701 = vrot.lane.b32.xlu0 %v6660, 96
        %v6702 = vpop.permute.xlu0 %6701
        %6703 = vrot.lane.b32.xlu0 %v6661, 96
        %v6704 = vpop.permute.xlu0 %6703
        %6705 = vrot.lane.b32.xlu0 %v6662, 96
        %v6706 = vpop.permute.xlu0 %6705
        %6707 = vrot.lane.b32.xlu0 %v6663, 96
        %v6708 = vpop.permute.xlu0 %6707
        %v6711 = vsel %vm277, %v6614, %v6670
        %v6714 = vsel %vm277, %v6615, %v6672
        %v6717 = vsel %vm277, %v6616, %v6674
        %v6720 = vsel %vm277, %v6617, %v6676
        %v6723 = vsel %vm277, %v6618, %v6678
        %v6725 = vsel %vm928, %v6711, %v6685
        %v6727 = vsel %vm928, %v6714, %v6687
        %v6729 = vsel %vm928, %v6717, %v6689
        %v6731 = vsel %vm928, %v6720, %v6691
        %v6733 = vsel %vm928, %v6723, %v6693
        %v6735 = vsel %vm949, %v6725, %v6700
        %v6737 = vsel %vm949, %v6727, %v6702
        %v6739 = vsel %vm949, %v6729, %v6704
        %v6741 = vsel %vm949, %v6731, %v6706
        %v6743 = vsel %vm949, %v6733, %v6708
        %v6749 = vunpack.c.l.b16 %v6735
        %v6750 = vunpack.c.h.b16 %v6735
        %v6751 = vunpack.c.l.b16 %v6737
        %v6752 = vunpack.c.h.b16 %v6737
        %v6753 = vunpack.c.l.b16 %v6739
        %v6754 = vunpack.c.h.b16 %v6739
        %v6755 = vunpack.c.l.b16 %v6741
        %v6756 = vunpack.c.h.b16 %v6741
        %v6757 = vunpack.c.l.b16 %v6743
        %v6758 = vunpack.c.h.b16 %v6743
        %v6759 = vpack.c.b16 %v6749, %v6749
        %v6760 = vpack.c.b16 %v6750, %v6750
        %v6761 = vpack.c.b16 %v6751, %v6751
        %v6762 = vpack.c.b16 %v6752, %v6752
        %v6763 = vpack.c.b16 %v6753, %v6753
        %v6764 = vpack.c.b16 %v6754, %v6754
        %v6765 = vpack.c.b16 %v6755, %v6755
        %v6766 = vpack.c.b16 %v6756, %v6756
        %v6767 = vpack.c.b16 %v6757, %v6757
        %v6768 = vpack.c.b16 %v6758, %v6758
        %6779 = vst [vmem:[#allocation5 + $0x14] sm:$0xf] %v6759
        %6780 = vst [vmem:[#allocation5 + $0x38] sm:$0xf] %v6760
        %6781 = vst [vmem:[#allocation5 + $0x5c] sm:$0xf] %v6761
        %6782 = vst [vmem:[#allocation5 + $0x80] sm:$0xf] %v6762
        %6783 = vst [vmem:[#allocation5 + $0xa4] sm:$0xf] %v6763
        %6784 = vst [vmem:[#allocation5 + $0xc8] sm:$0xf] %v6764
        %6785 = vst [vmem:[#allocation5 + $0xec] sm:$0xf] %v6765
        %6786 = vst [vmem:[#allocation5 + $0x110] sm:$0xf] %v6766
        %6787 = vst [vmem:[#allocation5 + $0x134] sm:$0xf] %v6767
        %v6788 = vld [vmem:[#allocation5 + $0x158] sm:$0xf]
        %v6789 = vsel %vm5884, %v6768, %v6788
        %6790 = vst [vmem:[#allocation5 + $0x158] sm:$0xf] %v6789
        %v6791 = vld [vmem:[#allocation3 + $0x30] sm:$0xff]
        %v6792 = vld [vmem:[#allocation3 + $0x38] sm:$0xff]
        %v6793 = vld [vmem:[#allocation3 + $0x40] sm:$0xff]
        %v6794 = vld [vmem:[#allocation3 + $0x48] sm:$0xff]
        %v6795 = vld [vmem:[#allocation3 + $0x50] sm:$0xff]
        %v6796 = vld [vmem:[#allocation3 + $0x58] sm:$0xff]
        %v6797 = vld [vmem:[#allocation3 + $0x60] sm:$0xff]
        %v6798 = vld [vmem:[#allocation3 + $0x68] sm:$0xff]
        %v6799 = vld [vmem:[#allocation3 + $0x70] sm:$0xff]
        %v6800 = vld [vmem:[#allocation3 + $0x78] sm:$0x7f]
        %v6801 = vpack.c.bf16 %v6792, %v6791
        %v6802 = vpack.c.bf16 %v6794, %v6793
        %v6803 = vpack.c.bf16 %v6796, %v6795
        %v6804 = vpack.c.bf16 %v6798, %v6797
        %v6805 = vpack.c.bf16 %v6800, %v6799
        %v6806 = vld [vmem:[#allocation3 + $0x31] sm:$0xff]
        %v6807 = vld [vmem:[#allocation3 + $0x39] sm:$0xff]
        %v6808 = vld [vmem:[#allocation3 + $0x41] sm:$0xff]
        %v6809 = vld [vmem:[#allocation3 + $0x49] sm:$0xff]
        %v6810 = vld [vmem:[#allocation3 + $0x51] sm:$0xff]
        %v6811 = vld [vmem:[#allocation3 + $0x59] sm:$0xff]
        %v6812 = vld [vmem:[#allocation3 + $0x61] sm:$0xff]
        %v6813 = vld [vmem:[#allocation3 + $0x69] sm:$0xff]
        %v6814 = vld [vmem:[#allocation3 + $0x71] sm:$0xff]
        %v6815 = vld [vmem:[#allocation3 + $0x79] sm:$0x7f]
        %v6816 = vpack.c.bf16 %v6807, %v6806
        %v6817 = vpack.c.bf16 %v6809, %v6808
        %v6818 = vpack.c.bf16 %v6811, %v6810
        %v6819 = vpack.c.bf16 %v6813, %v6812
        %v6820 = vpack.c.bf16 %v6815, %v6814
        %v6821 = vld [vmem:[#allocation3 + $0x32] sm:$0xff]
        %v6822 = vld [vmem:[#allocation3 + $0x3a] sm:$0xff]
        %v6823 = vld [vmem:[#allocation3 + $0x42] sm:$0xff]
        %v6824 = vld [vmem:[#allocation3 + $0x4a] sm:$0xff]
        %v6825 = vld [vmem:[#allocation3 + $0x52] sm:$0xff]
        %v6826 = vld [vmem:[#allocation3 + $0x5a] sm:$0xff]
        %v6827 = vld [vmem:[#allocation3 + $0x62] sm:$0xff]
        %v6828 = vld [vmem:[#allocation3 + $0x6a] sm:$0xff]
        %v6829 = vld [vmem:[#allocation3 + $0x72] sm:$0xff]
        %v6830 = vld [vmem:[#allocation3 + $0x7a] sm:$0x7f]
        %v6831 = vpack.c.bf16 %v6822, %v6821
        %v6832 = vpack.c.bf16 %v6824, %v6823
        %v6833 = vpack.c.bf16 %v6826, %v6825
        %v6834 = vpack.c.bf16 %v6828, %v6827
        %v6835 = vpack.c.bf16 %v6830, %v6829
        %v6836 = vld [vmem:[#allocation3 + $0x33] sm:$0xff]
        %v6837 = vld [vmem:[#allocation3 + $0x3b] sm:$0xff]
        %v6838 = vld [vmem:[#allocation3 + $0x43] sm:$0xff]
        %v6839 = vld [vmem:[#allocation3 + $0x4b] sm:$0xff]
        %v6840 = vld [vmem:[#allocation3 + $0x53] sm:$0xff]
        %v6841 = vld [vmem:[#allocation3 + $0x5b] sm:$0xff]
        %v6842 = vld [vmem:[#allocation3 + $0x63] sm:$0xff]
        %v6843 = vld [vmem:[#allocation3 + $0x6b] sm:$0xff]
        %v6844 = vld [vmem:[#allocation3 + $0x73] sm:$0xff]
        %v6845 = vld [vmem:[#allocation3 + $0x7b] sm:$0x7f]
        %v6846 = vpack.c.bf16 %v6837, %v6836
        %v6847 = vpack.c.bf16 %v6839, %v6838
        %v6848 = vpack.c.bf16 %v6841, %v6840
        %v6849 = vpack.c.bf16 %v6843, %v6842
        %v6850 = vpack.c.bf16 %v6845, %v6844
        %6856 = vrot.lane.b32.xlu0 %v6816, 32
        %v6857 = vpop.permute.xlu0 %6856
        %6858 = vrot.lane.b32.xlu0 %v6817, 32
        %v6859 = vpop.permute.xlu0 %6858
        %6860 = vrot.lane.b32.xlu0 %v6818, 32
        %v6861 = vpop.permute.xlu0 %6860
        %6862 = vrot.lane.b32.xlu0 %v6819, 32
        %v6863 = vpop.permute.xlu0 %6862
        %6864 = vrot.lane.b32.xlu0 %v6820, 32
        %v6865 = vpop.permute.xlu0 %6864
        %6871 = vrot.lane.b32.xlu0 %v6831, 64
        %v6872 = vpop.permute.xlu0 %6871
        %6873 = vrot.lane.b32.xlu0 %v6832, 64
        %v6874 = vpop.permute.xlu0 %6873
        %6875 = vrot.lane.b32.xlu0 %v6833, 64
        %v6876 = vpop.permute.xlu0 %6875
        %6877 = vrot.lane.b32.xlu0 %v6834, 64
        %v6878 = vpop.permute.xlu0 %6877
        %6879 = vrot.lane.b32.xlu0 %v6835, 64
        %v6880 = vpop.permute.xlu0 %6879
        %6886 = vrot.lane.b32.xlu0 %v6846, 96
        %v6887 = vpop.permute.xlu0 %6886
        %6888 = vrot.lane.b32.xlu0 %v6847, 96
        %v6889 = vpop.permute.xlu0 %6888
        %6890 = vrot.lane.b32.xlu0 %v6848, 96
        %v6891 = vpop.permute.xlu0 %6890
        %6892 = vrot.lane.b32.xlu0 %v6849, 96
        %v6893 = vpop.permute.xlu0 %6892
        %6894 = vrot.lane.b32.xlu0 %v6850, 96
        %v6895 = vpop.permute.xlu0 %6894
        %v6898 = vsel %vm277, %v6801, %v6857
        %v6901 = vsel %vm277, %v6802, %v6859
        %v6904 = vsel %vm277, %v6803, %v6861
        %v6907 = vsel %vm277, %v6804, %v6863
        %v6910 = vsel %vm277, %v6805, %v6865
        %v6912 = vsel %vm928, %v6898, %v6872
        %v6914 = vsel %vm928, %v6901, %v6874
        %v6916 = vsel %vm928, %v6904, %v6876
        %v6918 = vsel %vm928, %v6907, %v6878
        %v6920 = vsel %vm928, %v6910, %v6880
        %v6922 = vsel %vm949, %v6912, %v6887
        %v6924 = vsel %vm949, %v6914, %v6889
        %v6926 = vsel %vm949, %v6916, %v6891
        %v6928 = vsel %vm949, %v6918, %v6893
        %v6930 = vsel %vm949, %v6920, %v6895
        %v6936 = vunpack.c.l.b16 %v6922
        %v6937 = vunpack.c.h.b16 %v6922
        %v6938 = vunpack.c.l.b16 %v6924
        %v6939 = vunpack.c.h.b16 %v6924
        %v6940 = vunpack.c.l.b16 %v6926
        %v6941 = vunpack.c.h.b16 %v6926
        %v6942 = vunpack.c.l.b16 %v6928
        %v6943 = vunpack.c.h.b16 %v6928
        %v6944 = vunpack.c.l.b16 %v6930
        %v6945 = vunpack.c.h.b16 %v6930
        %v6946 = vpack.c.b16 %v6936, %v6936
        %v6947 = vpack.c.b16 %v6937, %v6937
        %v6948 = vpack.c.b16 %v6938, %v6938
        %v6949 = vpack.c.b16 %v6939, %v6939
        %v6950 = vpack.c.b16 %v6940, %v6940
        %v6951 = vpack.c.b16 %v6941, %v6941
        %v6952 = vpack.c.b16 %v6942, %v6942
        %v6953 = vpack.c.b16 %v6943, %v6943
        %v6954 = vpack.c.b16 %v6944, %v6944
        %v6955 = vpack.c.b16 %v6945, %v6945
        %6966 = vst [vmem:[#allocation5 + $0x18] sm:$0xf] %v6946
        %6967 = vst [vmem:[#allocation5 + $0x3c] sm:$0xf] %v6947
        %6968 = vst [vmem:[#allocation5 + $0x60] sm:$0xf] %v6948
        %6969 = vst [vmem:[#allocation5 + $0x84] sm:$0xf] %v6949
        %6970 = vst [vmem:[#allocation5 + $0xa8] sm:$0xf] %v6950
        %6971 = vst [vmem:[#allocation5 + $0xcc] sm:$0xf] %v6951
        %6972 = vst [vmem:[#allocation5 + $0xf0] sm:$0xf] %v6952
        %6973 = vst [vmem:[#allocation5 + $0x114] sm:$0xf] %v6953
        %6974 = vst [vmem:[#allocation5 + $0x138] sm:$0xf] %v6954
        %v6975 = vld [vmem:[#allocation5 + $0x15c] sm:$0xf]
        %v6976 = vsel %vm5884, %v6955, %v6975
        %6977 = vst [vmem:[#allocation5 + $0x15c] sm:$0xf] %v6976
        %v6978 = vld [vmem:[#allocation3 + $0x34] sm:$0xff]
        %v6979 = vld [vmem:[#allocation3 + $0x3c] sm:$0xff]
        %v6980 = vld [vmem:[#allocation3 + $0x44] sm:$0xff]
        %v6981 = vld [vmem:[#allocation3 + $0x4c] sm:$0xff]
        %v6982 = vld [vmem:[#allocation3 + $0x54] sm:$0xff]
        %v6983 = vld [vmem:[#allocation3 + $0x5c] sm:$0xff]
        %v6984 = vld [vmem:[#allocation3 + $0x64] sm:$0xff]
        %v6985 = vld [vmem:[#allocation3 + $0x6c] sm:$0xff]
        %v6986 = vld [vmem:[#allocation3 + $0x74] sm:$0xff]
        %v6987 = vld [vmem:[#allocation3 + $0x7c] sm:$0x7f]
        %v6988 = vpack.c.bf16 %v6979, %v6978
        %v6989 = vpack.c.bf16 %v6981, %v6980
        %v6990 = vpack.c.bf16 %v6983, %v6982
        %v6991 = vpack.c.bf16 %v6985, %v6984
        %v6992 = vpack.c.bf16 %v6987, %v6986
        %v6993 = vld [vmem:[#allocation3 + $0x35] sm:$0xff]
        %v6994 = vld [vmem:[#allocation3 + $0x3d] sm:$0xff]
        %v6995 = vld [vmem:[#allocation3 + $0x45] sm:$0xff]
        %v6996 = vld [vmem:[#allocation3 + $0x4d] sm:$0xff]
        %v6997 = vld [vmem:[#allocation3 + $0x55] sm:$0xff]
        %v6998 = vld [vmem:[#allocation3 + $0x5d] sm:$0xff]
        %v6999 = vld [vmem:[#allocation3 + $0x65] sm:$0xff]
        %v7000 = vld [vmem:[#allocation3 + $0x6d] sm:$0xff]
        %v7001 = vld [vmem:[#allocation3 + $0x75] sm:$0xff]
        %v7002 = vld [vmem:[#allocation3 + $0x7d] sm:$0x7f]
        %v7003 = vpack.c.bf16 %v6994, %v6993
        %v7004 = vpack.c.bf16 %v6996, %v6995
        %v7005 = vpack.c.bf16 %v6998, %v6997
        %v7006 = vpack.c.bf16 %v7000, %v6999
        %v7007 = vpack.c.bf16 %v7002, %v7001
        %v7008 = vld [vmem:[#allocation3 + $0x7c] sm:$0xff]
        %v7009 = vld [vmem:[#allocation3 + $0x84] sm:$0x7f]
        %v7010 = vpack.c.bf16 %v6980, %v6979
        %v7011 = vpack.c.bf16 %v6982, %v6981
        %v7012 = vpack.c.bf16 %v6984, %v6983
        %v7013 = vpack.c.bf16 %v6986, %v6985
        %v7014 = vpack.c.bf16 %v7009, %v7008
        %v7015 = vld [vmem:[#allocation3 + $0x7d] sm:$0xff]
        %v7016 = vld [vmem:[#allocation3 + $0x85] sm:$0x7f]
        %v7017 = vpack.c.bf16 %v6995, %v6994
        %v7018 = vpack.c.bf16 %v6997, %v6996
        %v7019 = vpack.c.bf16 %v6999, %v6998
        %v7020 = vpack.c.bf16 %v7001, %v7000
        %v7021 = vpack.c.bf16 %v7016, %v7015
        %7027 = vrot.lane.b32.xlu0 %v7003, 32
        %v7028 = vpop.permute.xlu0 %7027
        %7029 = vrot.lane.b32.xlu0 %v7004, 32
        %v7030 = vpop.permute.xlu0 %7029
        %7031 = vrot.lane.b32.xlu0 %v7005, 32
        %v7032 = vpop.permute.xlu0 %7031
        %7033 = vrot.lane.b32.xlu0 %v7006, 32
        %v7034 = vpop.permute.xlu0 %7033
        %7035 = vrot.lane.b32.xlu0 %v7007, 32
        %v7036 = vpop.permute.xlu0 %7035
        %7042 = vrot.lane.b32.xlu0 %v7010, 64
        %v7043 = vpop.permute.xlu0 %7042
        %7044 = vrot.lane.b32.xlu0 %v7011, 64
        %v7045 = vpop.permute.xlu0 %7044
        %7046 = vrot.lane.b32.xlu0 %v7012, 64
        %v7047 = vpop.permute.xlu0 %7046
        %7048 = vrot.lane.b32.xlu0 %v7013, 64
        %v7049 = vpop.permute.xlu0 %7048
        %7050 = vrot.lane.b32.xlu0 %v7014, 64
        %v7051 = vpop.permute.xlu0 %7050
        %7057 = vrot.lane.b32.xlu0 %v7017, 96
        %v7058 = vpop.permute.xlu0 %7057
        %7059 = vrot.lane.b32.xlu0 %v7018, 96
        %v7060 = vpop.permute.xlu0 %7059
        %7061 = vrot.lane.b32.xlu0 %v7019, 96
        %v7062 = vpop.permute.xlu0 %7061
        %7063 = vrot.lane.b32.xlu0 %v7020, 96
        %v7064 = vpop.permute.xlu0 %7063
        %7065 = vrot.lane.b32.xlu0 %v7021, 96
        %v7066 = vpop.permute.xlu0 %7065
        %v7069 = vsel %vm277, %v6988, %v7028
        %v7072 = vsel %vm277, %v6989, %v7030
        %v7075 = vsel %vm277, %v6990, %v7032
        %v7078 = vsel %vm277, %v6991, %v7034
        %v7081 = vsel %vm277, %v6992, %v7036
        %v7083 = vsel %vm928, %v7069, %v7043
        %v7085 = vsel %vm928, %v7072, %v7045
        %v7087 = vsel %vm928, %v7075, %v7047
        %v7089 = vsel %vm928, %v7078, %v7049
        %v7091 = vsel %vm928, %v7081, %v7051
        %v7093 = vsel %vm949, %v7083, %v7058
        %v7095 = vsel %vm949, %v7085, %v7060
        %v7097 = vsel %vm949, %v7087, %v7062
        %v7099 = vsel %vm949, %v7089, %v7064
        %v7101 = vsel %vm949, %v7091, %v7066
        %v7107 = vunpack.c.l.b16 %v7093
        %v7108 = vunpack.c.h.b16 %v7093
        %v7109 = vunpack.c.l.b16 %v7095
        %v7110 = vunpack.c.h.b16 %v7095
        %v7111 = vunpack.c.l.b16 %v7097
        %v7112 = vunpack.c.h.b16 %v7097
        %v7113 = vunpack.c.l.b16 %v7099
        %v7114 = vunpack.c.h.b16 %v7099
        %v7115 = vunpack.c.l.b16 %v7101
        %v7116 = vunpack.c.h.b16 %v7101
        %v7117 = vpack.c.b16 %v7107, %v7107
        %v7118 = vpack.c.b16 %v7108, %v7108
        %v7119 = vpack.c.b16 %v7109, %v7109
        %v7120 = vpack.c.b16 %v7110, %v7110
        %v7121 = vpack.c.b16 %v7111, %v7111
        %v7122 = vpack.c.b16 %v7112, %v7112
        %v7123 = vpack.c.b16 %v7113, %v7113
        %v7124 = vpack.c.b16 %v7114, %v7114
        %v7125 = vpack.c.b16 %v7115, %v7115
        %v7126 = vpack.c.b16 %v7116, %v7116
        %7137 = vst [vmem:[#allocation5 + $0x1c] sm:$0xf] %v7117
        %7138 = vst [vmem:[#allocation5 + $0x40] sm:$0xf] %v7118
        %7139 = vst [vmem:[#allocation5 + $0x64] sm:$0xf] %v7119
        %7140 = vst [vmem:[#allocation5 + $0x88] sm:$0xf] %v7120
        %7141 = vst [vmem:[#allocation5 + $0xac] sm:$0xf] %v7121
        %7142 = vst [vmem:[#allocation5 + $0xd0] sm:$0xf] %v7122
        %7143 = vst [vmem:[#allocation5 + $0xf4] sm:$0xf] %v7123
        %7144 = vst [vmem:[#allocation5 + $0x118] sm:$0xf] %v7124
        %7145 = vst [vmem:[#allocation5 + $0x13c] sm:$0xf] %v7125
        %v7146 = vld [vmem:[#allocation5 + $0x160] sm:$0xf]
        %v7147 = vsel %vm5884, %v7126, %v7146
        %7148 = vst [vmem:[#allocation5 + $0x160] sm:$0xf] %v7147
        %v7149 = vld [vmem:[#allocation3 + $0x3e] sm:$0xff]
        %v7150 = vld [vmem:[#allocation3 + $0x46] sm:$0xff]
        %v7151 = vld [vmem:[#allocation3 + $0x4e] sm:$0xff]
        %v7152 = vld [vmem:[#allocation3 + $0x56] sm:$0xff]
        %v7153 = vld [vmem:[#allocation3 + $0x5e] sm:$0xff]
        %v7154 = vld [vmem:[#allocation3 + $0x66] sm:$0xff]
        %v7155 = vld [vmem:[#allocation3 + $0x6e] sm:$0xff]
        %v7156 = vld [vmem:[#allocation3 + $0x76] sm:$0xff]
        %v7157 = vld [vmem:[#allocation3 + $0x7e] sm:$0xff]
        %v7158 = vld [vmem:[#allocation3 + $0x86] sm:$0x7f]
        %v7159 = vpack.c.bf16 %v7150, %v7149
        %v7160 = vpack.c.bf16 %v7152, %v7151
        %v7161 = vpack.c.bf16 %v7154, %v7153
        %v7162 = vpack.c.bf16 %v7156, %v7155
        %v7163 = vpack.c.bf16 %v7158, %v7157
        %v7164 = vld [vmem:[#allocation3 + $0x3f] sm:$0xff]
        %v7165 = vld [vmem:[#allocation3 + $0x47] sm:$0xff]
        %v7166 = vld [vmem:[#allocation3 + $0x4f] sm:$0xff]
        %v7167 = vld [vmem:[#allocation3 + $0x57] sm:$0xff]
        %v7168 = vld [vmem:[#allocation3 + $0x5f] sm:$0xff]
        %v7169 = vld [vmem:[#allocation3 + $0x67] sm:$0xff]
        %v7170 = vld [vmem:[#allocation3 + $0x6f] sm:$0xff]
        %v7171 = vld [vmem:[#allocation3 + $0x77] sm:$0xff]
        %v7172 = vld [vmem:[#allocation3 + $0x7f] sm:$0xff]
        %v7173 = vld [vmem:[#allocation3 + $0x87] sm:$0x7f]
        %v7174 = vpack.c.bf16 %v7165, %v7164
        %v7175 = vpack.c.bf16 %v7167, %v7166
        %v7176 = vpack.c.bf16 %v7169, %v7168
        %v7177 = vpack.c.bf16 %v7171, %v7170
        %v7178 = vpack.c.bf16 %v7173, %v7172
        %v7179 = vld [vmem:[#allocation3 + $0x40] sm:$0xff]
        %v7180 = vld [vmem:[#allocation3 + $0x48] sm:$0xff]
        %v7181 = vld [vmem:[#allocation3 + $0x50] sm:$0xff]
        %v7182 = vld [vmem:[#allocation3 + $0x58] sm:$0xff]
        %v7183 = vld [vmem:[#allocation3 + $0x60] sm:$0xff]
        %v7184 = vld [vmem:[#allocation3 + $0x68] sm:$0xff]
        %v7185 = vld [vmem:[#allocation3 + $0x70] sm:$0xff]
        %v7186 = vld [vmem:[#allocation3 + $0x78] sm:$0xff]
        %v7187 = vld [vmem:[#allocation3 + $0x80] sm:$0xff]
        %v7188 = vld [vmem:[#allocation3 + $0x88] sm:$0x7f]
        %v7189 = vpack.c.bf16 %v7180, %v7179
        %v7190 = vpack.c.bf16 %v7182, %v7181
        %v7191 = vpack.c.bf16 %v7184, %v7183
        %v7192 = vpack.c.bf16 %v7186, %v7185
        %v7193 = vpack.c.bf16 %v7188, %v7187
        %v7194 = vld [vmem:[#allocation3 + $0x41] sm:$0xff]
        %v7195 = vld [vmem:[#allocation3 + $0x49] sm:$0xff]
        %v7196 = vld [vmem:[#allocation3 + $0x51] sm:$0xff]
        %v7197 = vld [vmem:[#allocation3 + $0x59] sm:$0xff]
        %v7198 = vld [vmem:[#allocation3 + $0x61] sm:$0xff]
        %v7199 = vld [vmem:[#allocation3 + $0x69] sm:$0xff]
        %v7200 = vld [vmem:[#allocation3 + $0x71] sm:$0xff]
        %v7201 = vld [vmem:[#allocation3 + $0x79] sm:$0xff]
        %v7202 = vld [vmem:[#allocation3 + $0x81] sm:$0xff]
        %v7203 = vld [vmem:[#allocation3 + $0x89] sm:$0x7f]
        %v7204 = vpack.c.bf16 %v7195, %v7194
        %v7205 = vpack.c.bf16 %v7197, %v7196
        %v7206 = vpack.c.bf16 %v7199, %v7198
        %v7207 = vpack.c.bf16 %v7201, %v7200
        %v7208 = vpack.c.bf16 %v7203, %v7202
        %7214 = vrot.lane.b32.xlu0 %v7174, 32
        %v7215 = vpop.permute.xlu0 %7214
        %7216 = vrot.lane.b32.xlu0 %v7175, 32
        %v7217 = vpop.permute.xlu0 %7216
        %7218 = vrot.lane.b32.xlu0 %v7176, 32
        %v7219 = vpop.permute.xlu0 %7218
        %7220 = vrot.lane.b32.xlu0 %v7177, 32
        %v7221 = vpop.permute.xlu0 %7220
        %7222 = vrot.lane.b32.xlu0 %v7178, 32
        %v7223 = vpop.permute.xlu0 %7222
        %7229 = vrot.lane.b32.xlu0 %v7189, 64
        %v7230 = vpop.permute.xlu0 %7229
        %7231 = vrot.lane.b32.xlu0 %v7190, 64
        %v7232 = vpop.permute.xlu0 %7231
        %7233 = vrot.lane.b32.xlu0 %v7191, 64
        %v7234 = vpop.permute.xlu0 %7233
        %7235 = vrot.lane.b32.xlu0 %v7192, 64
        %v7236 = vpop.permute.xlu0 %7235
        %7237 = vrot.lane.b32.xlu0 %v7193, 64
        %v7238 = vpop.permute.xlu0 %7237
        %7244 = vrot.lane.b32.xlu0 %v7204, 96
        %v7245 = vpop.permute.xlu0 %7244
        %7246 = vrot.lane.b32.xlu0 %v7205, 96
        %v7247 = vpop.permute.xlu0 %7246
        %7248 = vrot.lane.b32.xlu0 %v7206, 96
        %v7249 = vpop.permute.xlu0 %7248
        %7250 = vrot.lane.b32.xlu0 %v7207, 96
        %v7251 = vpop.permute.xlu0 %7250
        %7252 = vrot.lane.b32.xlu0 %v7208, 96
        %v7253 = vpop.permute.xlu0 %7252
        %v7256 = vsel %vm277, %v7159, %v7215
        %v7259 = vsel %vm277, %v7160, %v7217
        %v7262 = vsel %vm277, %v7161, %v7219
        %v7265 = vsel %vm277, %v7162, %v7221
        %v7268 = vsel %vm277, %v7163, %v7223
        %v7270 = vsel %vm928, %v7256, %v7230
        %v7272 = vsel %vm928, %v7259, %v7232
        %v7274 = vsel %vm928, %v7262, %v7234
        %v7276 = vsel %vm928, %v7265, %v7236
        %v7278 = vsel %vm928, %v7268, %v7238
        %v7280 = vsel %vm949, %v7270, %v7245
        %v7282 = vsel %vm949, %v7272, %v7247
        %v7284 = vsel %vm949, %v7274, %v7249
        %v7286 = vsel %vm949, %v7276, %v7251
        %v7288 = vsel %vm949, %v7278, %v7253
        %v7294 = vunpack.c.l.b16 %v7280
        %v7295 = vunpack.c.h.b16 %v7280
        %v7296 = vunpack.c.l.b16 %v7282
        %v7297 = vunpack.c.h.b16 %v7282
        %v7298 = vunpack.c.l.b16 %v7284
        %v7299 = vunpack.c.h.b16 %v7284
        %v7300 = vunpack.c.l.b16 %v7286
        %v7301 = vunpack.c.h.b16 %v7286
        %v7302 = vunpack.c.l.b16 %v7288
        %v7303 = vunpack.c.h.b16 %v7288
        %v7304 = vpack.c.b16 %v7294, %v7294
        %v7305 = vpack.c.b16 %v7295, %v7295
        %v7306 = vpack.c.b16 %v7296, %v7296
        %v7307 = vpack.c.b16 %v7297, %v7297
        %v7308 = vpack.c.b16 %v7298, %v7298
        %v7309 = vpack.c.b16 %v7299, %v7299
        %v7310 = vpack.c.b16 %v7300, %v7300
        %v7311 = vpack.c.b16 %v7301, %v7301
        %v7312 = vpack.c.b16 %v7302, %v7302
        %v7313 = vpack.c.b16 %v7303, %v7303
        %7324 = vst [vmem:[#allocation5 + $0x20] sm:$0xf] %v7304
        %7325 = vst [vmem:[#allocation5 + $0x44] sm:$0xf] %v7305
        %7326 = vst [vmem:[#allocation5 + $0x68] sm:$0xf] %v7306
        %7327 = vst [vmem:[#allocation5 + $0x8c] sm:$0xf] %v7307
        %7328 = vst [vmem:[#allocation5 + $0xb0] sm:$0xf] %v7308
        %7329 = vst [vmem:[#allocation5 + $0xd4] sm:$0xf] %v7309
        %7330 = vst [vmem:[#allocation5 + $0xf8] sm:$0xf] %v7310
        %7331 = vst [vmem:[#allocation5 + $0x11c] sm:$0xf] %v7311
        %7332 = vst [vmem:[#allocation5 + $0x140] sm:$0xf] %v7312
        %v7333 = vld [vmem:[#allocation5 + $0x164] sm:$0xf]
        %v7334 = vsel %vm5884, %v7313, %v7333
        %7335 = vst [vmem:[#allocation5 + $0x164] sm:$0xf] %v7334
        %v7336 = vld [vmem:[#allocation5] sm:$0xff]
        %v7337 = vld [vmem:[#allocation5 + $0x8] sm:$0xff]
        %v7338 = vld [vmem:[#allocation5 + $0x10] sm:$0xff]
        %v7339 = vld [vmem:[#allocation5 + $0x18] sm:$0xff]
        %v7340 = vld [vmem:[#allocation5 + $0x20] sm:$0xf]
        %v7341 = vld [vmem:[#allocation5 + $0x24] sm:$0xff]
        %v7342 = vld [vmem:[#allocation5 + $0x2c] sm:$0xff]
        %v7343 = vld [vmem:[#allocation5 + $0x34] sm:$0xff]
        %v7344 = vld [vmem:[#allocation5 + $0x3c] sm:$0xff]
        %v7345 = vld [vmem:[#allocation5 + $0x44] sm:$0xf]
        %v7346 = vld [vmem:[#allocation5 + $0x48] sm:$0xff]
        %v7347 = vld [vmem:[#allocation5 + $0x50] sm:$0xff]
        %v7348 = vld [vmem:[#allocation5 + $0x58] sm:$0xff]
        %v7349 = vld [vmem:[#allocation5 + $0x60] sm:$0xff]
        %v7350 = vld [vmem:[#allocation5 + $0x68] sm:$0xf]
        %v7351 = vld [vmem:[#allocation5 + $0x6c] sm:$0xff]
        %v7352 = vld [vmem:[#allocation5 + $0x74] sm:$0xff]
        %v7353 = vld [vmem:[#allocation5 + $0x7c] sm:$0xff]
        %v7354 = vld [vmem:[#allocation5 + $0x84] sm:$0xff]
        %v7355 = vld [vmem:[#allocation5 + $0x8c] sm:$0xf]
        %v7356 = vld [vmem:[#allocation5 + $0x90] sm:$0xff]
        %v7357 = vld [vmem:[#allocation5 + $0x98] sm:$0xff]
        %v7358 = vld [vmem:[#allocation5 + $0xa0] sm:$0xff]
        %v7359 = vld [vmem:[#allocation5 + $0xa8] sm:$0xff]
        %v7360 = vld [vmem:[#allocation5 + $0xb0] sm:$0xf]
        %v7361 = vld [vmem:[#allocation5 + $0xb4] sm:$0xff]
        %v7362 = vld [vmem:[#allocation5 + $0xbc] sm:$0xff]
        %v7363 = vld [vmem:[#allocation5 + $0xc4] sm:$0xff]
        %v7364 = vld [vmem:[#allocation5 + $0xcc] sm:$0xff]
        %v7365 = vld [vmem:[#allocation5 + $0xd4] sm:$0xf]
        %v7366 = vld [vmem:[#allocation5 + $0xd8] sm:$0xff]
        %v7367 = vld [vmem:[#allocation5 + $0xe0] sm:$0xff]
        %v7368 = vld [vmem:[#allocation5 + $0xe8] sm:$0xff]
        %v7369 = vld [vmem:[#allocation5 + $0xf0] sm:$0xff]
        %v7370 = vld [vmem:[#allocation5 + $0xf8] sm:$0xf]
        %v7371 = vld [vmem:[#allocation5 + $0xfc] sm:$0xff]
        %v7372 = vld [vmem:[#allocation5 + $0x104] sm:$0xff]
        %v7373 = vld [vmem:[#allocation5 + $0x10c] sm:$0xff]
        %v7374 = vld [vmem:[#allocation5 + $0x114] sm:$0xff]
        %v7375 = vld [vmem:[#allocation5 + $0x11c] sm:$0xf]
        %v7376 = vld [vmem:[#allocation5 + $0x120] sm:$0xff]
        %v7377 = vld [vmem:[#allocation5 + $0x128] sm:$0xff]
        %v7378 = vld [vmem:[#allocation5 + $0x130] sm:$0xff]
        %v7379 = vld [vmem:[#allocation5 + $0x138] sm:$0xff]
        %v7380 = vld [vmem:[#allocation5 + $0x140] sm:$0xf]
        %v7381 = vld [vmem:[#allocation5 + $0x144] sm:$0xff]
        %v7382 = vld [vmem:[#allocation5 + $0x14c] sm:$0xff]
        %v7383 = vld [vmem:[#allocation5 + $0x154] sm:$0xff]
        %v7384 = vld [vmem:[#allocation5 + $0x15c] sm:$0xff]
        %v7385 = vld [vmem:[#allocation5 + $0x164] sm:$0xf]
        %v7386 = vld [vmem:[%s5] sm:$0xf]
        %v7387 = vld [vmem:[%s5 + $0x4] sm:$0xf]
        %v7388 = vld [vmem:[%s5 + $0x8] sm:$0xf]
        %v7389 = vld [vmem:[%s5 + $0xc] sm:$0xf]
        %v7390 = vld [vmem:[%s5 + $0x10] sm:$0xf]
        %v7391 = vld [vmem:[%s5 + $0x14] sm:$0xf]
        %v7392 = vld [vmem:[%s5 + $0x18] sm:$0xf]
        %v7393 = vld [vmem:[%s5 + $0x1c] sm:$0xf]
        %v7394 = vld [vmem:[%s5 + $0x20] sm:$0xf]
        %v7395 = vld [vmem:[%s5 + $0x24] sm:$0xf]
        %v7396 = vld [vmem:[%s5 + $0x28] sm:$0xf]
        %v7397 = vld [vmem:[%s5 + $0x2c] sm:$0xf]
        %v7398 = vld [vmem:[%s5 + $0x30] sm:$0xf]
        %v7399 = vld [vmem:[%s5 + $0x34] sm:$0xf]
        %v7400 = vld [vmem:[%s5 + $0x38] sm:$0xf]
        %v7401 = vld [vmem:[%s5 + $0x3c] sm:$0xf]
        %v7402 = vld [vmem:[%s5 + $0x40] sm:$0xf]
        %v7403 = vld [vmem:[%s5 + $0x44] sm:$0xf]
        %v7404 = vld [vmem:[%s5 + $0x48] sm:$0xf]
        %v7405 = vld [vmem:[%s5 + $0x4c] sm:$0xf]
        %v7406 = vld [vmem:[%s5 + $0x50] sm:$0xf]
        %v7407 = vld [vmem:[%s5 + $0x54] sm:$0xf]
        %v7408 = vld [vmem:[%s5 + $0x58] sm:$0xf]
        %v7409 = vld [vmem:[%s5 + $0x5c] sm:$0xf]
        %v7410 = vld [vmem:[%s5 + $0x60] sm:$0xf]
        %v7411 = vld [vmem:[%s5 + $0x64] sm:$0xf]
        %v7412 = vld [vmem:[%s5 + $0x68] sm:$0xf]
        %v7413 = vld [vmem:[%s5 + $0x6c] sm:$0xf]
        %v7414 = vld [vmem:[%s5 + $0x70] sm:$0xf]
        %v7415 = vld [vmem:[%s5 + $0x74] sm:$0xf]
        %v7416 = vld [vmem:[%s5 + $0x78] sm:$0xf]
        %v7417 = vld [vmem:[%s5 + $0x7c] sm:$0xf]
        %v7418 = vld [vmem:[%s5 + $0x80] sm:$0xf]
        %v7419 = vld [vmem:[%s5 + $0x84] sm:$0xf]
        %v7420 = vld [vmem:[%s5 + $0x88] sm:$0xf]
        %v7421 = vld [vmem:[%s5 + $0x8c] sm:$0xf]
        %v7422 = vld [vmem:[%s5 + $0x90] sm:$0xf]
        %v7423 = vld [vmem:[%s5 + $0x94] sm:$0xf]
        %v7424 = vld [vmem:[%s5 + $0x98] sm:$0xf]
        %v7425 = vld [vmem:[%s5 + $0x9c] sm:$0xf]
        %v7426 = vld [vmem:[%s5 + $0xa0] sm:$0xf]
        %v7427 = vld [vmem:[%s5 + $0xa4] sm:$0xf]
        %v7428 = vld [vmem:[%s5 + $0xa8] sm:$0xf]
        %v7429 = vld [vmem:[%s5 + $0xac] sm:$0xf]
        %v7430 = vld [vmem:[%s5 + $0xb0] sm:$0xf]
        %v7431 = vld [vmem:[%s5 + $0xb4] sm:$0xf]
        %v7432 = vld [vmem:[%s5 + $0xb8] sm:$0xf]
        %v7433 = vld [vmem:[%s5 + $0xbc] sm:$0xf]
        %v7434 = vld [vmem:[%s5 + $0xc0] sm:$0xf]
        %v7435 = vld [vmem:[%s5 + $0xc4] sm:$0xf]
        %v7436 = vld [vmem:[%s5 + $0xc8] sm:$0xf]
        %v7437 = vld [vmem:[%s5 + $0xcc] sm:$0xf]
        %v7438 = vld [vmem:[%s5 + $0xd0] sm:$0xf]
        %v7439 = vld [vmem:[%s5 + $0xd4] sm:$0xf]
        %v7440 = vld [vmem:[%s5 + $0xd8] sm:$0xf]
        %v7441 = vld [vmem:[%s5 + $0xdc] sm:$0xf]
        %v7442 = vld [vmem:[%s5 + $0xe0] sm:$0xf]
        %v7443 = vld [vmem:[%s5 + $0xe4] sm:$0xf]
        %v7444 = vld [vmem:[%s5 + $0xe8] sm:$0xf]
        %v7445 = vld [vmem:[%s5 + $0xec] sm:$0xf]
        %v7446 = vld [vmem:[%s5 + $0xf0] sm:$0xf]
        %v7447 = vld [vmem:[%s5 + $0xf4] sm:$0xf]
        %v7448 = vld [vmem:[%s5 + $0xf8] sm:$0xf]
        %v7449 = vld [vmem:[%s5 + $0xfc] sm:$0xf]
        %v7450 = vld [vmem:[%s5 + $0x100] sm:$0xf]
        %v7451 = vld [vmem:[%s5 + $0x104] sm:$0xf]
        %v7452 = vld [vmem:[%s5 + $0x108] sm:$0xf]
        %v7453 = vld [vmem:[%s5 + $0x10c] sm:$0xf]
        %v7454 = vld [vmem:[%s5 + $0x110] sm:$0xf]
        %v7455 = vld [vmem:[%s5 + $0x114] sm:$0xf]
        %v7456 = vld [vmem:[%s5 + $0x118] sm:$0xf]
        %v7457 = vld [vmem:[%s5 + $0x11c] sm:$0xf]
        %v7458 = vld [vmem:[%s5 + $0x120] sm:$0xf]
        %v7459 = vld [vmem:[%s5 + $0x124] sm:$0xf]
        %v7460 = vld [vmem:[%s5 + $0x128] sm:$0xf]
        %v7461 = vld [vmem:[%s5 + $0x12c] sm:$0xf]
        %v7462 = vld [vmem:[%s5 + $0x130] sm:$0xf]
        %v7463 = vld [vmem:[%s5 + $0x134] sm:$0xf]
        %v7464 = vld [vmem:[%s5 + $0x138] sm:$0xf]
        %v7465 = vld [vmem:[%s5 + $0x13c] sm:$0xf]
        %v7466 = vld [vmem:[%s5 + $0x140] sm:$0xf]
        %v7467 = vld [vmem:[%s5 + $0x144] sm:$0xf]
        %v7468 = vld [vmem:[%s5 + $0x148] sm:$0xf]
        %v7469 = vld [vmem:[%s5 + $0x14c] sm:$0xf]
        %v7470 = vld [vmem:[%s5 + $0x150] sm:$0xf]
        %v7471 = vld [vmem:[%s5 + $0x154] sm:$0xf]
        %v7472 = vld [vmem:[%s5 + $0x158] sm:$0xf]
        %v7473 = vld [vmem:[%s5 + $0x15c] sm:$0xf]
        %v7474 = vld [vmem:[%s5 + $0x160] sm:$0xf]
        %v7475 = vld [vmem:[%s5 + $0x164] sm:$0xf]
        %v7476 = vld [vmem:[%s5 + $0x168] sm:$0xf]
        %v7477 = vld [vmem:[%s5 + $0x16c] sm:$0xf]
        %v7478 = vld [vmem:[%s5 + $0x170] sm:$0xf]
        %v7479 = vld [vmem:[%s5 + $0x174] sm:$0xf]
        %v7480 = vld [vmem:[%s5 + $0x178] sm:$0xf]
        %v7481 = vld [vmem:[%s5 + $0x17c] sm:$0xf]
        %v7482 = vld [vmem:[%s5 + $0x180] sm:$0xf]
        %v7483 = vld [vmem:[%s5 + $0x184] sm:$0xf]
        %v7484 = vld [vmem:[%s5 + $0x188] sm:$0xf]
        %v7485 = vld [vmem:[%s5 + $0x18c] sm:$0xf]
        %v7486 = vld [vmem:[%s5 + $0x190] sm:$0xf]
        %v7487 = vld [vmem:[%s5 + $0x194] sm:$0xf]
        %v7488 = vld [vmem:[%s5 + $0x198] sm:$0xf]
        %v7489 = vld [vmem:[%s5 + $0x19c] sm:$0xf]
        %v7490 = vld [vmem:[%s5 + $0x1a0] sm:$0xf]
        %v7491 = vld [vmem:[%s5 + $0x1a4] sm:$0xf]
        %v7492 = vld [vmem:[%s5 + $0x1a8] sm:$0xf]
        %v7493 = vld [vmem:[%s5 + $0x1ac] sm:$0xf]
        %v7494 = vld [vmem:[%s5 + $0x1b0] sm:$0xf]
        %v7495 = vld [vmem:[%s5 + $0x1b4] sm:$0xf]
        %v7496 = vld [vmem:[%s5 + $0x1b8] sm:$0xf]
        %v7497 = vld [vmem:[%s5 + $0x1bc] sm:$0xf]
        %v7498 = vld [vmem:[%s5 + $0x1c0] sm:$0xf]
        %v7499 = vld [vmem:[%s5 + $0x1c4] sm:$0xf]
        %v7500 = vld [vmem:[%s5 + $0x1c8] sm:$0xf]
        %v7501 = vld [vmem:[%s5 + $0x1cc] sm:$0xf]
        %v7502 = vld [vmem:[%s5 + $0x1d0] sm:$0xf]
        %v7503 = vld [vmem:[%s5 + $0x1d4] sm:$0xf]
        %v7504 = vld [vmem:[%s5 + $0x1d8] sm:$0xf]
        %v7505 = vld [vmem:[%s5 + $0x1dc] sm:$0xf]
        %v7506 = vld [vmem:[%s5 + $0x1e0] sm:$0xf]
        %v7507 = vld [vmem:[%s5 + $0x1e4] sm:$0xf]
        %v7508 = vld [vmem:[%s5 + $0x1e8] sm:$0xf]
        %v7509 = vld [vmem:[%s5 + $0x1ec] sm:$0xf]
        %v7510 = vld [vmem:[%s5 + $0x1f0] sm:$0xf]
        %v7511 = vld [vmem:[%s5 + $0x1f4] sm:$0xf]
        %v7512 = vld [vmem:[%s5 + $0x1f8] sm:$0xf]
        %v7513 = vld [vmem:[%s5 + $0x1fc] sm:$0xf]
        %v7514 = vld [vmem:[%s5 + $0x200] sm:$0xf]
        %v7515 = vld [vmem:[%s5 + $0x204] sm:$0xf]
        %v7516 = vld [vmem:[%s5 + $0x208] sm:$0xf]
        %v7517 = vld [vmem:[%s5 + $0x20c] sm:$0xf]
        %v7518 = vld [vmem:[%s5 + $0x210] sm:$0xf]
        %v7519 = vld [vmem:[%s5 + $0x214] sm:$0xf]
        %v7520 = vld [vmem:[%s5 + $0x218] sm:$0xf]
        %v7521 = vld [vmem:[%s5 + $0x21c] sm:$0xf]
        %v7522 = vld [vmem:[%s5 + $0x220] sm:$0xf]
        %v7523 = vld [vmem:[%s5 + $0x224] sm:$0xf]
        %v7524 = vld [vmem:[%s5 + $0x228] sm:$0xf]
        %v7525 = vld [vmem:[%s5 + $0x22c] sm:$0xf]
        %v7526 = vld [vmem:[%s5 + $0x230] sm:$0xf]
        %v7527 = vld [vmem:[%s5 + $0x234] sm:$0xf]
        %v7528 = vld [vmem:[%s5 + $0x238] sm:$0xf]
        %v7529 = vld [vmem:[%s5 + $0x23c] sm:$0xf]
        %v7530 = vld [vmem:[%s6] sm:$0x1]
        %v7532 = vlaneseq
        %v7533 = vshrl.u32 %v7532, 7
        %v7534 = vsub.s32 0, %v7533
        %v7535 = vrot.slane %v7530, %v7534
        %v7587 = vunpack.c.l.b16 %v7336
        %v7588 = vunpack.c.h.b16 %v7336
        %v7589 = vunpack.c.l.b16 %v7337
        %v7590 = vunpack.c.h.b16 %v7337
        %v7591 = vunpack.c.l.b16 %v7338
        %v7592 = vunpack.c.h.b16 %v7338
        %v7593 = vunpack.c.l.b16 %v7339
        %v7594 = vunpack.c.h.b16 %v7339
        %v7595 = vunpack.c.l.b16 %v7340
        %v7596 = vunpack.c.l.b16 %v7341
        %v7597 = vunpack.c.h.b16 %v7341
        %v7598 = vunpack.c.l.b16 %v7342
        %v7599 = vunpack.c.h.b16 %v7342
        %v7600 = vunpack.c.l.b16 %v7343
        %v7601 = vunpack.c.h.b16 %v7343
        %v7602 = vunpack.c.l.b16 %v7344
        %v7603 = vunpack.c.h.b16 %v7344
        %v7604 = vunpack.c.l.b16 %v7345
        %v7605 = vunpack.c.l.b16 %v7346
        %v7606 = vunpack.c.h.b16 %v7346
        %v7607 = vunpack.c.l.b16 %v7347
        %v7608 = vunpack.c.h.b16 %v7347
        %v7609 = vunpack.c.l.b16 %v7348
        %v7610 = vunpack.c.h.b16 %v7348
        %v7611 = vunpack.c.l.b16 %v7349
        %v7612 = vunpack.c.h.b16 %v7349
        %v7613 = vunpack.c.l.b16 %v7350
        %v7614 = vunpack.c.l.b16 %v7351
        %v7615 = vunpack.c.h.b16 %v7351
        %v7616 = vunpack.c.l.b16 %v7352
        %v7617 = vunpack.c.h.b16 %v7352
        %v7618 = vunpack.c.l.b16 %v7353
        %v7619 = vunpack.c.h.b16 %v7353
        %v7620 = vunpack.c.l.b16 %v7354
        %v7621 = vunpack.c.h.b16 %v7354
        %v7622 = vunpack.c.l.b16 %v7355
        %v7623 = vunpack.c.l.b16 %v7356
        %v7624 = vunpack.c.h.b16 %v7356
        %v7625 = vunpack.c.l.b16 %v7357
        %v7626 = vunpack.c.h.b16 %v7357
        %v7627 = vunpack.c.l.b16 %v7358
        %v7628 = vunpack.c.h.b16 %v7358
        %v7629 = vunpack.c.l.b16 %v7359
        %v7630 = vunpack.c.h.b16 %v7359
        %v7631 = vunpack.c.l.b16 %v7360
        %v7632 = vunpack.c.l.b16 %v7361
        %v7633 = vunpack.c.h.b16 %v7361
        %v7634 = vunpack.c.l.b16 %v7362
        %v7635 = vunpack.c.h.b16 %v7362
        %v7636 = vunpack.c.l.b16 %v7363
        %v7637 = vunpack.c.h.b16 %v7363
        %v7638 = vunpack.c.l.b16 %v7364
        %v7639 = vunpack.c.h.b16 %v7364
        %v7640 = vunpack.c.l.b16 %v7365
        %v7641 = vunpack.c.l.b16 %v7366
        %v7642 = vunpack.c.h.b16 %v7366
        %v7643 = vunpack.c.l.b16 %v7367
        %v7644 = vunpack.c.h.b16 %v7367
        %v7645 = vunpack.c.l.b16 %v7368
        %v7646 = vunpack.c.h.b16 %v7368
        %v7647 = vunpack.c.l.b16 %v7369
        %v7648 = vunpack.c.h.b16 %v7369
        %v7649 = vunpack.c.l.b16 %v7370
        %v7650 = vunpack.c.l.b16 %v7371
        %v7651 = vunpack.c.h.b16 %v7371
        %v7652 = vunpack.c.l.b16 %v7372
        %v7653 = vunpack.c.h.b16 %v7372
        %v7654 = vunpack.c.l.b16 %v7373
        %v7655 = vunpack.c.h.b16 %v7373
        %v7656 = vunpack.c.l.b16 %v7374
        %v7657 = vunpack.c.h.b16 %v7374
        %v7658 = vunpack.c.l.b16 %v7375
        %v7659 = vunpack.c.l.b16 %v7376
        %v7660 = vunpack.c.h.b16 %v7376
        %v7661 = vunpack.c.l.b16 %v7377
        %v7662 = vunpack.c.h.b16 %v7377
        %v7663 = vunpack.c.l.b16 %v7378
        %v7664 = vunpack.c.h.b16 %v7378
        %v7665 = vunpack.c.l.b16 %v7379
        %v7666 = vunpack.c.h.b16 %v7379
        %v7667 = vunpack.c.l.b16 %v7380
        %v7668 = vunpack.c.l.b16 %v7381
        %v7669 = vunpack.c.h.b16 %v7381
        %v7670 = vunpack.c.l.b16 %v7382
        %v7671 = vunpack.c.h.b16 %v7382
        %v7672 = vunpack.c.l.b16 %v7383
        %v7673 = vunpack.c.h.b16 %v7383
        %v7674 = vunpack.c.l.b16 %v7384
        %v7675 = vunpack.c.h.b16 %v7384
        %v7676 = vunpack.c.l.b16 %v7385
        %v7677 = vpack.c.b16 %v7596, %v7587
        %v7678 = vpack.c.b16 %v7597, %v7588
        %v7679 = vpack.c.b16 %v7598, %v7589
        %v7680 = vpack.c.b16 %v7599, %v7590
        %v7681 = vpack.c.b16 %v7600, %v7591
        %v7682 = vpack.c.b16 %v7601, %v7592
        %v7683 = vpack.c.b16 %v7602, %v7593
        %v7684 = vpack.c.b16 %v7603, %v7594
        %v7685 = vpack.c.b16 %v7604, %v7595
        %v7686 = vpack.c.b16 %v7614, %v7605
        %v7687 = vpack.c.b16 %v7615, %v7606
        %v7688 = vpack.c.b16 %v7616, %v7607
        %v7689 = vpack.c.b16 %v7617, %v7608
        %v7690 = vpack.c.b16 %v7618, %v7609
        %v7691 = vpack.c.b16 %v7619, %v7610
        %v7692 = vpack.c.b16 %v7620, %v7611
        %v7693 = vpack.c.b16 %v7621, %v7612
        %v7694 = vpack.c.b16 %v7622, %v7613
        %v7695 = vpack.c.b16 %v7632, %v7623
        %v7696 = vpack.c.b16 %v7633, %v7624
        %v7697 = vpack.c.b16 %v7634, %v7625
        %v7698 = vpack.c.b16 %v7635, %v7626
        %v7699 = vpack.c.b16 %v7636, %v7627
        %v7700 = vpack.c.b16 %v7637, %v7628
        %v7701 = vpack.c.b16 %v7638, %v7629
        %v7702 = vpack.c.b16 %v7639, %v7630
        %v7703 = vpack.c.b16 %v7640, %v7631
        %v7704 = vpack.c.b16 %v7650, %v7641
        %v7705 = vpack.c.b16 %v7651, %v7642
        %v7706 = vpack.c.b16 %v7652, %v7643
        %v7707 = vpack.c.b16 %v7653, %v7644
        %v7708 = vpack.c.b16 %v7654, %v7645
        %v7709 = vpack.c.b16 %v7655, %v7646
        %v7710 = vpack.c.b16 %v7656, %v7647
        %v7711 = vpack.c.b16 %v7657, %v7648
        %v7712 = vpack.c.b16 %v7658, %v7649
        %v7713 = vpack.c.b16 %v7668, %v7659
        %v7714 = vpack.c.b16 %v7669, %v7660
        %v7715 = vpack.c.b16 %v7670, %v7661
        %v7716 = vpack.c.b16 %v7671, %v7662
        %v7717 = vpack.c.b16 %v7672, %v7663
        %v7718 = vpack.c.b16 %v7673, %v7664
        %v7719 = vpack.c.b16 %v7674, %v7665
        %v7720 = vpack.c.b16 %v7675, %v7666
        %v7721 = vpack.c.b16 %v7676, %v7667
        %v7911 = vunpack.c.l.b16 %v7386
        %v7912 = vunpack.c.l.b16 %v7387
        %v7913 = vunpack.c.l.b16 %v7388
        %v7914 = vunpack.c.l.b16 %v7389
        %v7915 = vunpack.c.l.b16 %v7390
        %v7916 = vunpack.c.l.b16 %v7391
        %v7917 = vunpack.c.l.b16 %v7392
        %v7918 = vunpack.c.l.b16 %v7393
        %v7919 = vunpack.c.l.b16 %v7394
        %v7920 = vunpack.c.l.b16 %v7395
        %v7921 = vunpack.c.l.b16 %v7396
        %v7922 = vunpack.c.l.b16 %v7397
        %v7923 = vunpack.c.l.b16 %v7398
        %v7924 = vunpack.c.l.b16 %v7399
        %v7925 = vunpack.c.l.b16 %v7400
        %v7926 = vunpack.c.l.b16 %v7401
        %v7927 = vunpack.c.l.b16 %v7402
        %v7928 = vunpack.c.l.b16 %v7403
        %v7929 = vunpack.c.l.b16 %v7404
        %v7930 = vunpack.c.l.b16 %v7405
        %v7931 = vunpack.c.l.b16 %v7406
        %v7932 = vunpack.c.l.b16 %v7407
        %v7933 = vunpack.c.l.b16 %v7408
        %v7934 = vunpack.c.l.b16 %v7409
        %v7935 = vunpack.c.l.b16 %v7410
        %v7936 = vunpack.c.l.b16 %v7411
        %v7937 = vunpack.c.l.b16 %v7412
        %v7938 = vunpack.c.l.b16 %v7413
        %v7939 = vunpack.c.l.b16 %v7414
        %v7940 = vunpack.c.l.b16 %v7415
        %v7941 = vunpack.c.l.b16 %v7416
        %v7942 = vunpack.c.l.b16 %v7417
        %v7943 = vunpack.c.l.b16 %v7418
        %v7944 = vunpack.c.l.b16 %v7419
        %v7945 = vunpack.c.l.b16 %v7420
        %v7946 = vunpack.c.l.b16 %v7421
        %v7947 = vunpack.c.l.b16 %v7422
        %v7948 = vunpack.c.l.b16 %v7423
        %v7949 = vunpack.c.l.b16 %v7424
        %v7950 = vunpack.c.l.b16 %v7425
        %v7951 = vunpack.c.l.b16 %v7426
        %v7952 = vunpack.c.l.b16 %v7427
        %v7953 = vunpack.c.l.b16 %v7428
        %v7954 = vunpack.c.l.b16 %v7429
        %v7955 = vunpack.c.l.b16 %v7430
        %v7956 = vunpack.c.l.b16 %v7431
        %v7957 = vunpack.c.l.b16 %v7432
        %v7958 = vunpack.c.l.b16 %v7433
        %v7959 = vunpack.c.l.b16 %v7434
        %v7960 = vunpack.c.l.b16 %v7435
        %v7961 = vunpack.c.l.b16 %v7436
        %v7962 = vunpack.c.l.b16 %v7437
        %v7963 = vunpack.c.l.b16 %v7438
        %v7964 = vunpack.c.l.b16 %v7439
        %v7965 = vunpack.c.l.b16 %v7440
        %v7966 = vunpack.c.l.b16 %v7441
        %v7967 = vunpack.c.l.b16 %v7442
        %v7968 = vunpack.c.l.b16 %v7443
        %v7969 = vunpack.c.l.b16 %v7444
        %v7970 = vunpack.c.l.b16 %v7445
        %v7971 = vunpack.c.l.b16 %v7446
        %v7972 = vunpack.c.l.b16 %v7447
        %v7973 = vunpack.c.l.b16 %v7448
        %v7974 = vunpack.c.l.b16 %v7449
        %v7975 = vunpack.c.l.b16 %v7450
        %v7976 = vunpack.c.l.b16 %v7451
        %v7977 = vunpack.c.l.b16 %v7452
        %v7978 = vunpack.c.l.b16 %v7453
        %v7979 = vunpack.c.l.b16 %v7454
        %v7980 = vunpack.c.l.b16 %v7455
        %v7981 = vunpack.c.l.b16 %v7456
        %v7982 = vunpack.c.l.b16 %v7457
        %v7983 = vunpack.c.l.b16 %v7458
        %v7984 = vunpack.c.l.b16 %v7459
        %v7985 = vunpack.c.l.b16 %v7460
        %v7986 = vunpack.c.l.b16 %v7461
        %v7987 = vunpack.c.l.b16 %v7462
        %v7988 = vunpack.c.l.b16 %v7463
        %v7989 = vunpack.c.l.b16 %v7464
        %v7990 = vunpack.c.l.b16 %v7465
        %v7991 = vunpack.c.l.b16 %v7466
        %v7992 = vunpack.c.l.b16 %v7467
        %v7993 = vunpack.c.l.b16 %v7468
        %v7994 = vunpack.c.l.b16 %v7469
        %v7995 = vunpack.c.l.b16 %v7470
        %v7996 = vunpack.c.l.b16 %v7471
        %v7997 = vunpack.c.l.b16 %v7472
        %v7998 = vunpack.c.l.b16 %v7473
        %v7999 = vunpack.c.l.b16 %v7474
        %v8000 = vunpack.c.l.b16 %v7475
        %v8001 = vunpack.c.l.b16 %v7476
        %v8002 = vunpack.c.l.b16 %v7477
        %v8003 = vunpack.c.l.b16 %v7478
        %v8004 = vunpack.c.l.b16 %v7479
        %v8005 = vunpack.c.l.b16 %v7480
        %v8006 = vunpack.c.l.b16 %v7481
        %v8007 = vunpack.c.l.b16 %v7482
        %v8008 = vunpack.c.l.b16 %v7483
        %v8009 = vunpack.c.l.b16 %v7484
        %v8010 = vunpack.c.l.b16 %v7485
        %v8011 = vunpack.c.l.b16 %v7486
        %v8012 = vunpack.c.l.b16 %v7487
        %v8013 = vunpack.c.l.b16 %v7488
        %v8014 = vunpack.c.l.b16 %v7489
        %v8015 = vunpack.c.l.b16 %v7490
        %v8016 = vunpack.c.l.b16 %v7491
        %v8017 = vunpack.c.l.b16 %v7492
        %v8018 = vunpack.c.l.b16 %v7493
        %v8019 = vunpack.c.l.b16 %v7494
        %v8020 = vunpack.c.l.b16 %v7495
        %v8021 = vunpack.c.l.b16 %v7496
        %v8022 = vunpack.c.l.b16 %v7497
        %v8023 = vunpack.c.l.b16 %v7498
        %v8024 = vunpack.c.l.b16 %v7499
        %v8025 = vunpack.c.l.b16 %v7500
        %v8026 = vunpack.c.l.b16 %v7501
        %v8027 = vunpack.c.l.b16 %v7502
        %v8028 = vunpack.c.l.b16 %v7503
        %v8029 = vunpack.c.l.b16 %v7504
        %v8030 = vunpack.c.l.b16 %v7505
        %v8031 = vunpack.c.l.b16 %v7506
        %v8032 = vunpack.c.l.b16 %v7507
        %v8033 = vunpack.c.l.b16 %v7508
        %v8034 = vunpack.c.l.b16 %v7509
        %v8035 = vunpack.c.l.b16 %v7510
        %v8036 = vunpack.c.l.b16 %v7511
        %v8037 = vunpack.c.l.b16 %v7512
        %v8038 = vunpack.c.l.b16 %v7513
        %v8039 = vunpack.c.l.b16 %v7514
        %v8040 = vunpack.c.l.b16 %v7515
        %v8041 = vunpack.c.l.b16 %v7516
        %v8042 = vunpack.c.l.b16 %v7517
        %v8043 = vunpack.c.l.b16 %v7518
        %v8044 = vunpack.c.l.b16 %v7519
        %v8045 = vunpack.c.l.b16 %v7520
        %v8046 = vunpack.c.l.b16 %v7521
        %v8047 = vunpack.c.l.b16 %v7522
        %v8048 = vunpack.c.l.b16 %v7523
        %v8049 = vunpack.c.l.b16 %v7524
        %v8050 = vunpack.c.l.b16 %v7525
        %v8051 = vunpack.c.l.b16 %v7526
        %v8052 = vunpack.c.l.b16 %v7527
        %v8053 = vunpack.c.l.b16 %v7528
        %v8054 = vunpack.c.l.b16 %v7529
        %v8055 = vpack.c.b16 %v7912, %v7911
        %v8056 = vpack.c.b16 %v7914, %v7913
        %v8057 = vpack.c.b16 %v7916, %v7915
        %v8058 = vpack.c.b16 %v7918, %v7917
        %v8059 = vpack.c.b16 %v7920, %v7919
        %v8060 = vpack.c.b16 %v7922, %v7921
        %v8061 = vpack.c.b16 %v7924, %v7923
        %v8062 = vpack.c.b16 %v7926, %v7925
        %v8063 = vpack.c.b16 %v7928, %v7927
        %v8064 = vpack.c.b16 %v7930, %v7929
        %v8065 = vpack.c.b16 %v7932, %v7931
        %v8066 = vpack.c.b16 %v7934, %v7933
        %v8067 = vpack.c.b16 %v7936, %v7935
        %v8068 = vpack.c.b16 %v7938, %v7937
        %v8069 = vpack.c.b16 %v7940, %v7939
        %v8070 = vpack.c.b16 %v7942, %v7941
        %v8071 = vpack.c.b16 %v7944, %v7943
        %v8072 = vpack.c.b16 %v7946, %v7945
        %v8073 = vpack.c.b16 %v7948, %v7947
        %v8074 = vpack.c.b16 %v7950, %v7949
        %v8075 = vpack.c.b16 %v7952, %v7951
        %v8076 = vpack.c.b16 %v7954, %v7953
        %v8077 = vpack.c.b16 %v7956, %v7955
        %v8078 = vpack.c.b16 %v7958, %v7957
        %v8079 = vpack.c.b16 %v7960, %v7959
        %v8080 = vpack.c.b16 %v7962, %v7961
        %v8081 = vpack.c.b16 %v7964, %v7963
        %v8082 = vpack.c.b16 %v7966, %v7965
        %v8083 = vpack.c.b16 %v7968, %v7967
        %v8084 = vpack.c.b16 %v7970, %v7969
        %v8085 = vpack.c.b16 %v7972, %v7971
        %v8086 = vpack.c.b16 %v7974, %v7973
        %v8087 = vpack.c.b16 %v7976, %v7975
        %v8088 = vpack.c.b16 %v7978, %v7977
        %v8089 = vpack.c.b16 %v7980, %v7979
        %v8090 = vpack.c.b16 %v7982, %v7981
        %v8091 = vpack.c.b16 %v7984, %v7983
        %v8092 = vpack.c.b16 %v7986, %v7985
        %v8093 = vpack.c.b16 %v7988, %v7987
        %v8094 = vpack.c.b16 %v7990, %v7989
        %v8095 = vpack.c.b16 %v7992, %v7991
        %v8096 = vpack.c.b16 %v7994, %v7993
        %v8097 = vpack.c.b16 %v7996, %v7995
        %v8098 = vpack.c.b16 %v7998, %v7997
        %v8099 = vpack.c.b16 %v8000, %v7999
        %v8100 = vpack.c.b16 %v8002, %v8001
        %v8101 = vpack.c.b16 %v8004, %v8003
        %v8102 = vpack.c.b16 %v8006, %v8005
        %v8103 = vpack.c.b16 %v8008, %v8007
        %v8104 = vpack.c.b16 %v8010, %v8009
        %v8105 = vpack.c.b16 %v8012, %v8011
        %v8106 = vpack.c.b16 %v8014, %v8013
        %v8107 = vpack.c.b16 %v8016, %v8015
        %v8108 = vpack.c.b16 %v8018, %v8017
        %v8109 = vpack.c.b16 %v8020, %v8019
        %v8110 = vpack.c.b16 %v8022, %v8021
        %v8111 = vpack.c.b16 %v8024, %v8023
        %v8112 = vpack.c.b16 %v8026, %v8025
        %v8113 = vpack.c.b16 %v8028, %v8027
        %v8114 = vpack.c.b16 %v8030, %v8029
        %v8115 = vpack.c.b16 %v8032, %v8031
        %v8116 = vpack.c.b16 %v8034, %v8033
        %v8117 = vpack.c.b16 %v8036, %v8035
        %v8118 = vpack.c.b16 %v8038, %v8037
        %v8119 = vpack.c.b16 %v8040, %v8039
        %v8120 = vpack.c.b16 %v8042, %v8041
        %v8121 = vpack.c.b16 %v8044, %v8043
        %v8122 = vpack.c.b16 %v8046, %v8045
        %v8123 = vpack.c.b16 %v8048, %v8047
        %v8124 = vpack.c.b16 %v8050, %v8049
        %v8125 = vpack.c.b16 %v8052, %v8051
        %v8126 = vpack.c.b16 %v8054, %v8053
        %8199 = vmatprep.subr.bf16.mxu0 0
        %8200 = vmatpush1.bf16.msra.mxu0 %v8062
        %8201 = vmatprep.subr.bf16.mxu0 0
        %8202 = vmatpush1.bf16.msra.mxu0 %v8061
        %8203 = vmatprep.subr.bf16.mxu0 0
        %8204 = vmatpush1.bf16.msra.mxu0 %v8060
        %8205 = vmatprep.subr.bf16.mxu0 0
        %8206 = vmatpush1.bf16.msra.mxu0 %v8059
        %8207 = vmatprep.subr.bf16.mxu0 0
        %8208 = vmatpush1.bf16.msra.mxu0 %v8058
        %8209 = vmatprep.subr.bf16.mxu0 0
        %8210 = vmatpush1.bf16.msra.mxu0 %v8057
        %8211 = vmatprep.subr.bf16.mxu0 0
        %8212 = vmatpush1.bf16.msra.mxu0 %v8056
        %8213 = vmatprep.subr.bf16.mxu0 0
        %8214 = vmatpush1.bf16.msra.mxu0 %v8055
        %8215 = vmatprep.subr.bf16.mxu0 0
        %8216 = vmatpush2.bf16.msra.mxu0 %v8070
        %8217 = vmatprep.subr.bf16.mxu0 0
        %8218 = vmatpush2.bf16.msra.mxu0 %v8069
        %8219 = vmatprep.subr.bf16.mxu0 0
        %8220 = vmatpush2.bf16.msra.mxu0 %v8068
        %8221 = vmatprep.subr.bf16.mxu0 0
        %8222 = vmatpush2.bf16.msra.mxu0 %v8067
        %8223 = vmatprep.subr.bf16.mxu0 0
        %8224 = vmatpush2.bf16.msra.mxu0 %v8066
        %8225 = vmatprep.subr.bf16.mxu0 0
        %8226 = vmatpush2.bf16.msra.mxu0 %v8065
        %8227 = vmatprep.subr.bf16.mxu0 0
        %8228 = vmatpush2.bf16.msra.mxu0 %v8064
        %8229 = vmatprep.subr.bf16.mxu0 0
        %8230 = vmatpush2.bf16.msra.mxu0 %v8063
        %8231 = vmatprep.mubr.bf16.mxu0 %v7678
        %8232 = vmatmul.mubr.bf16.gmra.mxu0 %v7677
        %v8233 = vpop.f32.mrf.mxu0
        %v8234 = vadd.f32 %v7535, %v8233
        %v8235 = vpop.f32.mrf.mxu0
        %v8236 = vpop.f32.mrf.mxu0
        %v8237 = vadd.f32 %v7535, %v8236
        %v8238 = vpop.f32.mrf.mxu0
        %8239 = vmatprep.mubr.bf16.mxu0 %v7687
        %8240 = vmatmul.mubr.bf16.gmra.mxu0 %v7686
        %v8241 = vpop.f32.mrf.mxu0
        %v8242 = vadd.f32 %v7535, %v8241
        %v8243 = vpop.f32.mrf.mxu0
        %v8244 = vpop.f32.mrf.mxu0
        %v8245 = vadd.f32 %v7535, %v8244
        %v8246 = vpop.f32.mrf.mxu0
        %8247 = vmatprep.mubr.bf16.mxu0 %v7696
        %8248 = vmatmul.mubr.bf16.gmra.mxu0 %v7695
        %v8249 = vpop.f32.mrf.mxu0
        %v8250 = vadd.f32 %v7535, %v8249
        %v8251 = vpop.f32.mrf.mxu0
        %v8252 = vpop.f32.mrf.mxu0
        %v8253 = vadd.f32 %v7535, %v8252
        %v8254 = vpop.f32.mrf.mxu0
        %8255 = vmatprep.mubr.bf16.mxu0 %v7705
        %8256 = vmatmul.mubr.bf16.gmra.mxu0 %v7704
        %v8257 = vpop.f32.mrf.mxu0
        %v8258 = vadd.f32 %v7535, %v8257
        %v8259 = vpop.f32.mrf.mxu0
        %v8260 = vpop.f32.mrf.mxu0
        %v8261 = vadd.f32 %v7535, %v8260
        %v8262 = vpop.f32.mrf.mxu0
        %8263 = vmatprep.mubr.bf16.mxu0 %v7714
        %8264 = vmatmul.mubr.bf16.gmra.mxu0 %v7713
        %v8265 = vpop.f32.mrf.mxu0
        %v8266 = vadd.f32 %v7535, %v8265
        %v8267 = vpop.f32.mrf.mxu0
        %v8268 = vpop.f32.mrf.mxu0
        %v8269 = vadd.f32 %v7535, %v8268
        %v8270 = vpop.f32.mrf.mxu0
        %8271 = vdwg.mxu0
        %8272 = vmatprep.subr.bf16.mxu0 0
        %8273 = vmatpush1.bf16.msra.mxu0 %v8078
        %8274 = vmatprep.subr.bf16.mxu0 0
        %8275 = vmatpush1.bf16.msra.mxu0 %v8077
        %8276 = vmatprep.subr.bf16.mxu0 0
        %8277 = vmatpush1.bf16.msra.mxu0 %v8076
        %8278 = vmatprep.subr.bf16.mxu0 0
        %8279 = vmatpush1.bf16.msra.mxu0 %v8075
        %8280 = vmatprep.subr.bf16.mxu0 0
        %8281 = vmatpush1.bf16.msra.mxu0 %v8074
        %8282 = vmatprep.subr.bf16.mxu0 0
        %8283 = vmatpush1.bf16.msra.mxu0 %v8073
        %8284 = vmatprep.subr.bf16.mxu0 0
        %8285 = vmatpush1.bf16.msra.mxu0 %v8072
        %8286 = vmatprep.subr.bf16.mxu0 0
        %8287 = vmatpush1.bf16.msra.mxu0 %v8071
        %8288 = vmatprep.subr.bf16.mxu0 0
        %8289 = vmatpush2.bf16.msra.mxu0 %v8086
        %8290 = vmatprep.subr.bf16.mxu0 0
        %8291 = vmatpush2.bf16.msra.mxu0 %v8085
        %8292 = vmatprep.subr.bf16.mxu0 0
        %8293 = vmatpush2.bf16.msra.mxu0 %v8084
        %8294 = vmatprep.subr.bf16.mxu0 0
        %8295 = vmatpush2.bf16.msra.mxu0 %v8083
        %8296 = vmatprep.subr.bf16.mxu0 0
        %8297 = vmatpush2.bf16.msra.mxu0 %v8082
        %8298 = vmatprep.subr.bf16.mxu0 0
        %8299 = vmatpush2.bf16.msra.mxu0 %v8081
        %8300 = vmatprep.subr.bf16.mxu0 0
        %8301 = vmatpush2.bf16.msra.mxu0 %v8080
        %8302 = vmatprep.subr.bf16.mxu0 0
        %8303 = vmatpush2.bf16.msra.mxu0 %v8079
        %8304 = vmatprep.mubr.bf16.mxu0 %v7680
        %8305 = vmatmul.mubr.bf16.gmra.mxu0 %v7679
        %v8306 = vpop.f32.mrf.mxu0
        %v8307 = vadd.f32 %v8234, %v8306
        %v8308 = vpop.f32.mrf.mxu0
        %v8309 = vpop.f32.mrf.mxu0
        %v8310 = vadd.f32 %v8237, %v8309
        %v8311 = vpop.f32.mrf.mxu0
        %8312 = vmatprep.mubr.bf16.mxu0 %v7689
        %8313 = vmatmul.mubr.bf16.gmra.mxu0 %v7688
        %v8314 = vpop.f32.mrf.mxu0
        %v8315 = vadd.f32 %v8242, %v8314
        %v8316 = vpop.f32.mrf.mxu0
        %v8317 = vpop.f32.mrf.mxu0
        %v8318 = vadd.f32 %v8245, %v8317
        %v8319 = vpop.f32.mrf.mxu0
        %8320 = vmatprep.mubr.bf16.mxu0 %v7698
        %8321 = vmatmul.mubr.bf16.gmra.mxu0 %v7697
        %v8322 = vpop.f32.mrf.mxu0
        %v8323 = vadd.f32 %v8250, %v8322
        %v8324 = vpop.f32.mrf.mxu0
        %v8325 = vpop.f32.mrf.mxu0
        %v8326 = vadd.f32 %v8253, %v8325
        %v8327 = vpop.f32.mrf.mxu0
        %8328 = vmatprep.mubr.bf16.mxu0 %v7707
        %8329 = vmatmul.mubr.bf16.gmra.mxu0 %v7706
        %v8330 = vpop.f32.mrf.mxu0
        %v8331 = vadd.f32 %v8258, %v8330
        %v8332 = vpop.f32.mrf.mxu0
        %v8333 = vpop.f32.mrf.mxu0
        %v8334 = vadd.f32 %v8261, %v8333
        %v8335 = vpop.f32.mrf.mxu0
        %8336 = vmatprep.mubr.bf16.mxu0 %v7716
        %8337 = vmatmul.mubr.bf16.gmra.mxu0 %v7715
        %v8338 = vpop.f32.mrf.mxu0
        %v8339 = vadd.f32 %v8266, %v8338
        %v8340 = vpop.f32.mrf.mxu0
        %v8341 = vpop.f32.mrf.mxu0
        %v8342 = vadd.f32 %v8269, %v8341
        %v8343 = vpop.f32.mrf.mxu0
        %8344 = vdwg.mxu0
        %8345 = vmatprep.subr.bf16.mxu0 0
        %8346 = vmatpush1.bf16.msra.mxu0 %v8094
        %8347 = vmatprep.subr.bf16.mxu0 0
        %8348 = vmatpush1.bf16.msra.mxu0 %v8093
        %8349 = vmatprep.subr.bf16.mxu0 0
        %8350 = vmatpush1.bf16.msra.mxu0 %v8092
        %8351 = vmatprep.subr.bf16.mxu0 0
        %8352 = vmatpush1.bf16.msra.mxu0 %v8091
        %8353 = vmatprep.subr.bf16.mxu0 0
        %8354 = vmatpush1.bf16.msra.mxu0 %v8090
        %8355 = vmatprep.subr.bf16.mxu0 0
        %8356 = vmatpush1.bf16.msra.mxu0 %v8089
        %8357 = vmatprep.subr.bf16.mxu0 0
        %8358 = vmatpush1.bf16.msra.mxu0 %v8088
        %8359 = vmatprep.subr.bf16.mxu0 0
        %8360 = vmatpush1.bf16.msra.mxu0 %v8087
        %8361 = vmatprep.subr.bf16.mxu0 0
        %8362 = vmatpush2.bf16.msra.mxu0 %v8102
        %8363 = vmatprep.subr.bf16.mxu0 0
        %8364 = vmatpush2.bf16.msra.mxu0 %v8101
        %8365 = vmatprep.subr.bf16.mxu0 0
        %8366 = vmatpush2.bf16.msra.mxu0 %v8100
        %8367 = vmatprep.subr.bf16.mxu0 0
        %8368 = vmatpush2.bf16.msra.mxu0 %v8099
        %8369 = vmatprep.subr.bf16.mxu0 0
        %8370 = vmatpush2.bf16.msra.mxu0 %v8098
        %8371 = vmatprep.subr.bf16.mxu0 0
        %8372 = vmatpush2.bf16.msra.mxu0 %v8097
        %8373 = vmatprep.subr.bf16.mxu0 0
        %8374 = vmatpush2.bf16.msra.mxu0 %v8096
        %8375 = vmatprep.subr.bf16.mxu0 0
        %8376 = vmatpush2.bf16.msra.mxu0 %v8095
        %8377 = vmatprep.mubr.bf16.mxu0 %v7682
        %8378 = vmatmul.mubr.bf16.gmra.mxu0 %v7681
        %v8379 = vpop.f32.mrf.mxu0
        %v8380 = vadd.f32 %v8307, %v8379
        %v8381 = vpop.f32.mrf.mxu0
        %v8382 = vpop.f32.mrf.mxu0
        %v8383 = vadd.f32 %v8310, %v8382
        %v8384 = vpop.f32.mrf.mxu0
        %8385 = vmatprep.mubr.bf16.mxu0 %v7691
        %8386 = vmatmul.mubr.bf16.gmra.mxu0 %v7690
        %v8387 = vpop.f32.mrf.mxu0
        %v8388 = vadd.f32 %v8315, %v8387
        %v8389 = vpop.f32.mrf.mxu0
        %v8390 = vpop.f32.mrf.mxu0
        %v8391 = vadd.f32 %v8318, %v8390
        %v8392 = vpop.f32.mrf.mxu0
        %8393 = vmatprep.mubr.bf16.mxu0 %v7700
        %8394 = vmatmul.mubr.bf16.gmra.mxu0 %v7699
        %v8395 = vpop.f32.mrf.mxu0
        %v8396 = vadd.f32 %v8323, %v8395
        %v8397 = vpop.f32.mrf.mxu0
        %v8398 = vpop.f32.mrf.mxu0
        %v8399 = vadd.f32 %v8326, %v8398
        %v8400 = vpop.f32.mrf.mxu0
        %8401 = vmatprep.mubr.bf16.mxu0 %v7709
        %8402 = vmatmul.mubr.bf16.gmra.mxu0 %v7708
        %v8403 = vpop.f32.mrf.mxu0
        %v8404 = vadd.f32 %v8331, %v8403
        %v8405 = vpop.f32.mrf.mxu0
        %v8406 = vpop.f32.mrf.mxu0
        %v8407 = vadd.f32 %v8334, %v8406
        %v8408 = vpop.f32.mrf.mxu0
        %8409 = vmatprep.mubr.bf16.mxu0 %v7718
        %8410 = vmatmul.mubr.bf16.gmra.mxu0 %v7717
        %v8411 = vpop.f32.mrf.mxu0
        %v8412 = vadd.f32 %v8339, %v8411
        %v8413 = vpop.f32.mrf.mxu0
        %v8414 = vpop.f32.mrf.mxu0
        %v8415 = vadd.f32 %v8342, %v8414
        %v8416 = vpop.f32.mrf.mxu0
        %8417 = vdwg.mxu0
        %8418 = vmatprep.subr.bf16.mxu0 0
        %8419 = vmatpush1.bf16.msra.mxu0 %v8110
        %8420 = vmatprep.subr.bf16.mxu0 0
        %8421 = vmatpush1.bf16.msra.mxu0 %v8109
        %8422 = vmatprep.subr.bf16.mxu0 0
        %8423 = vmatpush1.bf16.msra.mxu0 %v8108
        %8424 = vmatprep.subr.bf16.mxu0 0
        %8425 = vmatpush1.bf16.msra.mxu0 %v8107
        %8426 = vmatprep.subr.bf16.mxu0 0
        %8427 = vmatpush1.bf16.msra.mxu0 %v8106
        %8428 = vmatprep.subr.bf16.mxu0 0
        %8429 = vmatpush1.bf16.msra.mxu0 %v8105
        %8430 = vmatprep.subr.bf16.mxu0 0
        %8431 = vmatpush1.bf16.msra.mxu0 %v8104
        %8432 = vmatprep.subr.bf16.mxu0 0
        %8433 = vmatpush1.bf16.msra.mxu0 %v8103
        %8434 = vmatprep.subr.bf16.mxu0 0
        %8435 = vmatpush2.bf16.msra.mxu0 %v8118
        %8436 = vmatprep.subr.bf16.mxu0 0
        %8437 = vmatpush2.bf16.msra.mxu0 %v8117
        %8438 = vmatprep.subr.bf16.mxu0 0
        %8439 = vmatpush2.bf16.msra.mxu0 %v8116
        %8440 = vmatprep.subr.bf16.mxu0 0
        %8441 = vmatpush2.bf16.msra.mxu0 %v8115
        %8442 = vmatprep.subr.bf16.mxu0 0
        %8443 = vmatpush2.bf16.msra.mxu0 %v8114
        %8444 = vmatprep.subr.bf16.mxu0 0
        %8445 = vmatpush2.bf16.msra.mxu0 %v8113
        %8446 = vmatprep.subr.bf16.mxu0 0
        %8447 = vmatpush2.bf16.msra.mxu0 %v8112
        %8448 = vmatprep.subr.bf16.mxu0 0
        %8449 = vmatpush2.bf16.msra.mxu0 %v8111
        %8450 = vmatprep.mubr.bf16.mxu0 %v7684
        %8451 = vmatmul.mubr.bf16.gmra.mxu0 %v7683
        %v8452 = vpop.f32.mrf.mxu0
        %v8453 = vadd.f32 %v8380, %v8452
        %v8454 = vpop.f32.mrf.mxu0
        %v8455 = vpop.f32.mrf.mxu0
        %v8456 = vadd.f32 %v8383, %v8455
        %v8457 = vpop.f32.mrf.mxu0
        %8458 = vmatprep.mubr.bf16.mxu0 %v7693
        %8459 = vmatmul.mubr.bf16.gmra.mxu0 %v7692
        %v8460 = vpop.f32.mrf.mxu0
        %v8461 = vadd.f32 %v8388, %v8460
        %v8462 = vpop.f32.mrf.mxu0
        %v8463 = vpop.f32.mrf.mxu0
        %v8464 = vadd.f32 %v8391, %v8463
        %v8465 = vpop.f32.mrf.mxu0
        %8466 = vmatprep.mubr.bf16.mxu0 %v7702
        %8467 = vmatmul.mubr.bf16.gmra.mxu0 %v7701
        %v8468 = vpop.f32.mrf.mxu0
        %v8469 = vadd.f32 %v8396, %v8468
        %v8470 = vpop.f32.mrf.mxu0
        %v8471 = vpop.f32.mrf.mxu0
        %v8472 = vadd.f32 %v8399, %v8471
        %v8473 = vpop.f32.mrf.mxu0
        %8474 = vmatprep.mubr.bf16.mxu0 %v7711
        %8475 = vmatmul.mubr.bf16.gmra.mxu0 %v7710
        %v8476 = vpop.f32.mrf.mxu0
        %v8477 = vadd.f32 %v8404, %v8476
        %v8478 = vpop.f32.mrf.mxu0
        %v8479 = vpop.f32.mrf.mxu0
        %v8480 = vadd.f32 %v8407, %v8479
        %v8481 = vpop.f32.mrf.mxu0
        %8482 = vmatprep.mubr.bf16.mxu0 %v7720
        %8483 = vmatmul.mubr.bf16.gmra.mxu0 %v7719
        %v8484 = vpop.f32.mrf.mxu0
        %v8485 = vadd.f32 %v8412, %v8484
        %v8486 = vpop.f32.mrf.mxu0
        %v8487 = vpop.f32.mrf.mxu0
        %v8488 = vadd.f32 %v8415, %v8487
        %v8489 = vpop.f32.mrf.mxu0
        %8490 = vdwg.mxu0
        %8491 = vmatprep.subr.bf16.mxu0 0
        %8492 = vmatpush1.bf16.msra.mxu0 %v8126
        %8493 = vmatprep.subr.bf16.mxu0 0
        %8494 = vmatpush1.bf16.msra.mxu0 %v8125
        %8495 = vmatprep.subr.bf16.mxu0 0
        %8496 = vmatpush1.bf16.msra.mxu0 %v8124
        %8497 = vmatprep.subr.bf16.mxu0 0
        %8498 = vmatpush1.bf16.msra.mxu0 %v8123
        %8499 = vmatprep.subr.bf16.mxu0 0
        %8500 = vmatpush1.bf16.msra.mxu0 %v8122
        %8501 = vmatprep.subr.bf16.mxu0 0
        %8502 = vmatpush1.bf16.msra.mxu0 %v8121
        %8503 = vmatprep.subr.bf16.mxu0 0
        %8504 = vmatpush1.bf16.msra.mxu0 %v8120
        %8505 = vmatprep.subr.bf16.mxu0 0
        %8506 = vmatpush1.bf16.msra.mxu0 %v8119
        %8507 = vmatprep.subr.bf16.mxu0 0
        %8508 = vmatpush2.bf16.msra.mxu0 0
        %8509 = vmatprep.subr.bf16.mxu0 0
        %8510 = vmatpush2.bf16.msra.mxu0 0
        %8511 = vmatprep.subr.bf16.mxu0 0
        %8512 = vmatpush2.bf16.msra.mxu0 0
        %8513 = vmatprep.subr.bf16.mxu0 0
        %8514 = vmatpush2.bf16.msra.mxu0 0
        %8515 = vmatprep.subr.bf16.mxu0 0
        %8516 = vmatpush2.bf16.msra.mxu0 0
        %8517 = vmatprep.subr.bf16.mxu0 0
        %8518 = vmatpush2.bf16.msra.mxu0 0
        %8519 = vmatprep.subr.bf16.mxu0 0
        %8520 = vmatpush2.bf16.msra.mxu0 0
        %8521 = vmatprep.subr.bf16.mxu0 0
        %8522 = vmatpush2.bf16.msra.mxu0 0
        %8523 = vmatprep.mubr.bf16.mxu0 0
        %8524 = vmatmul.mubr.bf16.gmra.mxu0 %v7685
        %v8525 = vpop.f32.mrf.mxu0
        %v8526 = vadd.f32 %v8453, %v8525
        %v8527 = vpop.f32.mrf.mxu0
        %v8528 = vpop.f32.mrf.mxu0
        %v8529 = vadd.f32 %v8456, %v8528
        %v8530 = vpop.f32.mrf.mxu0
        %8531 = vmatprep.mubr.bf16.mxu0 0
        %8532 = vmatmul.mubr.bf16.gmra.mxu0 %v7694
        %v8533 = vpop.f32.mrf.mxu0
        %v8534 = vadd.f32 %v8461, %v8533
        %v8535 = vpop.f32.mrf.mxu0
        %v8536 = vpop.f32.mrf.mxu0
        %v8537 = vadd.f32 %v8464, %v8536
        %v8538 = vpop.f32.mrf.mxu0
        %8539 = vmatprep.mubr.bf16.mxu0 0
        %8540 = vmatmul.mubr.bf16.gmra.mxu0 %v7703
        %v8541 = vpop.f32.mrf.mxu0
        %v8542 = vadd.f32 %v8469, %v8541
        %v8543 = vpop.f32.mrf.mxu0
        %v8544 = vpop.f32.mrf.mxu0
        %v8545 = vadd.f32 %v8472, %v8544
        %v8546 = vpop.f32.mrf.mxu0
        %8547 = vmatprep.mubr.bf16.mxu0 0
        %8548 = vmatmul.mubr.bf16.gmra.mxu0 %v7712
        %v8549 = vpop.f32.mrf.mxu0
        %v8550 = vadd.f32 %v8477, %v8549
        %v8551 = vpop.f32.mrf.mxu0
        %v8552 = vpop.f32.mrf.mxu0
        %v8553 = vadd.f32 %v8480, %v8552
        %v8554 = vpop.f32.mrf.mxu0
        %8555 = vmatprep.mubr.bf16.mxu0 0
        %8556 = vmatmul.mubr.bf16.gmra.mxu0 %v7721
        %v8557 = vpop.f32.mrf.mxu0
        %v8558 = vadd.f32 %v8485, %v8557
        %v8559 = vpop.f32.mrf.mxu0
        %v8560 = vpop.f32.mrf.mxu0
        %v8561 = vadd.f32 %v8488, %v8560
        %v8562 = vpop.f32.mrf.mxu0
        %8563 = vdwg.mxu0
        %v8564 = vmax.f32 %v8526, 0.0
        %v8565 = vmax.f32 %v8529, 0.0
        %v8566 = vmax.f32 %v8534, 0.0
        %v8567 = vmax.f32 %v8537, 0.0
        %v8568 = vmax.f32 %v8542, 0.0
        %v8569 = vmax.f32 %v8545, 0.0
        %v8570 = vmax.f32 %v8550, 0.0
        %v8571 = vmax.f32 %v8553, 0.0
        %v8572 = vmax.f32 %v8558, 0.0
        %v8573 = vmax.f32 %v8561, 0.0
        %v8574 = vlaneseq
        %v8575 = vshrl.u32 %v8574, 7
        %v8576 = vadd.s32 %v8575, 8
        %v8577 = vadd.s32 %v8575, 16
        %v8578 = vadd.s32 %v8575, 24
        %v8579 = vadd.s32 %v8575, 32
        %v8580 = vadd.s32 %v8575, 40
        %v8581 = vadd.s32 %v8575, 48
        %v8582 = vadd.s32 %v8575, 56
        %v8583 = vadd.s32 %v8575, 64
        %v8584 = vadd.s32 %v8575, 72
        %vm8585 = vcmp.lt.s32.totalorder %v8575, 0
        %v8586 = vsub.s32 0, %v8575
        %v8587 = vsel %vm8585, %v8586, %v8575
        %v8588 = vmul.u32.u64.compose %v8587, 2863311531
        %v8589 = vextract.low.u32 %v8588
        %v8590 = vextract.high.u32 %v8588
        %v8591 = vshrl.u32 %v8590, 3
        %v8592 = vmul.u32 %v8591, 12
        %v8593 = vsub.s32 %v8587, %v8592
        %v8594 = vsub.s32 0, %v8593
        %v8595 = vsel %vm8585, %v8594, %v8593
        %vm8596 = vcmp.lt.s32.totalorder %v8576, 0
        %v8597 = vsub.s32 0, %v8576
        %v8598 = vsel %vm8596, %v8597, %v8576
        %v8599 = vmul.u32.u64.compose %v8598, 2863311531
        %v8600 = vextract.low.u32 %v8599
        %v8601 = vextract.high.u32 %v8599
        %v8602 = vshrl.u32 %v8601, 3
        %v8603 = vmul.u32 %v8602, 12
        %v8604 = vsub.s32 %v8598, %v8603
        %v8605 = vsub.s32 0, %v8604
        %v8606 = vsel %vm8596, %v8605, %v8604
        %vm8607 = vcmp.lt.s32.totalorder %v8577, 0
        %v8608 = vsub.s32 0, %v8577
        %v8609 = vsel %vm8607, %v8608, %v8577
        %v8610 = vmul.u32.u64.compose %v8609, 2863311531
        %v8611 = vextract.low.u32 %v8610
        %v8612 = vextract.high.u32 %v8610
        %v8613 = vshrl.u32 %v8612, 3
        %v8614 = vmul.u32 %v8613, 12
        %v8615 = vsub.s32 %v8609, %v8614
        %v8616 = vsub.s32 0, %v8615
        %v8617 = vsel %vm8607, %v8616, %v8615
        %vm8618 = vcmp.lt.s32.totalorder %v8578, 0
        %v8619 = vsub.s32 0, %v8578
        %v8620 = vsel %vm8618, %v8619, %v8578
        %v8621 = vmul.u32.u64.compose %v8620, 2863311531
        %v8622 = vextract.low.u32 %v8621
        %v8623 = vextract.high.u32 %v8621
        %v8624 = vshrl.u32 %v8623, 3
        %v8625 = vmul.u32 %v8624, 12
        %v8626 = vsub.s32 %v8620, %v8625
        %v8627 = vsub.s32 0, %v8626
        %v8628 = vsel %vm8618, %v8627, %v8626
        %vm8629 = vcmp.lt.s32.totalorder %v8579, 0
        %v8630 = vsub.s32 0, %v8579
        %v8631 = vsel %vm8629, %v8630, %v8579
        %v8632 = vmul.u32.u64.compose %v8631, 2863311531
        %v8633 = vextract.low.u32 %v8632
        %v8634 = vextract.high.u32 %v8632
        %v8635 = vshrl.u32 %v8634, 3
        %v8636 = vmul.u32 %v8635, 12
        %v8637 = vsub.s32 %v8631, %v8636
        %v8638 = vsub.s32 0, %v8637
        %v8639 = vsel %vm8629, %v8638, %v8637
        %vm8640 = vcmp.lt.s32.totalorder %v8580, 0
        %v8641 = vsub.s32 0, %v8580
        %v8642 = vsel %vm8640, %v8641, %v8580
        %v8643 = vmul.u32.u64.compose %v8642, 2863311531
        %v8644 = vextract.low.u32 %v8643
        %v8645 = vextract.high.u32 %v8643
        %v8646 = vshrl.u32 %v8645, 3
        %v8647 = vmul.u32 %v8646, 12
        %v8648 = vsub.s32 %v8642, %v8647
        %v8649 = vsub.s32 0, %v8648
        %v8650 = vsel %vm8640, %v8649, %v8648
        %vm8651 = vcmp.lt.s32.totalorder %v8581, 0
        %v8652 = vsub.s32 0, %v8581
        %v8653 = vsel %vm8651, %v8652, %v8581
        %v8654 = vmul.u32.u64.compose %v8653, 2863311531
        %v8655 = vextract.low.u32 %v8654
        %v8656 = vextract.high.u32 %v8654
        %v8657 = vshrl.u32 %v8656, 3
        %v8658 = vmul.u32 %v8657, 12
        %v8659 = vsub.s32 %v8653, %v8658
        %v8660 = vsub.s32 0, %v8659
        %v8661 = vsel %vm8651, %v8660, %v8659
        %vm8662 = vcmp.lt.s32.totalorder %v8582, 0
        %v8663 = vsub.s32 0, %v8582
        %v8664 = vsel %vm8662, %v8663, %v8582
        %v8665 = vmul.u32.u64.compose %v8664, 2863311531
        %v8666 = vextract.low.u32 %v8665
        %v8667 = vextract.high.u32 %v8665
        %v8668 = vshrl.u32 %v8667, 3
        %v8669 = vmul.u32 %v8668, 12
        %v8670 = vsub.s32 %v8664, %v8669
        %v8671 = vsub.s32 0, %v8670
        %v8672 = vsel %vm8662, %v8671, %v8670
        %vm8673 = vcmp.lt.s32.totalorder %v8583, 0
        %v8674 = vsub.s32 0, %v8583
        %v8675 = vsel %vm8673, %v8674, %v8583
        %v8676 = vmul.u32.u64.compose %v8675, 2863311531
        %v8677 = vextract.low.u32 %v8676
        %v8678 = vextract.high.u32 %v8676
        %v8679 = vshrl.u32 %v8678, 3
        %v8680 = vmul.u32 %v8679, 12
        %v8681 = vsub.s32 %v8675, %v8680
        %v8682 = vsub.s32 0, %v8681
        %v8683 = vsel %vm8673, %v8682, %v8681
        %vm8684 = vcmp.lt.s32.totalorder %v8584, 0
        %v8685 = vsub.s32 0, %v8584
        %v8686 = vsel %vm8684, %v8685, %v8584
        %v8687 = vmul.u32.u64.compose %v8686, 2863311531
        %v8688 = vextract.low.u32 %v8687
        %v8689 = vextract.high.u32 %v8687
        %v8690 = vshrl.u32 %v8689, 3
        %v8691 = vmul.u32 %v8690, 12
        %v8692 = vsub.s32 %v8686, %v8691
        %v8693 = vsub.s32 0, %v8692
        %v8694 = vsel %vm8684, %v8693, %v8692
        %vm8695 = vcmp.ne.s32.totalorder %v8595, 0
        %vm8696 = vcmp.ne.s32.totalorder %v8606, 0
        %vm8697 = vcmp.ne.s32.totalorder %v8617, 0
        %vm8698 = vcmp.ne.s32.totalorder %v8628, 0
        %vm8699 = vcmp.ne.s32.totalorder %v8639, 0
        %vm8700 = vcmp.ne.s32.totalorder %v8650, 0
        %vm8701 = vcmp.ne.s32.totalorder %v8661, 0
        %vm8702 = vcmp.ne.s32.totalorder %v8672, 0
        %vm8703 = vcmp.ne.s32.totalorder %v8683, 0
        %vm8704 = vcmp.ne.s32.totalorder %v8694, 0
        %vm8705 = vcmp.lt.s32.totalorder %v8595, 0
        %vm8706 = vcmp.lt.s32.totalorder %v8606, 0
        %vm8707 = vcmp.lt.s32.totalorder %v8617, 0
        %vm8708 = vcmp.lt.s32.totalorder %v8628, 0
        %vm8709 = vcmp.lt.s32.totalorder %v8639, 0
        %vm8710 = vcmp.lt.s32.totalorder %v8650, 0
        %vm8711 = vcmp.lt.s32.totalorder %v8661, 0
        %vm8712 = vcmp.lt.s32.totalorder %v8672, 0
        %vm8713 = vcmp.lt.s32.totalorder %v8683, 0
        %vm8714 = vcmp.lt.s32.totalorder %v8694, 0
        %vm8715 = vmand %vm8705, %vm8695
        %vm8716 = vmand %vm8706, %vm8696
        %vm8717 = vmand %vm8707, %vm8697
        %vm8718 = vmand %vm8708, %vm8698
        %vm8719 = vmand %vm8709, %vm8699
        %vm8720 = vmand %vm8710, %vm8700
        %vm8721 = vmand %vm8711, %vm8701
        %vm8722 = vmand %vm8712, %vm8702
        %vm8723 = vmand %vm8713, %vm8703
        %vm8724 = vmand %vm8714, %vm8704
        %v8725 = vadd.s32 %v8595, 12
        %v8726 = vadd.s32 %v8606, 12
        %v8727 = vadd.s32 %v8617, 12
        %v8728 = vadd.s32 %v8628, 12
        %v8729 = vadd.s32 %v8639, 12
        %v8730 = vadd.s32 %v8650, 12
        %v8731 = vadd.s32 %v8661, 12
        %v8732 = vadd.s32 %v8672, 12
        %v8733 = vadd.s32 %v8683, 12
        %v8734 = vadd.s32 %v8694, 12
        %v8735 = vsel %vm8715, %v8725, %v8595
        %v8736 = vsel %vm8716, %v8726, %v8606
        %v8737 = vsel %vm8717, %v8727, %v8617
        %v8738 = vsel %vm8718, %v8728, %v8628
        %v8739 = vsel %vm8719, %v8729, %v8639
        %v8740 = vsel %vm8720, %v8730, %v8650
        %v8741 = vsel %vm8721, %v8731, %v8661
        %v8742 = vsel %vm8722, %v8732, %v8672
        %v8743 = vsel %vm8723, %v8733, %v8683
        %v8744 = vsel %vm8724, %v8734, %v8694
        %vm8745 = vcmp.lt.s32.totalorder %v8735, 7
        %vm8746 = vcmp.lt.s32.totalorder %v8736, 7
        %vm8747 = vcmp.lt.s32.totalorder %v8737, 7
        %vm8748 = vcmp.lt.s32.totalorder %v8738, 7
        %vm8749 = vcmp.lt.s32.totalorder %v8739, 7
        %vm8750 = vcmp.lt.s32.totalorder %v8740, 7
        %vm8751 = vcmp.lt.s32.totalorder %v8741, 7
        %vm8752 = vcmp.lt.s32.totalorder %v8742, 7
        %vm8753 = vcmp.lt.s32.totalorder %v8743, 7
        %vm8754 = vcmp.lt.s32.totalorder %v8744, 7
        %v8755 = vsel %vm8745, %v8564, 0.0
        %v8756 = vsel %vm8746, %v8565, 0.0
        %v8757 = vsel %vm8747, %v8566, 0.0
        %v8758 = vsel %vm8748, %v8567, 0.0
        %v8759 = vsel %vm8749, %v8568, 0.0
        %v8760 = vsel %vm8750, %v8569, 0.0
        %v8761 = vsel %vm8751, %v8570, 0.0
        %v8762 = vsel %vm8752, %v8571, 0.0
        %v8763 = vsel %vm8753, %v8572, 0.0
        %v8764 = vsel %vm8754, %v8573, 0.0
        %vm8765 = vcmask 80896
        %v8766 = vsel %vm8765, %v8755, 0.0
        %v8767 = vsel %vm8765, %v8756, 0.0
        %v8768 = vadd.f32 %v8766, %v8767
        %v8769 = vsel %vm8765, %v8757, 0.0
        %v8770 = vadd.f32 %v8768, %v8769
        %v8771 = vsel %vm8765, %v8758, 0.0
        %v8772 = vadd.f32 %v8770, %v8771
        %v8773 = vsel %vm8765, %v8759, 0.0
        %v8774 = vadd.f32 %v8772, %v8773
        %v8775 = vsel %vm8765, %v8760, 0.0
        %v8776 = vadd.f32 %v8774, %v8775
        %v8777 = vsel %vm8765, %v8761, 0.0
        %v8778 = vadd.f32 %v8776, %v8777
        %v8779 = vsel %vm8765, %v8762, 0.0
        %v8780 = vadd.f32 %v8778, %v8779
        %v8781 = vsel %vm8765, %v8763, 0.0
        %v8782 = vadd.f32 %v8780, %v8781
        %vm8783 = vcmask 79872
        %v8784 = vsel %vm8783, %v8764, 0.0
        %v8785 = vadd.f32 %v8782, %v8784
        %v8786 = vrot.slane %v8785, 4
        %v8787 = vadd.f32 %v8785, %v8786
        %v8788 = vrot.slane %v8787, 2
        %v8789 = vadd.f32 %v8787, %v8788
        %v8790 = vrot.slane %v8789, 1
        %v8791 = vadd.f32 %v8789, %v8790
        %v8792 = vmul.f32 %v8791, 0.020408163
        %vm8793 = vcmask 73728
        %8794 = vst.msk [vmem:[%s270] sm:$0x1] %vm8793, %v8792
        %s8795 = sand.u32 %s181, 1
        %s8796 = scalar_lea.sflag [#allocation7], %s8795
        %s8797 = sand.u32 %s181, 1
        %s8798 = scalar_lea.vmem [#allocation6], %s8797
        // Predicated region
        $region49: #{model_forward.1} parent=47 // pred_check
          %p8799 = pneg %p191
        $region50: #{model_forward.1} parent=47 // pred_check_branch
          %8801 = sbr.rel (%p8799) target = $region52
        $region51: #{model_forward.1} parent=47 // pred_region
          %s8803 = ssub.s32 16, 16
          %8804 = vsyncadd %s8796, %s8803
          %s8805 = smul.addr %s21, 16
          %s8806 = scalar_lea.hbm %s7, %s8805
          %s8808 = sshll.u32 %s8798, 4
          %s8809 = int_to_ptr.vmem [resolvable:$true] %s8808
          %8811 = dma.vmem_to_hbm [thread:$0]  %s8809, 16, %s8806, %s8796
        $region52: #{model_forward.1} parent=47 // pred_fallthru
          _
      $region48: #{model_forward.1} parent=5 // pred_fallthru
        _
      %p8812 = scmp.le.s32.totalorder 2, %s16
      // Predicated region
      $region53: #{model_forward.1} parent=5 // pred_check
        %p8813 = pneg %p8812
      $region54: #{model_forward.1} parent=5 // pred_check_branch
        %8815 = sbr.rel (%p8813) target = $region56
      $region55: #{model_forward.1} parent=5 // pred_region
        %s8816 = ssub.s32 %s16, 2
        // Predicated region
        $region57: #{model_forward.1} parent=55 // pred_check
          %p8817 = pneg %p197
        $region58: #{model_forward.1} parent=55 // pred_check_branch
          %8819 = sbr.rel (%p8817) target = $region60
        $region59: #{model_forward.1} parent=55 // pred_region
          %s8820 = sand.u32 %s182, 1
          %s8821 = scalar_lea.sflag [#allocation7], %s8820
          %s8822 = sand.u32 %s182, 1
          %s8823 = scalar_lea.vmem [#allocation6], %s8822
          %8824 = dma.done %s8821, 16
        $region60: #{model_forward.1} parent=55 // pred_fallthru
          _
      $region56: #{model_forward.1} parent=5 // pred_fallthru
        _
    $region6: #{model_forward.1} parent=1 // loop_footer
      %s20 = sadd.s32 1, %s16
    $region7: #{model_forward.1} parent=1 // loop_footer_branch
      %15 = sbr.rel target = $region3
    $region8: #{model_forward.1} parent=1 // loop_exit
      _
    %8825 = vsyncpa [#allocation7], 1
    %s8826 = scalar_lea.sflag [#allocation7], 1
    %8827 = vsyncpa %s8826, 1

</llo_original>
